<compile_context>
chip_gen: v7x
topology: tpu7x:2x2x1
jax: 0.10.0
libtpu: 0.0.40
codegen_flags: <defaults>
</compile_context>

<pallas_src>
import functools

import numpy as np

import jax
import jax.numpy as jnp
from jax.experimental import pallas as pl
from jax.experimental.pallas import tpu as pltpu

# ----------------------------------------------------------------------------
# Reduced hyper-parameters (same architecture / semantics as the PyTorch
# module defaults, just smaller so the demo stays tiny).
# ----------------------------------------------------------------------------
CFG = dict(
    channels_input=1,
    channels_output=1,
    channels_H=32,
    encoder_n_layers=2,
    kernel_size=4,
    tsfm_n_layers=2,
    tsfm_n_head=4,
    tsfm_d_model=64,
    tsfm_d_inner=128,
    fft_size=30,     # -> F = fft_size//2 + 1 = 16 frequency bins
    hop_size=8,
    win_length=24,
)


def _layer_norm(y, g, b, eps=1e-6):
    mu = jnp.mean(y, axis=-1, keepdims=True)
    var = jnp.mean((y - mu) ** 2, axis=-1, keepdims=True)
    return (y - mu) * jax.lax.rsqrt(var + eps) * g + b


# ----------------------------------------------------------------------------
# Fused forward kernel (single invocation, no grid; everything VMEM-resident)
# ----------------------------------------------------------------------------
def clean_specnet_kernel(
    # inputs -------------------------------------------------------------
    x_ref, refl_ref, expand_ref, wsel_ref, cosa_ref, sina_ref,
    smat_ref, amask_ref,
    init_w_ref, init_b_ref,
    enc_w1_ref, enc_b1_ref, enc_w2v_ref, enc_b2v_ref, enc_w2g_ref, enc_b2g_ref,
    t1_w_ref, t1_b_ref, pre_ln_g_ref, pre_ln_b_ref,
    wq_ref, wk_ref, wv_ref, wo_ref,
    ln1_g_ref, ln1_b_ref, fw1_ref, fb1_ref, fw2_ref, fb2_ref,
    ln2_g_ref, ln2_b_ref,
    outw_ref, outb_ref,
    # output --------------------------------------------------------------
    o_ref,
    # static config ---------------------------------------------------------
    *, K, nh, n_enc, n_tsfm):
    f32 = jnp.float32
    bf16 = jnp.bfloat16

    # ---- STFT magnitude (fully vectorized; no gathers, no scratch) -----------
    xpad = jnp.dot(x_ref[...], refl_ref[...], preferred_element_type=f32)   # (BC, Lp)
    slab = jnp.dot(expand_ref[...], xpad, preferred_element_type=f32)       # (R, Lp)
    xw = slab * wsel_ref[...]                                               # shifted windows
    ca = jnp.dot(xw, cosa_ref[...], preferred_element_type=f32)             # (R, F)
    sa = jnp.dot(xw, sina_ref[...], preferred_element_type=f32)             # (R, F)
    x = jnp.sqrt(jnp.maximum(ca * ca + sa * sa, 1e-7))                      # magnitude

    # ---- initial 1x1 conv (matmul over channels) ----------------------------
    x = jnp.dot(x.astype(bf16), init_w_ref[...],
                preferred_element_type=f32) + init_b_ref[...]

    # ---- encoder blocks: Conv(K,'same')+ReLU -> Conv(K,'same')+GLU -----------
    def conv_same(xin, w_ref, b_ref, l):
        # out = sum_k smat[k] @ (x @ w_k) + b ; smat[k] performs the 'same'
        # tap shift, zero padding and batch-block isolation in one 0/1 matmul.
        xb = xin.astype(bf16)
        acc = None
        for k in range(K):
            t = jnp.dot(xb, w_ref[l, k], preferred_element_type=f32)
            t = jnp.dot(smat_ref[k], t, preferred_element_type=f32)
            acc = t if acc is None else acc + t
        return acc + b_ref[l]

    for l in range(n_enc):
        h1 = jnp.maximum(conv_same(x, enc_w1_ref, enc_b1_ref, l), 0.0)
        val = conv_same(h1, enc_w2v_ref, enc_b2v_ref, l)
        gate = conv_same(h1, enc_w2g_ref, enc_b2g_ref, l)
        x = val * jax.nn.sigmoid(gate)                   # GLU (value/gate pre-split)

    # ---- tsfm_conv1 (1x1) ----------------------------------------------------
    x = jnp.dot(x.astype(bf16), t1_w_ref[...],
                preferred_element_type=f32) + t1_b_ref[...]

    # ---- TransformerEncoder (dropout=0, no pos-enc; pre-stack LayerNorm) -----
    Dm = x.shape[1]
    dk = Dm // nh
    scale = 1.0 / float(dk) ** 0.5
    amask = amask_ref[...]                               # block-diag / pad-key mask
    x = _layer_norm(x, pre_ln_g_ref[...], pre_ln_b_ref[...])
    for l in range(n_tsfm):
        xb = x.astype(bf16)
        attn = None
        for h in range(nh):
            qh = jnp.dot(xb, wq_ref[l, h], preferred_element_type=f32) * scale
            kh = jnp.dot(xb, wk_ref[l, h], preferred_element_type=f32)
            vh = jnp.dot(xb, wv_ref[l, h], preferred_element_type=f32)
            # NT-form scores: contract dim 1 of both (no explicit transpose)
            s = jax.lax.dot_general(
                qh.astype(bf16), kh.astype(bf16),
                dimension_numbers=(((1,), (1,)), ((), ())),
                preferred_element_type=f32)
            s = s + amask
            s = s - jnp.max(s, axis=-1, keepdims=True)
            p = jnp.exp(s)
            p = p * pl.reciprocal(jnp.sum(p, axis=-1, keepdims=True), approx=True)
            ctx = jnp.dot(p.astype(bf16), vh.astype(bf16),
                          preferred_element_type=f32)
            head_out = jnp.dot(ctx.astype(bf16), wo_ref[l, h],
                               preferred_element_type=f32)
            attn = head_out if attn is None else attn + head_out
        x = _layer_norm(attn + x, ln1_g_ref[l], ln1_b_ref[l])       # post-norm
        hff = jnp.maximum(
            jnp.dot(x.astype(bf16), fw1_ref[l],
                    preferred_element_type=f32) + fb1_ref[l], 0.0)
        y = jnp.dot(hff.astype(bf16), fw2_ref[l],
                    preferred_element_type=f32) + fb2_ref[l] + x
        x = _layer_norm(y, ln2_g_ref[l], ln2_b_ref[l])

    # ---- fused tsfm_conv2 . output_conv + abs --------------------------------
    o_ref[...] = jnp.abs(
        jnp.dot(x.astype(bf16), outw_ref[...],
                preferred_element_type=f32) + outb_ref[...])


# ----------------------------------------------------------------------------
# Host-side (trace-time, numpy) constants: reflect pad, framing, window, DFT,
# conv tap-shift matrices and the attention mask.  Zero runtime cost.
# ----------------------------------------------------------------------------
def _host_constants(L, BC, T, T_pad, cfg):
    n_fft, hop, wl = cfg["fft_size"], cfg["hop_size"], cfg["win_length"]
    K = cfg["kernel_size"]
    F = n_fft // 2 + 1
    pad = n_fft // 2
    Lp = L + 2 * pad
    R = BC * T_pad
    lpad = (K - 1) // 2

    # reflect-pad (torch.stft center=True) folded into a (L, Lp) selection matrix
    src = np.pad(np.arange(L), (pad, pad), mode="reflect")
    refl = np.zeros((L, Lp), np.float32)
    refl[src, np.arange(Lp)] = 1.0

    # batch-row expansion: slab row r = b*T_pad + t  <-  audio row b
    expand = np.zeros((R, BC), np.float32)
    expand[np.arange(R), np.arange(R) // T_pad] = 1.0

    # per-frame shifted Hann window (torch.hann_window periodic, centered in n_fft)
    n = np.arange(wl)
    win = (0.5 - 0.5 * np.cos(2.0 * np.pi * n / wl)).astype(np.float32)
    win_f = np.zeros(n_fft, np.float32)
    off = (n_fft - wl) // 2
    win_f[off:off + wl] = win
    wsel = np.zeros((R, Lp), np.float32)
    for b in range(BC):
        for t in range(T):                              # pad rows (t >= T) stay zero
            wsel[b * T_pad + t, t * hop:t * hop + n_fft] = win_f

    # one-sided DFT basis on the padded-sample index m; the per-frame phase
    # shift cancels under |.| so no per-frame correction is needed.
    m = np.arange(Lp, dtype=np.float64)[:, None]
    f = np.arange(F, dtype=np.float64)[None, :]
    ang = 2.0 * np.pi * m * f / n_fft
    cosa = np.cos(ang).astype(np.float32)
    sina = np.sin(ang).astype(np.float32)

    # conv 'same' (PyTorch pads left=(K-1)//2) tap shift + zero-pad + batch-block
    # selection matrices: smat[k] @ x == x shifted by (k - lpad) rows, zeroed
    # outside the valid [0, T) frames of each batch block.
    r = np.arange(R)
    blk = r // T_pad
    t_idx = r % T_pad
    smat = np.zeros((K, R, R), np.float32)
    for k in range(K):
        t_src = t_idx + k - lpad
        ok = (t_src >= 0) & (t_src < T)
        smat[k, r[ok], blk[ok] * T_pad + t_src[ok]] = 1.0

    # additive attention mask: attend only within the same batch block and only
    # to real (non-padded) key frames.
    key_ok = t_idx < T
    allow = (blk[:, None] == blk[None, :]) & key_ok[None, :]
    amask = np.where(allow, 0.0, -1e30).astype(np.float32)

    return dict(refl=refl, expand=expand, wsel=wsel, cosa=cosa, sina=sina,
                smat=smat, amask=amask)


# ----------------------------------------------------------------------------
# Deterministic parameter init (synthetic; shapes consistent with the module)
# ----------------------------------------------------------------------------
def init_params(key, cfg):
    H = cfg["channels_H"]
    K = cfg["kernel_size"]
    Dm = cfg["tsfm_d_model"]
    Di = cfg["tsfm_d_inner"]
    F = cfg["fft_size"] // 2 + 1
    Fin = cfg["channels_input"] * F
    Fout = cfg["channels_output"] * F

    keys = iter(jax.random.split(key, 256))

    def w(shape):
        fan_in = 1
        for d in shape[:-1]:
            fan_in *= d
        return jax.random.normal(next(keys), shape, jnp.float32) / jnp.sqrt(
            jnp.float32(fan_in))

    def b(n):
        return jax.random.normal(next(keys), (1, n), jnp.float32) * 0.01

    p = dict(init_w=w((Fin, H)), init_b=b(H))
    p["enc"] = [dict(w1=w((K, H, H)), b1=b(H), w2=w((K, H, 2 * H)), b2=b(2 * H))
                for _ in range(cfg["encoder_n_layers"])]
    p["t1_w"], p["t1_b"] = w((H, Dm)), b(Dm)
    p["pre_ln_g"] = jnp.ones((1, Dm), jnp.float32)
    p["pre_ln_b"] = jnp.zeros((1, Dm), jnp.float32)
    p["tsfm"] = [dict(wq=w((Dm, Dm)), wk=w((Dm, Dm)), wv=w((Dm, Dm)), wo=w((Dm, Dm)),
                      ln1_g=jnp.ones((1, Dm), jnp.float32),
                      ln1_b=jnp.zeros((1, Dm), jnp.float32),
                      w1=w((Dm, Di)), b1=b(Di), w2=w((Di, Dm)), b2=b(Dm),
                      ln2_g=jnp.ones((1, Dm), jnp.float32),
                      ln2_b=jnp.zeros((1, Dm), jnp.float32))
                for _ in range(cfg["tsfm_n_layers"])]
    p["t2_w"], p["t2_b"] = w((Dm, H)), b(H)
    p["out_w"], p["out_b"] = w((H, Fout)), b(Fout)
    return p


def prep_weights(params, cfg):
    """One-time weight prep (run outside the jitted forward): stack per-layer
    params, split GLU value/gate and attention heads, fold tsfm_conv2 into
    output_conv, and cast matmul weights to bf16 (biases / LN params stay f32)."""
    H = cfg["channels_H"]
    Dm, nh = cfg["tsfm_d_model"], cfg["tsfm_n_head"]
    dk = Dm // nh
    bf16 = jnp.bfloat16
    enc = params["enc"]
    ts = params["tsfm"]

    def heads_in(w):   # (Dm, Dm) -> (nh, Dm, dk): output columns are head-major
        return jnp.transpose(w.reshape(Dm, nh, dk), (1, 0, 2))

    def heads_out(w):  # (Dm, Dm) -> (nh, dk, Dm): input rows are head-major
        return w.reshape(nh, dk, Dm)

    return dict(
        init_w=params["init_w"].astype(bf16), init_b=params["init_b"],
        enc_w1=jnp.stack([e["w1"] for e in enc]).astype(bf16),
        enc_b1=jnp.stack([e["b1"] for e in enc]),
        enc_w2v=jnp.stack([e["w2"][..., :H] for e in enc]).astype(bf16),
        enc_b2v=jnp.stack([e["b2"][:, :H] for e in enc]),
        enc_w2g=jnp.stack([e["w2"][..., H:] for e in enc]).astype(bf16),
        enc_b2g=jnp.stack([e["b2"][:, H:] for e in enc]),
        t1_w=params["t1_w"].astype(bf16), t1_b=params["t1_b"],
        pre_ln_g=params["pre_ln_g"], pre_ln_b=params["pre_ln_b"],
        wq=jnp.stack([heads_in(l["wq"]) for l in ts]).astype(bf16),
        wk=jnp.stack([heads_in(l["wk"]) for l in ts]).astype(bf16),
        wv=jnp.stack([heads_in(l["wv"]) for l in ts]).astype(bf16),
        wo=jnp.stack([heads_out(l["wo"]) for l in ts]).astype(bf16),
        ln1_g=jnp.stack([l["ln1_g"] for l in ts]),
        ln1_b=jnp.stack([l["ln1_b"] for l in ts]),
        fw1=jnp.stack([l["w1"] for l in ts]).astype(bf16),
        fb1=jnp.stack([l["b1"] for l in ts]),
        fw2=jnp.stack([l["w2"] for l in ts]).astype(bf16),
        fb2=jnp.stack([l["b2"] for l in ts]),
        ln2_g=jnp.stack([l["ln2_g"] for l in ts]),
        ln2_b=jnp.stack([l["ln2_b"] for l in ts]),
        outw=(params["t2_w"] @ params["out_w"]).astype(bf16),
        outb=params["t2_b"] @ params["out_w"] + params["out_b"],
    )


# ----------------------------------------------------------------------------
# Forward pass (semantics of CleanSpecNet.forward)
# ----------------------------------------------------------------------------
def clean_specnet_forward(weights, noisy_audio):
    cfg = CFG
    B, C, L = noisy_audio.shape
    # TODO(synk): channels_input > 1 needs the '(repeat b) t c -> b (repeat c) t'
    # channel/frequency regroup before the row-slab layout; this demo uses C == 1.
    n_fft, hop = cfg["fft_size"], cfg["hop_size"]
    K = cfg["kernel_size"]
    H = cfg["channels_H"]
    Dm = cfg["tsfm_d_model"]
    Di = cfg["tsfm_d_inner"]
    nh = cfg["tsfm_n_head"]
    dk = Dm // nh
    F = n_fft // 2 + 1
    Fout = cfg["channels_output"] * F
    n_enc = cfg["encoder_n_layers"]
    n_tsfm = cfg["tsfm_n_layers"]

    pad = n_fft // 2
    Lp = L + 2 * pad
    T = 1 + (Lp - n_fft) // hop                 # torch.stft frame count (center=True)
    T_pad = ((T + 7) // 8) * 8                  # 8-sublane-aligned row blocks
    BC = B * C
    R = BC * T_pad

    c = _host_constants(L, BC, T, T_pad, cfg)

    # 'b c t -> (b c) t' (the reflect pad itself happens inside the kernel)
    x2 = noisy_audio.reshape(BC, L).astype(jnp.float32)

    args = [
        x2, c["refl"], c["expand"], c["wsel"], c["cosa"], c["sina"],
        c["smat"], c["amask"],
        weights["init_w"], weights["init_b"],
        weights["enc_w1"], weights["enc_b1"],
        weights["enc_w2v"], weights["enc_b2v"],
        weights["enc_w2g"], weights["enc_b2g"],
        weights["t1_w"], weights["t1_b"],
        weights["pre_ln_g"], weights["pre_ln_b"],
        weights["wq"], weights["wk"], weights["wv"], weights["wo"],
        weights["ln1_g"], weights["ln1_b"],
        weights["fw1"], weights["fb1"], weights["fw2"], weights["fb2"],
        weights["ln2_g"], weights["ln2_b"],
        weights["outw"], weights["outb"],
    ]

    flops = 2 * (BC * L * Lp + R * BC * Lp + 2 * R * Lp * F + R * F * H
                 + n_enc * 3 * K * (R * H * H + R * R * H) + R * H * Dm
                 + n_tsfm * (nh * (3 * R * Dm * dk + 2 * R * R * dk + R * dk * Dm)
                             + 2 * R * Dm * Di)
                 + R * Dm * Fout)
    transcendentals = n_tsfm * nh * R * R + n_enc * R * H + 4 * R * F
    bytes_accessed = int(sum(int(np.prod(a.shape)) * a.dtype.itemsize for a in args)
                         + R * Fout * 4)

    kern = functools.partial(clean_specnet_kernel, K=K, nh=nh,
                             n_enc=n_enc, n_tsfm=n_tsfm)
    vmem = pl.BlockSpec(memory_space=pltpu.MemorySpace.VMEM)
    out = pl.pallas_call(
        kern,
        out_shape=jax.ShapeDtypeStruct((R, Fout), jnp.float32),
        in_specs=[vmem] * len(args),
        out_specs=vmem,
        cost_estimate=pl.CostEstimate(flops=int(flops),
                                      transcendentals=int(transcendentals),
                                      bytes_accessed=bytes_accessed),
    )(*args)
    # TODO(synk): on v7x add grid=(BC,) + dimension_semantics=("parallel",) to
    # use the second TensorCore; kept grid-free for v5e/v6e (1 TC).

    # crop padded rows / x[:, :, :L], then 'b (repeat c) t -> b repeat c t'
    Tc = min(T, L)
    x = out.reshape(B, T_pad, Fout)[:, :Tc, :]
    x = jnp.transpose(x, (0, 2, 1)).reshape(B, cfg["channels_output"], F, Tc)
    return x


# ----------------------------------------------------------------------------
if __name__ == "__main__":
    key = jax.random.PRNGKey(0)
    pkey, xkey = jax.random.split(key)
    params = init_params(pkey, CFG)
    weights = prep_weights(params, CFG)      # one-time fold, outside the jit

    B, C, L = 2, CFG["channels_input"], 64
    noisy_audio = jax.random.normal(xkey, (B, C, L), jnp.float32)

    fwd = jax.jit(clean_specnet_forward)
    out = jax.block_until_ready(fwd(weights, noisy_audio))

    F = CFG["fft_size"] // 2 + 1
    T = 1 + L // CFG["hop_size"]
    assert out.shape == (B, CFG["channels_output"], F, T), out.shape
    assert bool(jnp.all(jnp.isfinite(out))) and bool(jnp.all(out >= 0.0))
    print("KERNEL_OK")
</pallas_src>

<mosaic_0001>
module attributes {stable_mosaic.version = 11 : i64} {
  func.func @clean_specnet_kernel(%arg0: memref<2x64xf32, #tpu.memory_space<vmem>>, %arg1: memref<64x94xf32, #tpu.memory_space<vmem>>, %arg2: memref<32x2xf32, #tpu.memory_space<vmem>>, %arg3: memref<32x94xf32, #tpu.memory_space<vmem>>, %arg4: memref<94x16xf32, #tpu.memory_space<vmem>>, %arg5: memref<94x16xf32, #tpu.memory_space<vmem>>, %arg6: memref<4x32x32xf32, #tpu.memory_space<vmem>>, %arg7: memref<32x32xf32, #tpu.memory_space<vmem>>, %arg8: memref<16x32xbf16, #tpu.memory_space<vmem>>, %arg9: memref<1x32xf32, #tpu.memory_space<vmem>>, %arg10: memref<2x4x32x32xbf16, #tpu.memory_space<vmem>>, %arg11: memref<2x1x32xf32, #tpu.memory_space<vmem>>, %arg12: memref<2x4x32x32xbf16, #tpu.memory_space<vmem>>, %arg13: memref<2x1x32xf32, #tpu.memory_space<vmem>>, %arg14: memref<2x4x32x32xbf16, #tpu.memory_space<vmem>>, %arg15: memref<2x1x32xf32, #tpu.memory_space<vmem>>, %arg16: memref<32x64xbf16, #tpu.memory_space<vmem>>, %arg17: memref<1x64xf32, #tpu.memory_space<vmem>>, %arg18: memref<1x64xf32, #tpu.memory_space<vmem>>, %arg19: memref<1x64xf32, #tpu.memory_space<vmem>>, %arg20: memref<2x4x64x16xbf16, #tpu.memory_space<vmem>>, %arg21: memref<2x4x64x16xbf16, #tpu.memory_space<vmem>>, %arg22: memref<2x4x64x16xbf16, #tpu.memory_space<vmem>>, %arg23: memref<2x4x16x64xbf16, #tpu.memory_space<vmem>>, %arg24: memref<2x1x64xf32, #tpu.memory_space<vmem>>, %arg25: memref<2x1x64xf32, #tpu.memory_space<vmem>>, %arg26: memref<2x64x128xbf16, #tpu.memory_space<vmem>>, %arg27: memref<2x1x128xf32, #tpu.memory_space<vmem>>, %arg28: memref<2x128x64xbf16, #tpu.memory_space<vmem>>, %arg29: memref<2x1x64xf32, #tpu.memory_space<vmem>>, %arg30: memref<2x1x64xf32, #tpu.memory_space<vmem>>, %arg31: memref<2x1x64xf32, #tpu.memory_space<vmem>>, %arg32: memref<64x16xbf16, #tpu.memory_space<vmem>>, %arg33: memref<1x16xf32, #tpu.memory_space<vmem>>, %arg34: memref<32x16xf32, #tpu.memory_space<vmem>>) attributes {dimension_semantics = [], scalar_prefetch = 0 : i64, scratch_operands = 0 : i64, tpu.core_type = #tpu.core_type<tc>} {
    %c0 = arith.constant 0 : index
    %c0_0 = arith.constant 0 : index
    %0 = vector.load %arg0[%c0, %c0_0] : memref<2x64xf32, #tpu.memory_space<vmem>>, vector<2x64xf32>
    %c0_1 = arith.constant 0 : index
    %c0_2 = arith.constant 0 : index
    %1 = vector.load %arg1[%c0_1, %c0_2] : memref<64x94xf32, #tpu.memory_space<vmem>>, vector<64x94xf32>
    %cst = arith.constant dense<0.000000e+00> : vector<2x94xf32>
    %2 = tpu.matmul %0, %1, %cst {dimension_numbers = #tpu.dot_dimension_numbers<[1], [0], [0], [1], [0, 0, 1, 1], [], []>} : vector<2x64xf32>, vector<64x94xf32>, vector<2x94xf32> -> vector<2x94xf32>
    %c0_3 = arith.constant 0 : index
    %c0_4 = arith.constant 0 : index
    %3 = vector.load %arg2[%c0_3, %c0_4] : memref<32x2xf32, #tpu.memory_space<vmem>>, vector<32x2xf32>
    %cst_5 = arith.constant dense<0.000000e+00> : vector<32x94xf32>
    %4 = tpu.matmul %3, %2, %cst_5 {dimension_numbers = #tpu.dot_dimension_numbers<[1], [0], [0], [1], [0, 0, 1, 1], [], []>} : vector<32x2xf32>, vector<2x94xf32>, vector<32x94xf32> -> vector<32x94xf32>
    %c0_6 = arith.constant 0 : index
    %c0_7 = arith.constant 0 : index
    %5 = vector.load %arg3[%c0_6, %c0_7] : memref<32x94xf32, #tpu.memory_space<vmem>>, vector<32x94xf32>
    %6 = arith.mulf %4, %5 : vector<32x94xf32>
    %c0_8 = arith.constant 0 : index
    %c0_9 = arith.constant 0 : index
    %7 = vector.load %arg4[%c0_8, %c0_9] : memref<94x16xf32, #tpu.memory_space<vmem>>, vector<94x16xf32>
    %cst_10 = arith.constant dense<0.000000e+00> : vector<32x16xf32>
    %8 = tpu.matmul %6, %7, %cst_10 {dimension_numbers = #tpu.dot_dimension_numbers<[1], [0], [0], [1], [0, 0, 1, 1], [], []>} : vector<32x94xf32>, vector<94x16xf32>, vector<32x16xf32> -> vector<32x16xf32>
    %c0_11 = arith.constant 0 : index
    %c0_12 = arith.constant 0 : index
    %9 = vector.load %arg5[%c0_11, %c0_12] : memref<94x16xf32, #tpu.memory_space<vmem>>, vector<94x16xf32>
    %cst_13 = arith.constant dense<0.000000e+00> : vector<32x16xf32>
    %10 = tpu.matmul %6, %9, %cst_13 {dimension_numbers = #tpu.dot_dimension_numbers<[1], [0], [0], [1], [0, 0, 1, 1], [], []>} : vector<32x94xf32>, vector<94x16xf32>, vector<32x16xf32> -> vector<32x16xf32>
    %11 = arith.mulf %8, %8 : vector<32x16xf32>
    %12 = arith.mulf %10, %10 : vector<32x16xf32>
    %13 = arith.addf %11, %12 : vector<32x16xf32>
    %cst_14 = arith.constant 1.000000e-07 : f32
    %14 = vector.broadcast %cst_14 : f32 to vector<32x16xf32>
    %15 = arith.maximumf %13, %14 : vector<32x16xf32>
    %16 = math.sqrt %15 : vector<32x16xf32>
    %17 = arith.truncf %16 : vector<32x16xf32> to vector<32x16xbf16>
    %c0_15 = arith.constant 0 : index
    %c0_16 = arith.constant 0 : index
    %18 = vector.load %arg8[%c0_15, %c0_16] : memref<16x32xbf16, #tpu.memory_space<vmem>>, vector<16x32xbf16>
    %cst_17 = arith.constant dense<0.000000e+00> : vector<32x32xf32>
    %19 = tpu.matmul %17, %18, %cst_17 {dimension_numbers = #tpu.dot_dimension_numbers<[1], [0], [0], [1], [0, 0, 1, 1], [], []>} : vector<32x16xbf16>, vector<16x32xbf16>, vector<32x32xf32> -> vector<32x32xf32>
    %c0_18 = arith.constant 0 : index
    %c0_19 = arith.constant 0 : index
    %20 = vector.load %arg9[%c0_18, %c0_19] : memref<1x32xf32, #tpu.memory_space<vmem>>, vector<1x32xf32>
    %21 = vector.broadcast %20 : vector<1x32xf32> to vector<32x32xf32>
    %22 = arith.addf %19, %21 : vector<32x32xf32>
    %23 = arith.truncf %22 : vector<32x32xf32> to vector<32x32xbf16>
    %c0_20 = arith.constant 0 : index
    %c0_21 = arith.constant 0 : index
    %c0_22 = arith.constant 0 : index
    %c0_23 = arith.constant 0 : index
    %24 = vector.load %arg10[%c0_20, %c0_21, %c0_22, %c0_23] : memref<2x4x32x32xbf16, #tpu.memory_space<vmem>>, vector<1x1x32x32xbf16>
    %25 = vector.shape_cast %24 : vector<1x1x32x32xbf16> to vector<32x32xbf16>
    %cst_24 = arith.constant dense<0.000000e+00> : vector<32x32xf32>
    %26 = tpu.matmul %23, %25, %cst_24 {dimension_numbers = #tpu.dot_dimension_numbers<[1], [0], [0], [1], [0, 0, 1, 1], [], []>} : vector<32x32xbf16>, vector<32x32xbf16>, vector<32x32xf32> -> vector<32x32xf32>
    %c0_25 = arith.constant 0 : index
    %c0_26 = arith.constant 0 : index
    %c0_27 = arith.constant 0 : index
    %27 = vector.load %arg6[%c0_25, %c0_26, %c0_27] : memref<4x32x32xf32, #tpu.memory_space<vmem>>, vector<1x32x32xf32>
    %28 = vector.shape_cast %27 : vector<1x32x32xf32> to vector<32x32xf32>
    %cst_28 = arith.constant dense<0.000000e+00> : vector<32x32xf32>
    %29 = tpu.matmul %28, %26, %cst_28 {dimension_numbers = #tpu.dot_dimension_numbers<[1], [0], [0], [1], [0, 0, 1, 1], [], []>} : vector<32x32xf32>, vector<32x32xf32>, vector<32x32xf32> -> vector<32x32xf32>
    %c0_29 = arith.constant 0 : index
    %c1 = arith.constant 1 : index
    %c0_30 = arith.constant 0 : index
    %c0_31 = arith.constant 0 : index
    %30 = vector.load %arg10[%c0_29, %c1, %c0_30, %c0_31] : memref<2x4x32x32xbf16, #tpu.memory_space<vmem>>, vector<1x1x32x32xbf16>
    %31 = vector.shape_cast %30 : vector<1x1x32x32xbf16> to vector<32x32xbf16>
    %cst_32 = arith.constant dense<0.000000e+00> : vector<32x32xf32>
    %32 = tpu.matmul %23, %31, %cst_32 {dimension_numbers = #tpu.dot_dimension_numbers<[1], [0], [0], [1], [0, 0, 1, 1], [], []>} : vector<32x32xbf16>, vector<32x32xbf16>, vector<32x32xf32> -> vector<32x32xf32>
    %c1_33 = arith.constant 1 : index
    %c0_34 = arith.constant 0 : index
    %c0_35 = arith.constant 0 : index
    %33 = vector.load %arg6[%c1_33, %c0_34, %c0_35] : memref<4x32x32xf32, #tpu.memory_space<vmem>>, vector<1x32x32xf32>
    %34 = vector.shape_cast %33 : vector<1x32x32xf32> to vector<32x32xf32>
    %cst_36 = arith.constant dense<0.000000e+00> : vector<32x32xf32>
    %35 = tpu.matmul %34, %32, %cst_36 {dimension_numbers = #tpu.dot_dimension_numbers<[1], [0], [0], [1], [0, 0, 1, 1], [], []>} : vector<32x32xf32>, vector<32x32xf32>, vector<32x32xf32> -> vector<32x32xf32>
    %36 = arith.addf %29, %35 : vector<32x32xf32>
    %c0_37 = arith.constant 0 : index
    %c2 = arith.constant 2 : index
    %c0_38 = arith.constant 0 : index
    %c0_39 = arith.constant 0 : index
    %37 = vector.load %arg10[%c0_37, %c2, %c0_38, %c0_39] : memref<2x4x32x32xbf16, #tpu.memory_space<vmem>>, vector<1x1x32x32xbf16>
    %38 = vector.shape_cast %37 : vector<1x1x32x32xbf16> to vector<32x32xbf16>
    %cst_40 = arith.constant dense<0.000000e+00> : vector<32x32xf32>
    %39 = tpu.matmul %23, %38, %cst_40 {dimension_numbers = #tpu.dot_dimension_numbers<[1], [0], [0], [1], [0, 0, 1, 1], [], []>} : vector<32x32xbf16>, vector<32x32xbf16>, vector<32x32xf32> -> vector<32x32xf32>
    %c2_41 = arith.constant 2 : index
    %c0_42 = arith.constant 0 : index
    %c0_43 = arith.constant 0 : index
    %40 = vector.load %arg6[%c2_41, %c0_42, %c0_43] : memref<4x32x32xf32, #tpu.memory_space<vmem>>, vector<1x32x32xf32>
    %41 = vector.shape_cast %40 : vector<1x32x32xf32> to vector<32x32xf32>
    %cst_44 = arith.constant dense<0.000000e+00> : vector<32x32xf32>
    %42 = tpu.matmul %41, %39, %cst_44 {dimension_numbers = #tpu.dot_dimension_numbers<[1], [0], [0], [1], [0, 0, 1, 1], [], []>} : vector<32x32xf32>, vector<32x32xf32>, vector<32x32xf32> -> vector<32x32xf32>
    %43 = arith.addf %36, %42 : vector<32x32xf32>
    %c0_45 = arith.constant 0 : index
    %c3 = arith.constant 3 : index
    %c0_46 = arith.constant 0 : index
    %c0_47 = arith.constant 0 : index
    %44 = vector.load %arg10[%c0_45, %c3, %c0_46, %c0_47] : memref<2x4x32x32xbf16, #tpu.memory_space<vmem>>, vector<1x1x32x32xbf16>
    %45 = vector.shape_cast %44 : vector<1x1x32x32xbf16> to vector<32x32xbf16>
    %cst_48 = arith.constant dense<0.000000e+00> : vector<32x32xf32>
    %46 = tpu.matmul %23, %45, %cst_48 {dimension_numbers = #tpu.dot_dimension_numbers<[1], [0], [0], [1], [0, 0, 1, 1], [], []>} : vector<32x32xbf16>, vector<32x32xbf16>, vector<32x32xf32> -> vector<32x32xf32>
    %c3_49 = arith.constant 3 : index
    %c0_50 = arith.constant 0 : index
    %c0_51 = arith.constant 0 : index
    %47 = vector.load %arg6[%c3_49, %c0_50, %c0_51] : memref<4x32x32xf32, #tpu.memory_space<vmem>>, vector<1x32x32xf32>
    %48 = vector.shape_cast %47 : vector<1x32x32xf32> to vector<32x32xf32>
    %cst_52 = arith.constant dense<0.000000e+00> : vector<32x32xf32>
    %49 = tpu.matmul %48, %46, %cst_52 {dimension_numbers = #tpu.dot_dimension_numbers<[1], [0], [0], [1], [0, 0, 1, 1], [], []>} : vector<32x32xf32>, vector<32x32xf32>, vector<32x32xf32> -> vector<32x32xf32>
    %50 = arith.addf %43, %49 : vector<32x32xf32>
    %c0_53 = arith.constant 0 : index
    %c0_54 = arith.constant 0 : index
    %c0_55 = arith.constant 0 : index
    %51 = vector.load %arg11[%c0_53, %c0_54, %c0_55] : memref<2x1x32xf32, #tpu.memory_space<vmem>>, vector<1x1x32xf32>
    %52 = vector.shape_cast %51 : vector<1x1x32xf32> to vector<1x32xf32>
    %53 = vector.broadcast %52 : vector<1x32xf32> to vector<32x32xf32>
    %54 = arith.addf %50, %53 : vector<32x32xf32>
    %cst_56 = arith.constant 0.000000e+00 : f32
    %55 = vector.broadcast %cst_56 : f32 to vector<32x32xf32>
    %56 = arith.maximumf %54, %55 : vector<32x32xf32>
    %57 = arith.truncf %56 : vector<32x32xf32> to vector<32x32xbf16>
    %c0_57 = arith.constant 0 : index
    %c0_58 = arith.constant 0 : index
    %c0_59 = arith.constant 0 : index
    %c0_60 = arith.constant 0 : index
    %58 = vector.load %arg12[%c0_57, %c0_58, %c0_59, %c0_60] : memref<2x4x32x32xbf16, #tpu.memory_space<vmem>>, vector<1x1x32x32xbf16>
    %59 = vector.shape_cast %58 : vector<1x1x32x32xbf16> to vector<32x32xbf16>
    %cst_61 = arith.constant dense<0.000000e+00> : vector<32x32xf32>
    %60 = tpu.matmul %57, %59, %cst_61 {dimension_numbers = #tpu.dot_dimension_numbers<[1], [0], [0], [1], [0, 0, 1, 1], [], []>} : vector<32x32xbf16>, vector<32x32xbf16>, vector<32x32xf32> -> vector<32x32xf32>
    %c0_62 = arith.constant 0 : index
    %c0_63 = arith.constant 0 : index
    %c0_64 = arith.constant 0 : index
    %61 = vector.load %arg6[%c0_62, %c0_63, %c0_64] : memref<4x32x32xf32, #tpu.memory_space<vmem>>, vector<1x32x32xf32>
    %62 = vector.shape_cast %61 : vector<1x32x32xf32> to vector<32x32xf32>
    %cst_65 = arith.constant dense<0.000000e+00> : vector<32x32xf32>
    %63 = tpu.matmul %62, %60, %cst_65 {dimension_numbers = #tpu.dot_dimension_numbers<[1], [0], [0], [1], [0, 0, 1, 1], [], []>} : vector<32x32xf32>, vector<32x32xf32>, vector<32x32xf32> -> vector<32x32xf32>
    %c0_66 = arith.constant 0 : index
    %c1_67 = arith.constant 1 : index
    %c0_68 = arith.constant 0 : index
    %c0_69 = arith.constant 0 : index
    %64 = vector.load %arg12[%c0_66, %c1_67, %c0_68, %c0_69] : memref<2x4x32x32xbf16, #tpu.memory_space<vmem>>, vector<1x1x32x32xbf16>
    %65 = vector.shape_cast %64 : vector<1x1x32x32xbf16> to vector<32x32xbf16>
    %cst_70 = arith.constant dense<0.000000e+00> : vector<32x32xf32>
    %66 = tpu.matmul %57, %65, %cst_70 {dimension_numbers = #tpu.dot_dimension_numbers<[1], [0], [0], [1], [0, 0, 1, 1], [], []>} : vector<32x32xbf16>, vector<32x32xbf16>, vector<32x32xf32> -> vector<32x32xf32>
    %c1_71 = arith.constant 1 : index
    %c0_72 = arith.constant 0 : index
    %c0_73 = arith.constant 0 : index
    %67 = vector.load %arg6[%c1_71, %c0_72, %c0_73] : memref<4x32x32xf32, #tpu.memory_space<vmem>>, vector<1x32x32xf32>
    %68 = vector.shape_cast %67 : vector<1x32x32xf32> to vector<32x32xf32>
    %cst_74 = arith.constant dense<0.000000e+00> : vector<32x32xf32>
    %69 = tpu.matmul %68, %66, %cst_74 {dimension_numbers = #tpu.dot_dimension_numbers<[1], [0], [0], [1], [0, 0, 1, 1], [], []>} : vector<32x32xf32>, vector<32x32xf32>, vector<32x32xf32> -> vector<32x32xf32>
    %70 = arith.addf %63, %69 : vector<32x32xf32>
    %c0_75 = arith.constant 0 : index
    %c2_76 = arith.constant 2 : index
    %c0_77 = arith.constant 0 : index
    %c0_78 = arith.constant 0 : index
    %71 = vector.load %arg12[%c0_75, %c2_76, %c0_77, %c0_78] : memref<2x4x32x32xbf16, #tpu.memory_space<vmem>>, vector<1x1x32x32xbf16>
    %72 = vector.shape_cast %71 : vector<1x1x32x32xbf16> to vector<32x32xbf16>
    %cst_79 = arith.constant dense<0.000000e+00> : vector<32x32xf32>
    %73 = tpu.matmul %57, %72, %cst_79 {dimension_numbers = #tpu.dot_dimension_numbers<[1], [0], [0], [1], [0, 0, 1, 1], [], []>} : vector<32x32xbf16>, vector<32x32xbf16>, vector<32x32xf32> -> vector<32x32xf32>
    %c2_80 = arith.constant 2 : index
    %c0_81 = arith.constant 0 : index
    %c0_82 = arith.constant 0 : index
    %74 = vector.load %arg6[%c2_80, %c0_81, %c0_82] : memref<4x32x32xf32, #tpu.memory_space<vmem>>, vector<1x32x32xf32>
    %75 = vector.shape_cast %74 : vector<1x32x32xf32> to vector<32x32xf32>
    %cst_83 = arith.constant dense<0.000000e+00> : vector<32x32xf32>
    %76 = tpu.matmul %75, %73, %cst_83 {dimension_numbers = #tpu.dot_dimension_numbers<[1], [0], [0], [1], [0, 0, 1, 1], [], []>} : vector<32x32xf32>, vector<32x32xf32>, vector<32x32xf32> -> vector<32x32xf32>
    %77 = arith.addf %70, %76 : vector<32x32xf32>
    %c0_84 = arith.constant 0 : index
    %c3_85 = arith.constant 3 : index
    %c0_86 = arith.constant 0 : index
    %c0_87 = arith.constant 0 : index
    %78 = vector.load %arg12[%c0_84, %c3_85, %c0_86, %c0_87] : memref<2x4x32x32xbf16, #tpu.memory_space<vmem>>, vector<1x1x32x32xbf16>
    %79 = vector.shape_cast %78 : vector<1x1x32x32xbf16> to vector<32x32xbf16>
    %cst_88 = arith.constant dense<0.000000e+00> : vector<32x32xf32>
    %80 = tpu.matmul %57, %79, %cst_88 {dimension_numbers = #tpu.dot_dimension_numbers<[1], [0], [0], [1], [0, 0, 1, 1], [], []>} : vector<32x32xbf16>, vector<32x32xbf16>, vector<32x32xf32> -> vector<32x32xf32>
    %c3_89 = arith.constant 3 : index
    %c0_90 = arith.constant 0 : index
    %c0_91 = arith.constant 0 : index
    %81 = vector.load %arg6[%c3_89, %c0_90, %c0_91] : memref<4x32x32xf32, #tpu.memory_space<vmem>>, vector<1x32x32xf32>
    %82 = vector.shape_cast %81 : vector<1x32x32xf32> to vector<32x32xf32>
    %cst_92 = arith.constant dense<0.000000e+00> : vector<32x32xf32>
    %83 = tpu.matmul %82, %80, %cst_92 {dimension_numbers = #tpu.dot_dimension_numbers<[1], [0], [0], [1], [0, 0, 1, 1], [], []>} : vector<32x32xf32>, vector<32x32xf32>, vector<32x32xf32> -> vector<32x32xf32>
    %84 = arith.addf %77, %83 : vector<32x32xf32>
    %c0_93 = arith.constant 0 : index
    %c0_94 = arith.constant 0 : index
    %c0_95 = arith.constant 0 : index
    %85 = vector.load %arg13[%c0_93, %c0_94, %c0_95] : memref<2x1x32xf32, #tpu.memory_space<vmem>>, vector<1x1x32xf32>
    %86 = vector.shape_cast %85 : vector<1x1x32xf32> to vector<1x32xf32>
    %87 = vector.broadcast %86 : vector<1x32xf32> to vector<32x32xf32>
    %88 = arith.addf %84, %87 : vector<32x32xf32>
    %89 = arith.truncf %56 : vector<32x32xf32> to vector<32x32xbf16>
    %c0_96 = arith.constant 0 : index
    %c0_97 = arith.constant 0 : index
    %c0_98 = arith.constant 0 : index
    %c0_99 = arith.constant 0 : index
    %90 = vector.load %arg14[%c0_96, %c0_97, %c0_98, %c0_99] : memref<2x4x32x32xbf16, #tpu.memory_space<vmem>>, vector<1x1x32x32xbf16>
    %91 = vector.shape_cast %90 : vector<1x1x32x32xbf16> to vector<32x32xbf16>
    %cst_100 = arith.constant dense<0.000000e+00> : vector<32x32xf32>
    %92 = tpu.matmul %89, %91, %cst_100 {dimension_numbers = #tpu.dot_dimension_numbers<[1], [0], [0], [1], [0, 0, 1, 1], [], []>} : vector<32x32xbf16>, vector<32x32xbf16>, vector<32x32xf32> -> vector<32x32xf32>
    %c0_101 = arith.constant 0 : index
    %c0_102 = arith.constant 0 : index
    %c0_103 = arith.constant 0 : index
    %93 = vector.load %arg6[%c0_101, %c0_102, %c0_103] : memref<4x32x32xf32, #tpu.memory_space<vmem>>, vector<1x32x32xf32>
    %94 = vector.shape_cast %93 : vector<1x32x32xf32> to vector<32x32xf32>
    %cst_104 = arith.constant dense<0.000000e+00> : vector<32x32xf32>
    %95 = tpu.matmul %94, %92, %cst_104 {dimension_numbers = #tpu.dot_dimension_numbers<[1], [0], [0], [1], [0, 0, 1, 1], [], []>} : vector<32x32xf32>, vector<32x32xf32>, vector<32x32xf32> -> vector<32x32xf32>
    %c0_105 = arith.constant 0 : index
    %c1_106 = arith.constant 1 : index
    %c0_107 = arith.constant 0 : index
    %c0_108 = arith.constant 0 : index
    %96 = vector.load %arg14[%c0_105, %c1_106, %c0_107, %c0_108] : memref<2x4x32x32xbf16, #tpu.memory_space<vmem>>, vector<1x1x32x32xbf16>
    %97 = vector.shape_cast %96 : vector<1x1x32x32xbf16> to vector<32x32xbf16>
    %cst_109 = arith.constant dense<0.000000e+00> : vector<32x32xf32>
    %98 = tpu.matmul %89, %97, %cst_109 {dimension_numbers = #tpu.dot_dimension_numbers<[1], [0], [0], [1], [0, 0, 1, 1], [], []>} : vector<32x32xbf16>, vector<32x32xbf16>, vector<32x32xf32> -> vector<32x32xf32>
    %c1_110 = arith.constant 1 : index
    %c0_111 = arith.constant 0 : index
    %c0_112 = arith.constant 0 : index
    %99 = vector.load %arg6[%c1_110, %c0_111, %c0_112] : memref<4x32x32xf32, #tpu.memory_space<vmem>>, vector<1x32x32xf32>
    %100 = vector.shape_cast %99 : vector<1x32x32xf32> to vector<32x32xf32>
    %cst_113 = arith.constant dense<0.000000e+00> : vector<32x32xf32>
    %101 = tpu.matmul %100, %98, %cst_113 {dimension_numbers = #tpu.dot_dimension_numbers<[1], [0], [0], [1], [0, 0, 1, 1], [], []>} : vector<32x32xf32>, vector<32x32xf32>, vector<32x32xf32> -> vector<32x32xf32>
    %102 = arith.addf %95, %101 : vector<32x32xf32>
    %c0_114 = arith.constant 0 : index
    %c2_115 = arith.constant 2 : index
    %c0_116 = arith.constant 0 : index
    %c0_117 = arith.constant 0 : index
    %103 = vector.load %arg14[%c0_114, %c2_115, %c0_116, %c0_117] : memref<2x4x32x32xbf16, #tpu.memory_space<vmem>>, vector<1x1x32x32xbf16>
    %104 = vector.shape_cast %103 : vector<1x1x32x32xbf16> to vector<32x32xbf16>
    %cst_118 = arith.constant dense<0.000000e+00> : vector<32x32xf32>
    %105 = tpu.matmul %89, %104, %cst_118 {dimension_numbers = #tpu.dot_dimension_numbers<[1], [0], [0], [1], [0, 0, 1, 1], [], []>} : vector<32x32xbf16>, vector<32x32xbf16>, vector<32x32xf32> -> vector<32x32xf32>
    %c2_119 = arith.constant 2 : index
    %c0_120 = arith.constant 0 : index
    %c0_121 = arith.constant 0 : index
    %106 = vector.load %arg6[%c2_119, %c0_120, %c0_121] : memref<4x32x32xf32, #tpu.memory_space<vmem>>, vector<1x32x32xf32>
    %107 = vector.shape_cast %106 : vector<1x32x32xf32> to vector<32x32xf32>
    %cst_122 = arith.constant dense<0.000000e+00> : vector<32x32xf32>
    %108 = tpu.matmul %107, %105, %cst_122 {dimension_numbers = #tpu.dot_dimension_numbers<[1], [0], [0], [1], [0, 0, 1, 1], [], []>} : vector<32x32xf32>, vector<32x32xf32>, vector<32x32xf32> -> vector<32x32xf32>
    %109 = arith.addf %102, %108 : vector<32x32xf32>
    %c0_123 = arith.constant 0 : index
    %c3_124 = arith.constant 3 : index
    %c0_125 = arith.constant 0 : index
    %c0_126 = arith.constant 0 : index
    %110 = vector.load %arg14[%c0_123, %c3_124, %c0_125, %c0_126] : memref<2x4x32x32xbf16, #tpu.memory_space<vmem>>, vector<1x1x32x32xbf16>
    %111 = vector.shape_cast %110 : vector<1x1x32x32xbf16> to vector<32x32xbf16>
    %cst_127 = arith.constant dense<0.000000e+00> : vector<32x32xf32>
    %112 = tpu.matmul %89, %111, %cst_127 {dimension_numbers = #tpu.dot_dimension_numbers<[1], [0], [0], [1], [0, 0, 1, 1], [], []>} : vector<32x32xbf16>, vector<32x32xbf16>, vector<32x32xf32> -> vector<32x32xf32>
    %c3_128 = arith.constant 3 : index
    %c0_129 = arith.constant 0 : index
    %c0_130 = arith.constant 0 : index
    %113 = vector.load %arg6[%c3_128, %c0_129, %c0_130] : memref<4x32x32xf32, #tpu.memory_space<vmem>>, vector<1x32x32xf32>
    %114 = vector.shape_cast %113 : vector<1x32x32xf32> to vector<32x32xf32>
    %cst_131 = arith.constant dense<0.000000e+00> : vector<32x32xf32>
    %115 = tpu.matmul %114, %112, %cst_131 {dimension_numbers = #tpu.dot_dimension_numbers<[1], [0], [0], [1], [0, 0, 1, 1], [], []>} : vector<32x32xf32>, vector<32x32xf32>, vector<32x32xf32> -> vector<32x32xf32>
    %116 = arith.addf %109, %115 : vector<32x32xf32>
    %c0_132 = arith.constant 0 : index
    %c0_133 = arith.constant 0 : index
    %c0_134 = arith.constant 0 : index
    %117 = vector.load %arg15[%c0_132, %c0_133, %c0_134] : memref<2x1x32xf32, #tpu.memory_space<vmem>>, vector<1x1x32xf32>
    %118 = vector.shape_cast %117 : vector<1x1x32xf32> to vector<1x32xf32>
    %119 = vector.broadcast %118 : vector<1x32xf32> to vector<32x32xf32>
    %120 = arith.addf %116, %119 : vector<32x32xf32>
    %121 = arith.negf %120 : vector<32x32xf32>
    %122 = math.exp %121 : vector<32x32xf32>
    %cst_135 = arith.constant 1.000000e+00 : f32
    %123 = vector.broadcast %cst_135 : f32 to vector<32x32xf32>
    %124 = arith.addf %123, %122 : vector<32x32xf32>
    %125 = arith.divf %123, %124 : vector<32x32xf32>
    %126 = arith.mulf %88, %125 : vector<32x32xf32>
    %127 = arith.truncf %126 : vector<32x32xf32> to vector<32x32xbf16>
    %c1_136 = arith.constant 1 : index
    %c0_137 = arith.constant 0 : index
    %c0_138 = arith.constant 0 : index
    %c0_139 = arith.constant 0 : index
    %128 = vector.load %arg10[%c1_136, %c0_137, %c0_138, %c0_139] : memref<2x4x32x32xbf16, #tpu.memory_space<vmem>>, vector<1x1x32x32xbf16>
    %129 = vector.shape_cast %128 : vector<1x1x32x32xbf16> to vector<32x32xbf16>
    %cst_140 = arith.constant dense<0.000000e+00> : vector<32x32xf32>
    %130 = tpu.matmul %127, %129, %cst_140 {dimension_numbers = #tpu.dot_dimension_numbers<[1], [0], [0], [1], [0, 0, 1, 1], [], []>} : vector<32x32xbf16>, vector<32x32xbf16>, vector<32x32xf32> -> vector<32x32xf32>
    %c0_141 = arith.constant 0 : index
    %c0_142 = arith.constant 0 : index
    %c0_143 = arith.constant 0 : index
    %131 = vector.load %arg6[%c0_141, %c0_142, %c0_143] : memref<4x32x32xf32, #tpu.memory_space<vmem>>, vector<1x32x32xf32>
    %132 = vector.shape_cast %131 : vector<1x32x32xf32> to vector<32x32xf32>
    %cst_144 = arith.constant dense<0.000000e+00> : vector<32x32xf32>
    %133 = tpu.matmul %132, %130, %cst_144 {dimension_numbers = #tpu.dot_dimension_numbers<[1], [0], [0], [1], [0, 0, 1, 1], [], []>} : vector<32x32xf32>, vector<32x32xf32>, vector<32x32xf32> -> vector<32x32xf32>
    %c1_145 = arith.constant 1 : index
    %c1_146 = arith.constant 1 : index
    %c0_147 = arith.constant 0 : index
    %c0_148 = arith.constant 0 : index
    %134 = vector.load %arg10[%c1_145, %c1_146, %c0_147, %c0_148] : memref<2x4x32x32xbf16, #tpu.memory_space<vmem>>, vector<1x1x32x32xbf16>
    %135 = vector.shape_cast %134 : vector<1x1x32x32xbf16> to vector<32x32xbf16>
    %cst_149 = arith.constant dense<0.000000e+00> : vector<32x32xf32>
    %136 = tpu.matmul %127, %135, %cst_149 {dimension_numbers = #tpu.dot_dimension_numbers<[1], [0], [0], [1], [0, 0, 1, 1], [], []>} : vector<32x32xbf16>, vector<32x32xbf16>, vector<32x32xf32> -> vector<32x32xf32>
    %c1_150 = arith.constant 1 : index
    %c0_151 = arith.constant 0 : index
    %c0_152 = arith.constant 0 : index
    %137 = vector.load %arg6[%c1_150, %c0_151, %c0_152] : memref<4x32x32xf32, #tpu.memory_space<vmem>>, vector<1x32x32xf32>
    %138 = vector.shape_cast %137 : vector<1x32x32xf32> to vector<32x32xf32>
    %cst_153 = arith.constant dense<0.000000e+00> : vector<32x32xf32>
    %139 = tpu.matmul %138, %136, %cst_153 {dimension_numbers = #tpu.dot_dimension_numbers<[1], [0], [0], [1], [0, 0, 1, 1], [], []>} : vector<32x32xf32>, vector<32x32xf32>, vector<32x32xf32> -> vector<32x32xf32>
    %140 = arith.addf %133, %139 : vector<32x32xf32>
    %c1_154 = arith.constant 1 : index
    %c2_155 = arith.constant 2 : index
    %c0_156 = arith.constant 0 : index
    %c0_157 = arith.constant 0 : index
    %141 = vector.load %arg10[%c1_154, %c2_155, %c0_156, %c0_157] : memref<2x4x32x32xbf16, #tpu.memory_space<vmem>>, vector<1x1x32x32xbf16>
    %142 = vector.shape_cast %141 : vector<1x1x32x32xbf16> to vector<32x32xbf16>
    %cst_158 = arith.constant dense<0.000000e+00> : vector<32x32xf32>
    %143 = tpu.matmul %127, %142, %cst_158 {dimension_numbers = #tpu.dot_dimension_numbers<[1], [0], [0], [1], [0, 0, 1, 1], [], []>} : vector<32x32xbf16>, vector<32x32xbf16>, vector<32x32xf32> -> vector<32x32xf32>
    %c2_159 = arith.constant 2 : index
    %c0_160 = arith.constant 0 : index
    %c0_161 = arith.constant 0 : index
    %144 = vector.load %arg6[%c2_159, %c0_160, %c0_161] : memref<4x32x32xf32, #tpu.memory_space<vmem>>, vector<1x32x32xf32>
    %145 = vector.shape_cast %144 : vector<1x32x32xf32> to vector<32x32xf32>
    %cst_162 = arith.constant dense<0.000000e+00> : vector<32x32xf32>
    %146 = tpu.matmul %145, %143, %cst_162 {dimension_numbers = #tpu.dot_dimension_numbers<[1], [0], [0], [1], [0, 0, 1, 1], [], []>} : vector<32x32xf32>, vector<32x32xf32>, vector<32x32xf32> -> vector<32x32xf32>
    %147 = arith.addf %140, %146 : vector<32x32xf32>
    %c1_163 = arith.constant 1 : index
    %c3_164 = arith.constant 3 : index
    %c0_165 = arith.constant 0 : index
    %c0_166 = arith.constant 0 : index
    %148 = vector.load %arg10[%c1_163, %c3_164, %c0_165, %c0_166] : memref<2x4x32x32xbf16, #tpu.memory_space<vmem>>, vector<1x1x32x32xbf16>
    %149 = vector.shape_cast %148 : vector<1x1x32x32xbf16> to vector<32x32xbf16>
    %cst_167 = arith.constant dense<0.000000e+00> : vector<32x32xf32>
    %150 = tpu.matmul %127, %149, %cst_167 {dimension_numbers = #tpu.dot_dimension_numbers<[1], [0], [0], [1], [0, 0, 1, 1], [], []>} : vector<32x32xbf16>, vector<32x32xbf16>, vector<32x32xf32> -> vector<32x32xf32>
    %c3_168 = arith.constant 3 : index
    %c0_169 = arith.constant 0 : index
    %c0_170 = arith.constant 0 : index
    %151 = vector.load %arg6[%c3_168, %c0_169, %c0_170] : memref<4x32x32xf32, #tpu.memory_space<vmem>>, vector<1x32x32xf32>
    %152 = vector.shape_cast %151 : vector<1x32x32xf32> to vector<32x32xf32>
    %cst_171 = arith.constant dense<0.000000e+00> : vector<32x32xf32>
    %153 = tpu.matmul %152, %150, %cst_171 {dimension_numbers = #tpu.dot_dimension_numbers<[1], [0], [0], [1], [0, 0, 1, 1], [], []>} : vector<32x32xf32>, vector<32x32xf32>, vector<32x32xf32> -> vector<32x32xf32>
    %154 = arith.addf %147, %153 : vector<32x32xf32>
    %c1_172 = arith.constant 1 : index
    %c0_173 = arith.constant 0 : index
    %c0_174 = arith.constant 0 : index
    %155 = vector.load %arg11[%c1_172, %c0_173, %c0_174] : memref<2x1x32xf32, #tpu.memory_space<vmem>>, vector<1x1x32xf32>
    %156 = vector.shape_cast %155 : vector<1x1x32xf32> to vector<1x32xf32>
    %157 = vector.broadcast %156 : vector<1x32xf32> to vector<32x32xf32>
    %158 = arith.addf %154, %157 : vector<32x32xf32>
    %cst_175 = arith.constant 0.000000e+00 : f32
    %159 = vector.broadcast %cst_175 : f32 to vector<32x32xf32>
    %160 = arith.maximumf %158, %159 : vector<32x32xf32>
    %161 = arith.truncf %160 : vector<32x32xf32> to vector<32x32xbf16>
    %c1_176 = arith.constant 1 : index
    %c0_177 = arith.constant 0 : index
    %c0_178 = arith.constant 0 : index
    %c0_179 = arith.constant 0 : index
    %162 = vector.load %arg12[%c1_176, %c0_177, %c0_178, %c0_179] : memref<2x4x32x32xbf16, #tpu.memory_space<vmem>>, vector<1x1x32x32xbf16>
    %163 = vector.shape_cast %162 : vector<1x1x32x32xbf16> to vector<32x32xbf16>
    %cst_180 = arith.constant dense<0.000000e+00> : vector<32x32xf32>
    %164 = tpu.matmul %161, %163, %cst_180 {dimension_numbers = #tpu.dot_dimension_numbers<[1], [0], [0], [1], [0, 0, 1, 1], [], []>} : vector<32x32xbf16>, vector<32x32xbf16>, vector<32x32xf32> -> vector<32x32xf32>
    %c0_181 = arith.constant 0 : index
    %c0_182 = arith.constant 0 : index
    %c0_183 = arith.constant 0 : index
    %165 = vector.load %arg6[%c0_181, %c0_182, %c0_183] : memref<4x32x32xf32, #tpu.memory_space<vmem>>, vector<1x32x32xf32>
    %166 = vector.shape_cast %165 : vector<1x32x32xf32> to vector<32x32xf32>
    %cst_184 = arith.constant dense<0.000000e+00> : vector<32x32xf32>
    %167 = tpu.matmul %166, %164, %cst_184 {dimension_numbers = #tpu.dot_dimension_numbers<[1], [0], [0], [1], [0, 0, 1, 1], [], []>} : vector<32x32xf32>, vector<32x32xf32>, vector<32x32xf32> -> vector<32x32xf32>
    %c1_185 = arith.constant 1 : index
    %c1_186 = arith.constant 1 : index
    %c0_187 = arith.constant 0 : index
    %c0_188 = arith.constant 0 : index
    %168 = vector.load %arg12[%c1_185, %c1_186, %c0_187, %c0_188] : memref<2x4x32x32xbf16, #tpu.memory_space<vmem>>, vector<1x1x32x32xbf16>
    %169 = vector.shape_cast %168 : vector<1x1x32x32xbf16> to vector<32x32xbf16>
    %cst_189 = arith.constant dense<0.000000e+00> : vector<32x32xf32>
    %170 = tpu.matmul %161, %169, %cst_189 {dimension_numbers = #tpu.dot_dimension_numbers<[1], [0], [0], [1], [0, 0, 1, 1], [], []>} : vector<32x32xbf16>, vector<32x32xbf16>, vector<32x32xf32> -> vector<32x32xf32>
    %c1_190 = arith.constant 1 : index
    %c0_191 = arith.constant 0 : index
    %c0_192 = arith.constant 0 : index
    %171 = vector.load %arg6[%c1_190, %c0_191, %c0_192] : memref<4x32x32xf32, #tpu.memory_space<vmem>>, vector<1x32x32xf32>
    %172 = vector.shape_cast %171 : vector<1x32x32xf32> to vector<32x32xf32>
    %cst_193 = arith.constant dense<0.000000e+00> : vector<32x32xf32>
    %173 = tpu.matmul %172, %170, %cst_193 {dimension_numbers = #tpu.dot_dimension_numbers<[1], [0], [0], [1], [0, 0, 1, 1], [], []>} : vector<32x32xf32>, vector<32x32xf32>, vector<32x32xf32> -> vector<32x32xf32>
    %174 = arith.addf %167, %173 : vector<32x32xf32>
    %c1_194 = arith.constant 1 : index
    %c2_195 = arith.constant 2 : index
    %c0_196 = arith.constant 0 : index
    %c0_197 = arith.constant 0 : index
    %175 = vector.load %arg12[%c1_194, %c2_195, %c0_196, %c0_197] : memref<2x4x32x32xbf16, #tpu.memory_space<vmem>>, vector<1x1x32x32xbf16>
    %176 = vector.shape_cast %175 : vector<1x1x32x32xbf16> to vector<32x32xbf16>
    %cst_198 = arith.constant dense<0.000000e+00> : vector<32x32xf32>
    %177 = tpu.matmul %161, %176, %cst_198 {dimension_numbers = #tpu.dot_dimension_numbers<[1], [0], [0], [1], [0, 0, 1, 1], [], []>} : vector<32x32xbf16>, vector<32x32xbf16>, vector<32x32xf32> -> vector<32x32xf32>
    %c2_199 = arith.constant 2 : index
    %c0_200 = arith.constant 0 : index
    %c0_201 = arith.constant 0 : index
    %178 = vector.load %arg6[%c2_199, %c0_200, %c0_201] : memref<4x32x32xf32, #tpu.memory_space<vmem>>, vector<1x32x32xf32>
    %179 = vector.shape_cast %178 : vector<1x32x32xf32> to vector<32x32xf32>
    %cst_202 = arith.constant dense<0.000000e+00> : vector<32x32xf32>
    %180 = tpu.matmul %179, %177, %cst_202 {dimension_numbers = #tpu.dot_dimension_numbers<[1], [0], [0], [1], [0, 0, 1, 1], [], []>} : vector<32x32xf32>, vector<32x32xf32>, vector<32x32xf32> -> vector<32x32xf32>
    %181 = arith.addf %174, %180 : vector<32x32xf32>
    %c1_203 = arith.constant 1 : index
    %c3_204 = arith.constant 3 : index
    %c0_205 = arith.constant 0 : index
    %c0_206 = arith.constant 0 : index
    %182 = vector.load %arg12[%c1_203, %c3_204, %c0_205, %c0_206] : memref<2x4x32x32xbf16, #tpu.memory_space<vmem>>, vector<1x1x32x32xbf16>
    %183 = vector.shape_cast %182 : vector<1x1x32x32xbf16> to vector<32x32xbf16>
    %cst_207 = arith.constant dense<0.000000e+00> : vector<32x32xf32>
    %184 = tpu.matmul %161, %183, %cst_207 {dimension_numbers = #tpu.dot_dimension_numbers<[1], [0], [0], [1], [0, 0, 1, 1], [], []>} : vector<32x32xbf16>, vector<32x32xbf16>, vector<32x32xf32> -> vector<32x32xf32>
    %c3_208 = arith.constant 3 : index
    %c0_209 = arith.constant 0 : index
    %c0_210 = arith.constant 0 : index
    %185 = vector.load %arg6[%c3_208, %c0_209, %c0_210] : memref<4x32x32xf32, #tpu.memory_space<vmem>>, vector<1x32x32xf32>
    %186 = vector.shape_cast %185 : vector<1x32x32xf32> to vector<32x32xf32>
    %cst_211 = arith.constant dense<0.000000e+00> : vector<32x32xf32>
    %187 = tpu.matmul %186, %184, %cst_211 {dimension_numbers = #tpu.dot_dimension_numbers<[1], [0], [0], [1], [0, 0, 1, 1], [], []>} : vector<32x32xf32>, vector<32x32xf32>, vector<32x32xf32> -> vector<32x32xf32>
    %188 = arith.addf %181, %187 : vector<32x32xf32>
    %c1_212 = arith.constant 1 : index
    %c0_213 = arith.constant 0 : index
    %c0_214 = arith.constant 0 : index
    %189 = vector.load %arg13[%c1_212, %c0_213, %c0_214] : memref<2x1x32xf32, #tpu.memory_space<vmem>>, vector<1x1x32xf32>
    %190 = vector.shape_cast %189 : vector<1x1x32xf32> to vector<1x32xf32>
    %191 = vector.broadcast %190 : vector<1x32xf32> to vector<32x32xf32>
    %192 = arith.addf %188, %191 : vector<32x32xf32>
    %193 = arith.truncf %160 : vector<32x32xf32> to vector<32x32xbf16>
    %c1_215 = arith.constant 1 : index
    %c0_216 = arith.constant 0 : index
    %c0_217 = arith.constant 0 : index
    %c0_218 = arith.constant 0 : index
    %194 = vector.load %arg14[%c1_215, %c0_216, %c0_217, %c0_218] : memref<2x4x32x32xbf16, #tpu.memory_space<vmem>>, vector<1x1x32x32xbf16>
    %195 = vector.shape_cast %194 : vector<1x1x32x32xbf16> to vector<32x32xbf16>
    %cst_219 = arith.constant dense<0.000000e+00> : vector<32x32xf32>
    %196 = tpu.matmul %193, %195, %cst_219 {dimension_numbers = #tpu.dot_dimension_numbers<[1], [0], [0], [1], [0, 0, 1, 1], [], []>} : vector<32x32xbf16>, vector<32x32xbf16>, vector<32x32xf32> -> vector<32x32xf32>
    %c0_220 = arith.constant 0 : index
    %c0_221 = arith.constant 0 : index
    %c0_222 = arith.constant 0 : index
    %197 = vector.load %arg6[%c0_220, %c0_221, %c0_222] : memref<4x32x32xf32, #tpu.memory_space<vmem>>, vector<1x32x32xf32>
    %198 = vector.shape_cast %197 : vector<1x32x32xf32> to vector<32x32xf32>
    %cst_223 = arith.constant dense<0.000000e+00> : vector<32x32xf32>
    %199 = tpu.matmul %198, %196, %cst_223 {dimension_numbers = #tpu.dot_dimension_numbers<[1], [0], [0], [1], [0, 0, 1, 1], [], []>} : vector<32x32xf32>, vector<32x32xf32>, vector<32x32xf32> -> vector<32x32xf32>
    %c1_224 = arith.constant 1 : index
    %c1_225 = arith.constant 1 : index
    %c0_226 = arith.constant 0 : index
    %c0_227 = arith.constant 0 : index
    %200 = vector.load %arg14[%c1_224, %c1_225, %c0_226, %c0_227] : memref<2x4x32x32xbf16, #tpu.memory_space<vmem>>, vector<1x1x32x32xbf16>
    %201 = vector.shape_cast %200 : vector<1x1x32x32xbf16> to vector<32x32xbf16>
    %cst_228 = arith.constant dense<0.000000e+00> : vector<32x32xf32>
    %202 = tpu.matmul %193, %201, %cst_228 {dimension_numbers = #tpu.dot_dimension_numbers<[1], [0], [0], [1], [0, 0, 1, 1], [], []>} : vector<32x32xbf16>, vector<32x32xbf16>, vector<32x32xf32> -> vector<32x32xf32>
    %c1_229 = arith.constant 1 : index
    %c0_230 = arith.constant 0 : index
    %c0_231 = arith.constant 0 : index
    %203 = vector.load %arg6[%c1_229, %c0_230, %c0_231] : memref<4x32x32xf32, #tpu.memory_space<vmem>>, vector<1x32x32xf32>
    %204 = vector.shape_cast %203 : vector<1x32x32xf32> to vector<32x32xf32>
    %cst_232 = arith.constant dense<0.000000e+00> : vector<32x32xf32>
    %205 = tpu.matmul %204, %202, %cst_232 {dimension_numbers = #tpu.dot_dimension_numbers<[1], [0], [0], [1], [0, 0, 1, 1], [], []>} : vector<32x32xf32>, vector<32x32xf32>, vector<32x32xf32> -> vector<32x32xf32>
    %206 = arith.addf %199, %205 : vector<32x32xf32>
    %c1_233 = arith.constant 1 : index
    %c2_234 = arith.constant 2 : index
    %c0_235 = arith.constant 0 : index
    %c0_236 = arith.constant 0 : index
    %207 = vector.load %arg14[%c1_233, %c2_234, %c0_235, %c0_236] : memref<2x4x32x32xbf16, #tpu.memory_space<vmem>>, vector<1x1x32x32xbf16>
    %208 = vector.shape_cast %207 : vector<1x1x32x32xbf16> to vector<32x32xbf16>
    %cst_237 = arith.constant dense<0.000000e+00> : vector<32x32xf32>
    %209 = tpu.matmul %193, %208, %cst_237 {dimension_numbers = #tpu.dot_dimension_numbers<[1], [0], [0], [1], [0, 0, 1, 1], [], []>} : vector<32x32xbf16>, vector<32x32xbf16>, vector<32x32xf32> -> vector<32x32xf32>
    %c2_238 = arith.constant 2 : index
    %c0_239 = arith.constant 0 : index
    %c0_240 = arith.constant 0 : index
    %210 = vector.load %arg6[%c2_238, %c0_239, %c0_240] : memref<4x32x32xf32, #tpu.memory_space<vmem>>, vector<1x32x32xf32>
    %211 = vector.shape_cast %210 : vector<1x32x32xf32> to vector<32x32xf32>
    %cst_241 = arith.constant dense<0.000000e+00> : vector<32x32xf32>
    %212 = tpu.matmul %211, %209, %cst_241 {dimension_numbers = #tpu.dot_dimension_numbers<[1], [0], [0], [1], [0, 0, 1, 1], [], []>} : vector<32x32xf32>, vector<32x32xf32>, vector<32x32xf32> -> vector<32x32xf32>
    %213 = arith.addf %206, %212 : vector<32x32xf32>
    %c1_242 = arith.constant 1 : index
    %c3_243 = arith.constant 3 : index
    %c0_244 = arith.constant 0 : index
    %c0_245 = arith.constant 0 : index
    %214 = vector.load %arg14[%c1_242, %c3_243, %c0_244, %c0_245] : memref<2x4x32x32xbf16, #tpu.memory_space<vmem>>, vector<1x1x32x32xbf16>
    %215 = vector.shape_cast %214 : vector<1x1x32x32xbf16> to vector<32x32xbf16>
    %cst_246 = arith.constant dense<0.000000e+00> : vector<32x32xf32>
    %216 = tpu.matmul %193, %215, %cst_246 {dimension_numbers = #tpu.dot_dimension_numbers<[1], [0], [0], [1], [0, 0, 1, 1], [], []>} : vector<32x32xbf16>, vector<32x32xbf16>, vector<32x32xf32> -> vector<32x32xf32>
    %c3_247 = arith.constant 3 : index
    %c0_248 = arith.constant 0 : index
    %c0_249 = arith.constant 0 : index
    %217 = vector.load %arg6[%c3_247, %c0_248, %c0_249] : memref<4x32x32xf32, #tpu.memory_space<vmem>>, vector<1x32x32xf32>
    %218 = vector.shape_cast %217 : vector<1x32x32xf32> to vector<32x32xf32>
    %cst_250 = arith.constant dense<0.000000e+00> : vector<32x32xf32>
    %219 = tpu.matmul %218, %216, %cst_250 {dimension_numbers = #tpu.dot_dimension_numbers<[1], [0], [0], [1], [0, 0, 1, 1], [], []>} : vector<32x32xf32>, vector<32x32xf32>, vector<32x32xf32> -> vector<32x32xf32>
    %220 = arith.addf %213, %219 : vector<32x32xf32>
    %c1_251 = arith.constant 1 : index
    %c0_252 = arith.constant 0 : index
    %c0_253 = arith.constant 0 : index
    %221 = vector.load %arg15[%c1_251, %c0_252, %c0_253] : memref<2x1x32xf32, #tpu.memory_space<vmem>>, vector<1x1x32xf32>
    %222 = vector.shape_cast %221 : vector<1x1x32xf32> to vector<1x32xf32>
    %223 = vector.broadcast %222 : vector<1x32xf32> to vector<32x32xf32>
    %224 = arith.addf %220, %223 : vector<32x32xf32>
    %225 = arith.negf %224 : vector<32x32xf32>
    %226 = math.exp %225 : vector<32x32xf32>
    %cst_254 = arith.constant 1.000000e+00 : f32
    %227 = vector.broadcast %cst_254 : f32 to vector<32x32xf32>
    %228 = arith.addf %227, %226 : vector<32x32xf32>
    %229 = arith.divf %227, %228 : vector<32x32xf32>
    %230 = arith.mulf %192, %229 : vector<32x32xf32>
    %231 = arith.truncf %230 : vector<32x32xf32> to vector<32x32xbf16>
    %c0_255 = arith.constant 0 : index
    %c0_256 = arith.constant 0 : index
    %232 = vector.load %arg16[%c0_255, %c0_256] : memref<32x64xbf16, #tpu.memory_space<vmem>>, vector<32x64xbf16>
    %cst_257 = arith.constant dense<0.000000e+00> : vector<32x64xf32>
    %233 = tpu.matmul %231, %232, %cst_257 {dimension_numbers = #tpu.dot_dimension_numbers<[1], [0], [0], [1], [0, 0, 1, 1], [], []>} : vector<32x32xbf16>, vector<32x64xbf16>, vector<32x64xf32> -> vector<32x64xf32>
    %c0_258 = arith.constant 0 : index
    %c0_259 = arith.constant 0 : index
    %234 = vector.load %arg17[%c0_258, %c0_259] : memref<1x64xf32, #tpu.memory_space<vmem>>, vector<1x64xf32>
    %235 = vector.broadcast %234 : vector<1x64xf32> to vector<32x64xf32>
    %236 = arith.addf %233, %235 : vector<32x64xf32>
    %c0_260 = arith.constant 0 : index
    %c0_261 = arith.constant 0 : index
    %237 = vector.load %arg7[%c0_260, %c0_261] : memref<32x32xf32, #tpu.memory_space<vmem>>, vector<32x32xf32>
    %c0_262 = arith.constant 0 : index
    %c0_263 = arith.constant 0 : index
    %238 = vector.load %arg18[%c0_262, %c0_263] : memref<1x64xf32, #tpu.memory_space<vmem>>, vector<1x64xf32>
    %c0_264 = arith.constant 0 : index
    %c0_265 = arith.constant 0 : index
    %239 = vector.load %arg19[%c0_264, %c0_265] : memref<1x64xf32, #tpu.memory_space<vmem>>, vector<1x64xf32>
    %cst_266 = arith.constant dense<0.000000e+00> : vector<32xf32>
    %240 = vector.multi_reduction <add>, %236, %cst_266 [1] : vector<32x64xf32> to vector<32xf32>
    %241 = vector.shape_cast %240 : vector<32xf32> to vector<32x1xf32>
    %cst_267 = arith.constant 6.400000e+01 : f32
    %242 = vector.broadcast %cst_267 : f32 to vector<32x1xf32>
    %243 = arith.divf %241, %242 : vector<32x1xf32>
    %244 = vector.broadcast %243 : vector<32x1xf32> to vector<32x64xf32>
    %245 = arith.subf %236, %244 : vector<32x64xf32>
    %246 = arith.mulf %245, %245 : vector<32x64xf32>
    %cst_268 = arith.constant dense<0.000000e+00> : vector<32xf32>
    %247 = vector.multi_reduction <add>, %246, %cst_268 [1] : vector<32x64xf32> to vector<32xf32>
    %248 = vector.shape_cast %247 : vector<32xf32> to vector<32x1xf32>
    %cst_269 = arith.constant 6.400000e+01 : f32
    %249 = vector.broadcast %cst_269 : f32 to vector<32x1xf32>
    %250 = arith.divf %248, %249 : vector<32x1xf32>
    %251 = vector.broadcast %243 : vector<32x1xf32> to vector<32x64xf32>
    %252 = arith.subf %236, %251 : vector<32x64xf32>
    %cst_270 = arith.constant 9.99999997E-7 : f32
    %253 = vector.broadcast %cst_270 : f32 to vector<32x1xf32>
    %254 = arith.addf %250, %253 : vector<32x1xf32>
    %255 = math.rsqrt %254 : vector<32x1xf32>
    %256 = vector.broadcast %255 : vector<32x1xf32> to vector<32x64xf32>
    %257 = arith.mulf %252, %256 : vector<32x64xf32>
    %258 = vector.broadcast %238 : vector<1x64xf32> to vector<32x64xf32>
    %259 = arith.mulf %257, %258 : vector<32x64xf32>
    %260 = vector.broadcast %239 : vector<1x64xf32> to vector<32x64xf32>
    %261 = arith.addf %259, %260 : vector<32x64xf32>
    %262 = arith.truncf %261 : vector<32x64xf32> to vector<32x64xbf16>
    %c0_271 = arith.constant 0 : index
    %c0_272 = arith.constant 0 : index
    %c0_273 = arith.constant 0 : index
    %c0_274 = arith.constant 0 : index
    %263 = vector.load %arg20[%c0_271, %c0_272, %c0_273, %c0_274] : memref<2x4x64x16xbf16, #tpu.memory_space<vmem>>, vector<1x1x64x16xbf16>
    %264 = vector.shape_cast %263 : vector<1x1x64x16xbf16> to vector<64x16xbf16>
    %cst_275 = arith.constant dense<0.000000e+00> : vector<32x16xf32>
    %265 = tpu.matmul %262, %264, %cst_275 {dimension_numbers = #tpu.dot_dimension_numbers<[1], [0], [0], [1], [0, 0, 1, 1], [], []>} : vector<32x64xbf16>, vector<64x16xbf16>, vector<32x16xf32> -> vector<32x16xf32>
    %cst_276 = arith.constant 2.500000e-01 : f32
    %266 = vector.broadcast %cst_276 : f32 to vector<32x16xf32>
    %267 = arith.mulf %265, %266 : vector<32x16xf32>
    %c0_277 = arith.constant 0 : index
    %c0_278 = arith.constant 0 : index
    %c0_279 = arith.constant 0 : index
    %c0_280 = arith.constant 0 : index
    %268 = vector.load %arg21[%c0_277, %c0_278, %c0_279, %c0_280] : memref<2x4x64x16xbf16, #tpu.memory_space<vmem>>, vector<1x1x64x16xbf16>
    %269 = vector.shape_cast %268 : vector<1x1x64x16xbf16> to vector<64x16xbf16>
    %cst_281 = arith.constant dense<0.000000e+00> : vector<32x16xf32>
    %270 = tpu.matmul %262, %269, %cst_281 {dimension_numbers = #tpu.dot_dimension_numbers<[1], [0], [0], [1], [0, 0, 1, 1], [], []>} : vector<32x64xbf16>, vector<64x16xbf16>, vector<32x16xf32> -> vector<32x16xf32>
    %c0_282 = arith.constant 0 : index
    %c0_283 = arith.constant 0 : index
    %c0_284 = arith.constant 0 : index
    %c0_285 = arith.constant 0 : index
    %271 = vector.load %arg22[%c0_282, %c0_283, %c0_284, %c0_285] : memref<2x4x64x16xbf16, #tpu.memory_space<vmem>>, vector<1x1x64x16xbf16>
    %272 = vector.shape_cast %271 : vector<1x1x64x16xbf16> to vector<64x16xbf16>
    %cst_286 = arith.constant dense<0.000000e+00> : vector<32x16xf32>
    %273 = tpu.matmul %262, %272, %cst_286 {dimension_numbers = #tpu.dot_dimension_numbers<[1], [0], [0], [1], [0, 0, 1, 1], [], []>} : vector<32x64xbf16>, vector<64x16xbf16>, vector<32x16xf32> -> vector<32x16xf32>
    %274 = arith.truncf %267 : vector<32x16xf32> to vector<32x16xbf16>
    %275 = arith.truncf %270 : vector<32x16xf32> to vector<32x16xbf16>
    %cst_287 = arith.constant dense<0.000000e+00> : vector<32x32xf32>
    %276 = tpu.matmul %274, %275, %cst_287 {dimension_numbers = #tpu.dot_dimension_numbers<[1], [1], [0], [0], [0, 0, 1, 0], [], []>} : vector<32x16xbf16>, vector<32x16xbf16>, vector<32x32xf32> -> vector<32x32xf32>
    %277 = arith.addf %276, %237 : vector<32x32xf32>
    %cst_288 = arith.constant dense<0xFF800000> : vector<32xf32>
    %278 = vector.multi_reduction <maximumf>, %277, %cst_288 [1] : vector<32x32xf32> to vector<32xf32>
    %279 = vector.shape_cast %278 : vector<32xf32> to vector<32x1xf32>
    %280 = vector.broadcast %279 : vector<32x1xf32> to vector<32x32xf32>
    %281 = arith.subf %277, %280 : vector<32x32xf32>
    %282 = math.exp %281 : vector<32x32xf32>
    %cst_289 = arith.constant dense<0.000000e+00> : vector<32xf32>
    %283 = vector.multi_reduction <add>, %282, %cst_289 [1] : vector<32x32xf32> to vector<32xf32>
    %284 = vector.shape_cast %283 : vector<32xf32> to vector<32x1xf32>
    %285 = tpu.reciprocal %284 {approx = true} : vector<32x1xf32> -> vector<32x1xf32>
    %286 = vector.broadcast %285 : vector<32x1xf32> to vector<32x32xf32>
    %287 = arith.mulf %282, %286 : vector<32x32xf32>
    %288 = arith.truncf %287 : vector<32x32xf32> to vector<32x32xbf16>
    %289 = arith.truncf %273 : vector<32x16xf32> to vector<32x16xbf16>
    %cst_290 = arith.constant dense<0.000000e+00> : vector<32x16xf32>
    %290 = tpu.matmul %288, %289, %cst_290 {dimension_numbers = #tpu.dot_dimension_numbers<[1], [0], [0], [1], [0, 0, 1, 1], [], []>} : vector<32x32xbf16>, vector<32x16xbf16>, vector<32x16xf32> -> vector<32x16xf32>
    %291 = arith.truncf %290 : vector<32x16xf32> to vector<32x16xbf16>
    %c0_291 = arith.constant 0 : index
    %c0_292 = arith.constant 0 : index
    %c0_293 = arith.constant 0 : index
    %c0_294 = arith.constant 0 : index
    %292 = vector.load %arg23[%c0_291, %c0_292, %c0_293, %c0_294] : memref<2x4x16x64xbf16, #tpu.memory_space<vmem>>, vector<1x1x16x64xbf16>
    %293 = vector.shape_cast %292 : vector<1x1x16x64xbf16> to vector<16x64xbf16>
    %cst_295 = arith.constant dense<0.000000e+00> : vector<32x64xf32>
    %294 = tpu.matmul %291, %293, %cst_295 {dimension_numbers = #tpu.dot_dimension_numbers<[1], [0], [0], [1], [0, 0, 1, 1], [], []>} : vector<32x16xbf16>, vector<16x64xbf16>, vector<32x64xf32> -> vector<32x64xf32>
    %c0_296 = arith.constant 0 : index
    %c1_297 = arith.constant 1 : index
    %c0_298 = arith.constant 0 : index
    %c0_299 = arith.constant 0 : index
    %295 = vector.load %arg20[%c0_296, %c1_297, %c0_298, %c0_299] : memref<2x4x64x16xbf16, #tpu.memory_space<vmem>>, vector<1x1x64x16xbf16>
    %296 = vector.shape_cast %295 : vector<1x1x64x16xbf16> to vector<64x16xbf16>
    %cst_300 = arith.constant dense<0.000000e+00> : vector<32x16xf32>
    %297 = tpu.matmul %262, %296, %cst_300 {dimension_numbers = #tpu.dot_dimension_numbers<[1], [0], [0], [1], [0, 0, 1, 1], [], []>} : vector<32x64xbf16>, vector<64x16xbf16>, vector<32x16xf32> -> vector<32x16xf32>
    %cst_301 = arith.constant 2.500000e-01 : f32
    %298 = vector.broadcast %cst_301 : f32 to vector<32x16xf32>
    %299 = arith.mulf %297, %298 : vector<32x16xf32>
    %c0_302 = arith.constant 0 : index
    %c1_303 = arith.constant 1 : index
    %c0_304 = arith.constant 0 : index
    %c0_305 = arith.constant 0 : index
    %300 = vector.load %arg21[%c0_302, %c1_303, %c0_304, %c0_305] : memref<2x4x64x16xbf16, #tpu.memory_space<vmem>>, vector<1x1x64x16xbf16>
    %301 = vector.shape_cast %300 : vector<1x1x64x16xbf16> to vector<64x16xbf16>
    %cst_306 = arith.constant dense<0.000000e+00> : vector<32x16xf32>
    %302 = tpu.matmul %262, %301, %cst_306 {dimension_numbers = #tpu.dot_dimension_numbers<[1], [0], [0], [1], [0, 0, 1, 1], [], []>} : vector<32x64xbf16>, vector<64x16xbf16>, vector<32x16xf32> -> vector<32x16xf32>
    %c0_307 = arith.constant 0 : index
    %c1_308 = arith.constant 1 : index
    %c0_309 = arith.constant 0 : index
    %c0_310 = arith.constant 0 : index
    %303 = vector.load %arg22[%c0_307, %c1_308, %c0_309, %c0_310] : memref<2x4x64x16xbf16, #tpu.memory_space<vmem>>, vector<1x1x64x16xbf16>
    %304 = vector.shape_cast %303 : vector<1x1x64x16xbf16> to vector<64x16xbf16>
    %cst_311 = arith.constant dense<0.000000e+00> : vector<32x16xf32>
    %305 = tpu.matmul %262, %304, %cst_311 {dimension_numbers = #tpu.dot_dimension_numbers<[1], [0], [0], [1], [0, 0, 1, 1], [], []>} : vector<32x64xbf16>, vector<64x16xbf16>, vector<32x16xf32> -> vector<32x16xf32>
    %306 = arith.truncf %299 : vector<32x16xf32> to vector<32x16xbf16>
    %307 = arith.truncf %302 : vector<32x16xf32> to vector<32x16xbf16>
    %cst_312 = arith.constant dense<0.000000e+00> : vector<32x32xf32>
    %308 = tpu.matmul %306, %307, %cst_312 {dimension_numbers = #tpu.dot_dimension_numbers<[1], [1], [0], [0], [0, 0, 1, 0], [], []>} : vector<32x16xbf16>, vector<32x16xbf16>, vector<32x32xf32> -> vector<32x32xf32>
    %309 = arith.addf %308, %237 : vector<32x32xf32>
    %cst_313 = arith.constant dense<0xFF800000> : vector<32xf32>
    %310 = vector.multi_reduction <maximumf>, %309, %cst_313 [1] : vector<32x32xf32> to vector<32xf32>
    %311 = vector.shape_cast %310 : vector<32xf32> to vector<32x1xf32>
    %312 = vector.broadcast %311 : vector<32x1xf32> to vector<32x32xf32>
    %313 = arith.subf %309, %312 : vector<32x32xf32>
    %314 = math.exp %313 : vector<32x32xf32>
    %cst_314 = arith.constant dense<0.000000e+00> : vector<32xf32>
    %315 = vector.multi_reduction <add>, %314, %cst_314 [1] : vector<32x32xf32> to vector<32xf32>
    %316 = vector.shape_cast %315 : vector<32xf32> to vector<32x1xf32>
    %317 = tpu.reciprocal %316 {approx = true} : vector<32x1xf32> -> vector<32x1xf32>
    %318 = vector.broadcast %317 : vector<32x1xf32> to vector<32x32xf32>
    %319 = arith.mulf %314, %318 : vector<32x32xf32>
    %320 = arith.truncf %319 : vector<32x32xf32> to vector<32x32xbf16>
    %321 = arith.truncf %305 : vector<32x16xf32> to vector<32x16xbf16>
    %cst_315 = arith.constant dense<0.000000e+00> : vector<32x16xf32>
    %322 = tpu.matmul %320, %321, %cst_315 {dimension_numbers = #tpu.dot_dimension_numbers<[1], [0], [0], [1], [0, 0, 1, 1], [], []>} : vector<32x32xbf16>, vector<32x16xbf16>, vector<32x16xf32> -> vector<32x16xf32>
    %323 = arith.truncf %322 : vector<32x16xf32> to vector<32x16xbf16>
    %c0_316 = arith.constant 0 : index
    %c1_317 = arith.constant 1 : index
    %c0_318 = arith.constant 0 : index
    %c0_319 = arith.constant 0 : index
    %324 = vector.load %arg23[%c0_316, %c1_317, %c0_318, %c0_319] : memref<2x4x16x64xbf16, #tpu.memory_space<vmem>>, vector<1x1x16x64xbf16>
    %325 = vector.shape_cast %324 : vector<1x1x16x64xbf16> to vector<16x64xbf16>
    %cst_320 = arith.constant dense<0.000000e+00> : vector<32x64xf32>
    %326 = tpu.matmul %323, %325, %cst_320 {dimension_numbers = #tpu.dot_dimension_numbers<[1], [0], [0], [1], [0, 0, 1, 1], [], []>} : vector<32x16xbf16>, vector<16x64xbf16>, vector<32x64xf32> -> vector<32x64xf32>
    %327 = arith.addf %294, %326 : vector<32x64xf32>
    %c0_321 = arith.constant 0 : index
    %c2_322 = arith.constant 2 : index
    %c0_323 = arith.constant 0 : index
    %c0_324 = arith.constant 0 : index
    %328 = vector.load %arg20[%c0_321, %c2_322, %c0_323, %c0_324] : memref<2x4x64x16xbf16, #tpu.memory_space<vmem>>, vector<1x1x64x16xbf16>
    %329 = vector.shape_cast %328 : vector<1x1x64x16xbf16> to vector<64x16xbf16>
    %cst_325 = arith.constant dense<0.000000e+00> : vector<32x16xf32>
    %330 = tpu.matmul %262, %329, %cst_325 {dimension_numbers = #tpu.dot_dimension_numbers<[1], [0], [0], [1], [0, 0, 1, 1], [], []>} : vector<32x64xbf16>, vector<64x16xbf16>, vector<32x16xf32> -> vector<32x16xf32>
    %cst_326 = arith.constant 2.500000e-01 : f32
    %331 = vector.broadcast %cst_326 : f32 to vector<32x16xf32>
    %332 = arith.mulf %330, %331 : vector<32x16xf32>
    %c0_327 = arith.constant 0 : index
    %c2_328 = arith.constant 2 : index
    %c0_329 = arith.constant 0 : index
    %c0_330 = arith.constant 0 : index
    %333 = vector.load %arg21[%c0_327, %c2_328, %c0_329, %c0_330] : memref<2x4x64x16xbf16, #tpu.memory_space<vmem>>, vector<1x1x64x16xbf16>
    %334 = vector.shape_cast %333 : vector<1x1x64x16xbf16> to vector<64x16xbf16>
    %cst_331 = arith.constant dense<0.000000e+00> : vector<32x16xf32>
    %335 = tpu.matmul %262, %334, %cst_331 {dimension_numbers = #tpu.dot_dimension_numbers<[1], [0], [0], [1], [0, 0, 1, 1], [], []>} : vector<32x64xbf16>, vector<64x16xbf16>, vector<32x16xf32> -> vector<32x16xf32>
    %c0_332 = arith.constant 0 : index
    %c2_333 = arith.constant 2 : index
    %c0_334 = arith.constant 0 : index
    %c0_335 = arith.constant 0 : index
    %336 = vector.load %arg22[%c0_332, %c2_333, %c0_334, %c0_335] : memref<2x4x64x16xbf16, #tpu.memory_space<vmem>>, vector<1x1x64x16xbf16>
    %337 = vector.shape_cast %336 : vector<1x1x64x16xbf16> to vector<64x16xbf16>
    %cst_336 = arith.constant dense<0.000000e+00> : vector<32x16xf32>
    %338 = tpu.matmul %262, %337, %cst_336 {dimension_numbers = #tpu.dot_dimension_numbers<[1], [0], [0], [1], [0, 0, 1, 1], [], []>} : vector<32x64xbf16>, vector<64x16xbf16>, vector<32x16xf32> -> vector<32x16xf32>
    %339 = arith.truncf %332 : vector<32x16xf32> to vector<32x16xbf16>
    %340 = arith.truncf %335 : vector<32x16xf32> to vector<32x16xbf16>
    %cst_337 = arith.constant dense<0.000000e+00> : vector<32x32xf32>
    %341 = tpu.matmul %339, %340, %cst_337 {dimension_numbers = #tpu.dot_dimension_numbers<[1], [1], [0], [0], [0, 0, 1, 0], [], []>} : vector<32x16xbf16>, vector<32x16xbf16>, vector<32x32xf32> -> vector<32x32xf32>
    %342 = arith.addf %341, %237 : vector<32x32xf32>
    %cst_338 = arith.constant dense<0xFF800000> : vector<32xf32>
    %343 = vector.multi_reduction <maximumf>, %342, %cst_338 [1] : vector<32x32xf32> to vector<32xf32>
    %344 = vector.shape_cast %343 : vector<32xf32> to vector<32x1xf32>
    %345 = vector.broadcast %344 : vector<32x1xf32> to vector<32x32xf32>
    %346 = arith.subf %342, %345 : vector<32x32xf32>
    %347 = math.exp %346 : vector<32x32xf32>
    %cst_339 = arith.constant dense<0.000000e+00> : vector<32xf32>
    %348 = vector.multi_reduction <add>, %347, %cst_339 [1] : vector<32x32xf32> to vector<32xf32>
    %349 = vector.shape_cast %348 : vector<32xf32> to vector<32x1xf32>
    %350 = tpu.reciprocal %349 {approx = true} : vector<32x1xf32> -> vector<32x1xf32>
    %351 = vector.broadcast %350 : vector<32x1xf32> to vector<32x32xf32>
    %352 = arith.mulf %347, %351 : vector<32x32xf32>
    %353 = arith.truncf %352 : vector<32x32xf32> to vector<32x32xbf16>
    %354 = arith.truncf %338 : vector<32x16xf32> to vector<32x16xbf16>
    %cst_340 = arith.constant dense<0.000000e+00> : vector<32x16xf32>
    %355 = tpu.matmul %353, %354, %cst_340 {dimension_numbers = #tpu.dot_dimension_numbers<[1], [0], [0], [1], [0, 0, 1, 1], [], []>} : vector<32x32xbf16>, vector<32x16xbf16>, vector<32x16xf32> -> vector<32x16xf32>
    %356 = arith.truncf %355 : vector<32x16xf32> to vector<32x16xbf16>
    %c0_341 = arith.constant 0 : index
    %c2_342 = arith.constant 2 : index
    %c0_343 = arith.constant 0 : index
    %c0_344 = arith.constant 0 : index
    %357 = vector.load %arg23[%c0_341, %c2_342, %c0_343, %c0_344] : memref<2x4x16x64xbf16, #tpu.memory_space<vmem>>, vector<1x1x16x64xbf16>
    %358 = vector.shape_cast %357 : vector<1x1x16x64xbf16> to vector<16x64xbf16>
    %cst_345 = arith.constant dense<0.000000e+00> : vector<32x64xf32>
    %359 = tpu.matmul %356, %358, %cst_345 {dimension_numbers = #tpu.dot_dimension_numbers<[1], [0], [0], [1], [0, 0, 1, 1], [], []>} : vector<32x16xbf16>, vector<16x64xbf16>, vector<32x64xf32> -> vector<32x64xf32>
    %360 = arith.addf %327, %359 : vector<32x64xf32>
    %c0_346 = arith.constant 0 : index
    %c3_347 = arith.constant 3 : index
    %c0_348 = arith.constant 0 : index
    %c0_349 = arith.constant 0 : index
    %361 = vector.load %arg20[%c0_346, %c3_347, %c0_348, %c0_349] : memref<2x4x64x16xbf16, #tpu.memory_space<vmem>>, vector<1x1x64x16xbf16>
    %362 = vector.shape_cast %361 : vector<1x1x64x16xbf16> to vector<64x16xbf16>
    %cst_350 = arith.constant dense<0.000000e+00> : vector<32x16xf32>
    %363 = tpu.matmul %262, %362, %cst_350 {dimension_numbers = #tpu.dot_dimension_numbers<[1], [0], [0], [1], [0, 0, 1, 1], [], []>} : vector<32x64xbf16>, vector<64x16xbf16>, vector<32x16xf32> -> vector<32x16xf32>
    %cst_351 = arith.constant 2.500000e-01 : f32
    %364 = vector.broadcast %cst_351 : f32 to vector<32x16xf32>
    %365 = arith.mulf %363, %364 : vector<32x16xf32>
    %c0_352 = arith.constant 0 : index
    %c3_353 = arith.constant 3 : index
    %c0_354 = arith.constant 0 : index
    %c0_355 = arith.constant 0 : index
    %366 = vector.load %arg21[%c0_352, %c3_353, %c0_354, %c0_355] : memref<2x4x64x16xbf16, #tpu.memory_space<vmem>>, vector<1x1x64x16xbf16>
    %367 = vector.shape_cast %366 : vector<1x1x64x16xbf16> to vector<64x16xbf16>
    %cst_356 = arith.constant dense<0.000000e+00> : vector<32x16xf32>
    %368 = tpu.matmul %262, %367, %cst_356 {dimension_numbers = #tpu.dot_dimension_numbers<[1], [0], [0], [1], [0, 0, 1, 1], [], []>} : vector<32x64xbf16>, vector<64x16xbf16>, vector<32x16xf32> -> vector<32x16xf32>
    %c0_357 = arith.constant 0 : index
    %c3_358 = arith.constant 3 : index
    %c0_359 = arith.constant 0 : index
    %c0_360 = arith.constant 0 : index
    %369 = vector.load %arg22[%c0_357, %c3_358, %c0_359, %c0_360] : memref<2x4x64x16xbf16, #tpu.memory_space<vmem>>, vector<1x1x64x16xbf16>
    %370 = vector.shape_cast %369 : vector<1x1x64x16xbf16> to vector<64x16xbf16>
    %cst_361 = arith.constant dense<0.000000e+00> : vector<32x16xf32>
    %371 = tpu.matmul %262, %370, %cst_361 {dimension_numbers = #tpu.dot_dimension_numbers<[1], [0], [0], [1], [0, 0, 1, 1], [], []>} : vector<32x64xbf16>, vector<64x16xbf16>, vector<32x16xf32> -> vector<32x16xf32>
    %372 = arith.truncf %365 : vector<32x16xf32> to vector<32x16xbf16>
    %373 = arith.truncf %368 : vector<32x16xf32> to vector<32x16xbf16>
    %cst_362 = arith.constant dense<0.000000e+00> : vector<32x32xf32>
    %374 = tpu.matmul %372, %373, %cst_362 {dimension_numbers = #tpu.dot_dimension_numbers<[1], [1], [0], [0], [0, 0, 1, 0], [], []>} : vector<32x16xbf16>, vector<32x16xbf16>, vector<32x32xf32> -> vector<32x32xf32>
    %375 = arith.addf %374, %237 : vector<32x32xf32>
    %cst_363 = arith.constant dense<0xFF800000> : vector<32xf32>
    %376 = vector.multi_reduction <maximumf>, %375, %cst_363 [1] : vector<32x32xf32> to vector<32xf32>
    %377 = vector.shape_cast %376 : vector<32xf32> to vector<32x1xf32>
    %378 = vector.broadcast %377 : vector<32x1xf32> to vector<32x32xf32>
    %379 = arith.subf %375, %378 : vector<32x32xf32>
    %380 = math.exp %379 : vector<32x32xf32>
    %cst_364 = arith.constant dense<0.000000e+00> : vector<32xf32>
    %381 = vector.multi_reduction <add>, %380, %cst_364 [1] : vector<32x32xf32> to vector<32xf32>
    %382 = vector.shape_cast %381 : vector<32xf32> to vector<32x1xf32>
    %383 = tpu.reciprocal %382 {approx = true} : vector<32x1xf32> -> vector<32x1xf32>
    %384 = vector.broadcast %383 : vector<32x1xf32> to vector<32x32xf32>
    %385 = arith.mulf %380, %384 : vector<32x32xf32>
    %386 = arith.truncf %385 : vector<32x32xf32> to vector<32x32xbf16>
    %387 = arith.truncf %371 : vector<32x16xf32> to vector<32x16xbf16>
    %cst_365 = arith.constant dense<0.000000e+00> : vector<32x16xf32>
    %388 = tpu.matmul %386, %387, %cst_365 {dimension_numbers = #tpu.dot_dimension_numbers<[1], [0], [0], [1], [0, 0, 1, 1], [], []>} : vector<32x32xbf16>, vector<32x16xbf16>, vector<32x16xf32> -> vector<32x16xf32>
    %389 = arith.truncf %388 : vector<32x16xf32> to vector<32x16xbf16>
    %c0_366 = arith.constant 0 : index
    %c3_367 = arith.constant 3 : index
    %c0_368 = arith.constant 0 : index
    %c0_369 = arith.constant 0 : index
    %390 = vector.load %arg23[%c0_366, %c3_367, %c0_368, %c0_369] : memref<2x4x16x64xbf16, #tpu.memory_space<vmem>>, vector<1x1x16x64xbf16>
    %391 = vector.shape_cast %390 : vector<1x1x16x64xbf16> to vector<16x64xbf16>
    %cst_370 = arith.constant dense<0.000000e+00> : vector<32x64xf32>
    %392 = tpu.matmul %389, %391, %cst_370 {dimension_numbers = #tpu.dot_dimension_numbers<[1], [0], [0], [1], [0, 0, 1, 1], [], []>} : vector<32x16xbf16>, vector<16x64xbf16>, vector<32x64xf32> -> vector<32x64xf32>
    %393 = arith.addf %360, %392 : vector<32x64xf32>
    %394 = arith.addf %393, %261 : vector<32x64xf32>
    %c0_371 = arith.constant 0 : index
    %c0_372 = arith.constant 0 : index
    %c0_373 = arith.constant 0 : index
    %395 = vector.load %arg24[%c0_371, %c0_372, %c0_373] : memref<2x1x64xf32, #tpu.memory_space<vmem>>, vector<1x1x64xf32>
    %396 = vector.shape_cast %395 : vector<1x1x64xf32> to vector<1x64xf32>
    %c0_374 = arith.constant 0 : index
    %c0_375 = arith.constant 0 : index
    %c0_376 = arith.constant 0 : index
    %397 = vector.load %arg25[%c0_374, %c0_375, %c0_376] : memref<2x1x64xf32, #tpu.memory_space<vmem>>, vector<1x1x64xf32>
    %398 = vector.shape_cast %397 : vector<1x1x64xf32> to vector<1x64xf32>
    %cst_377 = arith.constant dense<0.000000e+00> : vector<32xf32>
    %399 = vector.multi_reduction <add>, %394, %cst_377 [1] : vector<32x64xf32> to vector<32xf32>
    %400 = vector.shape_cast %399 : vector<32xf32> to vector<32x1xf32>
    %cst_378 = arith.constant 6.400000e+01 : f32
    %401 = vector.broadcast %cst_378 : f32 to vector<32x1xf32>
    %402 = arith.divf %400, %401 : vector<32x1xf32>
    %403 = vector.broadcast %402 : vector<32x1xf32> to vector<32x64xf32>
    %404 = arith.subf %394, %403 : vector<32x64xf32>
    %405 = arith.mulf %404, %404 : vector<32x64xf32>
    %cst_379 = arith.constant dense<0.000000e+00> : vector<32xf32>
    %406 = vector.multi_reduction <add>, %405, %cst_379 [1] : vector<32x64xf32> to vector<32xf32>
    %407 = vector.shape_cast %406 : vector<32xf32> to vector<32x1xf32>
    %cst_380 = arith.constant 6.400000e+01 : f32
    %408 = vector.broadcast %cst_380 : f32 to vector<32x1xf32>
    %409 = arith.divf %407, %408 : vector<32x1xf32>
    %410 = vector.broadcast %402 : vector<32x1xf32> to vector<32x64xf32>
    %411 = arith.subf %394, %410 : vector<32x64xf32>
    %cst_381 = arith.constant 9.99999997E-7 : f32
    %412 = vector.broadcast %cst_381 : f32 to vector<32x1xf32>
    %413 = arith.addf %409, %412 : vector<32x1xf32>
    %414 = math.rsqrt %413 : vector<32x1xf32>
    %415 = vector.broadcast %414 : vector<32x1xf32> to vector<32x64xf32>
    %416 = arith.mulf %411, %415 : vector<32x64xf32>
    %417 = vector.broadcast %396 : vector<1x64xf32> to vector<32x64xf32>
    %418 = arith.mulf %416, %417 : vector<32x64xf32>
    %419 = vector.broadcast %398 : vector<1x64xf32> to vector<32x64xf32>
    %420 = arith.addf %418, %419 : vector<32x64xf32>
    %421 = arith.truncf %420 : vector<32x64xf32> to vector<32x64xbf16>
    %c0_382 = arith.constant 0 : index
    %c0_383 = arith.constant 0 : index
    %c0_384 = arith.constant 0 : index
    %422 = vector.load %arg26[%c0_382, %c0_383, %c0_384] : memref<2x64x128xbf16, #tpu.memory_space<vmem>>, vector<1x64x128xbf16>
    %423 = vector.shape_cast %422 : vector<1x64x128xbf16> to vector<64x128xbf16>
    %cst_385 = arith.constant dense<0.000000e+00> : vector<32x128xf32>
    %424 = tpu.matmul %421, %423, %cst_385 {dimension_numbers = #tpu.dot_dimension_numbers<[1], [0], [0], [1], [0, 0, 1, 1], [], []>} : vector<32x64xbf16>, vector<64x128xbf16>, vector<32x128xf32> -> vector<32x128xf32>
    %c0_386 = arith.constant 0 : index
    %c0_387 = arith.constant 0 : index
    %c0_388 = arith.constant 0 : index
    %425 = vector.load %arg27[%c0_386, %c0_387, %c0_388] : memref<2x1x128xf32, #tpu.memory_space<vmem>>, vector<1x1x128xf32>
    %426 = vector.shape_cast %425 : vector<1x1x128xf32> to vector<1x128xf32>
    %427 = vector.broadcast %426 : vector<1x128xf32> to vector<32x128xf32>
    %428 = arith.addf %424, %427 : vector<32x128xf32>
    %cst_389 = arith.constant 0.000000e+00 : f32
    %429 = vector.broadcast %cst_389 : f32 to vector<32x128xf32>
    %430 = arith.maximumf %428, %429 : vector<32x128xf32>
    %431 = arith.truncf %430 : vector<32x128xf32> to vector<32x128xbf16>
    %c0_390 = arith.constant 0 : index
    %c0_391 = arith.constant 0 : index
    %c0_392 = arith.constant 0 : index
    %432 = vector.load %arg28[%c0_390, %c0_391, %c0_392] : memref<2x128x64xbf16, #tpu.memory_space<vmem>>, vector<1x128x64xbf16>
    %433 = vector.shape_cast %432 : vector<1x128x64xbf16> to vector<128x64xbf16>
    %cst_393 = arith.constant dense<0.000000e+00> : vector<32x64xf32>
    %434 = tpu.matmul %431, %433, %cst_393 {dimension_numbers = #tpu.dot_dimension_numbers<[1], [0], [0], [1], [0, 0, 1, 1], [], []>} : vector<32x128xbf16>, vector<128x64xbf16>, vector<32x64xf32> -> vector<32x64xf32>
    %c0_394 = arith.constant 0 : index
    %c0_395 = arith.constant 0 : index
    %c0_396 = arith.constant 0 : index
    %435 = vector.load %arg29[%c0_394, %c0_395, %c0_396] : memref<2x1x64xf32, #tpu.memory_space<vmem>>, vector<1x1x64xf32>
    %436 = vector.shape_cast %435 : vector<1x1x64xf32> to vector<1x64xf32>
    %437 = vector.broadcast %436 : vector<1x64xf32> to vector<32x64xf32>
    %438 = arith.addf %434, %437 : vector<32x64xf32>
    %439 = arith.addf %438, %420 : vector<32x64xf32>
    %c0_397 = arith.constant 0 : index
    %c0_398 = arith.constant 0 : index
    %c0_399 = arith.constant 0 : index
    %440 = vector.load %arg30[%c0_397, %c0_398, %c0_399] : memref<2x1x64xf32, #tpu.memory_space<vmem>>, vector<1x1x64xf32>
    %441 = vector.shape_cast %440 : vector<1x1x64xf32> to vector<1x64xf32>
    %c0_400 = arith.constant 0 : index
    %c0_401 = arith.constant 0 : index
    %c0_402 = arith.constant 0 : index
    %442 = vector.load %arg31[%c0_400, %c0_401, %c0_402] : memref<2x1x64xf32, #tpu.memory_space<vmem>>, vector<1x1x64xf32>
    %443 = vector.shape_cast %442 : vector<1x1x64xf32> to vector<1x64xf32>
    %cst_403 = arith.constant dense<0.000000e+00> : vector<32xf32>
    %444 = vector.multi_reduction <add>, %439, %cst_403 [1] : vector<32x64xf32> to vector<32xf32>
    %445 = vector.shape_cast %444 : vector<32xf32> to vector<32x1xf32>
    %cst_404 = arith.constant 6.400000e+01 : f32
    %446 = vector.broadcast %cst_404 : f32 to vector<32x1xf32>
    %447 = arith.divf %445, %446 : vector<32x1xf32>
    %448 = vector.broadcast %447 : vector<32x1xf32> to vector<32x64xf32>
    %449 = arith.subf %439, %448 : vector<32x64xf32>
    %450 = arith.mulf %449, %449 : vector<32x64xf32>
    %cst_405 = arith.constant dense<0.000000e+00> : vector<32xf32>
    %451 = vector.multi_reduction <add>, %450, %cst_405 [1] : vector<32x64xf32> to vector<32xf32>
    %452 = vector.shape_cast %451 : vector<32xf32> to vector<32x1xf32>
    %cst_406 = arith.constant 6.400000e+01 : f32
    %453 = vector.broadcast %cst_406 : f32 to vector<32x1xf32>
    %454 = arith.divf %452, %453 : vector<32x1xf32>
    %455 = vector.broadcast %447 : vector<32x1xf32> to vector<32x64xf32>
    %456 = arith.subf %439, %455 : vector<32x64xf32>
    %cst_407 = arith.constant 9.99999997E-7 : f32
    %457 = vector.broadcast %cst_407 : f32 to vector<32x1xf32>
    %458 = arith.addf %454, %457 : vector<32x1xf32>
    %459 = math.rsqrt %458 : vector<32x1xf32>
    %460 = vector.broadcast %459 : vector<32x1xf32> to vector<32x64xf32>
    %461 = arith.mulf %456, %460 : vector<32x64xf32>
    %462 = vector.broadcast %441 : vector<1x64xf32> to vector<32x64xf32>
    %463 = arith.mulf %461, %462 : vector<32x64xf32>
    %464 = vector.broadcast %443 : vector<1x64xf32> to vector<32x64xf32>
    %465 = arith.addf %463, %464 : vector<32x64xf32>
    %466 = arith.truncf %465 : vector<32x64xf32> to vector<32x64xbf16>
    %c1_408 = arith.constant 1 : index
    %c0_409 = arith.constant 0 : index
    %c0_410 = arith.constant 0 : index
    %c0_411 = arith.constant 0 : index
    %467 = vector.load %arg20[%c1_408, %c0_409, %c0_410, %c0_411] : memref<2x4x64x16xbf16, #tpu.memory_space<vmem>>, vector<1x1x64x16xbf16>
    %468 = vector.shape_cast %467 : vector<1x1x64x16xbf16> to vector<64x16xbf16>
    %cst_412 = arith.constant dense<0.000000e+00> : vector<32x16xf32>
    %469 = tpu.matmul %466, %468, %cst_412 {dimension_numbers = #tpu.dot_dimension_numbers<[1], [0], [0], [1], [0, 0, 1, 1], [], []>} : vector<32x64xbf16>, vector<64x16xbf16>, vector<32x16xf32> -> vector<32x16xf32>
    %cst_413 = arith.constant 2.500000e-01 : f32
    %470 = vector.broadcast %cst_413 : f32 to vector<32x16xf32>
    %471 = arith.mulf %469, %470 : vector<32x16xf32>
    %c1_414 = arith.constant 1 : index
    %c0_415 = arith.constant 0 : index
    %c0_416 = arith.constant 0 : index
    %c0_417 = arith.constant 0 : index
    %472 = vector.load %arg21[%c1_414, %c0_415, %c0_416, %c0_417] : memref<2x4x64x16xbf16, #tpu.memory_space<vmem>>, vector<1x1x64x16xbf16>
    %473 = vector.shape_cast %472 : vector<1x1x64x16xbf16> to vector<64x16xbf16>
    %cst_418 = arith.constant dense<0.000000e+00> : vector<32x16xf32>
    %474 = tpu.matmul %466, %473, %cst_418 {dimension_numbers = #tpu.dot_dimension_numbers<[1], [0], [0], [1], [0, 0, 1, 1], [], []>} : vector<32x64xbf16>, vector<64x16xbf16>, vector<32x16xf32> -> vector<32x16xf32>
    %c1_419 = arith.constant 1 : index
    %c0_420 = arith.constant 0 : index
    %c0_421 = arith.constant 0 : index
    %c0_422 = arith.constant 0 : index
    %475 = vector.load %arg22[%c1_419, %c0_420, %c0_421, %c0_422] : memref<2x4x64x16xbf16, #tpu.memory_space<vmem>>, vector<1x1x64x16xbf16>
    %476 = vector.shape_cast %475 : vector<1x1x64x16xbf16> to vector<64x16xbf16>
    %cst_423 = arith.constant dense<0.000000e+00> : vector<32x16xf32>
    %477 = tpu.matmul %466, %476, %cst_423 {dimension_numbers = #tpu.dot_dimension_numbers<[1], [0], [0], [1], [0, 0, 1, 1], [], []>} : vector<32x64xbf16>, vector<64x16xbf16>, vector<32x16xf32> -> vector<32x16xf32>
    %478 = arith.truncf %471 : vector<32x16xf32> to vector<32x16xbf16>
    %479 = arith.truncf %474 : vector<32x16xf32> to vector<32x16xbf16>
    %cst_424 = arith.constant dense<0.000000e+00> : vector<32x32xf32>
    %480 = tpu.matmul %478, %479, %cst_424 {dimension_numbers = #tpu.dot_dimension_numbers<[1], [1], [0], [0], [0, 0, 1, 0], [], []>} : vector<32x16xbf16>, vector<32x16xbf16>, vector<32x32xf32> -> vector<32x32xf32>
    %481 = arith.addf %480, %237 : vector<32x32xf32>
    %cst_425 = arith.constant dense<0xFF800000> : vector<32xf32>
    %482 = vector.multi_reduction <maximumf>, %481, %cst_425 [1] : vector<32x32xf32> to vector<32xf32>
    %483 = vector.shape_cast %482 : vector<32xf32> to vector<32x1xf32>
    %484 = vector.broadcast %483 : vector<32x1xf32> to vector<32x32xf32>
    %485 = arith.subf %481, %484 : vector<32x32xf32>
    %486 = math.exp %485 : vector<32x32xf32>
    %cst_426 = arith.constant dense<0.000000e+00> : vector<32xf32>
    %487 = vector.multi_reduction <add>, %486, %cst_426 [1] : vector<32x32xf32> to vector<32xf32>
    %488 = vector.shape_cast %487 : vector<32xf32> to vector<32x1xf32>
    %489 = tpu.reciprocal %488 {approx = true} : vector<32x1xf32> -> vector<32x1xf32>
    %490 = vector.broadcast %489 : vector<32x1xf32> to vector<32x32xf32>
    %491 = arith.mulf %486, %490 : vector<32x32xf32>
    %492 = arith.truncf %491 : vector<32x32xf32> to vector<32x32xbf16>
    %493 = arith.truncf %477 : vector<32x16xf32> to vector<32x16xbf16>
    %cst_427 = arith.constant dense<0.000000e+00> : vector<32x16xf32>
    %494 = tpu.matmul %492, %493, %cst_427 {dimension_numbers = #tpu.dot_dimension_numbers<[1], [0], [0], [1], [0, 0, 1, 1], [], []>} : vector<32x32xbf16>, vector<32x16xbf16>, vector<32x16xf32> -> vector<32x16xf32>
    %495 = arith.truncf %494 : vector<32x16xf32> to vector<32x16xbf16>
    %c1_428 = arith.constant 1 : index
    %c0_429 = arith.constant 0 : index
    %c0_430 = arith.constant 0 : index
    %c0_431 = arith.constant 0 : index
    %496 = vector.load %arg23[%c1_428, %c0_429, %c0_430, %c0_431] : memref<2x4x16x64xbf16, #tpu.memory_space<vmem>>, vector<1x1x16x64xbf16>
    %497 = vector.shape_cast %496 : vector<1x1x16x64xbf16> to vector<16x64xbf16>
    %cst_432 = arith.constant dense<0.000000e+00> : vector<32x64xf32>
    %498 = tpu.matmul %495, %497, %cst_432 {dimension_numbers = #tpu.dot_dimension_numbers<[1], [0], [0], [1], [0, 0, 1, 1], [], []>} : vector<32x16xbf16>, vector<16x64xbf16>, vector<32x64xf32> -> vector<32x64xf32>
    %c1_433 = arith.constant 1 : index
    %c1_434 = arith.constant 1 : index
    %c0_435 = arith.constant 0 : index
    %c0_436 = arith.constant 0 : index
    %499 = vector.load %arg20[%c1_433, %c1_434, %c0_435, %c0_436] : memref<2x4x64x16xbf16, #tpu.memory_space<vmem>>, vector<1x1x64x16xbf16>
    %500 = vector.shape_cast %499 : vector<1x1x64x16xbf16> to vector<64x16xbf16>
    %cst_437 = arith.constant dense<0.000000e+00> : vector<32x16xf32>
    %501 = tpu.matmul %466, %500, %cst_437 {dimension_numbers = #tpu.dot_dimension_numbers<[1], [0], [0], [1], [0, 0, 1, 1], [], []>} : vector<32x64xbf16>, vector<64x16xbf16>, vector<32x16xf32> -> vector<32x16xf32>
    %cst_438 = arith.constant 2.500000e-01 : f32
    %502 = vector.broadcast %cst_438 : f32 to vector<32x16xf32>
    %503 = arith.mulf %501, %502 : vector<32x16xf32>
    %c1_439 = arith.constant 1 : index
    %c1_440 = arith.constant 1 : index
    %c0_441 = arith.constant 0 : index
    %c0_442 = arith.constant 0 : index
    %504 = vector.load %arg21[%c1_439, %c1_440, %c0_441, %c0_442] : memref<2x4x64x16xbf16, #tpu.memory_space<vmem>>, vector<1x1x64x16xbf16>
    %505 = vector.shape_cast %504 : vector<1x1x64x16xbf16> to vector<64x16xbf16>
    %cst_443 = arith.constant dense<0.000000e+00> : vector<32x16xf32>
    %506 = tpu.matmul %466, %505, %cst_443 {dimension_numbers = #tpu.dot_dimension_numbers<[1], [0], [0], [1], [0, 0, 1, 1], [], []>} : vector<32x64xbf16>, vector<64x16xbf16>, vector<32x16xf32> -> vector<32x16xf32>
    %c1_444 = arith.constant 1 : index
    %c1_445 = arith.constant 1 : index
    %c0_446 = arith.constant 0 : index
    %c0_447 = arith.constant 0 : index
    %507 = vector.load %arg22[%c1_444, %c1_445, %c0_446, %c0_447] : memref<2x4x64x16xbf16, #tpu.memory_space<vmem>>, vector<1x1x64x16xbf16>
    %508 = vector.shape_cast %507 : vector<1x1x64x16xbf16> to vector<64x16xbf16>
    %cst_448 = arith.constant dense<0.000000e+00> : vector<32x16xf32>
    %509 = tpu.matmul %466, %508, %cst_448 {dimension_numbers = #tpu.dot_dimension_numbers<[1], [0], [0], [1], [0, 0, 1, 1], [], []>} : vector<32x64xbf16>, vector<64x16xbf16>, vector<32x16xf32> -> vector<32x16xf32>
    %510 = arith.truncf %503 : vector<32x16xf32> to vector<32x16xbf16>
    %511 = arith.truncf %506 : vector<32x16xf32> to vector<32x16xbf16>
    %cst_449 = arith.constant dense<0.000000e+00> : vector<32x32xf32>
    %512 = tpu.matmul %510, %511, %cst_449 {dimension_numbers = #tpu.dot_dimension_numbers<[1], [1], [0], [0], [0, 0, 1, 0], [], []>} : vector<32x16xbf16>, vector<32x16xbf16>, vector<32x32xf32> -> vector<32x32xf32>
    %513 = arith.addf %512, %237 : vector<32x32xf32>
    %cst_450 = arith.constant dense<0xFF800000> : vector<32xf32>
    %514 = vector.multi_reduction <maximumf>, %513, %cst_450 [1] : vector<32x32xf32> to vector<32xf32>
    %515 = vector.shape_cast %514 : vector<32xf32> to vector<32x1xf32>
    %516 = vector.broadcast %515 : vector<32x1xf32> to vector<32x32xf32>
    %517 = arith.subf %513, %516 : vector<32x32xf32>
    %518 = math.exp %517 : vector<32x32xf32>
    %cst_451 = arith.constant dense<0.000000e+00> : vector<32xf32>
    %519 = vector.multi_reduction <add>, %518, %cst_451 [1] : vector<32x32xf32> to vector<32xf32>
    %520 = vector.shape_cast %519 : vector<32xf32> to vector<32x1xf32>
    %521 = tpu.reciprocal %520 {approx = true} : vector<32x1xf32> -> vector<32x1xf32>
    %522 = vector.broadcast %521 : vector<32x1xf32> to vector<32x32xf32>
    %523 = arith.mulf %518, %522 : vector<32x32xf32>
    %524 = arith.truncf %523 : vector<32x32xf32> to vector<32x32xbf16>
    %525 = arith.truncf %509 : vector<32x16xf32> to vector<32x16xbf16>
    %cst_452 = arith.constant dense<0.000000e+00> : vector<32x16xf32>
    %526 = tpu.matmul %524, %525, %cst_452 {dimension_numbers = #tpu.dot_dimension_numbers<[1], [0], [0], [1], [0, 0, 1, 1], [], []>} : vector<32x32xbf16>, vector<32x16xbf16>, vector<32x16xf32> -> vector<32x16xf32>
    %527 = arith.truncf %526 : vector<32x16xf32> to vector<32x16xbf16>
    %c1_453 = arith.constant 1 : index
    %c1_454 = arith.constant 1 : index
    %c0_455 = arith.constant 0 : index
    %c0_456 = arith.constant 0 : index
    %528 = vector.load %arg23[%c1_453, %c1_454, %c0_455, %c0_456] : memref<2x4x16x64xbf16, #tpu.memory_space<vmem>>, vector<1x1x16x64xbf16>
    %529 = vector.shape_cast %528 : vector<1x1x16x64xbf16> to vector<16x64xbf16>
    %cst_457 = arith.constant dense<0.000000e+00> : vector<32x64xf32>
    %530 = tpu.matmul %527, %529, %cst_457 {dimension_numbers = #tpu.dot_dimension_numbers<[1], [0], [0], [1], [0, 0, 1, 1], [], []>} : vector<32x16xbf16>, vector<16x64xbf16>, vector<32x64xf32> -> vector<32x64xf32>
    %531 = arith.addf %498, %530 : vector<32x64xf32>
    %c1_458 = arith.constant 1 : index
    %c2_459 = arith.constant 2 : index
    %c0_460 = arith.constant 0 : index
    %c0_461 = arith.constant 0 : index
    %532 = vector.load %arg20[%c1_458, %c2_459, %c0_460, %c0_461] : memref<2x4x64x16xbf16, #tpu.memory_space<vmem>>, vector<1x1x64x16xbf16>
    %533 = vector.shape_cast %532 : vector<1x1x64x16xbf16> to vector<64x16xbf16>
    %cst_462 = arith.constant dense<0.000000e+00> : vector<32x16xf32>
    %534 = tpu.matmul %466, %533, %cst_462 {dimension_numbers = #tpu.dot_dimension_numbers<[1], [0], [0], [1], [0, 0, 1, 1], [], []>} : vector<32x64xbf16>, vector<64x16xbf16>, vector<32x16xf32> -> vector<32x16xf32>
    %cst_463 = arith.constant 2.500000e-01 : f32
    %535 = vector.broadcast %cst_463 : f32 to vector<32x16xf32>
    %536 = arith.mulf %534, %535 : vector<32x16xf32>
    %c1_464 = arith.constant 1 : index
    %c2_465 = arith.constant 2 : index
    %c0_466 = arith.constant 0 : index
    %c0_467 = arith.constant 0 : index
    %537 = vector.load %arg21[%c1_464, %c2_465, %c0_466, %c0_467] : memref<2x4x64x16xbf16, #tpu.memory_space<vmem>>, vector<1x1x64x16xbf16>
    %538 = vector.shape_cast %537 : vector<1x1x64x16xbf16> to vector<64x16xbf16>
    %cst_468 = arith.constant dense<0.000000e+00> : vector<32x16xf32>
    %539 = tpu.matmul %466, %538, %cst_468 {dimension_numbers = #tpu.dot_dimension_numbers<[1], [0], [0], [1], [0, 0, 1, 1], [], []>} : vector<32x64xbf16>, vector<64x16xbf16>, vector<32x16xf32> -> vector<32x16xf32>
    %c1_469 = arith.constant 1 : index
    %c2_470 = arith.constant 2 : index
    %c0_471 = arith.constant 0 : index
    %c0_472 = arith.constant 0 : index
    %540 = vector.load %arg22[%c1_469, %c2_470, %c0_471, %c0_472] : memref<2x4x64x16xbf16, #tpu.memory_space<vmem>>, vector<1x1x64x16xbf16>
    %541 = vector.shape_cast %540 : vector<1x1x64x16xbf16> to vector<64x16xbf16>
    %cst_473 = arith.constant dense<0.000000e+00> : vector<32x16xf32>
    %542 = tpu.matmul %466, %541, %cst_473 {dimension_numbers = #tpu.dot_dimension_numbers<[1], [0], [0], [1], [0, 0, 1, 1], [], []>} : vector<32x64xbf16>, vector<64x16xbf16>, vector<32x16xf32> -> vector<32x16xf32>
    %543 = arith.truncf %536 : vector<32x16xf32> to vector<32x16xbf16>
    %544 = arith.truncf %539 : vector<32x16xf32> to vector<32x16xbf16>
    %cst_474 = arith.constant dense<0.000000e+00> : vector<32x32xf32>
    %545 = tpu.matmul %543, %544, %cst_474 {dimension_numbers = #tpu.dot_dimension_numbers<[1], [1], [0], [0], [0, 0, 1, 0], [], []>} : vector<32x16xbf16>, vector<32x16xbf16>, vector<32x32xf32> -> vector<32x32xf32>
    %546 = arith.addf %545, %237 : vector<32x32xf32>
    %cst_475 = arith.constant dense<0xFF800000> : vector<32xf32>
    %547 = vector.multi_reduction <maximumf>, %546, %cst_475 [1] : vector<32x32xf32> to vector<32xf32>
    %548 = vector.shape_cast %547 : vector<32xf32> to vector<32x1xf32>
    %549 = vector.broadcast %548 : vector<32x1xf32> to vector<32x32xf32>
    %550 = arith.subf %546, %549 : vector<32x32xf32>
    %551 = math.exp %550 : vector<32x32xf32>
    %cst_476 = arith.constant dense<0.000000e+00> : vector<32xf32>
    %552 = vector.multi_reduction <add>, %551, %cst_476 [1] : vector<32x32xf32> to vector<32xf32>
    %553 = vector.shape_cast %552 : vector<32xf32> to vector<32x1xf32>
    %554 = tpu.reciprocal %553 {approx = true} : vector<32x1xf32> -> vector<32x1xf32>
    %555 = vector.broadcast %554 : vector<32x1xf32> to vector<32x32xf32>
    %556 = arith.mulf %551, %555 : vector<32x32xf32>
    %557 = arith.truncf %556 : vector<32x32xf32> to vector<32x32xbf16>
    %558 = arith.truncf %542 : vector<32x16xf32> to vector<32x16xbf16>
    %cst_477 = arith.constant dense<0.000000e+00> : vector<32x16xf32>
    %559 = tpu.matmul %557, %558, %cst_477 {dimension_numbers = #tpu.dot_dimension_numbers<[1], [0], [0], [1], [0, 0, 1, 1], [], []>} : vector<32x32xbf16>, vector<32x16xbf16>, vector<32x16xf32> -> vector<32x16xf32>
    %560 = arith.truncf %559 : vector<32x16xf32> to vector<32x16xbf16>
    %c1_478 = arith.constant 1 : index
    %c2_479 = arith.constant 2 : index
    %c0_480 = arith.constant 0 : index
    %c0_481 = arith.constant 0 : index
    %561 = vector.load %arg23[%c1_478, %c2_479, %c0_480, %c0_481] : memref<2x4x16x64xbf16, #tpu.memory_space<vmem>>, vector<1x1x16x64xbf16>
    %562 = vector.shape_cast %561 : vector<1x1x16x64xbf16> to vector<16x64xbf16>
    %cst_482 = arith.constant dense<0.000000e+00> : vector<32x64xf32>
    %563 = tpu.matmul %560, %562, %cst_482 {dimension_numbers = #tpu.dot_dimension_numbers<[1], [0], [0], [1], [0, 0, 1, 1], [], []>} : vector<32x16xbf16>, vector<16x64xbf16>, vector<32x64xf32> -> vector<32x64xf32>
    %564 = arith.addf %531, %563 : vector<32x64xf32>
    %c1_483 = arith.constant 1 : index
    %c3_484 = arith.constant 3 : index
    %c0_485 = arith.constant 0 : index
    %c0_486 = arith.constant 0 : index
    %565 = vector.load %arg20[%c1_483, %c3_484, %c0_485, %c0_486] : memref<2x4x64x16xbf16, #tpu.memory_space<vmem>>, vector<1x1x64x16xbf16>
    %566 = vector.shape_cast %565 : vector<1x1x64x16xbf16> to vector<64x16xbf16>
    %cst_487 = arith.constant dense<0.000000e+00> : vector<32x16xf32>
    %567 = tpu.matmul %466, %566, %cst_487 {dimension_numbers = #tpu.dot_dimension_numbers<[1], [0], [0], [1], [0, 0, 1, 1], [], []>} : vector<32x64xbf16>, vector<64x16xbf16>, vector<32x16xf32> -> vector<32x16xf32>
    %cst_488 = arith.constant 2.500000e-01 : f32
    %568 = vector.broadcast %cst_488 : f32 to vector<32x16xf32>
    %569 = arith.mulf %567, %568 : vector<32x16xf32>
    %c1_489 = arith.constant 1 : index
    %c3_490 = arith.constant 3 : index
    %c0_491 = arith.constant 0 : index
    %c0_492 = arith.constant 0 : index
    %570 = vector.load %arg21[%c1_489, %c3_490, %c0_491, %c0_492] : memref<2x4x64x16xbf16, #tpu.memory_space<vmem>>, vector<1x1x64x16xbf16>
    %571 = vector.shape_cast %570 : vector<1x1x64x16xbf16> to vector<64x16xbf16>
    %cst_493 = arith.constant dense<0.000000e+00> : vector<32x16xf32>
    %572 = tpu.matmul %466, %571, %cst_493 {dimension_numbers = #tpu.dot_dimension_numbers<[1], [0], [0], [1], [0, 0, 1, 1], [], []>} : vector<32x64xbf16>, vector<64x16xbf16>, vector<32x16xf32> -> vector<32x16xf32>
    %c1_494 = arith.constant 1 : index
    %c3_495 = arith.constant 3 : index
    %c0_496 = arith.constant 0 : index
    %c0_497 = arith.constant 0 : index
    %573 = vector.load %arg22[%c1_494, %c3_495, %c0_496, %c0_497] : memref<2x4x64x16xbf16, #tpu.memory_space<vmem>>, vector<1x1x64x16xbf16>
    %574 = vector.shape_cast %573 : vector<1x1x64x16xbf16> to vector<64x16xbf16>
    %cst_498 = arith.constant dense<0.000000e+00> : vector<32x16xf32>
    %575 = tpu.matmul %466, %574, %cst_498 {dimension_numbers = #tpu.dot_dimension_numbers<[1], [0], [0], [1], [0, 0, 1, 1], [], []>} : vector<32x64xbf16>, vector<64x16xbf16>, vector<32x16xf32> -> vector<32x16xf32>
    %576 = arith.truncf %569 : vector<32x16xf32> to vector<32x16xbf16>
    %577 = arith.truncf %572 : vector<32x16xf32> to vector<32x16xbf16>
    %cst_499 = arith.constant dense<0.000000e+00> : vector<32x32xf32>
    %578 = tpu.matmul %576, %577, %cst_499 {dimension_numbers = #tpu.dot_dimension_numbers<[1], [1], [0], [0], [0, 0, 1, 0], [], []>} : vector<32x16xbf16>, vector<32x16xbf16>, vector<32x32xf32> -> vector<32x32xf32>
    %579 = arith.addf %578, %237 : vector<32x32xf32>
    %cst_500 = arith.constant dense<0xFF800000> : vector<32xf32>
    %580 = vector.multi_reduction <maximumf>, %579, %cst_500 [1] : vector<32x32xf32> to vector<32xf32>
    %581 = vector.shape_cast %580 : vector<32xf32> to vector<32x1xf32>
    %582 = vector.broadcast %581 : vector<32x1xf32> to vector<32x32xf32>
    %583 = arith.subf %579, %582 : vector<32x32xf32>
    %584 = math.exp %583 : vector<32x32xf32>
    %cst_501 = arith.constant dense<0.000000e+00> : vector<32xf32>
    %585 = vector.multi_reduction <add>, %584, %cst_501 [1] : vector<32x32xf32> to vector<32xf32>
    %586 = vector.shape_cast %585 : vector<32xf32> to vector<32x1xf32>
    %587 = tpu.reciprocal %586 {approx = true} : vector<32x1xf32> -> vector<32x1xf32>
    %588 = vector.broadcast %587 : vector<32x1xf32> to vector<32x32xf32>
    %589 = arith.mulf %584, %588 : vector<32x32xf32>
    %590 = arith.truncf %589 : vector<32x32xf32> to vector<32x32xbf16>
    %591 = arith.truncf %575 : vector<32x16xf32> to vector<32x16xbf16>
    %cst_502 = arith.constant dense<0.000000e+00> : vector<32x16xf32>
    %592 = tpu.matmul %590, %591, %cst_502 {dimension_numbers = #tpu.dot_dimension_numbers<[1], [0], [0], [1], [0, 0, 1, 1], [], []>} : vector<32x32xbf16>, vector<32x16xbf16>, vector<32x16xf32> -> vector<32x16xf32>
    %593 = arith.truncf %592 : vector<32x16xf32> to vector<32x16xbf16>
    %c1_503 = arith.constant 1 : index
    %c3_504 = arith.constant 3 : index
    %c0_505 = arith.constant 0 : index
    %c0_506 = arith.constant 0 : index
    %594 = vector.load %arg23[%c1_503, %c3_504, %c0_505, %c0_506] : memref<2x4x16x64xbf16, #tpu.memory_space<vmem>>, vector<1x1x16x64xbf16>
    %595 = vector.shape_cast %594 : vector<1x1x16x64xbf16> to vector<16x64xbf16>
    %cst_507 = arith.constant dense<0.000000e+00> : vector<32x64xf32>
    %596 = tpu.matmul %593, %595, %cst_507 {dimension_numbers = #tpu.dot_dimension_numbers<[1], [0], [0], [1], [0, 0, 1, 1], [], []>} : vector<32x16xbf16>, vector<16x64xbf16>, vector<32x64xf32> -> vector<32x64xf32>
    %597 = arith.addf %564, %596 : vector<32x64xf32>
    %598 = arith.addf %597, %465 : vector<32x64xf32>
    %c1_508 = arith.constant 1 : index
    %c0_509 = arith.constant 0 : index
    %c0_510 = arith.constant 0 : index
    %599 = vector.load %arg24[%c1_508, %c0_509, %c0_510] : memref<2x1x64xf32, #tpu.memory_space<vmem>>, vector<1x1x64xf32>
    %600 = vector.shape_cast %599 : vector<1x1x64xf32> to vector<1x64xf32>
    %c1_511 = arith.constant 1 : index
    %c0_512 = arith.constant 0 : index
    %c0_513 = arith.constant 0 : index
    %601 = vector.load %arg25[%c1_511, %c0_512, %c0_513] : memref<2x1x64xf32, #tpu.memory_space<vmem>>, vector<1x1x64xf32>
    %602 = vector.shape_cast %601 : vector<1x1x64xf32> to vector<1x64xf32>
    %cst_514 = arith.constant dense<0.000000e+00> : vector<32xf32>
    %603 = vector.multi_reduction <add>, %598, %cst_514 [1] : vector<32x64xf32> to vector<32xf32>
    %604 = vector.shape_cast %603 : vector<32xf32> to vector<32x1xf32>
    %cst_515 = arith.constant 6.400000e+01 : f32
    %605 = vector.broadcast %cst_515 : f32 to vector<32x1xf32>
    %606 = arith.divf %604, %605 : vector<32x1xf32>
    %607 = vector.broadcast %606 : vector<32x1xf32> to vector<32x64xf32>
    %608 = arith.subf %598, %607 : vector<32x64xf32>
    %609 = arith.mulf %608, %608 : vector<32x64xf32>
    %cst_516 = arith.constant dense<0.000000e+00> : vector<32xf32>
    %610 = vector.multi_reduction <add>, %609, %cst_516 [1] : vector<32x64xf32> to vector<32xf32>
    %611 = vector.shape_cast %610 : vector<32xf32> to vector<32x1xf32>
    %cst_517 = arith.constant 6.400000e+01 : f32
    %612 = vector.broadcast %cst_517 : f32 to vector<32x1xf32>
    %613 = arith.divf %611, %612 : vector<32x1xf32>
    %614 = vector.broadcast %606 : vector<32x1xf32> to vector<32x64xf32>
    %615 = arith.subf %598, %614 : vector<32x64xf32>
    %cst_518 = arith.constant 9.99999997E-7 : f32
    %616 = vector.broadcast %cst_518 : f32 to vector<32x1xf32>
    %617 = arith.addf %613, %616 : vector<32x1xf32>
    %618 = math.rsqrt %617 : vector<32x1xf32>
    %619 = vector.broadcast %618 : vector<32x1xf32> to vector<32x64xf32>
    %620 = arith.mulf %615, %619 : vector<32x64xf32>
    %621 = vector.broadcast %600 : vector<1x64xf32> to vector<32x64xf32>
    %622 = arith.mulf %620, %621 : vector<32x64xf32>
    %623 = vector.broadcast %602 : vector<1x64xf32> to vector<32x64xf32>
    %624 = arith.addf %622, %623 : vector<32x64xf32>
    %625 = arith.truncf %624 : vector<32x64xf32> to vector<32x64xbf16>
    %c1_519 = arith.constant 1 : index
    %c0_520 = arith.constant 0 : index
    %c0_521 = arith.constant 0 : index
    %626 = vector.load %arg26[%c1_519, %c0_520, %c0_521] : memref<2x64x128xbf16, #tpu.memory_space<vmem>>, vector<1x64x128xbf16>
    %627 = vector.shape_cast %626 : vector<1x64x128xbf16> to vector<64x128xbf16>
    %cst_522 = arith.constant dense<0.000000e+00> : vector<32x128xf32>
    %628 = tpu.matmul %625, %627, %cst_522 {dimension_numbers = #tpu.dot_dimension_numbers<[1], [0], [0], [1], [0, 0, 1, 1], [], []>} : vector<32x64xbf16>, vector<64x128xbf16>, vector<32x128xf32> -> vector<32x128xf32>
    %c1_523 = arith.constant 1 : index
    %c0_524 = arith.constant 0 : index
    %c0_525 = arith.constant 0 : index
    %629 = vector.load %arg27[%c1_523, %c0_524, %c0_525] : memref<2x1x128xf32, #tpu.memory_space<vmem>>, vector<1x1x128xf32>
    %630 = vector.shape_cast %629 : vector<1x1x128xf32> to vector<1x128xf32>
    %631 = vector.broadcast %630 : vector<1x128xf32> to vector<32x128xf32>
    %632 = arith.addf %628, %631 : vector<32x128xf32>
    %cst_526 = arith.constant 0.000000e+00 : f32
    %633 = vector.broadcast %cst_526 : f32 to vector<32x128xf32>
    %634 = arith.maximumf %632, %633 : vector<32x128xf32>
    %635 = arith.truncf %634 : vector<32x128xf32> to vector<32x128xbf16>
    %c1_527 = arith.constant 1 : index
    %c0_528 = arith.constant 0 : index
    %c0_529 = arith.constant 0 : index
    %636 = vector.load %arg28[%c1_527, %c0_528, %c0_529] : memref<2x128x64xbf16, #tpu.memory_space<vmem>>, vector<1x128x64xbf16>
    %637 = vector.shape_cast %636 : vector<1x128x64xbf16> to vector<128x64xbf16>
    %cst_530 = arith.constant dense<0.000000e+00> : vector<32x64xf32>
    %638 = tpu.matmul %635, %637, %cst_530 {dimension_numbers = #tpu.dot_dimension_numbers<[1], [0], [0], [1], [0, 0, 1, 1], [], []>} : vector<32x128xbf16>, vector<128x64xbf16>, vector<32x64xf32> -> vector<32x64xf32>
    %c1_531 = arith.constant 1 : index
    %c0_532 = arith.constant 0 : index
    %c0_533 = arith.constant 0 : index
    %639 = vector.load %arg29[%c1_531, %c0_532, %c0_533] : memref<2x1x64xf32, #tpu.memory_space<vmem>>, vector<1x1x64xf32>
    %640 = vector.shape_cast %639 : vector<1x1x64xf32> to vector<1x64xf32>
    %641 = vector.broadcast %640 : vector<1x64xf32> to vector<32x64xf32>
    %642 = arith.addf %638, %641 : vector<32x64xf32>
    %643 = arith.addf %642, %624 : vector<32x64xf32>
    %c1_534 = arith.constant 1 : index
    %c0_535 = arith.constant 0 : index
    %c0_536 = arith.constant 0 : index
    %644 = vector.load %arg30[%c1_534, %c0_535, %c0_536] : memref<2x1x64xf32, #tpu.memory_space<vmem>>, vector<1x1x64xf32>
    %645 = vector.shape_cast %644 : vector<1x1x64xf32> to vector<1x64xf32>
    %c1_537 = arith.constant 1 : index
    %c0_538 = arith.constant 0 : index
    %c0_539 = arith.constant 0 : index
    %646 = vector.load %arg31[%c1_537, %c0_538, %c0_539] : memref<2x1x64xf32, #tpu.memory_space<vmem>>, vector<1x1x64xf32>
    %647 = vector.shape_cast %646 : vector<1x1x64xf32> to vector<1x64xf32>
    %cst_540 = arith.constant dense<0.000000e+00> : vector<32xf32>
    %648 = vector.multi_reduction <add>, %643, %cst_540 [1] : vector<32x64xf32> to vector<32xf32>
    %649 = vector.shape_cast %648 : vector<32xf32> to vector<32x1xf32>
    %cst_541 = arith.constant 6.400000e+01 : f32
    %650 = vector.broadcast %cst_541 : f32 to vector<32x1xf32>
    %651 = arith.divf %649, %650 : vector<32x1xf32>
    %652 = vector.broadcast %651 : vector<32x1xf32> to vector<32x64xf32>
    %653 = arith.subf %643, %652 : vector<32x64xf32>
    %654 = arith.mulf %653, %653 : vector<32x64xf32>
    %cst_542 = arith.constant dense<0.000000e+00> : vector<32xf32>
    %655 = vector.multi_reduction <add>, %654, %cst_542 [1] : vector<32x64xf32> to vector<32xf32>
    %656 = vector.shape_cast %655 : vector<32xf32> to vector<32x1xf32>
    %cst_543 = arith.constant 6.400000e+01 : f32
    %657 = vector.broadcast %cst_543 : f32 to vector<32x1xf32>
    %658 = arith.divf %656, %657 : vector<32x1xf32>
    %659 = vector.broadcast %651 : vector<32x1xf32> to vector<32x64xf32>
    %660 = arith.subf %643, %659 : vector<32x64xf32>
    %cst_544 = arith.constant 9.99999997E-7 : f32
    %661 = vector.broadcast %cst_544 : f32 to vector<32x1xf32>
    %662 = arith.addf %658, %661 : vector<32x1xf32>
    %663 = math.rsqrt %662 : vector<32x1xf32>
    %664 = vector.broadcast %663 : vector<32x1xf32> to vector<32x64xf32>
    %665 = arith.mulf %660, %664 : vector<32x64xf32>
    %666 = vector.broadcast %645 : vector<1x64xf32> to vector<32x64xf32>
    %667 = arith.mulf %665, %666 : vector<32x64xf32>
    %668 = vector.broadcast %647 : vector<1x64xf32> to vector<32x64xf32>
    %669 = arith.addf %667, %668 : vector<32x64xf32>
    %670 = arith.truncf %669 : vector<32x64xf32> to vector<32x64xbf16>
    %c0_545 = arith.constant 0 : index
    %c0_546 = arith.constant 0 : index
    %671 = vector.load %arg32[%c0_545, %c0_546] : memref<64x16xbf16, #tpu.memory_space<vmem>>, vector<64x16xbf16>
    %cst_547 = arith.constant dense<0.000000e+00> : vector<32x16xf32>
    %672 = tpu.matmul %670, %671, %cst_547 {dimension_numbers = #tpu.dot_dimension_numbers<[1], [0], [0], [1], [0, 0, 1, 1], [], []>} : vector<32x64xbf16>, vector<64x16xbf16>, vector<32x16xf32> -> vector<32x16xf32>
    %c0_548 = arith.constant 0 : index
    %c0_549 = arith.constant 0 : index
    %673 = vector.load %arg33[%c0_548, %c0_549] : memref<1x16xf32, #tpu.memory_space<vmem>>, vector<1x16xf32>
    %674 = vector.broadcast %673 : vector<1x16xf32> to vector<32x16xf32>
    %675 = arith.addf %672, %674 : vector<32x16xf32>
    %676 = math.absf %675 : vector<32x16xf32>
    %c0_550 = arith.constant 0 : index
    %c0_551 = arith.constant 0 : index
    %677 = vector.load %arg34[%c0_550, %c0_551] : memref<32x16xf32, #tpu.memory_space<vmem>>, vector<32x16xf32>
    tpu.vector_store %arg34[%c0_550, %c0_551], %676 {strides = array<i32>} : memref<32x16xf32, #tpu.memory_space<vmem>>, vector<32x16xf32>,
    return
  }
}

</mosaic_0001>

<llo_original>
// kernel: clean_specnet_forward.1
$region0: #{clean_specnet_forward.1}
  #allocation0 [shape = 'u32[]', space=smem, size = 0x4, offset = 0x4, fixed_abs, tag = 'smem constant byte address 0x4 - core index']
  #allocation1 [shape = 'u32[144,128]{1,0:T(1,128)}', space=vmem, size = 0x12000, scoped, tag = 'internal scratch']
  %s0 = inlined_call_operand.smem [shape: u32[35], index: -1, kind: input, shape index: {}]
  %s1 = sld [smem:[%s0]]
  %s2 = scalar_lea.smem %s0, 1
  %s3 = sld [smem:[%s2]]
  %s4 = scalar_lea.smem %s0, 2
  %s5 = sld [smem:[%s4]]
  %s6 = scalar_lea.smem %s0, 3
  %s7 = sld [smem:[%s6]]
  %s8 = scalar_lea.smem %s0, 4
  %s9 = sld [smem:[%s8]]
  %s10 = scalar_lea.smem %s0, 5
  %s11 = sld [smem:[%s10]]
  %s12 = scalar_lea.smem %s0, 6
  %s13 = sld [smem:[%s12]]
  %s14 = scalar_lea.smem %s0, 7
  %s15 = sld [smem:[%s14]]
  %s16 = scalar_lea.smem %s0, 8
  %s17 = sld [smem:[%s16]]
  %s18 = scalar_lea.smem %s0, 9
  %s19 = sld [smem:[%s18]]
  %s20 = scalar_lea.smem %s0, 10
  %s21 = sld [smem:[%s20]]
  %s22 = scalar_lea.smem %s0, 11
  %s23 = sld [smem:[%s22]]
  %s24 = scalar_lea.smem %s0, 12
  %s25 = sld [smem:[%s24]]
  %s26 = scalar_lea.smem %s0, 13
  %s27 = sld [smem:[%s26]]
  %s28 = scalar_lea.smem %s0, 14
  %s29 = sld [smem:[%s28]]
  %s30 = scalar_lea.smem %s0, 15
  %s31 = sld [smem:[%s30]]
  %s32 = scalar_lea.smem %s0, 16
  %s33 = sld [smem:[%s32]]
  %s34 = scalar_lea.smem %s0, 17
  %s35 = sld [smem:[%s34]]
  %s36 = scalar_lea.smem %s0, 18
  %s37 = sld [smem:[%s36]]
  %s38 = scalar_lea.smem %s0, 19
  %s39 = sld [smem:[%s38]]
  %s40 = scalar_lea.smem %s0, 20
  %s41 = sld [smem:[%s40]]
  %s42 = scalar_lea.smem %s0, 21
  %s43 = sld [smem:[%s42]]
  %s44 = scalar_lea.smem %s0, 22
  %s45 = sld [smem:[%s44]]
  %s46 = scalar_lea.smem %s0, 23
  %s47 = sld [smem:[%s46]]
  %s48 = scalar_lea.smem %s0, 24
  %s49 = sld [smem:[%s48]]
  %s50 = scalar_lea.smem %s0, 25
  %s51 = sld [smem:[%s50]]
  %s52 = scalar_lea.smem %s0, 26
  %s53 = sld [smem:[%s52]]
  %s54 = scalar_lea.smem %s0, 27
  %s55 = sld [smem:[%s54]]
  %s56 = scalar_lea.smem %s0, 28
  %s57 = sld [smem:[%s56]]
  %s58 = scalar_lea.smem %s0, 29
  %s59 = sld [smem:[%s58]]
  %s60 = scalar_lea.smem %s0, 30
  %s61 = sld [smem:[%s60]]
  %s62 = scalar_lea.smem %s0, 31
  %s63 = sld [smem:[%s62]]
  %s64 = scalar_lea.smem %s0, 32
  %s65 = sld [smem:[%s64]]
  %s66 = scalar_lea.smem %s0, 33
  %s67 = sld [smem:[%s66]]
  %s68 = scalar_lea.smem %s0, 34
  %s69 = sld [smem:[%s68]]
  %s70 = sld [smem:[#allocation0]]
  $region202: #{clean_specnet_forward.1} parent=0
    _
  %s72 = ssub.s32 1, %s70
  %s73 = scalar_select 0, %s72, %s70
  $region1: #{clean_specnet_forward.1} parent=0
    #allocation2 [shape = 'u8[4096]{0}', space=vmem, size = 0x1000, scoped, tag = 'input window, operand 8, single buffered']
    #allocation3 [shape = 's32[1]{0}', space=sflag, size = 0x4, scoped, tag = 'scoped memory for clean_specnet_forward.1']
    #allocation4 [shape = 'u8[1024]{0}', space=vmem, size = 0x400, scoped, tag = 'input window, operand 11, single buffered']
    #allocation5 [shape = 's32[1]{0}', space=sflag, size = 0x4, scoped, tag = 'scoped memory for clean_specnet_forward.1']
    #allocation6 [shape = 'u8[1024]{0}', space=vmem, size = 0x400, scoped, tag = 'input window, operand 13, single buffered']
    #allocation7 [shape = 'u8[1024]{0}', space=vmem, size = 0x400, scoped, tag = 'input window, operand 15, single buffered']
    #allocation8 [shape = 's32[1]{0}', space=sflag, size = 0x4, scoped, tag = 'scoped memory for clean_specnet_forward.1']
    #allocation9 [shape = 'u8[512]{0}', space=vmem, size = 0x400, scoped, tag = 'input window, operand 17, single buffered']
    #allocation10 [shape = 'u8[512]{0}', space=vmem, size = 0x400, scoped, tag = 'input window, operand 18, single buffered']
    #allocation11 [shape = 's32[1]{0}', space=sflag, size = 0x4, scoped, tag = 'scoped memory for clean_specnet_forward.1']
    #allocation12 [shape = 'u8[512]{0}', space=vmem, size = 0x400, scoped, tag = 'input window, operand 19, single buffered']
    #allocation13 [shape = 'u8[1024]{0}', space=vmem, size = 0x400, scoped, tag = 'input window, operand 24, single buffered']
    #allocation14 [shape = 's32[1]{0}', space=sflag, size = 0x4, scoped, tag = 'scoped memory for clean_specnet_forward.1']
    #allocation15 [shape = 'u8[1024]{0}', space=vmem, size = 0x400, scoped, tag = 'input window, operand 25, single buffered']
    #allocation16 [shape = 'u8[1024]{0}', space=vmem, size = 0x400, scoped, tag = 'input window, operand 27, single buffered']
    #allocation17 [shape = 's32[1]{0}', space=sflag, size = 0x4, scoped, tag = 'scoped memory for clean_specnet_forward.1']
    #allocation18 [shape = 'u8[1024]{0}', space=vmem, size = 0x400, scoped, tag = 'input window, operand 29, single buffered']
    #allocation19 [shape = 'u8[1024]{0}', space=vmem, size = 0x400, scoped, tag = 'input window, operand 30, single buffered']
    #allocation20 [shape = 's32[1]{0}', space=sflag, size = 0x4, scoped, tag = 'scoped memory for clean_specnet_forward.1']
    #allocation21 [shape = 'u8[1024]{0}', space=vmem, size = 0x400, scoped, tag = 'input window, operand 31, single buffered']
    #allocation22 [shape = 'u8[512]{0}', space=vmem, size = 0x400, scoped, tag = 'input window, operand 33, single buffered']
    #allocation23 [shape = 's32[1]{0}', space=sflag, size = 0x4, scoped, tag = 'scoped memory for clean_specnet_forward.1']
    %74 = vsyncpa [#allocation3], 0
    %75 = vsyncpa [#allocation5], 0
    %76 = vsyncpa [#allocation8], 0
    %77 = vsyncpa [#allocation11], 0
    %78 = vsyncpa [#allocation14], 0
    %79 = vsyncpa [#allocation17], 0
    %80 = vsyncpa [#allocation20], 0
    %81 = vsyncpa [#allocation23], 0
    // Predicated region
    $region2: #{clean_specnet_forward.1} parent=1 // pred_check
      _
    $region3: #{clean_specnet_forward.1} parent=1 // pred_check_branch
      %83 = sbr.rel (0) target = $region5
    $region4: #{clean_specnet_forward.1} parent=1 // pred_region
      _
    $region5: #{clean_specnet_forward.1} parent=1 // pred_fallthru
      _
    // Predicated region
    $region6: #{clean_specnet_forward.1} parent=1 // pred_check
      _
    $region7: #{clean_specnet_forward.1} parent=1 // pred_check_branch
      %85 = sbr.rel (0) target = $region9
    $region8: #{clean_specnet_forward.1} parent=1 // pred_region
      _
    $region9: #{clean_specnet_forward.1} parent=1 // pred_fallthru
      _
    // Predicated region
    $region10: #{clean_specnet_forward.1} parent=1 // pred_check
      _
    $region11: #{clean_specnet_forward.1} parent=1 // pred_check_branch
      %87 = sbr.rel (0) target = $region13
    $region12: #{clean_specnet_forward.1} parent=1 // pred_region
      _
    $region13: #{clean_specnet_forward.1} parent=1 // pred_fallthru
      _
    // Predicated region
    $region14: #{clean_specnet_forward.1} parent=1 // pred_check
      _
    $region15: #{clean_specnet_forward.1} parent=1 // pred_check_branch
      %89 = sbr.rel (0) target = $region17
    $region16: #{clean_specnet_forward.1} parent=1 // pred_region
      _
    $region17: #{clean_specnet_forward.1} parent=1 // pred_fallthru
      _
    // Predicated region
    $region18: #{clean_specnet_forward.1} parent=1 // pred_check
      _
    $region19: #{clean_specnet_forward.1} parent=1 // pred_check_branch
      %91 = sbr.rel (0) target = $region21
    $region20: #{clean_specnet_forward.1} parent=1 // pred_region
      _
    $region21: #{clean_specnet_forward.1} parent=1 // pred_fallthru
      _
    // Predicated region
    $region22: #{clean_specnet_forward.1} parent=1 // pred_check
      _
    $region23: #{clean_specnet_forward.1} parent=1 // pred_check_branch
      %93 = sbr.rel (0) target = $region25
    $region24: #{clean_specnet_forward.1} parent=1 // pred_region
      _
    $region25: #{clean_specnet_forward.1} parent=1 // pred_fallthru
      _
    // Predicated region
    $region26: #{clean_specnet_forward.1} parent=1 // pred_check
      _
    $region27: #{clean_specnet_forward.1} parent=1 // pred_check_branch
      %95 = sbr.rel (0) target = $region29
    $region28: #{clean_specnet_forward.1} parent=1 // pred_region
      _
    $region29: #{clean_specnet_forward.1} parent=1 // pred_fallthru
      _
    // Predicated region
    $region30: #{clean_specnet_forward.1} parent=1 // pred_check
      _
    $region31: #{clean_specnet_forward.1} parent=1 // pred_check_branch
      %97 = sbr.rel (0) target = $region33
    $region32: #{clean_specnet_forward.1} parent=1 // pred_region
      _
    $region33: #{clean_specnet_forward.1} parent=1 // pred_fallthru
      _
    // Predicated region
    $region34: #{clean_specnet_forward.1} parent=1 // pred_check
      _
    $region35: #{clean_specnet_forward.1} parent=1 // pred_check_branch
      %99 = sbr.rel (0) target = $region37
    $region36: #{clean_specnet_forward.1} parent=1 // pred_region
      %s101 = ssub.s32 128, 128
      %102 = vsyncadd [#allocation3], %s101
      %s103 = sshll.u32 [#allocation2], 4
      %s104 = int_to_ptr.vmem [resolvable:$true] %s103
      %109 = dma.hbm_to_vmem [thread:$0]  %s17, 128, %s104, [#allocation3], 64, 64, 4
    $region37: #{clean_specnet_forward.1} parent=1 // pred_fallthru
      _
    // Predicated region
    $region38: #{clean_specnet_forward.1} parent=1 // pred_check
      _
    $region39: #{clean_specnet_forward.1} parent=1 // pred_check_branch
      %111 = sbr.rel (0) target = $region41
    $region40: #{clean_specnet_forward.1} parent=1 // pred_region
      _
    $region41: #{clean_specnet_forward.1} parent=1 // pred_fallthru
      _
    // Predicated region
    $region42: #{clean_specnet_forward.1} parent=1 // pred_check
      _
    $region43: #{clean_specnet_forward.1} parent=1 // pred_check_branch
      %113 = sbr.rel (0) target = $region45
    $region44: #{clean_specnet_forward.1} parent=1 // pred_region
      _
    $region45: #{clean_specnet_forward.1} parent=1 // pred_fallthru
      _
    // Predicated region
    $region46: #{clean_specnet_forward.1} parent=1 // pred_check
      _
    $region47: #{clean_specnet_forward.1} parent=1 // pred_check_branch
      %115 = sbr.rel (0) target = $region49
    $region48: #{clean_specnet_forward.1} parent=1 // pred_region
      %s117 = ssub.s32 32, 32
      %118 = vsyncadd [#allocation5], %s117
      %s119 = sshll.u32 [#allocation4], 4
      %s120 = int_to_ptr.vmem [resolvable:$true] %s119
      %125 = dma.hbm_to_vmem [thread:$0]  %s23, 32, %s120, [#allocation5], 16, 16, 1
    $region49: #{clean_specnet_forward.1} parent=1 // pred_fallthru
      _
    // Predicated region
    $region50: #{clean_specnet_forward.1} parent=1 // pred_check
      _
    $region51: #{clean_specnet_forward.1} parent=1 // pred_check_branch
      %127 = sbr.rel (0) target = $region53
    $region52: #{clean_specnet_forward.1} parent=1 // pred_region
      _
    $region53: #{clean_specnet_forward.1} parent=1 // pred_fallthru
      _
    // Predicated region
    $region54: #{clean_specnet_forward.1} parent=1 // pred_check
      _
    $region55: #{clean_specnet_forward.1} parent=1 // pred_check_branch
      %129 = sbr.rel (0) target = $region57
    $region56: #{clean_specnet_forward.1} parent=1 // pred_region
      %s131 = ssub.s32 32, 32
      %132 = vsyncadd [#allocation5], %s131
      %s133 = sshll.u32 [#allocation6], 4
      %s134 = int_to_ptr.vmem [resolvable:$true] %s133
      %139 = dma.hbm_to_vmem [thread:$0]  %s27, 32, %s134, [#allocation5], 16, 16, 1
    $region57: #{clean_specnet_forward.1} parent=1 // pred_fallthru
      _
    // Predicated region
    $region58: #{clean_specnet_forward.1} parent=1 // pred_check
      _
    $region59: #{clean_specnet_forward.1} parent=1 // pred_check_branch
      %141 = sbr.rel (0) target = $region61
    $region60: #{clean_specnet_forward.1} parent=1 // pred_region
      _
    $region61: #{clean_specnet_forward.1} parent=1 // pred_fallthru
      _
    // Predicated region
    $region62: #{clean_specnet_forward.1} parent=1 // pred_check
      _
    $region63: #{clean_specnet_forward.1} parent=1 // pred_check_branch
      %143 = sbr.rel (0) target = $region65
    $region64: #{clean_specnet_forward.1} parent=1 // pred_region
      %s145 = ssub.s32 32, 32
      %146 = vsyncadd [#allocation8], %s145
      %s147 = sshll.u32 [#allocation7], 4
      %s148 = int_to_ptr.vmem [resolvable:$true] %s147
      %153 = dma.hbm_to_vmem [thread:$0]  %s31, 32, %s148, [#allocation8], 16, 16, 1
    $region65: #{clean_specnet_forward.1} parent=1 // pred_fallthru
      _
    // Predicated region
    $region66: #{clean_specnet_forward.1} parent=1 // pred_check
      _
    $region67: #{clean_specnet_forward.1} parent=1 // pred_check_branch
      %155 = sbr.rel (0) target = $region69
    $region68: #{clean_specnet_forward.1} parent=1 // pred_region
      _
    $region69: #{clean_specnet_forward.1} parent=1 // pred_fallthru
      _
    // Predicated region
    $region70: #{clean_specnet_forward.1} parent=1 // pred_check
      _
    $region71: #{clean_specnet_forward.1} parent=1 // pred_check_branch
      %157 = sbr.rel (0) target = $region73
    $region72: #{clean_specnet_forward.1} parent=1 // pred_region
      %s159 = ssub.s32 16, 16
      %160 = vsyncadd [#allocation8], %s159
      %s162 = sshll.u32 [#allocation9], 4
      %s163 = int_to_ptr.vmem [resolvable:$true] %s162
      %165 = dma.hbm_to_vmem [thread:$0]  %s35, 16, %s163, [#allocation8]
    $region73: #{clean_specnet_forward.1} parent=1 // pred_fallthru
      _
    // Predicated region
    $region74: #{clean_specnet_forward.1} parent=1 // pred_check
      _
    $region75: #{clean_specnet_forward.1} parent=1 // pred_check_branch
      %167 = sbr.rel (0) target = $region77
    $region76: #{clean_specnet_forward.1} parent=1 // pred_region
      %s169 = ssub.s32 16, 16
      %170 = vsyncadd [#allocation11], %s169
      %s172 = sshll.u32 [#allocation10], 4
      %s173 = int_to_ptr.vmem [resolvable:$true] %s172
      %175 = dma.hbm_to_vmem [thread:$0]  %s37, 16, %s173, [#allocation11]
    $region77: #{clean_specnet_forward.1} parent=1 // pred_fallthru
      _
    // Predicated region
    $region78: #{clean_specnet_forward.1} parent=1 // pred_check
      _
    $region79: #{clean_specnet_forward.1} parent=1 // pred_check_branch
      %177 = sbr.rel (0) target = $region81
    $region80: #{clean_specnet_forward.1} parent=1 // pred_region
      %s179 = ssub.s32 16, 16
      %180 = vsyncadd [#allocation11], %s179
      %s182 = sshll.u32 [#allocation12], 4
      %s183 = int_to_ptr.vmem [resolvable:$true] %s182
      %185 = dma.hbm_to_vmem [thread:$0]  %s39, 16, %s183, [#allocation11]
    $region81: #{clean_specnet_forward.1} parent=1 // pred_fallthru
      _
    // Predicated region
    $region82: #{clean_specnet_forward.1} parent=1 // pred_check
      _
    $region83: #{clean_specnet_forward.1} parent=1 // pred_check_branch
      %187 = sbr.rel (0) target = $region85
    $region84: #{clean_specnet_forward.1} parent=1 // pred_region
      _
    $region85: #{clean_specnet_forward.1} parent=1 // pred_fallthru
      _
    // Predicated region
    $region86: #{clean_specnet_forward.1} parent=1 // pred_check
      _
    $region87: #{clean_specnet_forward.1} parent=1 // pred_check_branch
      %189 = sbr.rel (0) target = $region89
    $region88: #{clean_specnet_forward.1} parent=1 // pred_region
      _
    $region89: #{clean_specnet_forward.1} parent=1 // pred_fallthru
      _
    // Predicated region
    $region90: #{clean_specnet_forward.1} parent=1 // pred_check
      _
    $region91: #{clean_specnet_forward.1} parent=1 // pred_check_branch
      %191 = sbr.rel (0) target = $region93
    $region92: #{clean_specnet_forward.1} parent=1 // pred_region
      _
    $region93: #{clean_specnet_forward.1} parent=1 // pred_fallthru
      _
    // Predicated region
    $region94: #{clean_specnet_forward.1} parent=1 // pred_check
      _
    $region95: #{clean_specnet_forward.1} parent=1 // pred_check_branch
      %193 = sbr.rel (0) target = $region97
    $region96: #{clean_specnet_forward.1} parent=1 // pred_region
      _
    $region97: #{clean_specnet_forward.1} parent=1 // pred_fallthru
      _
    // Predicated region
    $region98: #{clean_specnet_forward.1} parent=1 // pred_check
      _
    $region99: #{clean_specnet_forward.1} parent=1 // pred_check_branch
      %195 = sbr.rel (0) target = $region101
    $region100: #{clean_specnet_forward.1} parent=1 // pred_region
      %s197 = ssub.s32 32, 32
      %198 = vsyncadd [#allocation14], %s197
      %s199 = sshll.u32 [#allocation13], 4
      %s200 = int_to_ptr.vmem [resolvable:$true] %s199
      %205 = dma.hbm_to_vmem [thread:$0]  %s49, 32, %s200, [#allocation14], 16, 16, 1
    $region101: #{clean_specnet_forward.1} parent=1 // pred_fallthru
      _
    // Predicated region
    $region102: #{clean_specnet_forward.1} parent=1 // pred_check
      _
    $region103: #{clean_specnet_forward.1} parent=1 // pred_check_branch
      %207 = sbr.rel (0) target = $region105
    $region104: #{clean_specnet_forward.1} parent=1 // pred_region
      %s209 = ssub.s32 32, 32
      %210 = vsyncadd [#allocation14], %s209
      %s211 = sshll.u32 [#allocation15], 4
      %s212 = int_to_ptr.vmem [resolvable:$true] %s211
      %217 = dma.hbm_to_vmem [thread:$0]  %s51, 32, %s212, [#allocation14], 16, 16, 1
    $region105: #{clean_specnet_forward.1} parent=1 // pred_fallthru
      _
    // Predicated region
    $region106: #{clean_specnet_forward.1} parent=1 // pred_check
      _
    $region107: #{clean_specnet_forward.1} parent=1 // pred_check_branch
      %219 = sbr.rel (0) target = $region109
    $region108: #{clean_specnet_forward.1} parent=1 // pred_region
      _
    $region109: #{clean_specnet_forward.1} parent=1 // pred_fallthru
      _
    // Predicated region
    $region110: #{clean_specnet_forward.1} parent=1 // pred_check
      _
    $region111: #{clean_specnet_forward.1} parent=1 // pred_check_branch
      %221 = sbr.rel (0) target = $region113
    $region112: #{clean_specnet_forward.1} parent=1 // pred_region
      %s223 = ssub.s32 32, 32
      %224 = vsyncadd [#allocation17], %s223
      %s225 = sshll.u32 [#allocation16], 4
      %s226 = int_to_ptr.vmem [resolvable:$true] %s225
      %231 = dma.hbm_to_vmem [thread:$0]  %s55, 32, %s226, [#allocation17], 16, 16, 1
    $region113: #{clean_specnet_forward.1} parent=1 // pred_fallthru
      _
    // Predicated region
    $region114: #{clean_specnet_forward.1} parent=1 // pred_check
      _
    $region115: #{clean_specnet_forward.1} parent=1 // pred_check_branch
      %233 = sbr.rel (0) target = $region117
    $region116: #{clean_specnet_forward.1} parent=1 // pred_region
      _
    $region117: #{clean_specnet_forward.1} parent=1 // pred_fallthru
      _
    // Predicated region
    $region118: #{clean_specnet_forward.1} parent=1 // pred_check
      _
    $region119: #{clean_specnet_forward.1} parent=1 // pred_check_branch
      %235 = sbr.rel (0) target = $region121
    $region120: #{clean_specnet_forward.1} parent=1 // pred_region
      %s237 = ssub.s32 32, 32
      %238 = vsyncadd [#allocation17], %s237
      %s239 = sshll.u32 [#allocation18], 4
      %s240 = int_to_ptr.vmem [resolvable:$true] %s239
      %245 = dma.hbm_to_vmem [thread:$0]  %s59, 32, %s240, [#allocation17], 16, 16, 1
    $region121: #{clean_specnet_forward.1} parent=1 // pred_fallthru
      _
    // Predicated region
    $region122: #{clean_specnet_forward.1} parent=1 // pred_check
      _
    $region123: #{clean_specnet_forward.1} parent=1 // pred_check_branch
      %247 = sbr.rel (0) target = $region125
    $region124: #{clean_specnet_forward.1} parent=1 // pred_region
      %s249 = ssub.s32 32, 32
      %250 = vsyncadd [#allocation20], %s249
      %s251 = sshll.u32 [#allocation19], 4
      %s252 = int_to_ptr.vmem [resolvable:$true] %s251
      %257 = dma.hbm_to_vmem [thread:$0]  %s61, 32, %s252, [#allocation20], 16, 16, 1
    $region125: #{clean_specnet_forward.1} parent=1 // pred_fallthru
      _
    // Predicated region
    $region126: #{clean_specnet_forward.1} parent=1 // pred_check
      _
    $region127: #{clean_specnet_forward.1} parent=1 // pred_check_branch
      %259 = sbr.rel (0) target = $region129
    $region128: #{clean_specnet_forward.1} parent=1 // pred_region
      %s261 = ssub.s32 32, 32
      %262 = vsyncadd [#allocation20], %s261
      %s263 = sshll.u32 [#allocation21], 4
      %s264 = int_to_ptr.vmem [resolvable:$true] %s263
      %269 = dma.hbm_to_vmem [thread:$0]  %s63, 32, %s264, [#allocation20], 16, 16, 1
    $region129: #{clean_specnet_forward.1} parent=1 // pred_fallthru
      _
    // Predicated region
    $region130: #{clean_specnet_forward.1} parent=1 // pred_check
      _
    $region131: #{clean_specnet_forward.1} parent=1 // pred_check_branch
      %271 = sbr.rel (0) target = $region133
    $region132: #{clean_specnet_forward.1} parent=1 // pred_region
      _
    $region133: #{clean_specnet_forward.1} parent=1 // pred_fallthru
      _
    // Predicated region
    $region134: #{clean_specnet_forward.1} parent=1 // pred_check
      _
    $region135: #{clean_specnet_forward.1} parent=1 // pred_check_branch
      %273 = sbr.rel (0) target = $region137
    $region136: #{clean_specnet_forward.1} parent=1 // pred_region
      %s275 = ssub.s32 16, 16
      %276 = vsyncadd [#allocation23], %s275
      %s278 = sshll.u32 [#allocation22], 4
      %s279 = int_to_ptr.vmem [resolvable:$true] %s278
      %281 = dma.hbm_to_vmem [thread:$0]  %s67, 16, %s279, [#allocation23]
    $region137: #{clean_specnet_forward.1} parent=1 // pred_fallthru
      _
    // Predicated region
    $region138: #{clean_specnet_forward.1} parent=1 // pred_check
      _
    $region139: #{clean_specnet_forward.1} parent=1 // pred_check_branch
      %283 = sbr.rel (0) target = $region141
    $region140: #{clean_specnet_forward.1} parent=1 // pred_region
      %284 = dma.done [#allocation3], 128
    $region141: #{clean_specnet_forward.1} parent=1 // pred_fallthru
      _
    // Predicated region
    $region142: #{clean_specnet_forward.1} parent=1 // pred_check
      _
    $region143: #{clean_specnet_forward.1} parent=1 // pred_check_branch
      %286 = sbr.rel (0) target = $region145
    $region144: #{clean_specnet_forward.1} parent=1 // pred_region
      %287 = dma.done [#allocation5], 32
    $region145: #{clean_specnet_forward.1} parent=1 // pred_fallthru
      _
    // Predicated region
    $region146: #{clean_specnet_forward.1} parent=1 // pred_check
      _
    $region147: #{clean_specnet_forward.1} parent=1 // pred_check_branch
      %289 = sbr.rel (0) target = $region149
    $region148: #{clean_specnet_forward.1} parent=1 // pred_region
      %290 = dma.done [#allocation5], 32
    $region149: #{clean_specnet_forward.1} parent=1 // pred_fallthru
      _
    // Predicated region
    $region150: #{clean_specnet_forward.1} parent=1 // pred_check
      _
    $region151: #{clean_specnet_forward.1} parent=1 // pred_check_branch
      %292 = sbr.rel (0) target = $region153
    $region152: #{clean_specnet_forward.1} parent=1 // pred_region
      %293 = dma.done [#allocation8], 32
    $region153: #{clean_specnet_forward.1} parent=1 // pred_fallthru
      _
    // Predicated region
    $region154: #{clean_specnet_forward.1} parent=1 // pred_check
      _
    $region155: #{clean_specnet_forward.1} parent=1 // pred_check_branch
      %295 = sbr.rel (0) target = $region157
    $region156: #{clean_specnet_forward.1} parent=1 // pred_region
      %296 = dma.done [#allocation8], 16
    $region157: #{clean_specnet_forward.1} parent=1 // pred_fallthru
      _
    // Predicated region
    $region158: #{clean_specnet_forward.1} parent=1 // pred_check
      _
    $region159: #{clean_specnet_forward.1} parent=1 // pred_check_branch
      %298 = sbr.rel (0) target = $region161
    $region160: #{clean_specnet_forward.1} parent=1 // pred_region
      %299 = dma.done [#allocation11], 16
    $region161: #{clean_specnet_forward.1} parent=1 // pred_fallthru
      _
    // Predicated region
    $region162: #{clean_specnet_forward.1} parent=1 // pred_check
      _
    $region163: #{clean_specnet_forward.1} parent=1 // pred_check_branch
      %301 = sbr.rel (0) target = $region165
    $region164: #{clean_specnet_forward.1} parent=1 // pred_region
      %302 = dma.done [#allocation11], 16
    $region165: #{clean_specnet_forward.1} parent=1 // pred_fallthru
      _
    // Predicated region
    $region166: #{clean_specnet_forward.1} parent=1 // pred_check
      _
    $region167: #{clean_specnet_forward.1} parent=1 // pred_check_branch
      %304 = sbr.rel (0) target = $region169
    $region168: #{clean_specnet_forward.1} parent=1 // pred_region
      %305 = dma.done [#allocation14], 32
    $region169: #{clean_specnet_forward.1} parent=1 // pred_fallthru
      _
    // Predicated region
    $region170: #{clean_specnet_forward.1} parent=1 // pred_check
      _
    $region171: #{clean_specnet_forward.1} parent=1 // pred_check_branch
      %307 = sbr.rel (0) target = $region173
    $region172: #{clean_specnet_forward.1} parent=1 // pred_region
      %308 = dma.done [#allocation14], 32
    $region173: #{clean_specnet_forward.1} parent=1 // pred_fallthru
      _
    // Predicated region
    $region174: #{clean_specnet_forward.1} parent=1 // pred_check
      _
    $region175: #{clean_specnet_forward.1} parent=1 // pred_check_branch
      %310 = sbr.rel (0) target = $region177
    $region176: #{clean_specnet_forward.1} parent=1 // pred_region
      %311 = dma.done [#allocation17], 32
    $region177: #{clean_specnet_forward.1} parent=1 // pred_fallthru
      _
    // Predicated region
    $region178: #{clean_specnet_forward.1} parent=1 // pred_check
      _
    $region179: #{clean_specnet_forward.1} parent=1 // pred_check_branch
      %313 = sbr.rel (0) target = $region181
    $region180: #{clean_specnet_forward.1} parent=1 // pred_region
      %314 = dma.done [#allocation17], 32
    $region181: #{clean_specnet_forward.1} parent=1 // pred_fallthru
      _
    // Predicated region
    $region182: #{clean_specnet_forward.1} parent=1 // pred_check
      _
    $region183: #{clean_specnet_forward.1} parent=1 // pred_check_branch
      %316 = sbr.rel (0) target = $region185
    $region184: #{clean_specnet_forward.1} parent=1 // pred_region
      %317 = dma.done [#allocation20], 32
    $region185: #{clean_specnet_forward.1} parent=1 // pred_fallthru
      _
    // Predicated region
    $region186: #{clean_specnet_forward.1} parent=1 // pred_check
      _
    $region187: #{clean_specnet_forward.1} parent=1 // pred_check_branch
      %319 = sbr.rel (0) target = $region189
    $region188: #{clean_specnet_forward.1} parent=1 // pred_region
      %320 = dma.done [#allocation20], 32
    $region189: #{clean_specnet_forward.1} parent=1 // pred_fallthru
      _
    // Predicated region
    $region190: #{clean_specnet_forward.1} parent=1 // pred_check
      _
    $region191: #{clean_specnet_forward.1} parent=1 // pred_check_branch
      %322 = sbr.rel (0) target = $region193
    $region192: #{clean_specnet_forward.1} parent=1 // pred_region
      %323 = dma.done [#allocation23], 16
    $region193: #{clean_specnet_forward.1} parent=1 // pred_fallthru
      _
    %v325 = vld [vmem:[%s1] sm:$0x3]
    %v326 = vld [vmem:[%s3] sm:$0xff]
    %v327 = vld [vmem:[%s3 + $0x8] sm:$0xff]
    %v328 = vld [vmem:[%s3 + $0x10] sm:$0xff]
    %v329 = vld [vmem:[%s3 + $0x18] sm:$0xff]
    %v330 = vld [vmem:[%s3 + $0x20] sm:$0xff]
    %v331 = vld [vmem:[%s3 + $0x28] sm:$0xff]
    %v332 = vld [vmem:[%s3 + $0x30] sm:$0xff]
    %v333 = vld [vmem:[%s3 + $0x38] sm:$0xff]
    %vm334 = vcmask 523264
    %v336 = vsel %vm334, %v325, 0
    %338 = vmatprep.subr.mxu0 0.0
    %339 = vmatpush1.msra.mxu0 %v326
    %340 = vmatprep.subr.mxu0 0.0
    %341 = vmatpush1.msra.mxu0 %v327
    %342 = vmatprep.subr.mxu0 0.0
    %343 = vmatpush1.msra.mxu0 %v328
    %344 = vmatprep.subr.mxu0 0.0
    %345 = vmatpush1.msra.mxu0 %v329
    %346 = vmatprep.subr.mxu0 0.0
    %347 = vmatpush1.msra.mxu0 %v330
    %348 = vmatprep.subr.mxu0 0.0
    %349 = vmatpush1.msra.mxu0 %v331
    %350 = vmatprep.subr.mxu0 0.0
    %351 = vmatpush1.msra.mxu0 %v332
    %352 = vmatprep.subr.mxu0 0.0
    %353 = vmatpush1.msra.mxu0 %v333
    %354 = vmatprep.subr.mxu0 0.0
    %355 = vmatpush1.msra.mxu0 0.0
    %356 = vmatprep.subr.mxu0 0.0
    %357 = vmatpush1.msra.mxu0 0.0
    %358 = vmatprep.subr.mxu0 0.0
    %359 = vmatpush1.msra.mxu0 0.0
    %360 = vmatprep.subr.mxu0 0.0
    %361 = vmatpush1.msra.mxu0 0.0
    %362 = vmatprep.subr.mxu0 0.0
    %363 = vmatpush1.msra.mxu0 0.0
    %364 = vmatprep.subr.mxu0 0.0
    %365 = vmatpush1.msra.mxu0 0.0
    %366 = vmatprep.subr.mxu0 0.0
    %367 = vmatpush1.msra.mxu0 0.0
    %368 = vmatprep.subr.mxu0 0.0
    %369 = vmatpush1.msra.mxu0 0.0
    %370 = vmatprep.subr.mxu0 0.0
    %371 = vmatpush1.msra.mxu0 0.0
    %372 = vmatprep.subr.mxu0 0.0
    %373 = vmatpush1.msra.mxu0 0.0
    %374 = vmatprep.subr.mxu0 0.0
    %375 = vmatpush1.msra.mxu0 0.0
    %376 = vmatprep.subr.mxu0 0.0
    %377 = vmatpush1.msra.mxu0 0.0
    %378 = vmatprep.subr.mxu0 0.0
    %379 = vmatpush1.msra.mxu0 0.0
    %380 = vmatprep.subr.mxu0 0.0
    %381 = vmatpush1.msra.mxu0 0.0
    %382 = vmatprep.subr.mxu0 0.0
    %383 = vmatpush1.msra.mxu0 0.0
    %384 = vmatprep.subr.mxu0 0.0
    %385 = vmatpush1.msra.mxu0 0.0
    %386 = vmatprep.subr.mxu0 0.0
    %387 = vmatpush1.msra.mxu0 0.0
    %388 = vmatprep.subr.mxu0 0.0
    %389 = vmatpush1.msra.mxu0 0.0
    %390 = vmatprep.subr.mxu0 0.0
    %391 = vmatpush1.msra.mxu0 0.0
    %392 = vmatprep.subr.mxu0 0.0
    %393 = vmatpush1.msra.mxu0 0.0
    %394 = vmatprep.subr.mxu0 0.0
    %395 = vmatpush1.msra.mxu0 0.0
    %396 = vmatprep.subr.mxu0 0.0
    %397 = vmatpush1.msra.mxu0 0.0
    %398 = vmatprep.subr.mxu0 0.0
    %399 = vmatpush1.msra.mxu0 0.0
    %400 = vmatprep.subr.mxu0 0.0
    %401 = vmatpush1.msra.mxu0 0.0
    %402 = vmatprep.mubr.f32.mxu0 0.0
    %403 = vmatmul.mubr.f32.gmra.mrb[0].mxu0 %v336
    %v404 = vpop.f32.mrb[0].mxu0
    %v405 = vadd.f32 0.0, %v404
    %v406 = vpop.f32.mrb[0].mxu0
    %407 = vdwg.mxu0
    %v408 = vld [vmem:[%s5] sm:$0xff]
    %v409 = vld [vmem:[%s5 + $0x8] sm:$0xff]
    %v410 = vld [vmem:[%s5 + $0x10] sm:$0xff]
    %v411 = vld [vmem:[%s5 + $0x18] sm:$0xff]
    %vm412 = vcmask 15360
    %v414 = vsel %vm412, %v408, 0
    %v417 = vsel %vm412, %v409, 0
    %v420 = vsel %vm412, %v410, 0
    %v423 = vsel %vm412, %v411, 0
    %vm425 = vcmask 1041408
    %v427 = vsel %vm425, %v405, 0
    %429 = vmatprep.subr.mxu0 0.0
    %430 = vmatpush1.msra.mxu0 %v427
    %431 = vmatprep.subr.mxu0 0.0
    %432 = vmatpush1.msra.mxu0 0.0
    %433 = vmatprep.subr.mxu0 0.0
    %434 = vmatpush1.msra.mxu0 0.0
    %435 = vmatprep.subr.mxu0 0.0
    %436 = vmatpush1.msra.mxu0 0.0
    %437 = vmatprep.subr.mxu0 0.0
    %438 = vmatpush1.msra.mxu0 0.0
    %439 = vmatprep.subr.mxu0 0.0
    %440 = vmatpush1.msra.mxu0 0.0
    %441 = vmatprep.subr.mxu0 0.0
    %442 = vmatpush1.msra.mxu0 0.0
    %443 = vmatprep.subr.mxu0 0.0
    %444 = vmatpush1.msra.mxu0 0.0
    %445 = vmatprep.subr.mxu0 0.0
    %446 = vmatpush1.msra.mxu0 0.0
    %447 = vmatprep.subr.mxu0 0.0
    %448 = vmatpush1.msra.mxu0 0.0
    %449 = vmatprep.subr.mxu0 0.0
    %450 = vmatpush1.msra.mxu0 0.0
    %451 = vmatprep.subr.mxu0 0.0
    %452 = vmatpush1.msra.mxu0 0.0
    %453 = vmatprep.subr.mxu0 0.0
    %454 = vmatpush1.msra.mxu0 0.0
    %455 = vmatprep.subr.mxu0 0.0
    %456 = vmatpush1.msra.mxu0 0.0
    %457 = vmatprep.subr.mxu0 0.0
    %458 = vmatpush1.msra.mxu0 0.0
    %459 = vmatprep.subr.mxu0 0.0
    %460 = vmatpush1.msra.mxu0 0.0
    %461 = vmatprep.subr.mxu0 0.0
    %462 = vmatpush1.msra.mxu0 0.0
    %463 = vmatprep.subr.mxu0 0.0
    %464 = vmatpush1.msra.mxu0 0.0
    %465 = vmatprep.subr.mxu0 0.0
    %466 = vmatpush1.msra.mxu0 0.0
    %467 = vmatprep.subr.mxu0 0.0
    %468 = vmatpush1.msra.mxu0 0.0
    %469 = vmatprep.subr.mxu0 0.0
    %470 = vmatpush1.msra.mxu0 0.0
    %471 = vmatprep.subr.mxu0 0.0
    %472 = vmatpush1.msra.mxu0 0.0
    %473 = vmatprep.subr.mxu0 0.0
    %474 = vmatpush1.msra.mxu0 0.0
    %475 = vmatprep.subr.mxu0 0.0
    %476 = vmatpush1.msra.mxu0 0.0
    %477 = vmatprep.subr.mxu0 0.0
    %478 = vmatpush1.msra.mxu0 0.0
    %479 = vmatprep.subr.mxu0 0.0
    %480 = vmatpush1.msra.mxu0 0.0
    %481 = vmatprep.subr.mxu0 0.0
    %482 = vmatpush1.msra.mxu0 0.0
    %483 = vmatprep.subr.mxu0 0.0
    %484 = vmatpush1.msra.mxu0 0.0
    %485 = vmatprep.subr.mxu0 0.0
    %486 = vmatpush1.msra.mxu0 0.0
    %487 = vmatprep.subr.mxu0 0.0
    %488 = vmatpush1.msra.mxu0 0.0
    %489 = vmatprep.subr.mxu0 0.0
    %490 = vmatpush1.msra.mxu0 0.0
    %491 = vmatprep.subr.mxu0 0.0
    %492 = vmatpush1.msra.mxu0 0.0
    %493 = vmatprep.mubr.f32.mxu0 0.0
    %494 = vmatmul.mubr.f32.gmra.mrb[0].mxu0 %v414
    %v495 = vpop.f32.mrb[0].mxu0
    %v496 = vadd.f32 0.0, %v495
    %v497 = vpop.f32.mrb[0].mxu0
    %498 = vmatprep.mubr.f32.mxu0 0.0
    %499 = vmatmul.mubr.f32.gmra.mrb[0].mxu0 %v417
    %v500 = vpop.f32.mrb[0].mxu0
    %v501 = vadd.f32 0.0, %v500
    %v502 = vpop.f32.mrb[0].mxu0
    %503 = vmatprep.mubr.f32.mxu0 0.0
    %504 = vmatmul.mubr.f32.gmra.mrb[0].mxu0 %v420
    %v505 = vpop.f32.mrb[0].mxu0
    %v506 = vadd.f32 0.0, %v505
    %v507 = vpop.f32.mrb[0].mxu0
    %508 = vmatprep.mubr.f32.mxu0 0.0
    %509 = vmatmul.mubr.f32.gmra.mrb[0].mxu0 %v423
    %v510 = vpop.f32.mrb[0].mxu0
    %v511 = vadd.f32 0.0, %v510
    %v512 = vpop.f32.mrb[0].mxu0
    %513 = vdwg.mxu0
    %v514 = vld [vmem:[%s7] sm:$0xff]
    %v515 = vld [vmem:[%s7 + $0x8] sm:$0xff]
    %v516 = vld [vmem:[%s7 + $0x10] sm:$0xff]
    %v517 = vld [vmem:[%s7 + $0x18] sm:$0xff]
    %v518 = vmul.f32 %v496, %v514
    %v519 = vmul.f32 %v501, %v515
    %v520 = vmul.f32 %v506, %v516
    %v521 = vmul.f32 %v511, %v517
    %v522 = vld [vmem:[%s9] sm:$0xff]
    %v523 = vld [vmem:[%s9 + $0x8] sm:$0xff]
    %v524 = vld [vmem:[%s9 + $0x10] sm:$0xff]
    %v525 = vld [vmem:[%s9 + $0x18] sm:$0xff]
    %v526 = vld [vmem:[%s9 + $0x20] sm:$0xff]
    %v527 = vld [vmem:[%s9 + $0x28] sm:$0xff]
    %v528 = vld [vmem:[%s9 + $0x30] sm:$0xff]
    %v529 = vld [vmem:[%s9 + $0x38] sm:$0xff]
    %v530 = vld [vmem:[%s9 + $0x40] sm:$0xff]
    %v531 = vld [vmem:[%s9 + $0x48] sm:$0xff]
    %v532 = vld [vmem:[%s9 + $0x50] sm:$0xff]
    %v533 = vld [vmem:[%s9 + $0x58] sm:$0x3f]
    %vm534 = vcmask 769024
    %v536 = vsel %vm534, %v518, 0
    %v539 = vsel %vm534, %v519, 0
    %v542 = vsel %vm534, %v520, 0
    %v545 = vsel %vm534, %v521, 0
    %vm547 = vcmask 1045504
    %v549 = vsel %vm547, %v533, 0
    %551 = vmatprep.subr.mxu0 0.0
    %552 = vmatpush1.msra.mxu0 %v522
    %553 = vmatprep.subr.mxu0 0.0
    %554 = vmatpush1.msra.mxu0 %v523
    %555 = vmatprep.subr.mxu0 0.0
    %556 = vmatpush1.msra.mxu0 %v524
    %557 = vmatprep.subr.mxu0 0.0
    %558 = vmatpush1.msra.mxu0 %v525
    %559 = vmatprep.subr.mxu0 0.0
    %560 = vmatpush1.msra.mxu0 %v526
    %561 = vmatprep.subr.mxu0 0.0
    %562 = vmatpush1.msra.mxu0 %v527
    %563 = vmatprep.subr.mxu0 0.0
    %564 = vmatpush1.msra.mxu0 %v528
    %565 = vmatprep.subr.mxu0 0.0
    %566 = vmatpush1.msra.mxu0 %v529
    %567 = vmatprep.subr.mxu0 0.0
    %568 = vmatpush1.msra.mxu0 %v530
    %569 = vmatprep.subr.mxu0 0.0
    %570 = vmatpush1.msra.mxu0 %v531
    %571 = vmatprep.subr.mxu0 0.0
    %572 = vmatpush1.msra.mxu0 %v532
    %573 = vmatprep.subr.mxu0 0.0
    %574 = vmatpush1.msra.mxu0 %v549
    %575 = vmatprep.subr.mxu0 0.0
    %576 = vmatpush1.msra.mxu0 0.0
    %577 = vmatprep.subr.mxu0 0.0
    %578 = vmatpush1.msra.mxu0 0.0
    %579 = vmatprep.subr.mxu0 0.0
    %580 = vmatpush1.msra.mxu0 0.0
    %581 = vmatprep.subr.mxu0 0.0
    %582 = vmatpush1.msra.mxu0 0.0
    %583 = vmatprep.subr.mxu0 0.0
    %584 = vmatpush1.msra.mxu0 0.0
    %585 = vmatprep.subr.mxu0 0.0
    %586 = vmatpush1.msra.mxu0 0.0
    %587 = vmatprep.subr.mxu0 0.0
    %588 = vmatpush1.msra.mxu0 0.0
    %589 = vmatprep.subr.mxu0 0.0
    %590 = vmatpush1.msra.mxu0 0.0
    %591 = vmatprep.subr.mxu0 0.0
    %592 = vmatpush1.msra.mxu0 0.0
    %593 = vmatprep.subr.mxu0 0.0
    %594 = vmatpush1.msra.mxu0 0.0
    %595 = vmatprep.subr.mxu0 0.0
    %596 = vmatpush1.msra.mxu0 0.0
    %597 = vmatprep.subr.mxu0 0.0
    %598 = vmatpush1.msra.mxu0 0.0
    %599 = vmatprep.subr.mxu0 0.0
    %600 = vmatpush1.msra.mxu0 0.0
    %601 = vmatprep.subr.mxu0 0.0
    %602 = vmatpush1.msra.mxu0 0.0
    %603 = vmatprep.subr.mxu0 0.0
    %604 = vmatpush1.msra.mxu0 0.0
    %605 = vmatprep.subr.mxu0 0.0
    %606 = vmatpush1.msra.mxu0 0.0
    %607 = vmatprep.subr.mxu0 0.0
    %608 = vmatpush1.msra.mxu0 0.0
    %609 = vmatprep.subr.mxu0 0.0
    %610 = vmatpush1.msra.mxu0 0.0
    %611 = vmatprep.subr.mxu0 0.0
    %612 = vmatpush1.msra.mxu0 0.0
    %613 = vmatprep.subr.mxu0 0.0
    %614 = vmatpush1.msra.mxu0 0.0
    %615 = vmatprep.mubr.f32.mxu0 0.0
    %616 = vmatmul.mubr.f32.gmra.mrb[0].mxu0 %v536
    %v617 = vpop.f32.mrb[0].mxu0
    %v618 = vadd.f32 0.0, %v617
    %v619 = vpop.f32.mrb[0].mxu0
    %620 = vmatprep.mubr.f32.mxu0 0.0
    %621 = vmatmul.mubr.f32.gmra.mrb[0].mxu0 %v539
    %v622 = vpop.f32.mrb[0].mxu0
    %v623 = vadd.f32 0.0, %v622
    %v624 = vpop.f32.mrb[0].mxu0
    %625 = vmatprep.mubr.f32.mxu0 0.0
    %626 = vmatmul.mubr.f32.gmra.mrb[0].mxu0 %v542
    %v627 = vpop.f32.mrb[0].mxu0
    %v628 = vadd.f32 0.0, %v627
    %v629 = vpop.f32.mrb[0].mxu0
    %630 = vmatprep.mubr.f32.mxu0 0.0
    %631 = vmatmul.mubr.f32.gmra.mrb[0].mxu0 %v545
    %v632 = vpop.f32.mrb[0].mxu0
    %v633 = vadd.f32 0.0, %v632
    %v634 = vpop.f32.mrb[0].mxu0
    %635 = vdwg.mxu0
    %v636 = vld [vmem:[%s11] sm:$0xff]
    %v637 = vld [vmem:[%s11 + $0x8] sm:$0xff]
    %v638 = vld [vmem:[%s11 + $0x10] sm:$0xff]
    %v639 = vld [vmem:[%s11 + $0x18] sm:$0xff]
    %v640 = vld [vmem:[%s11 + $0x20] sm:$0xff]
    %v641 = vld [vmem:[%s11 + $0x28] sm:$0xff]
    %v642 = vld [vmem:[%s11 + $0x30] sm:$0xff]
    %v643 = vld [vmem:[%s11 + $0x38] sm:$0xff]
    %v644 = vld [vmem:[%s11 + $0x40] sm:$0xff]
    %v645 = vld [vmem:[%s11 + $0x48] sm:$0xff]
    %v646 = vld [vmem:[%s11 + $0x50] sm:$0xff]
    %v647 = vld [vmem:[%s11 + $0x58] sm:$0x3f]
    %v649 = vsel %vm547, %v647, 0
    %651 = vmatprep.subr.mxu0 0.0
    %652 = vmatpush1.msra.mxu0 %v636
    %653 = vmatprep.subr.mxu0 0.0
    %654 = vmatpush1.msra.mxu0 %v637
    %655 = vmatprep.subr.mxu0 0.0
    %656 = vmatpush1.msra.mxu0 %v638
    %657 = vmatprep.subr.mxu0 0.0
    %658 = vmatpush1.msra.mxu0 %v639
    %659 = vmatprep.subr.mxu0 0.0
    %660 = vmatpush1.msra.mxu0 %v640
    %661 = vmatprep.subr.mxu0 0.0
    %662 = vmatpush1.msra.mxu0 %v641
    %663 = vmatprep.subr.mxu0 0.0
    %664 = vmatpush1.msra.mxu0 %v642
    %665 = vmatprep.subr.mxu0 0.0
    %666 = vmatpush1.msra.mxu0 %v643
    %667 = vmatprep.subr.mxu0 0.0
    %668 = vmatpush1.msra.mxu0 %v644
    %669 = vmatprep.subr.mxu0 0.0
    %670 = vmatpush1.msra.mxu0 %v645
    %671 = vmatprep.subr.mxu0 0.0
    %672 = vmatpush1.msra.mxu0 %v646
    %673 = vmatprep.subr.mxu0 0.0
    %674 = vmatpush1.msra.mxu0 %v649
    %675 = vmatprep.subr.mxu0 0.0
    %676 = vmatpush1.msra.mxu0 0.0
    %677 = vmatprep.subr.mxu0 0.0
    %678 = vmatpush1.msra.mxu0 0.0
    %679 = vmatprep.subr.mxu0 0.0
    %680 = vmatpush1.msra.mxu0 0.0
    %681 = vmatprep.subr.mxu0 0.0
    %682 = vmatpush1.msra.mxu0 0.0
    %683 = vmatprep.subr.mxu0 0.0
    %684 = vmatpush1.msra.mxu0 0.0
    %685 = vmatprep.subr.mxu0 0.0
    %686 = vmatpush1.msra.mxu0 0.0
    %687 = vmatprep.subr.mxu0 0.0
    %688 = vmatpush1.msra.mxu0 0.0
    %689 = vmatprep.subr.mxu0 0.0
    %690 = vmatpush1.msra.mxu0 0.0
    %691 = vmatprep.subr.mxu0 0.0
    %692 = vmatpush1.msra.mxu0 0.0
    %693 = vmatprep.subr.mxu0 0.0
    %694 = vmatpush1.msra.mxu0 0.0
    %695 = vmatprep.subr.mxu0 0.0
    %696 = vmatpush1.msra.mxu0 0.0
    %697 = vmatprep.subr.mxu0 0.0
    %698 = vmatpush1.msra.mxu0 0.0
    %699 = vmatprep.subr.mxu0 0.0
    %700 = vmatpush1.msra.mxu0 0.0
    %701 = vmatprep.subr.mxu0 0.0
    %702 = vmatpush1.msra.mxu0 0.0
    %703 = vmatprep.subr.mxu0 0.0
    %704 = vmatpush1.msra.mxu0 0.0
    %705 = vmatprep.subr.mxu0 0.0
    %706 = vmatpush1.msra.mxu0 0.0
    %707 = vmatprep.subr.mxu0 0.0
    %708 = vmatpush1.msra.mxu0 0.0
    %709 = vmatprep.subr.mxu0 0.0
    %710 = vmatpush1.msra.mxu0 0.0
    %711 = vmatprep.subr.mxu0 0.0
    %712 = vmatpush1.msra.mxu0 0.0
    %713 = vmatprep.subr.mxu0 0.0
    %714 = vmatpush1.msra.mxu0 0.0
    %715 = vmatprep.mubr.f32.mxu0 0.0
    %716 = vmatmul.mubr.f32.gmra.mrb[0].mxu0 %v536
    %v717 = vpop.f32.mrb[0].mxu0
    %v718 = vadd.f32 0.0, %v717
    %v719 = vpop.f32.mrb[0].mxu0
    %720 = vmatprep.mubr.f32.mxu0 0.0
    %721 = vmatmul.mubr.f32.gmra.mrb[0].mxu0 %v539
    %v722 = vpop.f32.mrb[0].mxu0
    %v723 = vadd.f32 0.0, %v722
    %v724 = vpop.f32.mrb[0].mxu0
    %725 = vmatprep.mubr.f32.mxu0 0.0
    %726 = vmatmul.mubr.f32.gmra.mrb[0].mxu0 %v542
    %v727 = vpop.f32.mrb[0].mxu0
    %v728 = vadd.f32 0.0, %v727
    %v729 = vpop.f32.mrb[0].mxu0
    %730 = vmatprep.mubr.f32.mxu0 0.0
    %731 = vmatmul.mubr.f32.gmra.mrb[0].mxu0 %v545
    %v732 = vpop.f32.mrb[0].mxu0
    %v733 = vadd.f32 0.0, %v732
    %v734 = vpop.f32.mrb[0].mxu0
    %735 = vdwg.mxu0
    %v736 = vmul.f32 %v618, %v618
    %v737 = vmul.f32 %v623, %v623
    %v738 = vmul.f32 %v628, %v628
    %v739 = vmul.f32 %v633, %v633
    %v740 = vmul.f32 %v718, %v718
    %v741 = vmul.f32 %v723, %v723
    %v742 = vmul.f32 %v728, %v728
    %v743 = vmul.f32 %v733, %v733
    %v744 = vadd.f32 %v736, %v740
    %v745 = vadd.f32 %v737, %v741
    %v746 = vadd.f32 %v738, %v742
    %v747 = vadd.f32 %v739, %v743
    %v748 = vmax.f32 %v744, 1e-07
    %v749 = vmax.f32 %v745, 1e-07
    %v750 = vmax.f32 %v746, 1e-07
    %v751 = vmax.f32 %v747, 1e-07
    %v752 = vrsqrt.pop %v748
    %v753 = vmul.f32 %v748, %v752
    %vm754 = vcmp.eq.f32.partialorder %v748, inf
    %v755 = vsel %vm754, %v748, %v753
    %vm756 = vcmp.eq.f32.partialorder %v748, 0.0
    %v757 = vand.u32 %v748, 2147483648
    %v758 = vsel %vm756, %v757, %v755
    %v759 = vrsqrt.pop %v749
    %v760 = vmul.f32 %v749, %v759
    %vm761 = vcmp.eq.f32.partialorder %v749, inf
    %v762 = vsel %vm761, %v749, %v760
    %vm763 = vcmp.eq.f32.partialorder %v749, 0.0
    %v764 = vand.u32 %v749, 2147483648
    %v765 = vsel %vm763, %v764, %v762
    %v766 = vrsqrt.pop %v750
    %v767 = vmul.f32 %v750, %v766
    %vm768 = vcmp.eq.f32.partialorder %v750, inf
    %v769 = vsel %vm768, %v750, %v767
    %vm770 = vcmp.eq.f32.partialorder %v750, 0.0
    %v771 = vand.u32 %v750, 2147483648
    %v772 = vsel %vm770, %v771, %v769
    %v773 = vrsqrt.pop %v751
    %v774 = vmul.f32 %v751, %v773
    %vm775 = vcmp.eq.f32.partialorder %v751, inf
    %v776 = vsel %vm775, %v751, %v774
    %vm777 = vcmp.eq.f32.partialorder %v751, 0.0
    %v778 = vand.u32 %v751, 2147483648
    %v779 = vsel %vm777, %v778, %v776
    %v780 = vpack.c.bf16 %v765, %v758
    %v781 = vpack.c.bf16 %v779, %v772
    %v782 = vld [vmem:[#allocation2] sm:$0xf]
    %v783 = vld [vmem:[#allocation2 + $0x4] sm:$0xf]
    %v784 = vld [vmem:[%s19] sm:$0x1]
    %v786 = vlaneseq
    %v787 = vshrl.u32 %v786, 7
    %v788 = vsub.s32 0, %v787
    %v789 = vrot.slane %v784, %v788
    %v793 = vunpack.c.l.b16 %v782
    %v794 = vunpack.c.l.b16 %v783
    %v795 = vpack.c.b16 %v794, %v793
    %vm797 = vcmask 130048
    %v799 = vsel %vm797, %v780, 0
    %v802 = vsel %vm797, %v781, 0
    %804 = vmatprep.subr.bf16.mxu0 0
    %805 = vmatpush1.bf16.msra.mxu0 %v795
    %806 = vmatprep.subr.bf16.mxu0 0
    %807 = vmatpush1.bf16.msra.mxu0 0
    %808 = vmatprep.subr.bf16.mxu0 0
    %809 = vmatpush1.bf16.msra.mxu0 0
    %810 = vmatprep.subr.bf16.mxu0 0
    %811 = vmatpush1.bf16.msra.mxu0 0
    %812 = vmatprep.subr.bf16.mxu0 0
    %813 = vmatpush1.bf16.msra.mxu0 0
    %814 = vmatprep.subr.bf16.mxu0 0
    %815 = vmatpush1.bf16.msra.mxu0 0
    %816 = vmatprep.subr.bf16.mxu0 0
    %817 = vmatpush1.bf16.msra.mxu0 0
    %818 = vmatprep.subr.bf16.mxu0 0
    %819 = vmatpush1.bf16.msra.mxu0 0
    %820 = vmatprep.subr.bf16.mxu0 0
    %821 = vmatpush1.bf16.msra.mxu0 0
    %822 = vmatprep.subr.bf16.mxu0 0
    %823 = vmatpush1.bf16.msra.mxu0 0
    %824 = vmatprep.subr.bf16.mxu0 0
    %825 = vmatpush1.bf16.msra.mxu0 0
    %826 = vmatprep.subr.bf16.mxu0 0
    %827 = vmatpush1.bf16.msra.mxu0 0
    %828 = vmatprep.subr.bf16.mxu0 0
    %829 = vmatpush1.bf16.msra.mxu0 0
    %830 = vmatprep.subr.bf16.mxu0 0
    %831 = vmatpush1.bf16.msra.mxu0 0
    %832 = vmatprep.subr.bf16.mxu0 0
    %833 = vmatpush1.bf16.msra.mxu0 0
    %834 = vmatprep.subr.bf16.mxu0 0
    %835 = vmatpush1.bf16.msra.mxu0 0
    %836 = vmatprep.mubr.bf16.mxu0 0
    %837 = vmatmul.mubr.bf16.gmra.mrb[0].mxu0 %v799
    %v838 = vpop.f32.mrb[0].mxu0
    %v839 = vadd.f32 %v789, %v838
    %v840 = vpop.f32.mrb[0].mxu0
    %v841 = vpop.f32.mrb[0].mxu0
    %v842 = vadd.f32 %v789, %v841
    %v843 = vpop.f32.mrb[0].mxu0
    %844 = vmatprep.mubr.bf16.mxu0 0
    %845 = vmatmul.mubr.bf16.gmra.mrb[0].mxu0 %v802
    %v846 = vpop.f32.mrb[0].mxu0
    %v847 = vadd.f32 %v789, %v846
    %v848 = vpop.f32.mrb[0].mxu0
    %v849 = vpop.f32.mrb[0].mxu0
    %v850 = vadd.f32 %v789, %v849
    %v851 = vpop.f32.mrb[0].mxu0
    %852 = vdwg.mxu0
    %v853 = vpack.c.bf16 %v842, %v839
    %v854 = vpack.c.bf16 %v850, %v847
    %v855 = vld [vmem:[%s21] sm:$0xf]
    %v856 = vld [vmem:[%s21 + $0x4] sm:$0xf]
    %v857 = vld [vmem:[%s21 + $0x8] sm:$0xf]
    %v858 = vld [vmem:[%s21 + $0xc] sm:$0xf]
    %v863 = vunpack.c.l.b16 %v855
    %v864 = vunpack.c.l.b16 %v856
    %v865 = vunpack.c.l.b16 %v857
    %v866 = vunpack.c.l.b16 %v858
    %v867 = vpack.c.b16 %v864, %v863
    %v868 = vpack.c.b16 %v866, %v865
    %vm871 = vcmask 261120
    %v873 = vsel %vm871, %v853, 0
    %v876 = vsel %vm871, %v854, 0
    %878 = vmatprep.subr.bf16.mxu0 0
    %879 = vmatpush1.bf16.msra.mxu0 %v867
    %880 = vmatprep.subr.bf16.mxu0 0
    %881 = vmatpush1.bf16.msra.mxu0 %v868
    %882 = vmatprep.subr.bf16.mxu0 0
    %883 = vmatpush1.bf16.msra.mxu0 0
    %884 = vmatprep.subr.bf16.mxu0 0
    %885 = vmatpush1.bf16.msra.mxu0 0
    %886 = vmatprep.subr.bf16.mxu0 0
    %887 = vmatpush1.bf16.msra.mxu0 0
    %888 = vmatprep.subr.bf16.mxu0 0
    %889 = vmatpush1.bf16.msra.mxu0 0
    %890 = vmatprep.subr.bf16.mxu0 0
    %891 = vmatpush1.bf16.msra.mxu0 0
    %892 = vmatprep.subr.bf16.mxu0 0
    %893 = vmatpush1.bf16.msra.mxu0 0
    %894 = vmatprep.subr.bf16.mxu0 0
    %895 = vmatpush1.bf16.msra.mxu0 0
    %896 = vmatprep.subr.bf16.mxu0 0
    %897 = vmatpush1.bf16.msra.mxu0 0
    %898 = vmatprep.subr.bf16.mxu0 0
    %899 = vmatpush1.bf16.msra.mxu0 0
    %900 = vmatprep.subr.bf16.mxu0 0
    %901 = vmatpush1.bf16.msra.mxu0 0
    %902 = vmatprep.subr.bf16.mxu0 0
    %903 = vmatpush1.bf16.msra.mxu0 0
    %904 = vmatprep.subr.bf16.mxu0 0
    %905 = vmatpush1.bf16.msra.mxu0 0
    %906 = vmatprep.subr.bf16.mxu0 0
    %907 = vmatpush1.bf16.msra.mxu0 0
    %908 = vmatprep.subr.bf16.mxu0 0
    %909 = vmatpush1.bf16.msra.mxu0 0
    %910 = vmatprep.mubr.bf16.mxu0 0
    %911 = vmatmul.mubr.bf16.gmra.mrb[0].mxu0 %v873
    %v912 = vpop.f32.mrb[0].mxu0
    %v913 = vadd.f32 0.0, %v912
    %v914 = vpop.f32.mrb[0].mxu0
    %v915 = vpop.f32.mrb[0].mxu0
    %v916 = vadd.f32 0.0, %v915
    %v917 = vpop.f32.mrb[0].mxu0
    %918 = vmatprep.mubr.bf16.mxu0 0
    %919 = vmatmul.mubr.bf16.gmra.mrb[0].mxu0 %v876
    %v920 = vpop.f32.mrb[0].mxu0
    %v921 = vadd.f32 0.0, %v920
    %v922 = vpop.f32.mrb[0].mxu0
    %v923 = vpop.f32.mrb[0].mxu0
    %v924 = vadd.f32 0.0, %v923
    %v925 = vpop.f32.mrb[0].mxu0
    %926 = vdwg.mxu0
    %v927 = vld [vmem:[%s13] sm:$0xff]
    %v928 = vld [vmem:[%s13 + $0x8] sm:$0xff]
    %v929 = vld [vmem:[%s13 + $0x10] sm:$0xff]
    %v930 = vld [vmem:[%s13 + $0x18] sm:$0xff]
    %s931 = scalar_lea.vmem %s21, 16
    %v932 = vld [vmem:[%s931] sm:$0xf]
    %v933 = vld [vmem:[%s931 + $0x4] sm:$0xf]
    %v934 = vld [vmem:[%s931 + $0x8] sm:$0xf]
    %v935 = vld [vmem:[%s931 + $0xc] sm:$0xf]
    %v940 = vunpack.c.l.b16 %v932
    %v941 = vunpack.c.l.b16 %v933
    %v942 = vunpack.c.l.b16 %v934
    %v943 = vunpack.c.l.b16 %v935
    %v944 = vpack.c.b16 %v941, %v940
    %v945 = vpack.c.b16 %v943, %v942
    %948 = vmatprep.subr.bf16.mxu0 0
    %949 = vmatpush1.bf16.msra.mxu0 %v944
    %950 = vmatprep.subr.bf16.mxu0 0
    %951 = vmatpush1.bf16.msra.mxu0 %v945
    %952 = vmatprep.subr.bf16.mxu0 0
    %953 = vmatpush1.bf16.msra.mxu0 0
    %954 = vmatprep.subr.bf16.mxu0 0
    %955 = vmatpush1.bf16.msra.mxu0 0
    %956 = vmatprep.subr.bf16.mxu0 0
    %957 = vmatpush1.bf16.msra.mxu0 0
    %958 = vmatprep.subr.bf16.mxu0 0
    %959 = vmatpush1.bf16.msra.mxu0 0
    %960 = vmatprep.subr.bf16.mxu0 0
    %961 = vmatpush1.bf16.msra.mxu0 0
    %962 = vmatprep.subr.bf16.mxu0 0
    %963 = vmatpush1.bf16.msra.mxu0 0
    %964 = vmatprep.subr.bf16.mxu0 0
    %965 = vmatpush1.bf16.msra.mxu0 0
    %966 = vmatprep.subr.bf16.mxu0 0
    %967 = vmatpush1.bf16.msra.mxu0 0
    %968 = vmatprep.subr.bf16.mxu0 0
    %969 = vmatpush1.bf16.msra.mxu0 0
    %970 = vmatprep.subr.bf16.mxu0 0
    %971 = vmatpush1.bf16.msra.mxu0 0
    %972 = vmatprep.subr.bf16.mxu0 0
    %973 = vmatpush1.bf16.msra.mxu0 0
    %974 = vmatprep.subr.bf16.mxu0 0
    %975 = vmatpush1.bf16.msra.mxu0 0
    %976 = vmatprep.subr.bf16.mxu0 0
    %977 = vmatpush1.bf16.msra.mxu0 0
    %978 = vmatprep.subr.bf16.mxu0 0
    %979 = vmatpush1.bf16.msra.mxu0 0
    %980 = vmatprep.mubr.bf16.mxu0 0
    %981 = vmatmul.mubr.bf16.gmra.mrb[0].mxu0 %v873
    %v982 = vpop.f32.mrb[0].mxu0
    %v983 = vadd.f32 0.0, %v982
    %v984 = vpop.f32.mrb[0].mxu0
    %v985 = vpop.f32.mrb[0].mxu0
    %v986 = vadd.f32 0.0, %v985
    %v987 = vpop.f32.mrb[0].mxu0
    %988 = vmatprep.mubr.bf16.mxu0 0
    %989 = vmatmul.mubr.bf16.gmra.mrb[0].mxu0 %v876
    %v990 = vpop.f32.mrb[0].mxu0
    %v991 = vadd.f32 0.0, %v990
    %v992 = vpop.f32.mrb[0].mxu0
    %v993 = vpop.f32.mrb[0].mxu0
    %v994 = vadd.f32 0.0, %v993
    %v995 = vpop.f32.mrb[0].mxu0
    %996 = vdwg.mxu0
    %s997 = scalar_lea.vmem %s13, 32
    %v998 = vld [vmem:[%s997] sm:$0xff]
    %v999 = vld [vmem:[%s997 + $0x8] sm:$0xff]
    %v1000 = vld [vmem:[%s997 + $0x10] sm:$0xff]
    %v1001 = vld [vmem:[%s997 + $0x18] sm:$0xff]
    %v1003 = vsel %vm871, %v998, 0
    %v1006 = vsel %vm871, %v999, 0
    %v1009 = vsel %vm871, %v1000, 0
    %v1012 = vsel %vm871, %v1001, 0
    %1014 = vmatprep.subr.mxu0 0.0
    %1015 = vmatpush1.msra.mxu0 %v983
    %1016 = vmatprep.subr.mxu0 0.0
    %1017 = vmatpush1.msra.mxu0 %v986
    %1018 = vmatprep.subr.mxu0 0.0
    %1019 = vmatpush1.msra.mxu0 %v991
    %1020 = vmatprep.subr.mxu0 0.0
    %1021 = vmatpush1.msra.mxu0 %v994
    %1022 = vmatprep.subr.mxu0 0.0
    %1023 = vmatpush1.msra.mxu0 0.0
    %1024 = vmatprep.subr.mxu0 0.0
    %1025 = vmatpush1.msra.mxu0 0.0
    %1026 = vmatprep.subr.mxu0 0.0
    %1027 = vmatpush1.msra.mxu0 0.0
    %1028 = vmatprep.subr.mxu0 0.0
    %1029 = vmatpush1.msra.mxu0 0.0
    %1030 = vmatprep.subr.mxu0 0.0
    %1031 = vmatpush1.msra.mxu0 0.0
    %1032 = vmatprep.subr.mxu0 0.0
    %1033 = vmatpush1.msra.mxu0 0.0
    %1034 = vmatprep.subr.mxu0 0.0
    %1035 = vmatpush1.msra.mxu0 0.0
    %1036 = vmatprep.subr.mxu0 0.0
    %1037 = vmatpush1.msra.mxu0 0.0
    %1038 = vmatprep.subr.mxu0 0.0
    %1039 = vmatpush1.msra.mxu0 0.0
    %1040 = vmatprep.subr.mxu0 0.0
    %1041 = vmatpush1.msra.mxu0 0.0
    %1042 = vmatprep.subr.mxu0 0.0
    %1043 = vmatpush1.msra.mxu0 0.0
    %1044 = vmatprep.subr.mxu0 0.0
    %1045 = vmatpush1.msra.mxu0 0.0
    %1046 = vmatprep.subr.mxu0 0.0
    %1047 = vmatpush1.msra.mxu0 0.0
    %1048 = vmatprep.subr.mxu0 0.0
    %1049 = vmatpush1.msra.mxu0 0.0
    %1050 = vmatprep.subr.mxu0 0.0
    %1051 = vmatpush1.msra.mxu0 0.0
    %1052 = vmatprep.subr.mxu0 0.0
    %1053 = vmatpush1.msra.mxu0 0.0
    %1054 = vmatprep.subr.mxu0 0.0
    %1055 = vmatpush1.msra.mxu0 0.0
    %1056 = vmatprep.subr.mxu0 0.0
    %1057 = vmatpush1.msra.mxu0 0.0
    %1058 = vmatprep.subr.mxu0 0.0
    %1059 = vmatpush1.msra.mxu0 0.0
    %1060 = vmatprep.subr.mxu0 0.0
    %1061 = vmatpush1.msra.mxu0 0.0
    %1062 = vmatprep.subr.mxu0 0.0
    %1063 = vmatpush1.msra.mxu0 0.0
    %1064 = vmatprep.subr.mxu0 0.0
    %1065 = vmatpush1.msra.mxu0 0.0
    %1066 = vmatprep.subr.mxu0 0.0
    %1067 = vmatpush1.msra.mxu0 0.0
    %1068 = vmatprep.subr.mxu0 0.0
    %1069 = vmatpush1.msra.mxu0 0.0
    %1070 = vmatprep.subr.mxu0 0.0
    %1071 = vmatpush1.msra.mxu0 0.0
    %1072 = vmatprep.subr.mxu0 0.0
    %1073 = vmatpush1.msra.mxu0 0.0
    %1074 = vmatprep.subr.mxu0 0.0
    %1075 = vmatpush1.msra.mxu0 0.0
    %1076 = vmatprep.subr.mxu0 0.0
    %1077 = vmatpush1.msra.mxu0 0.0
    %1078 = vmatprep.mubr.f32.mxu0 0.0
    %1079 = vmatmul.mubr.f32.gmra.mrb[0].mxu0 %v1003
    %v1080 = vpop.f32.mrb[0].mxu0
    %v1081 = vadd.f32 0.0, %v1080
    %v1082 = vpop.f32.mrb[0].mxu0
    %1083 = vmatprep.mubr.f32.mxu0 0.0
    %1084 = vmatmul.mubr.f32.gmra.mrb[0].mxu0 %v1006
    %v1085 = vpop.f32.mrb[0].mxu0
    %v1086 = vadd.f32 0.0, %v1085
    %v1087 = vpop.f32.mrb[0].mxu0
    %1088 = vmatprep.mubr.f32.mxu0 0.0
    %1089 = vmatmul.mubr.f32.gmra.mrb[0].mxu0 %v1009
    %v1090 = vpop.f32.mrb[0].mxu0
    %v1091 = vadd.f32 0.0, %v1090
    %v1092 = vpop.f32.mrb[0].mxu0
    %1093 = vmatprep.mubr.f32.mxu0 0.0
    %1094 = vmatmul.mubr.f32.gmra.mrb[0].mxu0 %v1012
    %v1095 = vpop.f32.mrb[0].mxu0
    %v1096 = vadd.f32 0.0, %v1095
    %v1097 = vpop.f32.mrb[0].mxu0
    %1098 = vdwg.mxu0
    %v1100 = vsel %vm871, %v927, 0
    %v1103 = vsel %vm871, %v928, 0
    %v1106 = vsel %vm871, %v929, 0
    %v1109 = vsel %vm871, %v930, 0
    %1111 = vmatprep.subr.mxu0 0.0
    %1112 = vmatpush1.msra.mxu0 %v913
    %1113 = vmatprep.subr.mxu0 0.0
    %1114 = vmatpush1.msra.mxu0 %v916
    %1115 = vmatprep.subr.mxu0 0.0
    %1116 = vmatpush1.msra.mxu0 %v921
    %1117 = vmatprep.subr.mxu0 0.0
    %1118 = vmatpush1.msra.mxu0 %v924
    %1119 = vmatprep.subr.mxu0 0.0
    %1120 = vmatpush1.msra.mxu0 0.0
    %1121 = vmatprep.subr.mxu0 0.0
    %1122 = vmatpush1.msra.mxu0 0.0
    %1123 = vmatprep.subr.mxu0 0.0
    %1124 = vmatpush1.msra.mxu0 0.0
    %1125 = vmatprep.subr.mxu0 0.0
    %1126 = vmatpush1.msra.mxu0 0.0
    %1127 = vmatprep.subr.mxu0 0.0
    %1128 = vmatpush1.msra.mxu0 0.0
    %1129 = vmatprep.subr.mxu0 0.0
    %1130 = vmatpush1.msra.mxu0 0.0
    %1131 = vmatprep.subr.mxu0 0.0
    %1132 = vmatpush1.msra.mxu0 0.0
    %1133 = vmatprep.subr.mxu0 0.0
    %1134 = vmatpush1.msra.mxu0 0.0
    %1135 = vmatprep.subr.mxu0 0.0
    %1136 = vmatpush1.msra.mxu0 0.0
    %1137 = vmatprep.subr.mxu0 0.0
    %1138 = vmatpush1.msra.mxu0 0.0
    %1139 = vmatprep.subr.mxu0 0.0
    %1140 = vmatpush1.msra.mxu0 0.0
    %1141 = vmatprep.subr.mxu0 0.0
    %1142 = vmatpush1.msra.mxu0 0.0
    %1143 = vmatprep.subr.mxu0 0.0
    %1144 = vmatpush1.msra.mxu0 0.0
    %1145 = vmatprep.subr.mxu0 0.0
    %1146 = vmatpush1.msra.mxu0 0.0
    %1147 = vmatprep.subr.mxu0 0.0
    %1148 = vmatpush1.msra.mxu0 0.0
    %1149 = vmatprep.subr.mxu0 0.0
    %1150 = vmatpush1.msra.mxu0 0.0
    %1151 = vmatprep.subr.mxu0 0.0
    %1152 = vmatpush1.msra.mxu0 0.0
    %1153 = vmatprep.subr.mxu0 0.0
    %1154 = vmatpush1.msra.mxu0 0.0
    %1155 = vmatprep.subr.mxu0 0.0
    %1156 = vmatpush1.msra.mxu0 0.0
    %1157 = vmatprep.subr.mxu0 0.0
    %1158 = vmatpush1.msra.mxu0 0.0
    %1159 = vmatprep.subr.mxu0 0.0
    %1160 = vmatpush1.msra.mxu0 0.0
    %1161 = vmatprep.subr.mxu0 0.0
    %1162 = vmatpush1.msra.mxu0 0.0
    %1163 = vmatprep.subr.mxu0 0.0
    %1164 = vmatpush1.msra.mxu0 0.0
    %1165 = vmatprep.subr.mxu0 0.0
    %1166 = vmatpush1.msra.mxu0 0.0
    %1167 = vmatprep.subr.mxu0 0.0
    %1168 = vmatpush1.msra.mxu0 0.0
    %1169 = vmatprep.subr.mxu0 0.0
    %1170 = vmatpush1.msra.mxu0 0.0
    %1171 = vmatprep.subr.mxu0 0.0
    %1172 = vmatpush1.msra.mxu0 0.0
    %1173 = vmatprep.subr.mxu0 0.0
    %1174 = vmatpush1.msra.mxu0 0.0
    %1175 = vmatprep.mubr.f32.mxu0 0.0
    %1176 = vmatmul.mubr.f32.gmra.mrb[0].mxu0 %v1100
    %v1177 = vpop.f32.mrb[0].mxu0
    %v1178 = vadd.f32 %v1081, %v1177
    %v1179 = vpop.f32.mrb[0].mxu0
    %1180 = vmatprep.mubr.f32.mxu0 0.0
    %1181 = vmatmul.mubr.f32.gmra.mrb[0].mxu0 %v1103
    %v1182 = vpop.f32.mrb[0].mxu0
    %v1183 = vadd.f32 %v1086, %v1182
    %v1184 = vpop.f32.mrb[0].mxu0
    %1185 = vmatprep.mubr.f32.mxu0 0.0
    %1186 = vmatmul.mubr.f32.gmra.mrb[0].mxu0 %v1106
    %v1187 = vpop.f32.mrb[0].mxu0
    %v1188 = vadd.f32 %v1091, %v1187
    %v1189 = vpop.f32.mrb[0].mxu0
    %1190 = vmatprep.mubr.f32.mxu0 0.0
    %1191 = vmatmul.mubr.f32.gmra.mrb[0].mxu0 %v1109
    %v1192 = vpop.f32.mrb[0].mxu0
    %v1193 = vadd.f32 %v1096, %v1192
    %v1194 = vpop.f32.mrb[0].mxu0
    %1195 = vdwg.mxu0
    %s1196 = scalar_lea.vmem %s21, 32
    %v1197 = vld [vmem:[%s1196] sm:$0xf]
    %v1198 = vld [vmem:[%s1196 + $0x4] sm:$0xf]
    %v1199 = vld [vmem:[%s1196 + $0x8] sm:$0xf]
    %v1200 = vld [vmem:[%s1196 + $0xc] sm:$0xf]
    %v1205 = vunpack.c.l.b16 %v1197
    %v1206 = vunpack.c.l.b16 %v1198
    %v1207 = vunpack.c.l.b16 %v1199
    %v1208 = vunpack.c.l.b16 %v1200
    %v1209 = vpack.c.b16 %v1206, %v1205
    %v1210 = vpack.c.b16 %v1208, %v1207
    %1213 = vmatprep.subr.bf16.mxu0 0
    %1214 = vmatpush1.bf16.msra.mxu0 %v1209
    %1215 = vmatprep.subr.bf16.mxu0 0
    %1216 = vmatpush1.bf16.msra.mxu0 %v1210
    %1217 = vmatprep.subr.bf16.mxu0 0
    %1218 = vmatpush1.bf16.msra.mxu0 0
    %1219 = vmatprep.subr.bf16.mxu0 0
    %1220 = vmatpush1.bf16.msra.mxu0 0
    %1221 = vmatprep.subr.bf16.mxu0 0
    %1222 = vmatpush1.bf16.msra.mxu0 0
    %1223 = vmatprep.subr.bf16.mxu0 0
    %1224 = vmatpush1.bf16.msra.mxu0 0
    %1225 = vmatprep.subr.bf16.mxu0 0
    %1226 = vmatpush1.bf16.msra.mxu0 0
    %1227 = vmatprep.subr.bf16.mxu0 0
    %1228 = vmatpush1.bf16.msra.mxu0 0
    %1229 = vmatprep.subr.bf16.mxu0 0
    %1230 = vmatpush1.bf16.msra.mxu0 0
    %1231 = vmatprep.subr.bf16.mxu0 0
    %1232 = vmatpush1.bf16.msra.mxu0 0
    %1233 = vmatprep.subr.bf16.mxu0 0
    %1234 = vmatpush1.bf16.msra.mxu0 0
    %1235 = vmatprep.subr.bf16.mxu0 0
    %1236 = vmatpush1.bf16.msra.mxu0 0
    %1237 = vmatprep.subr.bf16.mxu0 0
    %1238 = vmatpush1.bf16.msra.mxu0 0
    %1239 = vmatprep.subr.bf16.mxu0 0
    %1240 = vmatpush1.bf16.msra.mxu0 0
    %1241 = vmatprep.subr.bf16.mxu0 0
    %1242 = vmatpush1.bf16.msra.mxu0 0
    %1243 = vmatprep.subr.bf16.mxu0 0
    %1244 = vmatpush1.bf16.msra.mxu0 0
    %1245 = vmatprep.mubr.bf16.mxu0 0
    %1246 = vmatmul.mubr.bf16.gmra.mrb[0].mxu0 %v873
    %v1247 = vpop.f32.mrb[0].mxu0
    %v1248 = vadd.f32 0.0, %v1247
    %v1249 = vpop.f32.mrb[0].mxu0
    %v1250 = vpop.f32.mrb[0].mxu0
    %v1251 = vadd.f32 0.0, %v1250
    %v1252 = vpop.f32.mrb[0].mxu0
    %1253 = vmatprep.mubr.bf16.mxu0 0
    %1254 = vmatmul.mubr.bf16.gmra.mrb[0].mxu0 %v876
    %v1255 = vpop.f32.mrb[0].mxu0
    %v1256 = vadd.f32 0.0, %v1255
    %v1257 = vpop.f32.mrb[0].mxu0
    %v1258 = vpop.f32.mrb[0].mxu0
    %v1259 = vadd.f32 0.0, %v1258
    %v1260 = vpop.f32.mrb[0].mxu0
    %1261 = vdwg.mxu0
    %s1262 = scalar_lea.vmem %s13, 64
    %v1263 = vld [vmem:[%s1262] sm:$0xff]
    %v1264 = vld [vmem:[%s1262 + $0x8] sm:$0xff]
    %v1265 = vld [vmem:[%s1262 + $0x10] sm:$0xff]
    %v1266 = vld [vmem:[%s1262 + $0x18] sm:$0xff]
    %v1268 = vsel %vm871, %v1263, 0
    %v1271 = vsel %vm871, %v1264, 0
    %v1274 = vsel %vm871, %v1265, 0
    %v1277 = vsel %vm871, %v1266, 0
    %1279 = vmatprep.subr.mxu0 0.0
    %1280 = vmatpush1.msra.mxu0 %v1248
    %1281 = vmatprep.subr.mxu0 0.0
    %1282 = vmatpush1.msra.mxu0 %v1251
    %1283 = vmatprep.subr.mxu0 0.0
    %1284 = vmatpush1.msra.mxu0 %v1256
    %1285 = vmatprep.subr.mxu0 0.0
    %1286 = vmatpush1.msra.mxu0 %v1259
    %1287 = vmatprep.subr.mxu0 0.0
    %1288 = vmatpush1.msra.mxu0 0.0
    %1289 = vmatprep.subr.mxu0 0.0
    %1290 = vmatpush1.msra.mxu0 0.0
    %1291 = vmatprep.subr.mxu0 0.0
    %1292 = vmatpush1.msra.mxu0 0.0
    %1293 = vmatprep.subr.mxu0 0.0
    %1294 = vmatpush1.msra.mxu0 0.0
    %1295 = vmatprep.subr.mxu0 0.0
    %1296 = vmatpush1.msra.mxu0 0.0
    %1297 = vmatprep.subr.mxu0 0.0
    %1298 = vmatpush1.msra.mxu0 0.0
    %1299 = vmatprep.subr.mxu0 0.0
    %1300 = vmatpush1.msra.mxu0 0.0
    %1301 = vmatprep.subr.mxu0 0.0
    %1302 = vmatpush1.msra.mxu0 0.0
    %1303 = vmatprep.subr.mxu0 0.0
    %1304 = vmatpush1.msra.mxu0 0.0
    %1305 = vmatprep.subr.mxu0 0.0
    %1306 = vmatpush1.msra.mxu0 0.0
    %1307 = vmatprep.subr.mxu0 0.0
    %1308 = vmatpush1.msra.mxu0 0.0
    %1309 = vmatprep.subr.mxu0 0.0
    %1310 = vmatpush1.msra.mxu0 0.0
    %1311 = vmatprep.subr.mxu0 0.0
    %1312 = vmatpush1.msra.mxu0 0.0
    %1313 = vmatprep.subr.mxu0 0.0
    %1314 = vmatpush1.msra.mxu0 0.0
    %1315 = vmatprep.subr.mxu0 0.0
    %1316 = vmatpush1.msra.mxu0 0.0
    %1317 = vmatprep.subr.mxu0 0.0
    %1318 = vmatpush1.msra.mxu0 0.0
    %1319 = vmatprep.subr.mxu0 0.0
    %1320 = vmatpush1.msra.mxu0 0.0
    %1321 = vmatprep.subr.mxu0 0.0
    %1322 = vmatpush1.msra.mxu0 0.0
    %1323 = vmatprep.subr.mxu0 0.0
    %1324 = vmatpush1.msra.mxu0 0.0
    %1325 = vmatprep.subr.mxu0 0.0
    %1326 = vmatpush1.msra.mxu0 0.0
    %1327 = vmatprep.subr.mxu0 0.0
    %1328 = vmatpush1.msra.mxu0 0.0
    %1329 = vmatprep.subr.mxu0 0.0
    %1330 = vmatpush1.msra.mxu0 0.0
    %1331 = vmatprep.subr.mxu0 0.0
    %1332 = vmatpush1.msra.mxu0 0.0
    %1333 = vmatprep.subr.mxu0 0.0
    %1334 = vmatpush1.msra.mxu0 0.0
    %1335 = vmatprep.subr.mxu0 0.0
    %1336 = vmatpush1.msra.mxu0 0.0
    %1337 = vmatprep.subr.mxu0 0.0
    %1338 = vmatpush1.msra.mxu0 0.0
    %1339 = vmatprep.subr.mxu0 0.0
    %1340 = vmatpush1.msra.mxu0 0.0
    %1341 = vmatprep.subr.mxu0 0.0
    %1342 = vmatpush1.msra.mxu0 0.0
    %1343 = vmatprep.mubr.f32.mxu0 0.0
    %1344 = vmatmul.mubr.f32.gmra.mrb[0].mxu0 %v1268
    %v1345 = vpop.f32.mrb[0].mxu0
    %v1346 = vadd.f32 0.0, %v1345
    %v1347 = vpop.f32.mrb[0].mxu0
    %1348 = vmatprep.mubr.f32.mxu0 0.0
    %1349 = vmatmul.mubr.f32.gmra.mrb[0].mxu0 %v1271
    %v1350 = vpop.f32.mrb[0].mxu0
    %v1351 = vadd.f32 0.0, %v1350
    %v1352 = vpop.f32.mrb[0].mxu0
    %1353 = vmatprep.mubr.f32.mxu0 0.0
    %1354 = vmatmul.mubr.f32.gmra.mrb[0].mxu0 %v1274
    %v1355 = vpop.f32.mrb[0].mxu0
    %v1356 = vadd.f32 0.0, %v1355
    %v1357 = vpop.f32.mrb[0].mxu0
    %1358 = vmatprep.mubr.f32.mxu0 0.0
    %1359 = vmatmul.mubr.f32.gmra.mrb[0].mxu0 %v1277
    %v1360 = vpop.f32.mrb[0].mxu0
    %v1361 = vadd.f32 0.0, %v1360
    %v1362 = vpop.f32.mrb[0].mxu0
    %1363 = vdwg.mxu0
    %v1364 = vadd.f32 %v1178, %v1346
    %v1365 = vadd.f32 %v1183, %v1351
    %v1366 = vadd.f32 %v1188, %v1356
    %v1367 = vadd.f32 %v1193, %v1361
    %s1368 = scalar_lea.vmem %s21, 48
    %v1369 = vld [vmem:[%s1368] sm:$0xf]
    %v1370 = vld [vmem:[%s1368 + $0x4] sm:$0xf]
    %v1371 = vld [vmem:[%s1368 + $0x8] sm:$0xf]
    %v1372 = vld [vmem:[%s1368 + $0xc] sm:$0xf]
    %v1377 = vunpack.c.l.b16 %v1369
    %v1378 = vunpack.c.l.b16 %v1370
    %v1379 = vunpack.c.l.b16 %v1371
    %v1380 = vunpack.c.l.b16 %v1372
    %v1381 = vpack.c.b16 %v1378, %v1377
    %v1382 = vpack.c.b16 %v1380, %v1379
    %1385 = vmatprep.subr.bf16.mxu0 0
    %1386 = vmatpush1.bf16.msra.mxu0 %v1381
    %1387 = vmatprep.subr.bf16.mxu0 0
    %1388 = vmatpush1.bf16.msra.mxu0 %v1382
    %1389 = vmatprep.subr.bf16.mxu0 0
    %1390 = vmatpush1.bf16.msra.mxu0 0
    %1391 = vmatprep.subr.bf16.mxu0 0
    %1392 = vmatpush1.bf16.msra.mxu0 0
    %1393 = vmatprep.subr.bf16.mxu0 0
    %1394 = vmatpush1.bf16.msra.mxu0 0
    %1395 = vmatprep.subr.bf16.mxu0 0
    %1396 = vmatpush1.bf16.msra.mxu0 0
    %1397 = vmatprep.subr.bf16.mxu0 0
    %1398 = vmatpush1.bf16.msra.mxu0 0
    %1399 = vmatprep.subr.bf16.mxu0 0
    %1400 = vmatpush1.bf16.msra.mxu0 0
    %1401 = vmatprep.subr.bf16.mxu0 0
    %1402 = vmatpush1.bf16.msra.mxu0 0
    %1403 = vmatprep.subr.bf16.mxu0 0
    %1404 = vmatpush1.bf16.msra.mxu0 0
    %1405 = vmatprep.subr.bf16.mxu0 0
    %1406 = vmatpush1.bf16.msra.mxu0 0
    %1407 = vmatprep.subr.bf16.mxu0 0
    %1408 = vmatpush1.bf16.msra.mxu0 0
    %1409 = vmatprep.subr.bf16.mxu0 0
    %1410 = vmatpush1.bf16.msra.mxu0 0
    %1411 = vmatprep.subr.bf16.mxu0 0
    %1412 = vmatpush1.bf16.msra.mxu0 0
    %1413 = vmatprep.subr.bf16.mxu0 0
    %1414 = vmatpush1.bf16.msra.mxu0 0
    %1415 = vmatprep.subr.bf16.mxu0 0
    %1416 = vmatpush1.bf16.msra.mxu0 0
    %1417 = vmatprep.mubr.bf16.mxu0 0
    %1418 = vmatmul.mubr.bf16.gmra.mrb[0].mxu0 %v873
    %v1419 = vpop.f32.mrb[0].mxu0
    %v1420 = vadd.f32 0.0, %v1419
    %v1421 = vpop.f32.mrb[0].mxu0
    %v1422 = vpop.f32.mrb[0].mxu0
    %v1423 = vadd.f32 0.0, %v1422
    %v1424 = vpop.f32.mrb[0].mxu0
    %1425 = vmatprep.mubr.bf16.mxu0 0
    %1426 = vmatmul.mubr.bf16.gmra.mrb[0].mxu0 %v876
    %v1427 = vpop.f32.mrb[0].mxu0
    %v1428 = vadd.f32 0.0, %v1427
    %v1429 = vpop.f32.mrb[0].mxu0
    %v1430 = vpop.f32.mrb[0].mxu0
    %v1431 = vadd.f32 0.0, %v1430
    %v1432 = vpop.f32.mrb[0].mxu0
    %1433 = vdwg.mxu0
    %s1434 = scalar_lea.vmem %s13, 96
    %v1435 = vld [vmem:[%s1434] sm:$0xff]
    %v1436 = vld [vmem:[%s1434 + $0x8] sm:$0xff]
    %v1437 = vld [vmem:[%s1434 + $0x10] sm:$0xff]
    %v1438 = vld [vmem:[%s1434 + $0x18] sm:$0xff]
    %v1440 = vsel %vm871, %v1435, 0
    %v1443 = vsel %vm871, %v1436, 0
    %v1446 = vsel %vm871, %v1437, 0
    %v1449 = vsel %vm871, %v1438, 0
    %1451 = vmatprep.subr.mxu0 0.0
    %1452 = vmatpush1.msra.mxu0 %v1420
    %1453 = vmatprep.subr.mxu0 0.0
    %1454 = vmatpush1.msra.mxu0 %v1423
    %1455 = vmatprep.subr.mxu0 0.0
    %1456 = vmatpush1.msra.mxu0 %v1428
    %1457 = vmatprep.subr.mxu0 0.0
    %1458 = vmatpush1.msra.mxu0 %v1431
    %1459 = vmatprep.subr.mxu0 0.0
    %1460 = vmatpush1.msra.mxu0 0.0
    %1461 = vmatprep.subr.mxu0 0.0
    %1462 = vmatpush1.msra.mxu0 0.0
    %1463 = vmatprep.subr.mxu0 0.0
    %1464 = vmatpush1.msra.mxu0 0.0
    %1465 = vmatprep.subr.mxu0 0.0
    %1466 = vmatpush1.msra.mxu0 0.0
    %1467 = vmatprep.subr.mxu0 0.0
    %1468 = vmatpush1.msra.mxu0 0.0
    %1469 = vmatprep.subr.mxu0 0.0
    %1470 = vmatpush1.msra.mxu0 0.0
    %1471 = vmatprep.subr.mxu0 0.0
    %1472 = vmatpush1.msra.mxu0 0.0
    %1473 = vmatprep.subr.mxu0 0.0
    %1474 = vmatpush1.msra.mxu0 0.0
    %1475 = vmatprep.subr.mxu0 0.0
    %1476 = vmatpush1.msra.mxu0 0.0
    %1477 = vmatprep.subr.mxu0 0.0
    %1478 = vmatpush1.msra.mxu0 0.0
    %1479 = vmatprep.subr.mxu0 0.0
    %1480 = vmatpush1.msra.mxu0 0.0
    %1481 = vmatprep.subr.mxu0 0.0
    %1482 = vmatpush1.msra.mxu0 0.0
    %1483 = vmatprep.subr.mxu0 0.0
    %1484 = vmatpush1.msra.mxu0 0.0
    %1485 = vmatprep.subr.mxu0 0.0
    %1486 = vmatpush1.msra.mxu0 0.0
    %1487 = vmatprep.subr.mxu0 0.0
    %1488 = vmatpush1.msra.mxu0 0.0
    %1489 = vmatprep.subr.mxu0 0.0
    %1490 = vmatpush1.msra.mxu0 0.0
    %1491 = vmatprep.subr.mxu0 0.0
    %1492 = vmatpush1.msra.mxu0 0.0
    %1493 = vmatprep.subr.mxu0 0.0
    %1494 = vmatpush1.msra.mxu0 0.0
    %1495 = vmatprep.subr.mxu0 0.0
    %1496 = vmatpush1.msra.mxu0 0.0
    %1497 = vmatprep.subr.mxu0 0.0
    %1498 = vmatpush1.msra.mxu0 0.0
    %1499 = vmatprep.subr.mxu0 0.0
    %1500 = vmatpush1.msra.mxu0 0.0
    %1501 = vmatprep.subr.mxu0 0.0
    %1502 = vmatpush1.msra.mxu0 0.0
    %1503 = vmatprep.subr.mxu0 0.0
    %1504 = vmatpush1.msra.mxu0 0.0
    %1505 = vmatprep.subr.mxu0 0.0
    %1506 = vmatpush1.msra.mxu0 0.0
    %1507 = vmatprep.subr.mxu0 0.0
    %1508 = vmatpush1.msra.mxu0 0.0
    %1509 = vmatprep.subr.mxu0 0.0
    %1510 = vmatpush1.msra.mxu0 0.0
    %1511 = vmatprep.subr.mxu0 0.0
    %1512 = vmatpush1.msra.mxu0 0.0
    %1513 = vmatprep.subr.mxu0 0.0
    %1514 = vmatpush1.msra.mxu0 0.0
    %1515 = vmatprep.mubr.f32.mxu0 0.0
    %1516 = vmatmul.mubr.f32.gmra.mrb[0].mxu0 %v1440
    %v1517 = vpop.f32.mrb[0].mxu0
    %v1518 = vadd.f32 0.0, %v1517
    %v1519 = vpop.f32.mrb[0].mxu0
    %1520 = vmatprep.mubr.f32.mxu0 0.0
    %1521 = vmatmul.mubr.f32.gmra.mrb[0].mxu0 %v1443
    %v1522 = vpop.f32.mrb[0].mxu0
    %v1523 = vadd.f32 0.0, %v1522
    %v1524 = vpop.f32.mrb[0].mxu0
    %1525 = vmatprep.mubr.f32.mxu0 0.0
    %1526 = vmatmul.mubr.f32.gmra.mrb[0].mxu0 %v1446
    %v1527 = vpop.f32.mrb[0].mxu0
    %v1528 = vadd.f32 0.0, %v1527
    %v1529 = vpop.f32.mrb[0].mxu0
    %1530 = vmatprep.mubr.f32.mxu0 0.0
    %1531 = vmatmul.mubr.f32.gmra.mrb[0].mxu0 %v1449
    %v1532 = vpop.f32.mrb[0].mxu0
    %v1533 = vadd.f32 0.0, %v1532
    %v1534 = vpop.f32.mrb[0].mxu0
    %1535 = vdwg.mxu0
    %v1536 = vadd.f32 %v1364, %v1518
    %v1537 = vadd.f32 %v1365, %v1523
    %v1538 = vadd.f32 %v1366, %v1528
    %v1539 = vadd.f32 %v1367, %v1533
    %v1540 = vld [vmem:[#allocation4] sm:$0x1]
    %v1542 = vlaneseq
    %v1543 = vshrl.u32 %v1542, 7
    %v1544 = vsub.s32 0, %v1543
    %v1545 = vrot.slane %v1540, %v1544
    %v1547 = vadd.f32 %v1536, %v1545
    %v1548 = vadd.f32 %v1537, %v1545
    %v1549 = vadd.f32 %v1538, %v1545
    %v1550 = vadd.f32 %v1539, %v1545
    %v1551 = vmax.f32 %v1547, 0.0
    %v1552 = vmax.f32 %v1548, 0.0
    %v1553 = vmax.f32 %v1549, 0.0
    %v1554 = vmax.f32 %v1550, 0.0
    %v1555 = vpack.c.bf16 %v1552, %v1551
    %v1556 = vpack.c.bf16 %v1554, %v1553
    %v1557 = vld [vmem:[%s25] sm:$0xf]
    %v1558 = vld [vmem:[%s25 + $0x4] sm:$0xf]
    %v1559 = vld [vmem:[%s25 + $0x8] sm:$0xf]
    %v1560 = vld [vmem:[%s25 + $0xc] sm:$0xf]
    %v1565 = vunpack.c.l.b16 %v1557
    %v1566 = vunpack.c.l.b16 %v1558
    %v1567 = vunpack.c.l.b16 %v1559
    %v1568 = vunpack.c.l.b16 %v1560
    %v1569 = vpack.c.b16 %v1566, %v1565
    %v1570 = vpack.c.b16 %v1568, %v1567
    %v1574 = vsel %vm871, %v1555, 0
    %v1577 = vsel %vm871, %v1556, 0
    %1579 = vmatprep.subr.bf16.mxu0 0
    %1580 = vmatpush1.bf16.msra.mxu0 %v1569
    %1581 = vmatprep.subr.bf16.mxu0 0
    %1582 = vmatpush1.bf16.msra.mxu0 %v1570
    %1583 = vmatprep.subr.bf16.mxu0 0
    %1584 = vmatpush1.bf16.msra.mxu0 0
    %1585 = vmatprep.subr.bf16.mxu0 0
    %1586 = vmatpush1.bf16.msra.mxu0 0
    %1587 = vmatprep.subr.bf16.mxu0 0
    %1588 = vmatpush1.bf16.msra.mxu0 0
    %1589 = vmatprep.subr.bf16.mxu0 0
    %1590 = vmatpush1.bf16.msra.mxu0 0
    %1591 = vmatprep.subr.bf16.mxu0 0
    %1592 = vmatpush1.bf16.msra.mxu0 0
    %1593 = vmatprep.subr.bf16.mxu0 0
    %1594 = vmatpush1.bf16.msra.mxu0 0
    %1595 = vmatprep.subr.bf16.mxu0 0
    %1596 = vmatpush1.bf16.msra.mxu0 0
    %1597 = vmatprep.subr.bf16.mxu0 0
    %1598 = vmatpush1.bf16.msra.mxu0 0
    %1599 = vmatprep.subr.bf16.mxu0 0
    %1600 = vmatpush1.bf16.msra.mxu0 0
    %1601 = vmatprep.subr.bf16.mxu0 0
    %1602 = vmatpush1.bf16.msra.mxu0 0
    %1603 = vmatprep.subr.bf16.mxu0 0
    %1604 = vmatpush1.bf16.msra.mxu0 0
    %1605 = vmatprep.subr.bf16.mxu0 0
    %1606 = vmatpush1.bf16.msra.mxu0 0
    %1607 = vmatprep.subr.bf16.mxu0 0
    %1608 = vmatpush1.bf16.msra.mxu0 0
    %1609 = vmatprep.subr.bf16.mxu0 0
    %1610 = vmatpush1.bf16.msra.mxu0 0
    %1611 = vmatprep.mubr.bf16.mxu0 0
    %1612 = vmatmul.mubr.bf16.gmra.mrb[0].mxu0 %v1574
    %v1613 = vpop.f32.mrb[0].mxu0
    %v1614 = vadd.f32 0.0, %v1613
    %v1615 = vpop.f32.mrb[0].mxu0
    %v1616 = vpop.f32.mrb[0].mxu0
    %v1617 = vadd.f32 0.0, %v1616
    %v1618 = vpop.f32.mrb[0].mxu0
    %1619 = vmatprep.mubr.bf16.mxu0 0
    %1620 = vmatmul.mubr.bf16.gmra.mrb[0].mxu0 %v1577
    %v1621 = vpop.f32.mrb[0].mxu0
    %v1622 = vadd.f32 0.0, %v1621
    %v1623 = vpop.f32.mrb[0].mxu0
    %v1624 = vpop.f32.mrb[0].mxu0
    %v1625 = vadd.f32 0.0, %v1624
    %v1626 = vpop.f32.mrb[0].mxu0
    %1627 = vdwg.mxu0
    %s1628 = scalar_lea.vmem %s25, 16
    %v1629 = vld [vmem:[%s1628] sm:$0xf]
    %v1630 = vld [vmem:[%s1628 + $0x4] sm:$0xf]
    %v1631 = vld [vmem:[%s1628 + $0x8] sm:$0xf]
    %v1632 = vld [vmem:[%s1628 + $0xc] sm:$0xf]
    %v1637 = vunpack.c.l.b16 %v1629
    %v1638 = vunpack.c.l.b16 %v1630
    %v1639 = vunpack.c.l.b16 %v1631
    %v1640 = vunpack.c.l.b16 %v1632
    %v1641 = vpack.c.b16 %v1638, %v1637
    %v1642 = vpack.c.b16 %v1640, %v1639
    %1645 = vmatprep.subr.bf16.mxu0 0
    %1646 = vmatpush1.bf16.msra.mxu0 %v1641
    %1647 = vmatprep.subr.bf16.mxu0 0
    %1648 = vmatpush1.bf16.msra.mxu0 %v1642
    %1649 = vmatprep.subr.bf16.mxu0 0
    %1650 = vmatpush1.bf16.msra.mxu0 0
    %1651 = vmatprep.subr.bf16.mxu0 0
    %1652 = vmatpush1.bf16.msra.mxu0 0
    %1653 = vmatprep.subr.bf16.mxu0 0
    %1654 = vmatpush1.bf16.msra.mxu0 0
    %1655 = vmatprep.subr.bf16.mxu0 0
    %1656 = vmatpush1.bf16.msra.mxu0 0
    %1657 = vmatprep.subr.bf16.mxu0 0
    %1658 = vmatpush1.bf16.msra.mxu0 0
    %1659 = vmatprep.subr.bf16.mxu0 0
    %1660 = vmatpush1.bf16.msra.mxu0 0
    %1661 = vmatprep.subr.bf16.mxu0 0
    %1662 = vmatpush1.bf16.msra.mxu0 0
    %1663 = vmatprep.subr.bf16.mxu0 0
    %1664 = vmatpush1.bf16.msra.mxu0 0
    %1665 = vmatprep.subr.bf16.mxu0 0
    %1666 = vmatpush1.bf16.msra.mxu0 0
    %1667 = vmatprep.subr.bf16.mxu0 0
    %1668 = vmatpush1.bf16.msra.mxu0 0
    %1669 = vmatprep.subr.bf16.mxu0 0
    %1670 = vmatpush1.bf16.msra.mxu0 0
    %1671 = vmatprep.subr.bf16.mxu0 0
    %1672 = vmatpush1.bf16.msra.mxu0 0
    %1673 = vmatprep.subr.bf16.mxu0 0
    %1674 = vmatpush1.bf16.msra.mxu0 0
    %1675 = vmatprep.subr.bf16.mxu0 0
    %1676 = vmatpush1.bf16.msra.mxu0 0
    %1677 = vmatprep.mubr.bf16.mxu0 0
    %1678 = vmatmul.mubr.bf16.gmra.mrb[0].mxu0 %v1574
    %v1679 = vpop.f32.mrb[0].mxu0
    %v1680 = vadd.f32 0.0, %v1679
    %v1681 = vpop.f32.mrb[0].mxu0
    %v1682 = vpop.f32.mrb[0].mxu0
    %v1683 = vadd.f32 0.0, %v1682
    %v1684 = vpop.f32.mrb[0].mxu0
    %1685 = vmatprep.mubr.bf16.mxu0 0
    %1686 = vmatmul.mubr.bf16.gmra.mrb[0].mxu0 %v1577
    %v1687 = vpop.f32.mrb[0].mxu0
    %v1688 = vadd.f32 0.0, %v1687
    %v1689 = vpop.f32.mrb[0].mxu0
    %v1690 = vpop.f32.mrb[0].mxu0
    %v1691 = vadd.f32 0.0, %v1690
    %v1692 = vpop.f32.mrb[0].mxu0
    %1693 = vdwg.mxu0
    %1694 = vmatprep.subr.mxu0 0.0
    %1695 = vmatpush1.msra.mxu0 %v1680
    %1696 = vmatprep.subr.mxu0 0.0
    %1697 = vmatpush1.msra.mxu0 %v1683
    %1698 = vmatprep.subr.mxu0 0.0
    %1699 = vmatpush1.msra.mxu0 %v1688
    %1700 = vmatprep.subr.mxu0 0.0
    %1701 = vmatpush1.msra.mxu0 %v1691
    %1702 = vmatprep.subr.mxu0 0.0
    %1703 = vmatpush1.msra.mxu0 0.0
    %1704 = vmatprep.subr.mxu0 0.0
    %1705 = vmatpush1.msra.mxu0 0.0
    %1706 = vmatprep.subr.mxu0 0.0
    %1707 = vmatpush1.msra.mxu0 0.0
    %1708 = vmatprep.subr.mxu0 0.0
    %1709 = vmatpush1.msra.mxu0 0.0
    %1710 = vmatprep.subr.mxu0 0.0
    %1711 = vmatpush1.msra.mxu0 0.0
    %1712 = vmatprep.subr.mxu0 0.0
    %1713 = vmatpush1.msra.mxu0 0.0
    %1714 = vmatprep.subr.mxu0 0.0
    %1715 = vmatpush1.msra.mxu0 0.0
    %1716 = vmatprep.subr.mxu0 0.0
    %1717 = vmatpush1.msra.mxu0 0.0
    %1718 = vmatprep.subr.mxu0 0.0
    %1719 = vmatpush1.msra.mxu0 0.0
    %1720 = vmatprep.subr.mxu0 0.0
    %1721 = vmatpush1.msra.mxu0 0.0
    %1722 = vmatprep.subr.mxu0 0.0
    %1723 = vmatpush1.msra.mxu0 0.0
    %1724 = vmatprep.subr.mxu0 0.0
    %1725 = vmatpush1.msra.mxu0 0.0
    %1726 = vmatprep.subr.mxu0 0.0
    %1727 = vmatpush1.msra.mxu0 0.0
    %1728 = vmatprep.subr.mxu0 0.0
    %1729 = vmatpush1.msra.mxu0 0.0
    %1730 = vmatprep.subr.mxu0 0.0
    %1731 = vmatpush1.msra.mxu0 0.0
    %1732 = vmatprep.subr.mxu0 0.0
    %1733 = vmatpush1.msra.mxu0 0.0
    %1734 = vmatprep.subr.mxu0 0.0
    %1735 = vmatpush1.msra.mxu0 0.0
    %1736 = vmatprep.subr.mxu0 0.0
    %1737 = vmatpush1.msra.mxu0 0.0
    %1738 = vmatprep.subr.mxu0 0.0
    %1739 = vmatpush1.msra.mxu0 0.0
    %1740 = vmatprep.subr.mxu0 0.0
    %1741 = vmatpush1.msra.mxu0 0.0
    %1742 = vmatprep.subr.mxu0 0.0
    %1743 = vmatpush1.msra.mxu0 0.0
    %1744 = vmatprep.subr.mxu0 0.0
    %1745 = vmatpush1.msra.mxu0 0.0
    %1746 = vmatprep.subr.mxu0 0.0
    %1747 = vmatpush1.msra.mxu0 0.0
    %1748 = vmatprep.subr.mxu0 0.0
    %1749 = vmatpush1.msra.mxu0 0.0
    %1750 = vmatprep.subr.mxu0 0.0
    %1751 = vmatpush1.msra.mxu0 0.0
    %1752 = vmatprep.subr.mxu0 0.0
    %1753 = vmatpush1.msra.mxu0 0.0
    %1754 = vmatprep.subr.mxu0 0.0
    %1755 = vmatpush1.msra.mxu0 0.0
    %1756 = vmatprep.subr.mxu0 0.0
    %1757 = vmatpush1.msra.mxu0 0.0
    %1758 = vmatprep.mubr.f32.mxu0 0.0
    %1759 = vmatmul.mubr.f32.gmra.mrb[0].mxu0 %v1003
    %v1760 = vpop.f32.mrb[0].mxu0
    %v1761 = vadd.f32 0.0, %v1760
    %v1762 = vpop.f32.mrb[0].mxu0
    %1763 = vmatprep.mubr.f32.mxu0 0.0
    %1764 = vmatmul.mubr.f32.gmra.mrb[0].mxu0 %v1006
    %v1765 = vpop.f32.mrb[0].mxu0
    %v1766 = vadd.f32 0.0, %v1765
    %v1767 = vpop.f32.mrb[0].mxu0
    %1768 = vmatprep.mubr.f32.mxu0 0.0
    %1769 = vmatmul.mubr.f32.gmra.mrb[0].mxu0 %v1009
    %v1770 = vpop.f32.mrb[0].mxu0
    %v1771 = vadd.f32 0.0, %v1770
    %v1772 = vpop.f32.mrb[0].mxu0
    %1773 = vmatprep.mubr.f32.mxu0 0.0
    %1774 = vmatmul.mubr.f32.gmra.mrb[0].mxu0 %v1012
    %v1775 = vpop.f32.mrb[0].mxu0
    %v1776 = vadd.f32 0.0, %v1775
    %v1777 = vpop.f32.mrb[0].mxu0
    %1778 = vdwg.mxu0
    %1779 = vmatprep.subr.mxu0 0.0
    %1780 = vmatpush1.msra.mxu0 %v1614
    %1781 = vmatprep.subr.mxu0 0.0
    %1782 = vmatpush1.msra.mxu0 %v1617
    %1783 = vmatprep.subr.mxu0 0.0
    %1784 = vmatpush1.msra.mxu0 %v1622
    %1785 = vmatprep.subr.mxu0 0.0
    %1786 = vmatpush1.msra.mxu0 %v1625
    %1787 = vmatprep.subr.mxu0 0.0
    %1788 = vmatpush1.msra.mxu0 0.0
    %1789 = vmatprep.subr.mxu0 0.0
    %1790 = vmatpush1.msra.mxu0 0.0
    %1791 = vmatprep.subr.mxu0 0.0
    %1792 = vmatpush1.msra.mxu0 0.0
    %1793 = vmatprep.subr.mxu0 0.0
    %1794 = vmatpush1.msra.mxu0 0.0
    %1795 = vmatprep.subr.mxu0 0.0
    %1796 = vmatpush1.msra.mxu0 0.0
    %1797 = vmatprep.subr.mxu0 0.0
    %1798 = vmatpush1.msra.mxu0 0.0
    %1799 = vmatprep.subr.mxu0 0.0
    %1800 = vmatpush1.msra.mxu0 0.0
    %1801 = vmatprep.subr.mxu0 0.0
    %1802 = vmatpush1.msra.mxu0 0.0
    %1803 = vmatprep.subr.mxu0 0.0
    %1804 = vmatpush1.msra.mxu0 0.0
    %1805 = vmatprep.subr.mxu0 0.0
    %1806 = vmatpush1.msra.mxu0 0.0
    %1807 = vmatprep.subr.mxu0 0.0
    %1808 = vmatpush1.msra.mxu0 0.0
    %1809 = vmatprep.subr.mxu0 0.0
    %1810 = vmatpush1.msra.mxu0 0.0
    %1811 = vmatprep.subr.mxu0 0.0
    %1812 = vmatpush1.msra.mxu0 0.0
    %1813 = vmatprep.subr.mxu0 0.0
    %1814 = vmatpush1.msra.mxu0 0.0
    %1815 = vmatprep.subr.mxu0 0.0
    %1816 = vmatpush1.msra.mxu0 0.0
    %1817 = vmatprep.subr.mxu0 0.0
    %1818 = vmatpush1.msra.mxu0 0.0
    %1819 = vmatprep.subr.mxu0 0.0
    %1820 = vmatpush1.msra.mxu0 0.0
    %1821 = vmatprep.subr.mxu0 0.0
    %1822 = vmatpush1.msra.mxu0 0.0
    %1823 = vmatprep.subr.mxu0 0.0
    %1824 = vmatpush1.msra.mxu0 0.0
    %1825 = vmatprep.subr.mxu0 0.0
    %1826 = vmatpush1.msra.mxu0 0.0
    %1827 = vmatprep.subr.mxu0 0.0
    %1828 = vmatpush1.msra.mxu0 0.0
    %1829 = vmatprep.subr.mxu0 0.0
    %1830 = vmatpush1.msra.mxu0 0.0
    %1831 = vmatprep.subr.mxu0 0.0
    %1832 = vmatpush1.msra.mxu0 0.0
    %1833 = vmatprep.subr.mxu0 0.0
    %1834 = vmatpush1.msra.mxu0 0.0
    %1835 = vmatprep.subr.mxu0 0.0
    %1836 = vmatpush1.msra.mxu0 0.0
    %1837 = vmatprep.subr.mxu0 0.0
    %1838 = vmatpush1.msra.mxu0 0.0
    %1839 = vmatprep.subr.mxu0 0.0
    %1840 = vmatpush1.msra.mxu0 0.0
    %1841 = vmatprep.subr.mxu0 0.0
    %1842 = vmatpush1.msra.mxu0 0.0
    %1843 = vmatprep.mubr.f32.mxu0 0.0
    %1844 = vmatmul.mubr.f32.gmra.mrb[0].mxu0 %v1100
    %v1845 = vpop.f32.mrb[0].mxu0
    %v1846 = vadd.f32 %v1761, %v1845
    %v1847 = vpop.f32.mrb[0].mxu0
    %1848 = vmatprep.mubr.f32.mxu0 0.0
    %1849 = vmatmul.mubr.f32.gmra.mrb[0].mxu0 %v1103
    %v1850 = vpop.f32.mrb[0].mxu0
    %v1851 = vadd.f32 %v1766, %v1850
    %v1852 = vpop.f32.mrb[0].mxu0
    %1853 = vmatprep.mubr.f32.mxu0 0.0
    %1854 = vmatmul.mubr.f32.gmra.mrb[0].mxu0 %v1106
    %v1855 = vpop.f32.mrb[0].mxu0
    %v1856 = vadd.f32 %v1771, %v1855
    %v1857 = vpop.f32.mrb[0].mxu0
    %1858 = vmatprep.mubr.f32.mxu0 0.0
    %1859 = vmatmul.mubr.f32.gmra.mrb[0].mxu0 %v1109
    %v1860 = vpop.f32.mrb[0].mxu0
    %v1861 = vadd.f32 %v1776, %v1860
    %v1862 = vpop.f32.mrb[0].mxu0
    %1863 = vdwg.mxu0
    %s1864 = scalar_lea.vmem %s25, 32
    %v1865 = vld [vmem:[%s1864] sm:$0xf]
    %v1866 = vld [vmem:[%s1864 + $0x4] sm:$0xf]
    %v1867 = vld [vmem:[%s1864 + $0x8] sm:$0xf]
    %v1868 = vld [vmem:[%s1864 + $0xc] sm:$0xf]
    %v1873 = vunpack.c.l.b16 %v1865
    %v1874 = vunpack.c.l.b16 %v1866
    %v1875 = vunpack.c.l.b16 %v1867
    %v1876 = vunpack.c.l.b16 %v1868
    %v1877 = vpack.c.b16 %v1874, %v1873
    %v1878 = vpack.c.b16 %v1876, %v1875
    %1881 = vmatprep.subr.bf16.mxu0 0
    %1882 = vmatpush1.bf16.msra.mxu0 %v1877
    %1883 = vmatprep.subr.bf16.mxu0 0
    %1884 = vmatpush1.bf16.msra.mxu0 %v1878
    %1885 = vmatprep.subr.bf16.mxu0 0
    %1886 = vmatpush1.bf16.msra.mxu0 0
    %1887 = vmatprep.subr.bf16.mxu0 0
    %1888 = vmatpush1.bf16.msra.mxu0 0
    %1889 = vmatprep.subr.bf16.mxu0 0
    %1890 = vmatpush1.bf16.msra.mxu0 0
    %1891 = vmatprep.subr.bf16.mxu0 0
    %1892 = vmatpush1.bf16.msra.mxu0 0
    %1893 = vmatprep.subr.bf16.mxu0 0
    %1894 = vmatpush1.bf16.msra.mxu0 0
    %1895 = vmatprep.subr.bf16.mxu0 0
    %1896 = vmatpush1.bf16.msra.mxu0 0
    %1897 = vmatprep.subr.bf16.mxu0 0
    %1898 = vmatpush1.bf16.msra.mxu0 0
    %1899 = vmatprep.subr.bf16.mxu0 0
    %1900 = vmatpush1.bf16.msra.mxu0 0
    %1901 = vmatprep.subr.bf16.mxu0 0
    %1902 = vmatpush1.bf16.msra.mxu0 0
    %1903 = vmatprep.subr.bf16.mxu0 0
    %1904 = vmatpush1.bf16.msra.mxu0 0
    %1905 = vmatprep.subr.bf16.mxu0 0
    %1906 = vmatpush1.bf16.msra.mxu0 0
    %1907 = vmatprep.subr.bf16.mxu0 0
    %1908 = vmatpush1.bf16.msra.mxu0 0
    %1909 = vmatprep.subr.bf16.mxu0 0
    %1910 = vmatpush1.bf16.msra.mxu0 0
    %1911 = vmatprep.subr.bf16.mxu0 0
    %1912 = vmatpush1.bf16.msra.mxu0 0
    %1913 = vmatprep.mubr.bf16.mxu0 0
    %1914 = vmatmul.mubr.bf16.gmra.mrb[0].mxu0 %v1574
    %v1915 = vpop.f32.mrb[0].mxu0
    %v1916 = vadd.f32 0.0, %v1915
    %v1917 = vpop.f32.mrb[0].mxu0
    %v1918 = vpop.f32.mrb[0].mxu0
    %v1919 = vadd.f32 0.0, %v1918
    %v1920 = vpop.f32.mrb[0].mxu0
    %1921 = vmatprep.mubr.bf16.mxu0 0
    %1922 = vmatmul.mubr.bf16.gmra.mrb[0].mxu0 %v1577
    %v1923 = vpop.f32.mrb[0].mxu0
    %v1924 = vadd.f32 0.0, %v1923
    %v1925 = vpop.f32.mrb[0].mxu0
    %v1926 = vpop.f32.mrb[0].mxu0
    %v1927 = vadd.f32 0.0, %v1926
    %v1928 = vpop.f32.mrb[0].mxu0
    %1929 = vdwg.mxu0
    %1930 = vmatprep.subr.mxu0 0.0
    %1931 = vmatpush1.msra.mxu0 %v1916
    %1932 = vmatprep.subr.mxu0 0.0
    %1933 = vmatpush1.msra.mxu0 %v1919
    %1934 = vmatprep.subr.mxu0 0.0
    %1935 = vmatpush1.msra.mxu0 %v1924
    %1936 = vmatprep.subr.mxu0 0.0
    %1937 = vmatpush1.msra.mxu0 %v1927
    %1938 = vmatprep.subr.mxu0 0.0
    %1939 = vmatpush1.msra.mxu0 0.0
    %1940 = vmatprep.subr.mxu0 0.0
    %1941 = vmatpush1.msra.mxu0 0.0
    %1942 = vmatprep.subr.mxu0 0.0
    %1943 = vmatpush1.msra.mxu0 0.0
    %1944 = vmatprep.subr.mxu0 0.0
    %1945 = vmatpush1.msra.mxu0 0.0
    %1946 = vmatprep.subr.mxu0 0.0
    %1947 = vmatpush1.msra.mxu0 0.0
    %1948 = vmatprep.subr.mxu0 0.0
    %1949 = vmatpush1.msra.mxu0 0.0
    %1950 = vmatprep.subr.mxu0 0.0
    %1951 = vmatpush1.msra.mxu0 0.0
    %1952 = vmatprep.subr.mxu0 0.0
    %1953 = vmatpush1.msra.mxu0 0.0
    %1954 = vmatprep.subr.mxu0 0.0
    %1955 = vmatpush1.msra.mxu0 0.0
    %1956 = vmatprep.subr.mxu0 0.0
    %1957 = vmatpush1.msra.mxu0 0.0
    %1958 = vmatprep.subr.mxu0 0.0
    %1959 = vmatpush1.msra.mxu0 0.0
    %1960 = vmatprep.subr.mxu0 0.0
    %1961 = vmatpush1.msra.mxu0 0.0
    %1962 = vmatprep.subr.mxu0 0.0
    %1963 = vmatpush1.msra.mxu0 0.0
    %1964 = vmatprep.subr.mxu0 0.0
    %1965 = vmatpush1.msra.mxu0 0.0
    %1966 = vmatprep.subr.mxu0 0.0
    %1967 = vmatpush1.msra.mxu0 0.0
    %1968 = vmatprep.subr.mxu0 0.0
    %1969 = vmatpush1.msra.mxu0 0.0
    %1970 = vmatprep.subr.mxu0 0.0
    %1971 = vmatpush1.msra.mxu0 0.0
    %1972 = vmatprep.subr.mxu0 0.0
    %1973 = vmatpush1.msra.mxu0 0.0
    %1974 = vmatprep.subr.mxu0 0.0
    %1975 = vmatpush1.msra.mxu0 0.0
    %1976 = vmatprep.subr.mxu0 0.0
    %1977 = vmatpush1.msra.mxu0 0.0
    %1978 = vmatprep.subr.mxu0 0.0
    %1979 = vmatpush1.msra.mxu0 0.0
    %1980 = vmatprep.subr.mxu0 0.0
    %1981 = vmatpush1.msra.mxu0 0.0
    %1982 = vmatprep.subr.mxu0 0.0
    %1983 = vmatpush1.msra.mxu0 0.0
    %1984 = vmatprep.subr.mxu0 0.0
    %1985 = vmatpush1.msra.mxu0 0.0
    %1986 = vmatprep.subr.mxu0 0.0
    %1987 = vmatpush1.msra.mxu0 0.0
    %1988 = vmatprep.subr.mxu0 0.0
    %1989 = vmatpush1.msra.mxu0 0.0
    %1990 = vmatprep.subr.mxu0 0.0
    %1991 = vmatpush1.msra.mxu0 0.0
    %1992 = vmatprep.subr.mxu0 0.0
    %1993 = vmatpush1.msra.mxu0 0.0
    %1994 = vmatprep.mubr.f32.mxu0 0.0
    %1995 = vmatmul.mubr.f32.gmra.mrb[0].mxu0 %v1268
    %v1996 = vpop.f32.mrb[0].mxu0
    %v1997 = vadd.f32 0.0, %v1996
    %v1998 = vpop.f32.mrb[0].mxu0
    %1999 = vmatprep.mubr.f32.mxu0 0.0
    %2000 = vmatmul.mubr.f32.gmra.mrb[0].mxu0 %v1271
    %v2001 = vpop.f32.mrb[0].mxu0
    %v2002 = vadd.f32 0.0, %v2001
    %v2003 = vpop.f32.mrb[0].mxu0
    %2004 = vmatprep.mubr.f32.mxu0 0.0
    %2005 = vmatmul.mubr.f32.gmra.mrb[0].mxu0 %v1274
    %v2006 = vpop.f32.mrb[0].mxu0
    %v2007 = vadd.f32 0.0, %v2006
    %v2008 = vpop.f32.mrb[0].mxu0
    %2009 = vmatprep.mubr.f32.mxu0 0.0
    %2010 = vmatmul.mubr.f32.gmra.mrb[0].mxu0 %v1277
    %v2011 = vpop.f32.mrb[0].mxu0
    %v2012 = vadd.f32 0.0, %v2011
    %v2013 = vpop.f32.mrb[0].mxu0
    %2014 = vdwg.mxu0
    %v2015 = vadd.f32 %v1846, %v1997
    %v2016 = vadd.f32 %v1851, %v2002
    %v2017 = vadd.f32 %v1856, %v2007
    %v2018 = vadd.f32 %v1861, %v2012
    %s2019 = scalar_lea.vmem %s25, 48
    %v2020 = vld [vmem:[%s2019] sm:$0xf]
    %v2021 = vld [vmem:[%s2019 + $0x4] sm:$0xf]
    %v2022 = vld [vmem:[%s2019 + $0x8] sm:$0xf]
    %v2023 = vld [vmem:[%s2019 + $0xc] sm:$0xf]
    %v2028 = vunpack.c.l.b16 %v2020
    %v2029 = vunpack.c.l.b16 %v2021
    %v2030 = vunpack.c.l.b16 %v2022
    %v2031 = vunpack.c.l.b16 %v2023
    %v2032 = vpack.c.b16 %v2029, %v2028
    %v2033 = vpack.c.b16 %v2031, %v2030
    %2036 = vmatprep.subr.bf16.mxu0 0
    %2037 = vmatpush1.bf16.msra.mxu0 %v2032
    %2038 = vmatprep.subr.bf16.mxu0 0
    %2039 = vmatpush1.bf16.msra.mxu0 %v2033
    %2040 = vmatprep.subr.bf16.mxu0 0
    %2041 = vmatpush1.bf16.msra.mxu0 0
    %2042 = vmatprep.subr.bf16.mxu0 0
    %2043 = vmatpush1.bf16.msra.mxu0 0
    %2044 = vmatprep.subr.bf16.mxu0 0
    %2045 = vmatpush1.bf16.msra.mxu0 0
    %2046 = vmatprep.subr.bf16.mxu0 0
    %2047 = vmatpush1.bf16.msra.mxu0 0
    %2048 = vmatprep.subr.bf16.mxu0 0
    %2049 = vmatpush1.bf16.msra.mxu0 0
    %2050 = vmatprep.subr.bf16.mxu0 0
    %2051 = vmatpush1.bf16.msra.mxu0 0
    %2052 = vmatprep.subr.bf16.mxu0 0
    %2053 = vmatpush1.bf16.msra.mxu0 0
    %2054 = vmatprep.subr.bf16.mxu0 0
    %2055 = vmatpush1.bf16.msra.mxu0 0
    %2056 = vmatprep.subr.bf16.mxu0 0
    %2057 = vmatpush1.bf16.msra.mxu0 0
    %2058 = vmatprep.subr.bf16.mxu0 0
    %2059 = vmatpush1.bf16.msra.mxu0 0
    %2060 = vmatprep.subr.bf16.mxu0 0
    %2061 = vmatpush1.bf16.msra.mxu0 0
    %2062 = vmatprep.subr.bf16.mxu0 0
    %2063 = vmatpush1.bf16.msra.mxu0 0
    %2064 = vmatprep.subr.bf16.mxu0 0
    %2065 = vmatpush1.bf16.msra.mxu0 0
    %2066 = vmatprep.subr.bf16.mxu0 0
    %2067 = vmatpush1.bf16.msra.mxu0 0
    %2068 = vmatprep.mubr.bf16.mxu0 0
    %2069 = vmatmul.mubr.bf16.gmra.mrb[0].mxu0 %v1574
    %v2070 = vpop.f32.mrb[0].mxu0
    %v2071 = vadd.f32 0.0, %v2070
    %v2072 = vpop.f32.mrb[0].mxu0
    %v2073 = vpop.f32.mrb[0].mxu0
    %v2074 = vadd.f32 0.0, %v2073
    %v2075 = vpop.f32.mrb[0].mxu0
    %2076 = vmatprep.mubr.bf16.mxu0 0
    %2077 = vmatmul.mubr.bf16.gmra.mrb[0].mxu0 %v1577
    %v2078 = vpop.f32.mrb[0].mxu0
    %v2079 = vadd.f32 0.0, %v2078
    %v2080 = vpop.f32.mrb[0].mxu0
    %v2081 = vpop.f32.mrb[0].mxu0
    %v2082 = vadd.f32 0.0, %v2081
    %v2083 = vpop.f32.mrb[0].mxu0
    %2084 = vdwg.mxu0
    %2085 = vmatprep.subr.mxu0 0.0
    %2086 = vmatpush1.msra.mxu0 %v2071
    %2087 = vmatprep.subr.mxu0 0.0
    %2088 = vmatpush1.msra.mxu0 %v2074
    %2089 = vmatprep.subr.mxu0 0.0
    %2090 = vmatpush1.msra.mxu0 %v2079
    %2091 = vmatprep.subr.mxu0 0.0
    %2092 = vmatpush1.msra.mxu0 %v2082
    %2093 = vmatprep.subr.mxu0 0.0
    %2094 = vmatpush1.msra.mxu0 0.0
    %2095 = vmatprep.subr.mxu0 0.0
    %2096 = vmatpush1.msra.mxu0 0.0
    %2097 = vmatprep.subr.mxu0 0.0
    %2098 = vmatpush1.msra.mxu0 0.0
    %2099 = vmatprep.subr.mxu0 0.0
    %2100 = vmatpush1.msra.mxu0 0.0
    %2101 = vmatprep.subr.mxu0 0.0
    %2102 = vmatpush1.msra.mxu0 0.0
    %2103 = vmatprep.subr.mxu0 0.0
    %2104 = vmatpush1.msra.mxu0 0.0
    %2105 = vmatprep.subr.mxu0 0.0
    %2106 = vmatpush1.msra.mxu0 0.0
    %2107 = vmatprep.subr.mxu0 0.0
    %2108 = vmatpush1.msra.mxu0 0.0
    %2109 = vmatprep.subr.mxu0 0.0
    %2110 = vmatpush1.msra.mxu0 0.0
    %2111 = vmatprep.subr.mxu0 0.0
    %2112 = vmatpush1.msra.mxu0 0.0
    %2113 = vmatprep.subr.mxu0 0.0
    %2114 = vmatpush1.msra.mxu0 0.0
    %2115 = vmatprep.subr.mxu0 0.0
    %2116 = vmatpush1.msra.mxu0 0.0
    %2117 = vmatprep.subr.mxu0 0.0
    %2118 = vmatpush1.msra.mxu0 0.0
    %2119 = vmatprep.subr.mxu0 0.0
    %2120 = vmatpush1.msra.mxu0 0.0
    %2121 = vmatprep.subr.mxu0 0.0
    %2122 = vmatpush1.msra.mxu0 0.0
    %2123 = vmatprep.subr.mxu0 0.0
    %2124 = vmatpush1.msra.mxu0 0.0
    %2125 = vmatprep.subr.mxu0 0.0
    %2126 = vmatpush1.msra.mxu0 0.0
    %2127 = vmatprep.subr.mxu0 0.0
    %2128 = vmatpush1.msra.mxu0 0.0
    %2129 = vmatprep.subr.mxu0 0.0
    %2130 = vmatpush1.msra.mxu0 0.0
    %2131 = vmatprep.subr.mxu0 0.0
    %2132 = vmatpush1.msra.mxu0 0.0
    %2133 = vmatprep.subr.mxu0 0.0
    %2134 = vmatpush1.msra.mxu0 0.0
    %2135 = vmatprep.subr.mxu0 0.0
    %2136 = vmatpush1.msra.mxu0 0.0
    %2137 = vmatprep.subr.mxu0 0.0
    %2138 = vmatpush1.msra.mxu0 0.0
    %2139 = vmatprep.subr.mxu0 0.0
    %2140 = vmatpush1.msra.mxu0 0.0
    %2141 = vmatprep.subr.mxu0 0.0
    %2142 = vmatpush1.msra.mxu0 0.0
    %2143 = vmatprep.subr.mxu0 0.0
    %2144 = vmatpush1.msra.mxu0 0.0
    %2145 = vmatprep.subr.mxu0 0.0
    %2146 = vmatpush1.msra.mxu0 0.0
    %2147 = vmatprep.subr.mxu0 0.0
    %2148 = vmatpush1.msra.mxu0 0.0
    %2149 = vmatprep.mubr.f32.mxu0 0.0
    %2150 = vmatmul.mubr.f32.gmra.mrb[0].mxu0 %v1440
    %v2151 = vpop.f32.mrb[0].mxu0
    %v2152 = vadd.f32 0.0, %v2151
    %v2153 = vpop.f32.mrb[0].mxu0
    %2154 = vmatprep.mubr.f32.mxu0 0.0
    %2155 = vmatmul.mubr.f32.gmra.mrb[0].mxu0 %v1443
    %v2156 = vpop.f32.mrb[0].mxu0
    %v2157 = vadd.f32 0.0, %v2156
    %v2158 = vpop.f32.mrb[0].mxu0
    %2159 = vmatprep.mubr.f32.mxu0 0.0
    %2160 = vmatmul.mubr.f32.gmra.mrb[0].mxu0 %v1446
    %v2161 = vpop.f32.mrb[0].mxu0
    %v2162 = vadd.f32 0.0, %v2161
    %v2163 = vpop.f32.mrb[0].mxu0
    %2164 = vmatprep.mubr.f32.mxu0 0.0
    %2165 = vmatmul.mubr.f32.gmra.mrb[0].mxu0 %v1449
    %v2166 = vpop.f32.mrb[0].mxu0
    %v2167 = vadd.f32 0.0, %v2166
    %v2168 = vpop.f32.mrb[0].mxu0
    %2169 = vdwg.mxu0
    %v2170 = vadd.f32 %v2015, %v2152
    %v2171 = vadd.f32 %v2016, %v2157
    %v2172 = vadd.f32 %v2017, %v2162
    %v2173 = vadd.f32 %v2018, %v2167
    %v2174 = vld [vmem:[#allocation6] sm:$0x1]
    %v2176 = vlaneseq
    %v2177 = vshrl.u32 %v2176, 7
    %v2178 = vsub.s32 0, %v2177
    %v2179 = vrot.slane %v2174, %v2178
    %v2181 = vadd.f32 %v2170, %v2179
    %v2182 = vadd.f32 %v2171, %v2179
    %v2183 = vadd.f32 %v2172, %v2179
    %v2184 = vadd.f32 %v2173, %v2179
    %v2185 = vld [vmem:[%s29] sm:$0xf]
    %v2186 = vld [vmem:[%s29 + $0x4] sm:$0xf]
    %v2187 = vld [vmem:[%s29 + $0x8] sm:$0xf]
    %v2188 = vld [vmem:[%s29 + $0xc] sm:$0xf]
    %v2193 = vunpack.c.l.b16 %v2185
    %v2194 = vunpack.c.l.b16 %v2186
    %v2195 = vunpack.c.l.b16 %v2187
    %v2196 = vunpack.c.l.b16 %v2188
    %v2197 = vpack.c.b16 %v2194, %v2193
    %v2198 = vpack.c.b16 %v2196, %v2195
    %2201 = vmatprep.subr.bf16.mxu0 0
    %2202 = vmatpush1.bf16.msra.mxu0 %v2197
    %2203 = vmatprep.subr.bf16.mxu0 0
    %2204 = vmatpush1.bf16.msra.mxu0 %v2198
    %2205 = vmatprep.subr.bf16.mxu0 0
    %2206 = vmatpush1.bf16.msra.mxu0 0
    %2207 = vmatprep.subr.bf16.mxu0 0
    %2208 = vmatpush1.bf16.msra.mxu0 0
    %2209 = vmatprep.subr.bf16.mxu0 0
    %2210 = vmatpush1.bf16.msra.mxu0 0
    %2211 = vmatprep.subr.bf16.mxu0 0
    %2212 = vmatpush1.bf16.msra.mxu0 0
    %2213 = vmatprep.subr.bf16.mxu0 0
    %2214 = vmatpush1.bf16.msra.mxu0 0
    %2215 = vmatprep.subr.bf16.mxu0 0
    %2216 = vmatpush1.bf16.msra.mxu0 0
    %2217 = vmatprep.subr.bf16.mxu0 0
    %2218 = vmatpush1.bf16.msra.mxu0 0
    %2219 = vmatprep.subr.bf16.mxu0 0
    %2220 = vmatpush1.bf16.msra.mxu0 0
    %2221 = vmatprep.subr.bf16.mxu0 0
    %2222 = vmatpush1.bf16.msra.mxu0 0
    %2223 = vmatprep.subr.bf16.mxu0 0
    %2224 = vmatpush1.bf16.msra.mxu0 0
    %2225 = vmatprep.subr.bf16.mxu0 0
    %2226 = vmatpush1.bf16.msra.mxu0 0
    %2227 = vmatprep.subr.bf16.mxu0 0
    %2228 = vmatpush1.bf16.msra.mxu0 0
    %2229 = vmatprep.subr.bf16.mxu0 0
    %2230 = vmatpush1.bf16.msra.mxu0 0
    %2231 = vmatprep.subr.bf16.mxu0 0
    %2232 = vmatpush1.bf16.msra.mxu0 0
    %2233 = vmatprep.mubr.bf16.mxu0 0
    %2234 = vmatmul.mubr.bf16.gmra.mrb[0].mxu0 %v1574
    %v2235 = vpop.f32.mrb[0].mxu0
    %v2236 = vadd.f32 0.0, %v2235
    %v2237 = vpop.f32.mrb[0].mxu0
    %v2238 = vpop.f32.mrb[0].mxu0
    %v2239 = vadd.f32 0.0, %v2238
    %v2240 = vpop.f32.mrb[0].mxu0
    %2241 = vmatprep.mubr.bf16.mxu0 0
    %2242 = vmatmul.mubr.bf16.gmra.mrb[0].mxu0 %v1577
    %v2243 = vpop.f32.mrb[0].mxu0
    %v2244 = vadd.f32 0.0, %v2243
    %v2245 = vpop.f32.mrb[0].mxu0
    %v2246 = vpop.f32.mrb[0].mxu0
    %v2247 = vadd.f32 0.0, %v2246
    %v2248 = vpop.f32.mrb[0].mxu0
    %2249 = vdwg.mxu0
    %s2250 = scalar_lea.vmem %s29, 16
    %v2251 = vld [vmem:[%s2250] sm:$0xf]
    %v2252 = vld [vmem:[%s2250 + $0x4] sm:$0xf]
    %v2253 = vld [vmem:[%s2250 + $0x8] sm:$0xf]
    %v2254 = vld [vmem:[%s2250 + $0xc] sm:$0xf]
    %v2259 = vunpack.c.l.b16 %v2251
    %v2260 = vunpack.c.l.b16 %v2252
    %v2261 = vunpack.c.l.b16 %v2253
    %v2262 = vunpack.c.l.b16 %v2254
    %v2263 = vpack.c.b16 %v2260, %v2259
    %v2264 = vpack.c.b16 %v2262, %v2261
    %2267 = vmatprep.subr.bf16.mxu0 0
    %2268 = vmatpush1.bf16.msra.mxu0 %v2263
    %2269 = vmatprep.subr.bf16.mxu0 0
    %2270 = vmatpush1.bf16.msra.mxu0 %v2264
    %2271 = vmatprep.subr.bf16.mxu0 0
    %2272 = vmatpush1.bf16.msra.mxu0 0
    %2273 = vmatprep.subr.bf16.mxu0 0
    %2274 = vmatpush1.bf16.msra.mxu0 0
    %2275 = vmatprep.subr.bf16.mxu0 0
    %2276 = vmatpush1.bf16.msra.mxu0 0
    %2277 = vmatprep.subr.bf16.mxu0 0
    %2278 = vmatpush1.bf16.msra.mxu0 0
    %2279 = vmatprep.subr.bf16.mxu0 0
    %2280 = vmatpush1.bf16.msra.mxu0 0
    %2281 = vmatprep.subr.bf16.mxu0 0
    %2282 = vmatpush1.bf16.msra.mxu0 0
    %2283 = vmatprep.subr.bf16.mxu0 0
    %2284 = vmatpush1.bf16.msra.mxu0 0
    %2285 = vmatprep.subr.bf16.mxu0 0
    %2286 = vmatpush1.bf16.msra.mxu0 0
    %2287 = vmatprep.subr.bf16.mxu0 0
    %2288 = vmatpush1.bf16.msra.mxu0 0
    %2289 = vmatprep.subr.bf16.mxu0 0
    %2290 = vmatpush1.bf16.msra.mxu0 0
    %2291 = vmatprep.subr.bf16.mxu0 0
    %2292 = vmatpush1.bf16.msra.mxu0 0
    %2293 = vmatprep.subr.bf16.mxu0 0
    %2294 = vmatpush1.bf16.msra.mxu0 0
    %2295 = vmatprep.subr.bf16.mxu0 0
    %2296 = vmatpush1.bf16.msra.mxu0 0
    %2297 = vmatprep.subr.bf16.mxu0 0
    %2298 = vmatpush1.bf16.msra.mxu0 0
    %2299 = vmatprep.mubr.bf16.mxu0 0
    %2300 = vmatmul.mubr.bf16.gmra.mrb[0].mxu0 %v1574
    %v2301 = vpop.f32.mrb[0].mxu0
    %v2302 = vadd.f32 0.0, %v2301
    %v2303 = vpop.f32.mrb[0].mxu0
    %v2304 = vpop.f32.mrb[0].mxu0
    %v2305 = vadd.f32 0.0, %v2304
    %v2306 = vpop.f32.mrb[0].mxu0
    %2307 = vmatprep.mubr.bf16.mxu0 0
    %2308 = vmatmul.mubr.bf16.gmra.mrb[0].mxu0 %v1577
    %v2309 = vpop.f32.mrb[0].mxu0
    %v2310 = vadd.f32 0.0, %v2309
    %v2311 = vpop.f32.mrb[0].mxu0
    %v2312 = vpop.f32.mrb[0].mxu0
    %v2313 = vadd.f32 0.0, %v2312
    %v2314 = vpop.f32.mrb[0].mxu0
    %2315 = vdwg.mxu0
    %2316 = vmatprep.subr.mxu0 0.0
    %2317 = vmatpush1.msra.mxu0 %v2302
    %2318 = vmatprep.subr.mxu0 0.0
    %2319 = vmatpush1.msra.mxu0 %v2305
    %2320 = vmatprep.subr.mxu0 0.0
    %2321 = vmatpush1.msra.mxu0 %v2310
    %2322 = vmatprep.subr.mxu0 0.0
    %2323 = vmatpush1.msra.mxu0 %v2313
    %2324 = vmatprep.subr.mxu0 0.0
    %2325 = vmatpush1.msra.mxu0 0.0
    %2326 = vmatprep.subr.mxu0 0.0
    %2327 = vmatpush1.msra.mxu0 0.0
    %2328 = vmatprep.subr.mxu0 0.0
    %2329 = vmatpush1.msra.mxu0 0.0
    %2330 = vmatprep.subr.mxu0 0.0
    %2331 = vmatpush1.msra.mxu0 0.0
    %2332 = vmatprep.subr.mxu0 0.0
    %2333 = vmatpush1.msra.mxu0 0.0
    %2334 = vmatprep.subr.mxu0 0.0
    %2335 = vmatpush1.msra.mxu0 0.0
    %2336 = vmatprep.subr.mxu0 0.0
    %2337 = vmatpush1.msra.mxu0 0.0
    %2338 = vmatprep.subr.mxu0 0.0
    %2339 = vmatpush1.msra.mxu0 0.0
    %2340 = vmatprep.subr.mxu0 0.0
    %2341 = vmatpush1.msra.mxu0 0.0
    %2342 = vmatprep.subr.mxu0 0.0
    %2343 = vmatpush1.msra.mxu0 0.0
    %2344 = vmatprep.subr.mxu0 0.0
    %2345 = vmatpush1.msra.mxu0 0.0
    %2346 = vmatprep.subr.mxu0 0.0
    %2347 = vmatpush1.msra.mxu0 0.0
    %2348 = vmatprep.subr.mxu0 0.0
    %2349 = vmatpush1.msra.mxu0 0.0
    %2350 = vmatprep.subr.mxu0 0.0
    %2351 = vmatpush1.msra.mxu0 0.0
    %2352 = vmatprep.subr.mxu0 0.0
    %2353 = vmatpush1.msra.mxu0 0.0
    %2354 = vmatprep.subr.mxu0 0.0
    %2355 = vmatpush1.msra.mxu0 0.0
    %2356 = vmatprep.subr.mxu0 0.0
    %2357 = vmatpush1.msra.mxu0 0.0
    %2358 = vmatprep.subr.mxu0 0.0
    %2359 = vmatpush1.msra.mxu0 0.0
    %2360 = vmatprep.subr.mxu0 0.0
    %2361 = vmatpush1.msra.mxu0 0.0
    %2362 = vmatprep.subr.mxu0 0.0
    %2363 = vmatpush1.msra.mxu0 0.0
    %2364 = vmatprep.subr.mxu0 0.0
    %2365 = vmatpush1.msra.mxu0 0.0
    %2366 = vmatprep.subr.mxu0 0.0
    %2367 = vmatpush1.msra.mxu0 0.0
    %2368 = vmatprep.subr.mxu0 0.0
    %2369 = vmatpush1.msra.mxu0 0.0
    %2370 = vmatprep.subr.mxu0 0.0
    %2371 = vmatpush1.msra.mxu0 0.0
    %2372 = vmatprep.subr.mxu0 0.0
    %2373 = vmatpush1.msra.mxu0 0.0
    %2374 = vmatprep.subr.mxu0 0.0
    %2375 = vmatpush1.msra.mxu0 0.0
    %2376 = vmatprep.subr.mxu0 0.0
    %2377 = vmatpush1.msra.mxu0 0.0
    %2378 = vmatprep.subr.mxu0 0.0
    %2379 = vmatpush1.msra.mxu0 0.0
    %2380 = vmatprep.mubr.f32.mxu0 0.0
    %2381 = vmatmul.mubr.f32.gmra.mrb[0].mxu0 %v1003
    %v2382 = vpop.f32.mrb[0].mxu0
    %v2383 = vadd.f32 0.0, %v2382
    %v2384 = vpop.f32.mrb[0].mxu0
    %2385 = vmatprep.mubr.f32.mxu0 0.0
    %2386 = vmatmul.mubr.f32.gmra.mrb[0].mxu0 %v1006
    %v2387 = vpop.f32.mrb[0].mxu0
    %v2388 = vadd.f32 0.0, %v2387
    %v2389 = vpop.f32.mrb[0].mxu0
    %2390 = vmatprep.mubr.f32.mxu0 0.0
    %2391 = vmatmul.mubr.f32.gmra.mrb[0].mxu0 %v1009
    %v2392 = vpop.f32.mrb[0].mxu0
    %v2393 = vadd.f32 0.0, %v2392
    %v2394 = vpop.f32.mrb[0].mxu0
    %2395 = vmatprep.mubr.f32.mxu0 0.0
    %2396 = vmatmul.mubr.f32.gmra.mrb[0].mxu0 %v1012
    %v2397 = vpop.f32.mrb[0].mxu0
    %v2398 = vadd.f32 0.0, %v2397
    %v2399 = vpop.f32.mrb[0].mxu0
    %2400 = vdwg.mxu0
    %2401 = vmatprep.subr.mxu0 0.0
    %2402 = vmatpush1.msra.mxu0 %v2236
    %2403 = vmatprep.subr.mxu0 0.0
    %2404 = vmatpush1.msra.mxu0 %v2239
    %2405 = vmatprep.subr.mxu0 0.0
    %2406 = vmatpush1.msra.mxu0 %v2244
    %2407 = vmatprep.subr.mxu0 0.0
    %2408 = vmatpush1.msra.mxu0 %v2247
    %2409 = vmatprep.subr.mxu0 0.0
    %2410 = vmatpush1.msra.mxu0 0.0
    %2411 = vmatprep.subr.mxu0 0.0
    %2412 = vmatpush1.msra.mxu0 0.0
    %2413 = vmatprep.subr.mxu0 0.0
    %2414 = vmatpush1.msra.mxu0 0.0
    %2415 = vmatprep.subr.mxu0 0.0
    %2416 = vmatpush1.msra.mxu0 0.0
    %2417 = vmatprep.subr.mxu0 0.0
    %2418 = vmatpush1.msra.mxu0 0.0
    %2419 = vmatprep.subr.mxu0 0.0
    %2420 = vmatpush1.msra.mxu0 0.0
    %2421 = vmatprep.subr.mxu0 0.0
    %2422 = vmatpush1.msra.mxu0 0.0
    %2423 = vmatprep.subr.mxu0 0.0
    %2424 = vmatpush1.msra.mxu0 0.0
    %2425 = vmatprep.subr.mxu0 0.0
    %2426 = vmatpush1.msra.mxu0 0.0
    %2427 = vmatprep.subr.mxu0 0.0
    %2428 = vmatpush1.msra.mxu0 0.0
    %2429 = vmatprep.subr.mxu0 0.0
    %2430 = vmatpush1.msra.mxu0 0.0
    %2431 = vmatprep.subr.mxu0 0.0
    %2432 = vmatpush1.msra.mxu0 0.0
    %2433 = vmatprep.subr.mxu0 0.0
    %2434 = vmatpush1.msra.mxu0 0.0
    %2435 = vmatprep.subr.mxu0 0.0
    %2436 = vmatpush1.msra.mxu0 0.0
    %2437 = vmatprep.subr.mxu0 0.0
    %2438 = vmatpush1.msra.mxu0 0.0
    %2439 = vmatprep.subr.mxu0 0.0
    %2440 = vmatpush1.msra.mxu0 0.0
    %2441 = vmatprep.subr.mxu0 0.0
    %2442 = vmatpush1.msra.mxu0 0.0
    %2443 = vmatprep.subr.mxu0 0.0
    %2444 = vmatpush1.msra.mxu0 0.0
    %2445 = vmatprep.subr.mxu0 0.0
    %2446 = vmatpush1.msra.mxu0 0.0
    %2447 = vmatprep.subr.mxu0 0.0
    %2448 = vmatpush1.msra.mxu0 0.0
    %2449 = vmatprep.subr.mxu0 0.0
    %2450 = vmatpush1.msra.mxu0 0.0
    %2451 = vmatprep.subr.mxu0 0.0
    %2452 = vmatpush1.msra.mxu0 0.0
    %2453 = vmatprep.subr.mxu0 0.0
    %2454 = vmatpush1.msra.mxu0 0.0
    %2455 = vmatprep.subr.mxu0 0.0
    %2456 = vmatpush1.msra.mxu0 0.0
    %2457 = vmatprep.subr.mxu0 0.0
    %2458 = vmatpush1.msra.mxu0 0.0
    %2459 = vmatprep.subr.mxu0 0.0
    %2460 = vmatpush1.msra.mxu0 0.0
    %2461 = vmatprep.subr.mxu0 0.0
    %2462 = vmatpush1.msra.mxu0 0.0
    %2463 = vmatprep.subr.mxu0 0.0
    %2464 = vmatpush1.msra.mxu0 0.0
    %2465 = vmatprep.mubr.f32.mxu0 0.0
    %2466 = vmatmul.mubr.f32.gmra.mrb[0].mxu0 %v1100
    %v2467 = vpop.f32.mrb[0].mxu0
    %v2468 = vadd.f32 %v2383, %v2467
    %v2469 = vpop.f32.mrb[0].mxu0
    %2470 = vmatprep.mubr.f32.mxu0 0.0
    %2471 = vmatmul.mubr.f32.gmra.mrb[0].mxu0 %v1103
    %v2472 = vpop.f32.mrb[0].mxu0
    %v2473 = vadd.f32 %v2388, %v2472
    %v2474 = vpop.f32.mrb[0].mxu0
    %2475 = vmatprep.mubr.f32.mxu0 0.0
    %2476 = vmatmul.mubr.f32.gmra.mrb[0].mxu0 %v1106
    %v2477 = vpop.f32.mrb[0].mxu0
    %v2478 = vadd.f32 %v2393, %v2477
    %v2479 = vpop.f32.mrb[0].mxu0
    %2480 = vmatprep.mubr.f32.mxu0 0.0
    %2481 = vmatmul.mubr.f32.gmra.mrb[0].mxu0 %v1109
    %v2482 = vpop.f32.mrb[0].mxu0
    %v2483 = vadd.f32 %v2398, %v2482
    %v2484 = vpop.f32.mrb[0].mxu0
    %2485 = vdwg.mxu0
    %s2486 = scalar_lea.vmem %s29, 32
    %v2487 = vld [vmem:[%s2486] sm:$0xf]
    %v2488 = vld [vmem:[%s2486 + $0x4] sm:$0xf]
    %v2489 = vld [vmem:[%s2486 + $0x8] sm:$0xf]
    %v2490 = vld [vmem:[%s2486 + $0xc] sm:$0xf]
    %v2495 = vunpack.c.l.b16 %v2487
    %v2496 = vunpack.c.l.b16 %v2488
    %v2497 = vunpack.c.l.b16 %v2489
    %v2498 = vunpack.c.l.b16 %v2490
    %v2499 = vpack.c.b16 %v2496, %v2495
    %v2500 = vpack.c.b16 %v2498, %v2497
    %2503 = vmatprep.subr.bf16.mxu0 0
    %2504 = vmatpush1.bf16.msra.mxu0 %v2499
    %2505 = vmatprep.subr.bf16.mxu0 0
    %2506 = vmatpush1.bf16.msra.mxu0 %v2500
    %2507 = vmatprep.subr.bf16.mxu0 0
    %2508 = vmatpush1.bf16.msra.mxu0 0
    %2509 = vmatprep.subr.bf16.mxu0 0
    %2510 = vmatpush1.bf16.msra.mxu0 0
    %2511 = vmatprep.subr.bf16.mxu0 0
    %2512 = vmatpush1.bf16.msra.mxu0 0
    %2513 = vmatprep.subr.bf16.mxu0 0
    %2514 = vmatpush1.bf16.msra.mxu0 0
    %2515 = vmatprep.subr.bf16.mxu0 0
    %2516 = vmatpush1.bf16.msra.mxu0 0
    %2517 = vmatprep.subr.bf16.mxu0 0
    %2518 = vmatpush1.bf16.msra.mxu0 0
    %2519 = vmatprep.subr.bf16.mxu0 0
    %2520 = vmatpush1.bf16.msra.mxu0 0
    %2521 = vmatprep.subr.bf16.mxu0 0
    %2522 = vmatpush1.bf16.msra.mxu0 0
    %2523 = vmatprep.subr.bf16.mxu0 0
    %2524 = vmatpush1.bf16.msra.mxu0 0
    %2525 = vmatprep.subr.bf16.mxu0 0
    %2526 = vmatpush1.bf16.msra.mxu0 0
    %2527 = vmatprep.subr.bf16.mxu0 0
    %2528 = vmatpush1.bf16.msra.mxu0 0
    %2529 = vmatprep.subr.bf16.mxu0 0
    %2530 = vmatpush1.bf16.msra.mxu0 0
    %2531 = vmatprep.subr.bf16.mxu0 0
    %2532 = vmatpush1.bf16.msra.mxu0 0
    %2533 = vmatprep.subr.bf16.mxu0 0
    %2534 = vmatpush1.bf16.msra.mxu0 0
    %2535 = vmatprep.mubr.bf16.mxu0 0
    %2536 = vmatmul.mubr.bf16.gmra.mrb[0].mxu0 %v1574
    %v2537 = vpop.f32.mrb[0].mxu0
    %v2538 = vadd.f32 0.0, %v2537
    %v2539 = vpop.f32.mrb[0].mxu0
    %v2540 = vpop.f32.mrb[0].mxu0
    %v2541 = vadd.f32 0.0, %v2540
    %v2542 = vpop.f32.mrb[0].mxu0
    %2543 = vmatprep.mubr.bf16.mxu0 0
    %2544 = vmatmul.mubr.bf16.gmra.mrb[0].mxu0 %v1577
    %v2545 = vpop.f32.mrb[0].mxu0
    %v2546 = vadd.f32 0.0, %v2545
    %v2547 = vpop.f32.mrb[0].mxu0
    %v2548 = vpop.f32.mrb[0].mxu0
    %v2549 = vadd.f32 0.0, %v2548
    %v2550 = vpop.f32.mrb[0].mxu0
    %2551 = vdwg.mxu0
    %2552 = vmatprep.subr.mxu0 0.0
    %2553 = vmatpush1.msra.mxu0 %v2538
    %2554 = vmatprep.subr.mxu0 0.0
    %2555 = vmatpush1.msra.mxu0 %v2541
    %2556 = vmatprep.subr.mxu0 0.0
    %2557 = vmatpush1.msra.mxu0 %v2546
    %2558 = vmatprep.subr.mxu0 0.0
    %2559 = vmatpush1.msra.mxu0 %v2549
    %2560 = vmatprep.subr.mxu0 0.0
    %2561 = vmatpush1.msra.mxu0 0.0
    %2562 = vmatprep.subr.mxu0 0.0
    %2563 = vmatpush1.msra.mxu0 0.0
    %2564 = vmatprep.subr.mxu0 0.0
    %2565 = vmatpush1.msra.mxu0 0.0
    %2566 = vmatprep.subr.mxu0 0.0
    %2567 = vmatpush1.msra.mxu0 0.0
    %2568 = vmatprep.subr.mxu0 0.0
    %2569 = vmatpush1.msra.mxu0 0.0
    %2570 = vmatprep.subr.mxu0 0.0
    %2571 = vmatpush1.msra.mxu0 0.0
    %2572 = vmatprep.subr.mxu0 0.0
    %2573 = vmatpush1.msra.mxu0 0.0
    %2574 = vmatprep.subr.mxu0 0.0
    %2575 = vmatpush1.msra.mxu0 0.0
    %2576 = vmatprep.subr.mxu0 0.0
    %2577 = vmatpush1.msra.mxu0 0.0
    %2578 = vmatprep.subr.mxu0 0.0
    %2579 = vmatpush1.msra.mxu0 0.0
    %2580 = vmatprep.subr.mxu0 0.0
    %2581 = vmatpush1.msra.mxu0 0.0
    %2582 = vmatprep.subr.mxu0 0.0
    %2583 = vmatpush1.msra.mxu0 0.0
    %2584 = vmatprep.subr.mxu0 0.0
    %2585 = vmatpush1.msra.mxu0 0.0
    %2586 = vmatprep.subr.mxu0 0.0
    %2587 = vmatpush1.msra.mxu0 0.0
    %2588 = vmatprep.subr.mxu0 0.0
    %2589 = vmatpush1.msra.mxu0 0.0
    %2590 = vmatprep.subr.mxu0 0.0
    %2591 = vmatpush1.msra.mxu0 0.0
    %2592 = vmatprep.subr.mxu0 0.0
    %2593 = vmatpush1.msra.mxu0 0.0
    %2594 = vmatprep.subr.mxu0 0.0
    %2595 = vmatpush1.msra.mxu0 0.0
    %2596 = vmatprep.subr.mxu0 0.0
    %2597 = vmatpush1.msra.mxu0 0.0
    %2598 = vmatprep.subr.mxu0 0.0
    %2599 = vmatpush1.msra.mxu0 0.0
    %2600 = vmatprep.subr.mxu0 0.0
    %2601 = vmatpush1.msra.mxu0 0.0
    %2602 = vmatprep.subr.mxu0 0.0
    %2603 = vmatpush1.msra.mxu0 0.0
    %2604 = vmatprep.subr.mxu0 0.0
    %2605 = vmatpush1.msra.mxu0 0.0
    %2606 = vmatprep.subr.mxu0 0.0
    %2607 = vmatpush1.msra.mxu0 0.0
    %2608 = vmatprep.subr.mxu0 0.0
    %2609 = vmatpush1.msra.mxu0 0.0
    %2610 = vmatprep.subr.mxu0 0.0
    %2611 = vmatpush1.msra.mxu0 0.0
    %2612 = vmatprep.subr.mxu0 0.0
    %2613 = vmatpush1.msra.mxu0 0.0
    %2614 = vmatprep.subr.mxu0 0.0
    %2615 = vmatpush1.msra.mxu0 0.0
    %2616 = vmatprep.mubr.f32.mxu0 0.0
    %2617 = vmatmul.mubr.f32.gmra.mrb[0].mxu0 %v1268
    %v2618 = vpop.f32.mrb[0].mxu0
    %v2619 = vadd.f32 0.0, %v2618
    %v2620 = vpop.f32.mrb[0].mxu0
    %2621 = vmatprep.mubr.f32.mxu0 0.0
    %2622 = vmatmul.mubr.f32.gmra.mrb[0].mxu0 %v1271
    %v2623 = vpop.f32.mrb[0].mxu0
    %v2624 = vadd.f32 0.0, %v2623
    %v2625 = vpop.f32.mrb[0].mxu0
    %2626 = vmatprep.mubr.f32.mxu0 0.0
    %2627 = vmatmul.mubr.f32.gmra.mrb[0].mxu0 %v1274
    %v2628 = vpop.f32.mrb[0].mxu0
    %v2629 = vadd.f32 0.0, %v2628
    %v2630 = vpop.f32.mrb[0].mxu0
    %2631 = vmatprep.mubr.f32.mxu0 0.0
    %2632 = vmatmul.mubr.f32.gmra.mrb[0].mxu0 %v1277
    %v2633 = vpop.f32.mrb[0].mxu0
    %v2634 = vadd.f32 0.0, %v2633
    %v2635 = vpop.f32.mrb[0].mxu0
    %2636 = vdwg.mxu0
    %v2637 = vadd.f32 %v2468, %v2619
    %v2638 = vadd.f32 %v2473, %v2624
    %v2639 = vadd.f32 %v2478, %v2629
    %v2640 = vadd.f32 %v2483, %v2634
    %s2641 = scalar_lea.vmem %s29, 48
    %v2642 = vld [vmem:[%s2641] sm:$0xf]
    %v2643 = vld [vmem:[%s2641 + $0x4] sm:$0xf]
    %v2644 = vld [vmem:[%s2641 + $0x8] sm:$0xf]
    %v2645 = vld [vmem:[%s2641 + $0xc] sm:$0xf]
    %v2650 = vunpack.c.l.b16 %v2642
    %v2651 = vunpack.c.l.b16 %v2643
    %v2652 = vunpack.c.l.b16 %v2644
    %v2653 = vunpack.c.l.b16 %v2645
    %v2654 = vpack.c.b16 %v2651, %v2650
    %v2655 = vpack.c.b16 %v2653, %v2652
    %2658 = vmatprep.subr.bf16.mxu0 0
    %2659 = vmatpush1.bf16.msra.mxu0 %v2654
    %2660 = vmatprep.subr.bf16.mxu0 0
    %2661 = vmatpush1.bf16.msra.mxu0 %v2655
    %2662 = vmatprep.subr.bf16.mxu0 0
    %2663 = vmatpush1.bf16.msra.mxu0 0
    %2664 = vmatprep.subr.bf16.mxu0 0
    %2665 = vmatpush1.bf16.msra.mxu0 0
    %2666 = vmatprep.subr.bf16.mxu0 0
    %2667 = vmatpush1.bf16.msra.mxu0 0
    %2668 = vmatprep.subr.bf16.mxu0 0
    %2669 = vmatpush1.bf16.msra.mxu0 0
    %2670 = vmatprep.subr.bf16.mxu0 0
    %2671 = vmatpush1.bf16.msra.mxu0 0
    %2672 = vmatprep.subr.bf16.mxu0 0
    %2673 = vmatpush1.bf16.msra.mxu0 0
    %2674 = vmatprep.subr.bf16.mxu0 0
    %2675 = vmatpush1.bf16.msra.mxu0 0
    %2676 = vmatprep.subr.bf16.mxu0 0
    %2677 = vmatpush1.bf16.msra.mxu0 0
    %2678 = vmatprep.subr.bf16.mxu0 0
    %2679 = vmatpush1.bf16.msra.mxu0 0
    %2680 = vmatprep.subr.bf16.mxu0 0
    %2681 = vmatpush1.bf16.msra.mxu0 0
    %2682 = vmatprep.subr.bf16.mxu0 0
    %2683 = vmatpush1.bf16.msra.mxu0 0
    %2684 = vmatprep.subr.bf16.mxu0 0
    %2685 = vmatpush1.bf16.msra.mxu0 0
    %2686 = vmatprep.subr.bf16.mxu0 0
    %2687 = vmatpush1.bf16.msra.mxu0 0
    %2688 = vmatprep.subr.bf16.mxu0 0
    %2689 = vmatpush1.bf16.msra.mxu0 0
    %2690 = vmatprep.mubr.bf16.mxu0 0
    %2691 = vmatmul.mubr.bf16.gmra.mrb[0].mxu0 %v1574
    %v2692 = vpop.f32.mrb[0].mxu0
    %v2693 = vadd.f32 0.0, %v2692
    %v2694 = vpop.f32.mrb[0].mxu0
    %v2695 = vpop.f32.mrb[0].mxu0
    %v2696 = vadd.f32 0.0, %v2695
    %v2697 = vpop.f32.mrb[0].mxu0
    %2698 = vmatprep.mubr.bf16.mxu0 0
    %2699 = vmatmul.mubr.bf16.gmra.mrb[0].mxu0 %v1577
    %v2700 = vpop.f32.mrb[0].mxu0
    %v2701 = vadd.f32 0.0, %v2700
    %v2702 = vpop.f32.mrb[0].mxu0
    %v2703 = vpop.f32.mrb[0].mxu0
    %v2704 = vadd.f32 0.0, %v2703
    %v2705 = vpop.f32.mrb[0].mxu0
    %2706 = vdwg.mxu0
    %2707 = vmatprep.subr.mxu0 0.0
    %2708 = vmatpush1.msra.mxu0 %v2693
    %2709 = vmatprep.subr.mxu0 0.0
    %2710 = vmatpush1.msra.mxu0 %v2696
    %2711 = vmatprep.subr.mxu0 0.0
    %2712 = vmatpush1.msra.mxu0 %v2701
    %2713 = vmatprep.subr.mxu0 0.0
    %2714 = vmatpush1.msra.mxu0 %v2704
    %2715 = vmatprep.subr.mxu0 0.0
    %2716 = vmatpush1.msra.mxu0 0.0
    %2717 = vmatprep.subr.mxu0 0.0
    %2718 = vmatpush1.msra.mxu0 0.0
    %2719 = vmatprep.subr.mxu0 0.0
    %2720 = vmatpush1.msra.mxu0 0.0
    %2721 = vmatprep.subr.mxu0 0.0
    %2722 = vmatpush1.msra.mxu0 0.0
    %2723 = vmatprep.subr.mxu0 0.0
    %2724 = vmatpush1.msra.mxu0 0.0
    %2725 = vmatprep.subr.mxu0 0.0
    %2726 = vmatpush1.msra.mxu0 0.0
    %2727 = vmatprep.subr.mxu0 0.0
    %2728 = vmatpush1.msra.mxu0 0.0
    %2729 = vmatprep.subr.mxu0 0.0
    %2730 = vmatpush1.msra.mxu0 0.0
    %2731 = vmatprep.subr.mxu0 0.0
    %2732 = vmatpush1.msra.mxu0 0.0
    %2733 = vmatprep.subr.mxu0 0.0
    %2734 = vmatpush1.msra.mxu0 0.0
    %2735 = vmatprep.subr.mxu0 0.0
    %2736 = vmatpush1.msra.mxu0 0.0
    %2737 = vmatprep.subr.mxu0 0.0
    %2738 = vmatpush1.msra.mxu0 0.0
    %2739 = vmatprep.subr.mxu0 0.0
    %2740 = vmatpush1.msra.mxu0 0.0
    %2741 = vmatprep.subr.mxu0 0.0
    %2742 = vmatpush1.msra.mxu0 0.0
    %2743 = vmatprep.subr.mxu0 0.0
    %2744 = vmatpush1.msra.mxu0 0.0
    %2745 = vmatprep.subr.mxu0 0.0
    %2746 = vmatpush1.msra.mxu0 0.0
    %2747 = vmatprep.subr.mxu0 0.0
    %2748 = vmatpush1.msra.mxu0 0.0
    %2749 = vmatprep.subr.mxu0 0.0
    %2750 = vmatpush1.msra.mxu0 0.0
    %2751 = vmatprep.subr.mxu0 0.0
    %2752 = vmatpush1.msra.mxu0 0.0
    %2753 = vmatprep.subr.mxu0 0.0
    %2754 = vmatpush1.msra.mxu0 0.0
    %2755 = vmatprep.subr.mxu0 0.0
    %2756 = vmatpush1.msra.mxu0 0.0
    %2757 = vmatprep.subr.mxu0 0.0
    %2758 = vmatpush1.msra.mxu0 0.0
    %2759 = vmatprep.subr.mxu0 0.0
    %2760 = vmatpush1.msra.mxu0 0.0
    %2761 = vmatprep.subr.mxu0 0.0
    %2762 = vmatpush1.msra.mxu0 0.0
    %2763 = vmatprep.subr.mxu0 0.0
    %2764 = vmatpush1.msra.mxu0 0.0
    %2765 = vmatprep.subr.mxu0 0.0
    %2766 = vmatpush1.msra.mxu0 0.0
    %2767 = vmatprep.subr.mxu0 0.0
    %2768 = vmatpush1.msra.mxu0 0.0
    %2769 = vmatprep.subr.mxu0 0.0
    %2770 = vmatpush1.msra.mxu0 0.0
    %2771 = vmatprep.mubr.f32.mxu0 0.0
    %2772 = vmatmul.mubr.f32.gmra.mrb[0].mxu0 %v1440
    %v2773 = vpop.f32.mrb[0].mxu0
    %v2774 = vadd.f32 0.0, %v2773
    %v2775 = vpop.f32.mrb[0].mxu0
    %2776 = vmatprep.mubr.f32.mxu0 0.0
    %2777 = vmatmul.mubr.f32.gmra.mrb[0].mxu0 %v1443
    %v2778 = vpop.f32.mrb[0].mxu0
    %v2779 = vadd.f32 0.0, %v2778
    %v2780 = vpop.f32.mrb[0].mxu0
    %2781 = vmatprep.mubr.f32.mxu0 0.0
    %2782 = vmatmul.mubr.f32.gmra.mrb[0].mxu0 %v1446
    %v2783 = vpop.f32.mrb[0].mxu0
    %v2784 = vadd.f32 0.0, %v2783
    %v2785 = vpop.f32.mrb[0].mxu0
    %2786 = vmatprep.mubr.f32.mxu0 0.0
    %2787 = vmatmul.mubr.f32.gmra.mrb[0].mxu0 %v1449
    %v2788 = vpop.f32.mrb[0].mxu0
    %v2789 = vadd.f32 0.0, %v2788
    %v2790 = vpop.f32.mrb[0].mxu0
    %2791 = vdwg.mxu0
    %v2792 = vadd.f32 %v2637, %v2774
    %v2793 = vadd.f32 %v2638, %v2779
    %v2794 = vadd.f32 %v2639, %v2784
    %v2795 = vadd.f32 %v2640, %v2789
    %v2796 = vld [vmem:[#allocation7] sm:$0x1]
    %v2798 = vlaneseq
    %v2799 = vshrl.u32 %v2798, 7
    %v2800 = vsub.s32 0, %v2799
    %v2801 = vrot.slane %v2796, %v2800
    %v2803 = vadd.f32 %v2792, %v2801
    %v2804 = vadd.f32 %v2793, %v2801
    %v2805 = vadd.f32 %v2794, %v2801
    %v2806 = vadd.f32 %v2795, %v2801
    %v2807 = vxor.u32 %v2803, 2147483648
    %v2808 = vxor.u32 %v2804, 2147483648
    %v2809 = vxor.u32 %v2805, 2147483648
    %v2810 = vxor.u32 %v2806, 2147483648
    %v2811 = vmul.f32 %v2807, 1.442695
    %v2812 = vpow.pop %v2811
    %v2813 = vmul.f32 %v2808, 1.442695
    %v2814 = vpow.pop %v2813
    %v2815 = vmul.f32 %v2809, 1.442695
    %v2816 = vpow.pop %v2815
    %v2817 = vmul.f32 %v2810, 1.442695
    %v2818 = vpow.pop %v2817
    %v2819 = vadd.f32 %v2812, 1.0
    %v2820 = vadd.f32 %v2814, 1.0
    %v2821 = vadd.f32 %v2816, 1.0
    %v2822 = vadd.f32 %v2818, 1.0
    %v2823 = vrcp.pop %v2819
    %v2824 = vmul.f32 1.0, %v2823
    %v2825 = vrcp.pop %v2820
    %v2826 = vmul.f32 1.0, %v2825
    %v2827 = vrcp.pop %v2821
    %v2828 = vmul.f32 1.0, %v2827
    %v2829 = vrcp.pop %v2822
    %v2830 = vmul.f32 1.0, %v2829
    %v2831 = vmul.f32 %v2181, %v2824
    %v2832 = vmul.f32 %v2182, %v2826
    %v2833 = vmul.f32 %v2183, %v2828
    %v2834 = vmul.f32 %v2184, %v2830
    %v2835 = vpack.c.bf16 %v2832, %v2831
    %v2836 = vpack.c.bf16 %v2834, %v2833
    %s2837 = scalar_lea.vmem %s21, 64
    %v2838 = vld [vmem:[%s2837] sm:$0xf]
    %v2839 = vld [vmem:[%s2837 + $0x4] sm:$0xf]
    %v2840 = vld [vmem:[%s2837 + $0x8] sm:$0xf]
    %v2841 = vld [vmem:[%s2837 + $0xc] sm:$0xf]
    %v2846 = vunpack.c.l.b16 %v2838
    %v2847 = vunpack.c.l.b16 %v2839
    %v2848 = vunpack.c.l.b16 %v2840
    %v2849 = vunpack.c.l.b16 %v2841
    %v2850 = vpack.c.b16 %v2847, %v2846
    %v2851 = vpack.c.b16 %v2849, %v2848
    %v2855 = vsel %vm871, %v2835, 0
    %v2858 = vsel %vm871, %v2836, 0
    %2860 = vmatprep.subr.bf16.mxu0 0
    %2861 = vmatpush1.bf16.msra.mxu0 %v2850
    %2862 = vmatprep.subr.bf16.mxu0 0
    %2863 = vmatpush1.bf16.msra.mxu0 %v2851
    %2864 = vmatprep.subr.bf16.mxu0 0
    %2865 = vmatpush1.bf16.msra.mxu0 0
    %2866 = vmatprep.subr.bf16.mxu0 0
    %2867 = vmatpush1.bf16.msra.mxu0 0
    %2868 = vmatprep.subr.bf16.mxu0 0
    %2869 = vmatpush1.bf16.msra.mxu0 0
    %2870 = vmatprep.subr.bf16.mxu0 0
    %2871 = vmatpush1.bf16.msra.mxu0 0
    %2872 = vmatprep.subr.bf16.mxu0 0
    %2873 = vmatpush1.bf16.msra.mxu0 0
    %2874 = vmatprep.subr.bf16.mxu0 0
    %2875 = vmatpush1.bf16.msra.mxu0 0
    %2876 = vmatprep.subr.bf16.mxu0 0
    %2877 = vmatpush1.bf16.msra.mxu0 0
    %2878 = vmatprep.subr.bf16.mxu0 0
    %2879 = vmatpush1.bf16.msra.mxu0 0
    %2880 = vmatprep.subr.bf16.mxu0 0
    %2881 = vmatpush1.bf16.msra.mxu0 0
    %2882 = vmatprep.subr.bf16.mxu0 0
    %2883 = vmatpush1.bf16.msra.mxu0 0
    %2884 = vmatprep.subr.bf16.mxu0 0
    %2885 = vmatpush1.bf16.msra.mxu0 0
    %2886 = vmatprep.subr.bf16.mxu0 0
    %2887 = vmatpush1.bf16.msra.mxu0 0
    %2888 = vmatprep.subr.bf16.mxu0 0
    %2889 = vmatpush1.bf16.msra.mxu0 0
    %2890 = vmatprep.subr.bf16.mxu0 0
    %2891 = vmatpush1.bf16.msra.mxu0 0
    %2892 = vmatprep.mubr.bf16.mxu0 0
    %2893 = vmatmul.mubr.bf16.gmra.mrb[0].mxu0 %v2855
    %v2894 = vpop.f32.mrb[0].mxu0
    %v2895 = vadd.f32 0.0, %v2894
    %v2896 = vpop.f32.mrb[0].mxu0
    %v2897 = vpop.f32.mrb[0].mxu0
    %v2898 = vadd.f32 0.0, %v2897
    %v2899 = vpop.f32.mrb[0].mxu0
    %2900 = vmatprep.mubr.bf16.mxu0 0
    %2901 = vmatmul.mubr.bf16.gmra.mrb[0].mxu0 %v2858
    %v2902 = vpop.f32.mrb[0].mxu0
    %v2903 = vadd.f32 0.0, %v2902
    %v2904 = vpop.f32.mrb[0].mxu0
    %v2905 = vpop.f32.mrb[0].mxu0
    %v2906 = vadd.f32 0.0, %v2905
    %v2907 = vpop.f32.mrb[0].mxu0
    %2908 = vdwg.mxu0
    %s2909 = scalar_lea.vmem %s21, 80
    %v2910 = vld [vmem:[%s2909] sm:$0xf]
    %v2911 = vld [vmem:[%s2909 + $0x4] sm:$0xf]
    %v2912 = vld [vmem:[%s2909 + $0x8] sm:$0xf]
    %v2913 = vld [vmem:[%s2909 + $0xc] sm:$0xf]
    %v2918 = vunpack.c.l.b16 %v2910
    %v2919 = vunpack.c.l.b16 %v2911
    %v2920 = vunpack.c.l.b16 %v2912
    %v2921 = vunpack.c.l.b16 %v2913
    %v2922 = vpack.c.b16 %v2919, %v2918
    %v2923 = vpack.c.b16 %v2921, %v2920
    %2926 = vmatprep.subr.bf16.mxu0 0
    %2927 = vmatpush1.bf16.msra.mxu0 %v2922
    %2928 = vmatprep.subr.bf16.mxu0 0
    %2929 = vmatpush1.bf16.msra.mxu0 %v2923
    %2930 = vmatprep.subr.bf16.mxu0 0
    %2931 = vmatpush1.bf16.msra.mxu0 0
    %2932 = vmatprep.subr.bf16.mxu0 0
    %2933 = vmatpush1.bf16.msra.mxu0 0
    %2934 = vmatprep.subr.bf16.mxu0 0
    %2935 = vmatpush1.bf16.msra.mxu0 0
    %2936 = vmatprep.subr.bf16.mxu0 0
    %2937 = vmatpush1.bf16.msra.mxu0 0
    %2938 = vmatprep.subr.bf16.mxu0 0
    %2939 = vmatpush1.bf16.msra.mxu0 0
    %2940 = vmatprep.subr.bf16.mxu0 0
    %2941 = vmatpush1.bf16.msra.mxu0 0
    %2942 = vmatprep.subr.bf16.mxu0 0
    %2943 = vmatpush1.bf16.msra.mxu0 0
    %2944 = vmatprep.subr.bf16.mxu0 0
    %2945 = vmatpush1.bf16.msra.mxu0 0
    %2946 = vmatprep.subr.bf16.mxu0 0
    %2947 = vmatpush1.bf16.msra.mxu0 0
    %2948 = vmatprep.subr.bf16.mxu0 0
    %2949 = vmatpush1.bf16.msra.mxu0 0
    %2950 = vmatprep.subr.bf16.mxu0 0
    %2951 = vmatpush1.bf16.msra.mxu0 0
    %2952 = vmatprep.subr.bf16.mxu0 0
    %2953 = vmatpush1.bf16.msra.mxu0 0
    %2954 = vmatprep.subr.bf16.mxu0 0
    %2955 = vmatpush1.bf16.msra.mxu0 0
    %2956 = vmatprep.subr.bf16.mxu0 0
    %2957 = vmatpush1.bf16.msra.mxu0 0
    %2958 = vmatprep.mubr.bf16.mxu0 0
    %2959 = vmatmul.mubr.bf16.gmra.mrb[0].mxu0 %v2855
    %v2960 = vpop.f32.mrb[0].mxu0
    %v2961 = vadd.f32 0.0, %v2960
    %v2962 = vpop.f32.mrb[0].mxu0
    %v2963 = vpop.f32.mrb[0].mxu0
    %v2964 = vadd.f32 0.0, %v2963
    %v2965 = vpop.f32.mrb[0].mxu0
    %2966 = vmatprep.mubr.bf16.mxu0 0
    %2967 = vmatmul.mubr.bf16.gmra.mrb[0].mxu0 %v2858
    %v2968 = vpop.f32.mrb[0].mxu0
    %v2969 = vadd.f32 0.0, %v2968
    %v2970 = vpop.f32.mrb[0].mxu0
    %v2971 = vpop.f32.mrb[0].mxu0
    %v2972 = vadd.f32 0.0, %v2971
    %v2973 = vpop.f32.mrb[0].mxu0
    %2974 = vdwg.mxu0
    %2975 = vmatprep.subr.mxu0 0.0
    %2976 = vmatpush1.msra.mxu0 %v2961
    %2977 = vmatprep.subr.mxu0 0.0
    %2978 = vmatpush1.msra.mxu0 %v2964
    %2979 = vmatprep.subr.mxu0 0.0
    %2980 = vmatpush1.msra.mxu0 %v2969
    %2981 = vmatprep.subr.mxu0 0.0
    %2982 = vmatpush1.msra.mxu0 %v2972
    %2983 = vmatprep.subr.mxu0 0.0
    %2984 = vmatpush1.msra.mxu0 0.0
    %2985 = vmatprep.subr.mxu0 0.0
    %2986 = vmatpush1.msra.mxu0 0.0
    %2987 = vmatprep.subr.mxu0 0.0
    %2988 = vmatpush1.msra.mxu0 0.0
    %2989 = vmatprep.subr.mxu0 0.0
    %2990 = vmatpush1.msra.mxu0 0.0
    %2991 = vmatprep.subr.mxu0 0.0
    %2992 = vmatpush1.msra.mxu0 0.0
    %2993 = vmatprep.subr.mxu0 0.0
    %2994 = vmatpush1.msra.mxu0 0.0
    %2995 = vmatprep.subr.mxu0 0.0
    %2996 = vmatpush1.msra.mxu0 0.0
    %2997 = vmatprep.subr.mxu0 0.0
    %2998 = vmatpush1.msra.mxu0 0.0
    %2999 = vmatprep.subr.mxu0 0.0
    %3000 = vmatpush1.msra.mxu0 0.0
    %3001 = vmatprep.subr.mxu0 0.0
    %3002 = vmatpush1.msra.mxu0 0.0
    %3003 = vmatprep.subr.mxu0 0.0
    %3004 = vmatpush1.msra.mxu0 0.0
    %3005 = vmatprep.subr.mxu0 0.0
    %3006 = vmatpush1.msra.mxu0 0.0
    %3007 = vmatprep.subr.mxu0 0.0
    %3008 = vmatpush1.msra.mxu0 0.0
    %3009 = vmatprep.subr.mxu0 0.0
    %3010 = vmatpush1.msra.mxu0 0.0
    %3011 = vmatprep.subr.mxu0 0.0
    %3012 = vmatpush1.msra.mxu0 0.0
    %3013 = vmatprep.subr.mxu0 0.0
    %3014 = vmatpush1.msra.mxu0 0.0
    %3015 = vmatprep.subr.mxu0 0.0
    %3016 = vmatpush1.msra.mxu0 0.0
    %3017 = vmatprep.subr.mxu0 0.0
    %3018 = vmatpush1.msra.mxu0 0.0
    %3019 = vmatprep.subr.mxu0 0.0
    %3020 = vmatpush1.msra.mxu0 0.0
    %3021 = vmatprep.subr.mxu0 0.0
    %3022 = vmatpush1.msra.mxu0 0.0
    %3023 = vmatprep.subr.mxu0 0.0
    %3024 = vmatpush1.msra.mxu0 0.0
    %3025 = vmatprep.subr.mxu0 0.0
    %3026 = vmatpush1.msra.mxu0 0.0
    %3027 = vmatprep.subr.mxu0 0.0
    %3028 = vmatpush1.msra.mxu0 0.0
    %3029 = vmatprep.subr.mxu0 0.0
    %3030 = vmatpush1.msra.mxu0 0.0
    %3031 = vmatprep.subr.mxu0 0.0
    %3032 = vmatpush1.msra.mxu0 0.0
    %3033 = vmatprep.subr.mxu0 0.0
    %3034 = vmatpush1.msra.mxu0 0.0
    %3035 = vmatprep.subr.mxu0 0.0
    %3036 = vmatpush1.msra.mxu0 0.0
    %3037 = vmatprep.subr.mxu0 0.0
    %3038 = vmatpush1.msra.mxu0 0.0
    %3039 = vmatprep.mubr.f32.mxu0 0.0
    %3040 = vmatmul.mubr.f32.gmra.mrb[0].mxu0 %v1003
    %v3041 = vpop.f32.mrb[0].mxu0
    %v3042 = vadd.f32 0.0, %v3041
    %v3043 = vpop.f32.mrb[0].mxu0
    %3044 = vmatprep.mubr.f32.mxu0 0.0
    %3045 = vmatmul.mubr.f32.gmra.mrb[0].mxu0 %v1006
    %v3046 = vpop.f32.mrb[0].mxu0
    %v3047 = vadd.f32 0.0, %v3046
    %v3048 = vpop.f32.mrb[0].mxu0
    %3049 = vmatprep.mubr.f32.mxu0 0.0
    %3050 = vmatmul.mubr.f32.gmra.mrb[0].mxu0 %v1009
    %v3051 = vpop.f32.mrb[0].mxu0
    %v3052 = vadd.f32 0.0, %v3051
    %v3053 = vpop.f32.mrb[0].mxu0
    %3054 = vmatprep.mubr.f32.mxu0 0.0
    %3055 = vmatmul.mubr.f32.gmra.mrb[0].mxu0 %v1012
    %v3056 = vpop.f32.mrb[0].mxu0
    %v3057 = vadd.f32 0.0, %v3056
    %v3058 = vpop.f32.mrb[0].mxu0
    %3059 = vdwg.mxu0
    %3060 = vmatprep.subr.mxu0 0.0
    %3061 = vmatpush1.msra.mxu0 %v2895
    %3062 = vmatprep.subr.mxu0 0.0
    %3063 = vmatpush1.msra.mxu0 %v2898
    %3064 = vmatprep.subr.mxu0 0.0
    %3065 = vmatpush1.msra.mxu0 %v2903
    %3066 = vmatprep.subr.mxu0 0.0
    %3067 = vmatpush1.msra.mxu0 %v2906
    %3068 = vmatprep.subr.mxu0 0.0
    %3069 = vmatpush1.msra.mxu0 0.0
    %3070 = vmatprep.subr.mxu0 0.0
    %3071 = vmatpush1.msra.mxu0 0.0
    %3072 = vmatprep.subr.mxu0 0.0
    %3073 = vmatpush1.msra.mxu0 0.0
    %3074 = vmatprep.subr.mxu0 0.0
    %3075 = vmatpush1.msra.mxu0 0.0
    %3076 = vmatprep.subr.mxu0 0.0
    %3077 = vmatpush1.msra.mxu0 0.0
    %3078 = vmatprep.subr.mxu0 0.0
    %3079 = vmatpush1.msra.mxu0 0.0
    %3080 = vmatprep.subr.mxu0 0.0
    %3081 = vmatpush1.msra.mxu0 0.0
    %3082 = vmatprep.subr.mxu0 0.0
    %3083 = vmatpush1.msra.mxu0 0.0
    %3084 = vmatprep.subr.mxu0 0.0
    %3085 = vmatpush1.msra.mxu0 0.0
    %3086 = vmatprep.subr.mxu0 0.0
    %3087 = vmatpush1.msra.mxu0 0.0
    %3088 = vmatprep.subr.mxu0 0.0
    %3089 = vmatpush1.msra.mxu0 0.0
    %3090 = vmatprep.subr.mxu0 0.0
    %3091 = vmatpush1.msra.mxu0 0.0
    %3092 = vmatprep.subr.mxu0 0.0
    %3093 = vmatpush1.msra.mxu0 0.0
    %3094 = vmatprep.subr.mxu0 0.0
    %3095 = vmatpush1.msra.mxu0 0.0
    %3096 = vmatprep.subr.mxu0 0.0
    %3097 = vmatpush1.msra.mxu0 0.0
    %3098 = vmatprep.subr.mxu0 0.0
    %3099 = vmatpush1.msra.mxu0 0.0
    %3100 = vmatprep.subr.mxu0 0.0
    %3101 = vmatpush1.msra.mxu0 0.0
    %3102 = vmatprep.subr.mxu0 0.0
    %3103 = vmatpush1.msra.mxu0 0.0
    %3104 = vmatprep.subr.mxu0 0.0
    %3105 = vmatpush1.msra.mxu0 0.0
    %3106 = vmatprep.subr.mxu0 0.0
    %3107 = vmatpush1.msra.mxu0 0.0
    %3108 = vmatprep.subr.mxu0 0.0
    %3109 = vmatpush1.msra.mxu0 0.0
    %3110 = vmatprep.subr.mxu0 0.0
    %3111 = vmatpush1.msra.mxu0 0.0
    %3112 = vmatprep.subr.mxu0 0.0
    %3113 = vmatpush1.msra.mxu0 0.0
    %3114 = vmatprep.subr.mxu0 0.0
    %3115 = vmatpush1.msra.mxu0 0.0
    %3116 = vmatprep.subr.mxu0 0.0
    %3117 = vmatpush1.msra.mxu0 0.0
    %3118 = vmatprep.subr.mxu0 0.0
    %3119 = vmatpush1.msra.mxu0 0.0
    %3120 = vmatprep.subr.mxu0 0.0
    %3121 = vmatpush1.msra.mxu0 0.0
    %3122 = vmatprep.subr.mxu0 0.0
    %3123 = vmatpush1.msra.mxu0 0.0
    %3124 = vmatprep.mubr.f32.mxu0 0.0
    %3125 = vmatmul.mubr.f32.gmra.mrb[0].mxu0 %v1100
    %v3126 = vpop.f32.mrb[0].mxu0
    %v3127 = vadd.f32 %v3042, %v3126
    %v3128 = vpop.f32.mrb[0].mxu0
    %3129 = vmatprep.mubr.f32.mxu0 0.0
    %3130 = vmatmul.mubr.f32.gmra.mrb[0].mxu0 %v1103
    %v3131 = vpop.f32.mrb[0].mxu0
    %v3132 = vadd.f32 %v3047, %v3131
    %v3133 = vpop.f32.mrb[0].mxu0
    %3134 = vmatprep.mubr.f32.mxu0 0.0
    %3135 = vmatmul.mubr.f32.gmra.mrb[0].mxu0 %v1106
    %v3136 = vpop.f32.mrb[0].mxu0
    %v3137 = vadd.f32 %v3052, %v3136
    %v3138 = vpop.f32.mrb[0].mxu0
    %3139 = vmatprep.mubr.f32.mxu0 0.0
    %3140 = vmatmul.mubr.f32.gmra.mrb[0].mxu0 %v1109
    %v3141 = vpop.f32.mrb[0].mxu0
    %v3142 = vadd.f32 %v3057, %v3141
    %v3143 = vpop.f32.mrb[0].mxu0
    %3144 = vdwg.mxu0
    %s3145 = scalar_lea.vmem %s21, 96
    %v3146 = vld [vmem:[%s3145] sm:$0xf]
    %v3147 = vld [vmem:[%s3145 + $0x4] sm:$0xf]
    %v3148 = vld [vmem:[%s3145 + $0x8] sm:$0xf]
    %v3149 = vld [vmem:[%s3145 + $0xc] sm:$0xf]
    %v3154 = vunpack.c.l.b16 %v3146
    %v3155 = vunpack.c.l.b16 %v3147
    %v3156 = vunpack.c.l.b16 %v3148
    %v3157 = vunpack.c.l.b16 %v3149
    %v3158 = vpack.c.b16 %v3155, %v3154
    %v3159 = vpack.c.b16 %v3157, %v3156
    %3162 = vmatprep.subr.bf16.mxu0 0
    %3163 = vmatpush1.bf16.msra.mxu0 %v3158
    %3164 = vmatprep.subr.bf16.mxu0 0
    %3165 = vmatpush1.bf16.msra.mxu0 %v3159
    %3166 = vmatprep.subr.bf16.mxu0 0
    %3167 = vmatpush1.bf16.msra.mxu0 0
    %3168 = vmatprep.subr.bf16.mxu0 0
    %3169 = vmatpush1.bf16.msra.mxu0 0
    %3170 = vmatprep.subr.bf16.mxu0 0
    %3171 = vmatpush1.bf16.msra.mxu0 0
    %3172 = vmatprep.subr.bf16.mxu0 0
    %3173 = vmatpush1.bf16.msra.mxu0 0
    %3174 = vmatprep.subr.bf16.mxu0 0
    %3175 = vmatpush1.bf16.msra.mxu0 0
    %3176 = vmatprep.subr.bf16.mxu0 0
    %3177 = vmatpush1.bf16.msra.mxu0 0
    %3178 = vmatprep.subr.bf16.mxu0 0
    %3179 = vmatpush1.bf16.msra.mxu0 0
    %3180 = vmatprep.subr.bf16.mxu0 0
    %3181 = vmatpush1.bf16.msra.mxu0 0
    %3182 = vmatprep.subr.bf16.mxu0 0
    %3183 = vmatpush1.bf16.msra.mxu0 0
    %3184 = vmatprep.subr.bf16.mxu0 0
    %3185 = vmatpush1.bf16.msra.mxu0 0
    %3186 = vmatprep.subr.bf16.mxu0 0
    %3187 = vmatpush1.bf16.msra.mxu0 0
    %3188 = vmatprep.subr.bf16.mxu0 0
    %3189 = vmatpush1.bf16.msra.mxu0 0
    %3190 = vmatprep.subr.bf16.mxu0 0
    %3191 = vmatpush1.bf16.msra.mxu0 0
    %3192 = vmatprep.subr.bf16.mxu0 0
    %3193 = vmatpush1.bf16.msra.mxu0 0
    %3194 = vmatprep.mubr.bf16.mxu0 0
    %3195 = vmatmul.mubr.bf16.gmra.mrb[0].mxu0 %v2855
    %v3196 = vpop.f32.mrb[0].mxu0
    %v3197 = vadd.f32 0.0, %v3196
    %v3198 = vpop.f32.mrb[0].mxu0
    %v3199 = vpop.f32.mrb[0].mxu0
    %v3200 = vadd.f32 0.0, %v3199
    %v3201 = vpop.f32.mrb[0].mxu0
    %3202 = vmatprep.mubr.bf16.mxu0 0
    %3203 = vmatmul.mubr.bf16.gmra.mrb[0].mxu0 %v2858
    %v3204 = vpop.f32.mrb[0].mxu0
    %v3205 = vadd.f32 0.0, %v3204
    %v3206 = vpop.f32.mrb[0].mxu0
    %v3207 = vpop.f32.mrb[0].mxu0
    %v3208 = vadd.f32 0.0, %v3207
    %v3209 = vpop.f32.mrb[0].mxu0
    %3210 = vdwg.mxu0
    %3211 = vmatprep.subr.mxu0 0.0
    %3212 = vmatpush1.msra.mxu0 %v3197
    %3213 = vmatprep.subr.mxu0 0.0
    %3214 = vmatpush1.msra.mxu0 %v3200
    %3215 = vmatprep.subr.mxu0 0.0
    %3216 = vmatpush1.msra.mxu0 %v3205
    %3217 = vmatprep.subr.mxu0 0.0
    %3218 = vmatpush1.msra.mxu0 %v3208
    %3219 = vmatprep.subr.mxu0 0.0
    %3220 = vmatpush1.msra.mxu0 0.0
    %3221 = vmatprep.subr.mxu0 0.0
    %3222 = vmatpush1.msra.mxu0 0.0
    %3223 = vmatprep.subr.mxu0 0.0
    %3224 = vmatpush1.msra.mxu0 0.0
    %3225 = vmatprep.subr.mxu0 0.0
    %3226 = vmatpush1.msra.mxu0 0.0
    %3227 = vmatprep.subr.mxu0 0.0
    %3228 = vmatpush1.msra.mxu0 0.0
    %3229 = vmatprep.subr.mxu0 0.0
    %3230 = vmatpush1.msra.mxu0 0.0
    %3231 = vmatprep.subr.mxu0 0.0
    %3232 = vmatpush1.msra.mxu0 0.0
    %3233 = vmatprep.subr.mxu0 0.0
    %3234 = vmatpush1.msra.mxu0 0.0
    %3235 = vmatprep.subr.mxu0 0.0
    %3236 = vmatpush1.msra.mxu0 0.0
    %3237 = vmatprep.subr.mxu0 0.0
    %3238 = vmatpush1.msra.mxu0 0.0
    %3239 = vmatprep.subr.mxu0 0.0
    %3240 = vmatpush1.msra.mxu0 0.0
    %3241 = vmatprep.subr.mxu0 0.0
    %3242 = vmatpush1.msra.mxu0 0.0
    %3243 = vmatprep.subr.mxu0 0.0
    %3244 = vmatpush1.msra.mxu0 0.0
    %3245 = vmatprep.subr.mxu0 0.0
    %3246 = vmatpush1.msra.mxu0 0.0
    %3247 = vmatprep.subr.mxu0 0.0
    %3248 = vmatpush1.msra.mxu0 0.0
    %3249 = vmatprep.subr.mxu0 0.0
    %3250 = vmatpush1.msra.mxu0 0.0
    %3251 = vmatprep.subr.mxu0 0.0
    %3252 = vmatpush1.msra.mxu0 0.0
    %3253 = vmatprep.subr.mxu0 0.0
    %3254 = vmatpush1.msra.mxu0 0.0
    %3255 = vmatprep.subr.mxu0 0.0
    %3256 = vmatpush1.msra.mxu0 0.0
    %3257 = vmatprep.subr.mxu0 0.0
    %3258 = vmatpush1.msra.mxu0 0.0
    %3259 = vmatprep.subr.mxu0 0.0
    %3260 = vmatpush1.msra.mxu0 0.0
    %3261 = vmatprep.subr.mxu0 0.0
    %3262 = vmatpush1.msra.mxu0 0.0
    %3263 = vmatprep.subr.mxu0 0.0
    %3264 = vmatpush1.msra.mxu0 0.0
    %3265 = vmatprep.subr.mxu0 0.0
    %3266 = vmatpush1.msra.mxu0 0.0
    %3267 = vmatprep.subr.mxu0 0.0
    %3268 = vmatpush1.msra.mxu0 0.0
    %3269 = vmatprep.subr.mxu0 0.0
    %3270 = vmatpush1.msra.mxu0 0.0
    %3271 = vmatprep.subr.mxu0 0.0
    %3272 = vmatpush1.msra.mxu0 0.0
    %3273 = vmatprep.subr.mxu0 0.0
    %3274 = vmatpush1.msra.mxu0 0.0
    %3275 = vmatprep.mubr.f32.mxu0 0.0
    %3276 = vmatmul.mubr.f32.gmra.mrb[0].mxu0 %v1268
    %v3277 = vpop.f32.mrb[0].mxu0
    %v3278 = vadd.f32 0.0, %v3277
    %v3279 = vpop.f32.mrb[0].mxu0
    %3280 = vmatprep.mubr.f32.mxu0 0.0
    %3281 = vmatmul.mubr.f32.gmra.mrb[0].mxu0 %v1271
    %v3282 = vpop.f32.mrb[0].mxu0
    %v3283 = vadd.f32 0.0, %v3282
    %v3284 = vpop.f32.mrb[0].mxu0
    %3285 = vmatprep.mubr.f32.mxu0 0.0
    %3286 = vmatmul.mubr.f32.gmra.mrb[0].mxu0 %v1274
    %v3287 = vpop.f32.mrb[0].mxu0
    %v3288 = vadd.f32 0.0, %v3287
    %v3289 = vpop.f32.mrb[0].mxu0
    %3290 = vmatprep.mubr.f32.mxu0 0.0
    %3291 = vmatmul.mubr.f32.gmra.mrb[0].mxu0 %v1277
    %v3292 = vpop.f32.mrb[0].mxu0
    %v3293 = vadd.f32 0.0, %v3292
    %v3294 = vpop.f32.mrb[0].mxu0
    %3295 = vdwg.mxu0
    %v3296 = vadd.f32 %v3127, %v3278
    %v3297 = vadd.f32 %v3132, %v3283
    %v3298 = vadd.f32 %v3137, %v3288
    %v3299 = vadd.f32 %v3142, %v3293
    %s3300 = scalar_lea.vmem %s21, 112
    %v3301 = vld [vmem:[%s3300] sm:$0xf]
    %v3302 = vld [vmem:[%s3300 + $0x4] sm:$0xf]
    %v3303 = vld [vmem:[%s3300 + $0x8] sm:$0xf]
    %v3304 = vld [vmem:[%s3300 + $0xc] sm:$0xf]
    %v3309 = vunpack.c.l.b16 %v3301
    %v3310 = vunpack.c.l.b16 %v3302
    %v3311 = vunpack.c.l.b16 %v3303
    %v3312 = vunpack.c.l.b16 %v3304
    %v3313 = vpack.c.b16 %v3310, %v3309
    %v3314 = vpack.c.b16 %v3312, %v3311
    %3317 = vmatprep.subr.bf16.mxu0 0
    %3318 = vmatpush1.bf16.msra.mxu0 %v3313
    %3319 = vmatprep.subr.bf16.mxu0 0
    %3320 = vmatpush1.bf16.msra.mxu0 %v3314
    %3321 = vmatprep.subr.bf16.mxu0 0
    %3322 = vmatpush1.bf16.msra.mxu0 0
    %3323 = vmatprep.subr.bf16.mxu0 0
    %3324 = vmatpush1.bf16.msra.mxu0 0
    %3325 = vmatprep.subr.bf16.mxu0 0
    %3326 = vmatpush1.bf16.msra.mxu0 0
    %3327 = vmatprep.subr.bf16.mxu0 0
    %3328 = vmatpush1.bf16.msra.mxu0 0
    %3329 = vmatprep.subr.bf16.mxu0 0
    %3330 = vmatpush1.bf16.msra.mxu0 0
    %3331 = vmatprep.subr.bf16.mxu0 0
    %3332 = vmatpush1.bf16.msra.mxu0 0
    %3333 = vmatprep.subr.bf16.mxu0 0
    %3334 = vmatpush1.bf16.msra.mxu0 0
    %3335 = vmatprep.subr.bf16.mxu0 0
    %3336 = vmatpush1.bf16.msra.mxu0 0
    %3337 = vmatprep.subr.bf16.mxu0 0
    %3338 = vmatpush1.bf16.msra.mxu0 0
    %3339 = vmatprep.subr.bf16.mxu0 0
    %3340 = vmatpush1.bf16.msra.mxu0 0
    %3341 = vmatprep.subr.bf16.mxu0 0
    %3342 = vmatpush1.bf16.msra.mxu0 0
    %3343 = vmatprep.subr.bf16.mxu0 0
    %3344 = vmatpush1.bf16.msra.mxu0 0
    %3345 = vmatprep.subr.bf16.mxu0 0
    %3346 = vmatpush1.bf16.msra.mxu0 0
    %3347 = vmatprep.subr.bf16.mxu0 0
    %3348 = vmatpush1.bf16.msra.mxu0 0
    %3349 = vmatprep.mubr.bf16.mxu0 0
    %3350 = vmatmul.mubr.bf16.gmra.mrb[0].mxu0 %v2855
    %v3351 = vpop.f32.mrb[0].mxu0
    %v3352 = vadd.f32 0.0, %v3351
    %v3353 = vpop.f32.mrb[0].mxu0
    %v3354 = vpop.f32.mrb[0].mxu0
    %v3355 = vadd.f32 0.0, %v3354
    %v3356 = vpop.f32.mrb[0].mxu0
    %3357 = vmatprep.mubr.bf16.mxu0 0
    %3358 = vmatmul.mubr.bf16.gmra.mrb[0].mxu0 %v2858
    %v3359 = vpop.f32.mrb[0].mxu0
    %v3360 = vadd.f32 0.0, %v3359
    %v3361 = vpop.f32.mrb[0].mxu0
    %v3362 = vpop.f32.mrb[0].mxu0
    %v3363 = vadd.f32 0.0, %v3362
    %v3364 = vpop.f32.mrb[0].mxu0
    %3365 = vdwg.mxu0
    %3366 = vmatprep.subr.mxu0 0.0
    %3367 = vmatpush1.msra.mxu0 %v3352
    %3368 = vmatprep.subr.mxu0 0.0
    %3369 = vmatpush1.msra.mxu0 %v3355
    %3370 = vmatprep.subr.mxu0 0.0
    %3371 = vmatpush1.msra.mxu0 %v3360
    %3372 = vmatprep.subr.mxu0 0.0
    %3373 = vmatpush1.msra.mxu0 %v3363
    %3374 = vmatprep.subr.mxu0 0.0
    %3375 = vmatpush1.msra.mxu0 0.0
    %3376 = vmatprep.subr.mxu0 0.0
    %3377 = vmatpush1.msra.mxu0 0.0
    %3378 = vmatprep.subr.mxu0 0.0
    %3379 = vmatpush1.msra.mxu0 0.0
    %3380 = vmatprep.subr.mxu0 0.0
    %3381 = vmatpush1.msra.mxu0 0.0
    %3382 = vmatprep.subr.mxu0 0.0
    %3383 = vmatpush1.msra.mxu0 0.0
    %3384 = vmatprep.subr.mxu0 0.0
    %3385 = vmatpush1.msra.mxu0 0.0
    %3386 = vmatprep.subr.mxu0 0.0
    %3387 = vmatpush1.msra.mxu0 0.0
    %3388 = vmatprep.subr.mxu0 0.0
    %3389 = vmatpush1.msra.mxu0 0.0
    %3390 = vmatprep.subr.mxu0 0.0
    %3391 = vmatpush1.msra.mxu0 0.0
    %3392 = vmatprep.subr.mxu0 0.0
    %3393 = vmatpush1.msra.mxu0 0.0
    %3394 = vmatprep.subr.mxu0 0.0
    %3395 = vmatpush1.msra.mxu0 0.0
    %3396 = vmatprep.subr.mxu0 0.0
    %3397 = vmatpush1.msra.mxu0 0.0
    %3398 = vmatprep.subr.mxu0 0.0
    %3399 = vmatpush1.msra.mxu0 0.0
    %3400 = vmatprep.subr.mxu0 0.0
    %3401 = vmatpush1.msra.mxu0 0.0
    %3402 = vmatprep.subr.mxu0 0.0
    %3403 = vmatpush1.msra.mxu0 0.0
    %3404 = vmatprep.subr.mxu0 0.0
    %3405 = vmatpush1.msra.mxu0 0.0
    %3406 = vmatprep.subr.mxu0 0.0
    %3407 = vmatpush1.msra.mxu0 0.0
    %3408 = vmatprep.subr.mxu0 0.0
    %3409 = vmatpush1.msra.mxu0 0.0
    %3410 = vmatprep.subr.mxu0 0.0
    %3411 = vmatpush1.msra.mxu0 0.0
    %3412 = vmatprep.subr.mxu0 0.0
    %3413 = vmatpush1.msra.mxu0 0.0
    %3414 = vmatprep.subr.mxu0 0.0
    %3415 = vmatpush1.msra.mxu0 0.0
    %3416 = vmatprep.subr.mxu0 0.0
    %3417 = vmatpush1.msra.mxu0 0.0
    %3418 = vmatprep.subr.mxu0 0.0
    %3419 = vmatpush1.msra.mxu0 0.0
    %3420 = vmatprep.subr.mxu0 0.0
    %3421 = vmatpush1.msra.mxu0 0.0
    %3422 = vmatprep.subr.mxu0 0.0
    %3423 = vmatpush1.msra.mxu0 0.0
    %3424 = vmatprep.subr.mxu0 0.0
    %3425 = vmatpush1.msra.mxu0 0.0
    %3426 = vmatprep.subr.mxu0 0.0
    %3427 = vmatpush1.msra.mxu0 0.0
    %3428 = vmatprep.subr.mxu0 0.0
    %3429 = vmatpush1.msra.mxu0 0.0
    %3430 = vmatprep.mubr.f32.mxu0 0.0
    %3431 = vmatmul.mubr.f32.gmra.mrb[0].mxu0 %v1440
    %v3432 = vpop.f32.mrb[0].mxu0
    %v3433 = vadd.f32 0.0, %v3432
    %v3434 = vpop.f32.mrb[0].mxu0
    %3435 = vmatprep.mubr.f32.mxu0 0.0
    %3436 = vmatmul.mubr.f32.gmra.mrb[0].mxu0 %v1443
    %v3437 = vpop.f32.mrb[0].mxu0
    %v3438 = vadd.f32 0.0, %v3437
    %v3439 = vpop.f32.mrb[0].mxu0
    %3440 = vmatprep.mubr.f32.mxu0 0.0
    %3441 = vmatmul.mubr.f32.gmra.mrb[0].mxu0 %v1446
    %v3442 = vpop.f32.mrb[0].mxu0
    %v3443 = vadd.f32 0.0, %v3442
    %v3444 = vpop.f32.mrb[0].mxu0
    %3445 = vmatprep.mubr.f32.mxu0 0.0
    %3446 = vmatmul.mubr.f32.gmra.mrb[0].mxu0 %v1449
    %v3447 = vpop.f32.mrb[0].mxu0
    %v3448 = vadd.f32 0.0, %v3447
    %v3449 = vpop.f32.mrb[0].mxu0
    %3450 = vdwg.mxu0
    %v3451 = vadd.f32 %v3296, %v3433
    %v3452 = vadd.f32 %v3297, %v3438
    %v3453 = vadd.f32 %v3298, %v3443
    %v3454 = vadd.f32 %v3299, %v3448
    %s3455 = scalar_lea.vmem [#allocation4], 1
    %v3456 = vld [vmem:[%s3455] sm:$0x1]
    %v3458 = vlaneseq
    %v3459 = vshrl.u32 %v3458, 7
    %v3460 = vsub.s32 0, %v3459
    %v3461 = vrot.slane %v3456, %v3460
    %v3463 = vadd.f32 %v3451, %v3461
    %v3464 = vadd.f32 %v3452, %v3461
    %v3465 = vadd.f32 %v3453, %v3461
    %v3466 = vadd.f32 %v3454, %v3461
    %v3467 = vmax.f32 %v3463, 0.0
    %v3468 = vmax.f32 %v3464, 0.0
    %v3469 = vmax.f32 %v3465, 0.0
    %v3470 = vmax.f32 %v3466, 0.0
    %v3471 = vpack.c.bf16 %v3468, %v3467
    %v3472 = vpack.c.bf16 %v3470, %v3469
    %s3473 = scalar_lea.vmem %s25, 64
    %v3474 = vld [vmem:[%s3473] sm:$0xf]
    %v3475 = vld [vmem:[%s3473 + $0x4] sm:$0xf]
    %v3476 = vld [vmem:[%s3473 + $0x8] sm:$0xf]
    %v3477 = vld [vmem:[%s3473 + $0xc] sm:$0xf]
    %v3482 = vunpack.c.l.b16 %v3474
    %v3483 = vunpack.c.l.b16 %v3475
    %v3484 = vunpack.c.l.b16 %v3476
    %v3485 = vunpack.c.l.b16 %v3477
    %v3486 = vpack.c.b16 %v3483, %v3482
    %v3487 = vpack.c.b16 %v3485, %v3484
    %v3491 = vsel %vm871, %v3471, 0
    %v3494 = vsel %vm871, %v3472, 0
    %3496 = vmatprep.subr.bf16.mxu0 0
    %3497 = vmatpush1.bf16.msra.mxu0 %v3486
    %3498 = vmatprep.subr.bf16.mxu0 0
    %3499 = vmatpush1.bf16.msra.mxu0 %v3487
    %3500 = vmatprep.subr.bf16.mxu0 0
    %3501 = vmatpush1.bf16.msra.mxu0 0
    %3502 = vmatprep.subr.bf16.mxu0 0
    %3503 = vmatpush1.bf16.msra.mxu0 0
    %3504 = vmatprep.subr.bf16.mxu0 0
    %3505 = vmatpush1.bf16.msra.mxu0 0
    %3506 = vmatprep.subr.bf16.mxu0 0
    %3507 = vmatpush1.bf16.msra.mxu0 0
    %3508 = vmatprep.subr.bf16.mxu0 0
    %3509 = vmatpush1.bf16.msra.mxu0 0
    %3510 = vmatprep.subr.bf16.mxu0 0
    %3511 = vmatpush1.bf16.msra.mxu0 0
    %3512 = vmatprep.subr.bf16.mxu0 0
    %3513 = vmatpush1.bf16.msra.mxu0 0
    %3514 = vmatprep.subr.bf16.mxu0 0
    %3515 = vmatpush1.bf16.msra.mxu0 0
    %3516 = vmatprep.subr.bf16.mxu0 0
    %3517 = vmatpush1.bf16.msra.mxu0 0
    %3518 = vmatprep.subr.bf16.mxu0 0
    %3519 = vmatpush1.bf16.msra.mxu0 0
    %3520 = vmatprep.subr.bf16.mxu0 0
    %3521 = vmatpush1.bf16.msra.mxu0 0
    %3522 = vmatprep.subr.bf16.mxu0 0
    %3523 = vmatpush1.bf16.msra.mxu0 0
    %3524 = vmatprep.subr.bf16.mxu0 0
    %3525 = vmatpush1.bf16.msra.mxu0 0
    %3526 = vmatprep.subr.bf16.mxu0 0
    %3527 = vmatpush1.bf16.msra.mxu0 0
    %3528 = vmatprep.mubr.bf16.mxu0 0
    %3529 = vmatmul.mubr.bf16.gmra.mrb[0].mxu0 %v3491
    %v3530 = vpop.f32.mrb[0].mxu0
    %v3531 = vadd.f32 0.0, %v3530
    %v3532 = vpop.f32.mrb[0].mxu0
    %v3533 = vpop.f32.mrb[0].mxu0
    %v3534 = vadd.f32 0.0, %v3533
    %v3535 = vpop.f32.mrb[0].mxu0
    %3536 = vmatprep.mubr.bf16.mxu0 0
    %3537 = vmatmul.mubr.bf16.gmra.mrb[0].mxu0 %v3494
    %v3538 = vpop.f32.mrb[0].mxu0
    %v3539 = vadd.f32 0.0, %v3538
    %v3540 = vpop.f32.mrb[0].mxu0
    %v3541 = vpop.f32.mrb[0].mxu0
    %v3542 = vadd.f32 0.0, %v3541
    %v3543 = vpop.f32.mrb[0].mxu0
    %3544 = vdwg.mxu0
    %s3545 = scalar_lea.vmem %s25, 80
    %v3546 = vld [vmem:[%s3545] sm:$0xf]
    %v3547 = vld [vmem:[%s3545 + $0x4] sm:$0xf]
    %v3548 = vld [vmem:[%s3545 + $0x8] sm:$0xf]
    %v3549 = vld [vmem:[%s3545 + $0xc] sm:$0xf]
    %v3554 = vunpack.c.l.b16 %v3546
    %v3555 = vunpack.c.l.b16 %v3547
    %v3556 = vunpack.c.l.b16 %v3548
    %v3557 = vunpack.c.l.b16 %v3549
    %v3558 = vpack.c.b16 %v3555, %v3554
    %v3559 = vpack.c.b16 %v3557, %v3556
    %3562 = vmatprep.subr.bf16.mxu0 0
    %3563 = vmatpush1.bf16.msra.mxu0 %v3558
    %3564 = vmatprep.subr.bf16.mxu0 0
    %3565 = vmatpush1.bf16.msra.mxu0 %v3559
    %3566 = vmatprep.subr.bf16.mxu0 0
    %3567 = vmatpush1.bf16.msra.mxu0 0
    %3568 = vmatprep.subr.bf16.mxu0 0
    %3569 = vmatpush1.bf16.msra.mxu0 0
    %3570 = vmatprep.subr.bf16.mxu0 0
    %3571 = vmatpush1.bf16.msra.mxu0 0
    %3572 = vmatprep.subr.bf16.mxu0 0
    %3573 = vmatpush1.bf16.msra.mxu0 0
    %3574 = vmatprep.subr.bf16.mxu0 0
    %3575 = vmatpush1.bf16.msra.mxu0 0
    %3576 = vmatprep.subr.bf16.mxu0 0
    %3577 = vmatpush1.bf16.msra.mxu0 0
    %3578 = vmatprep.subr.bf16.mxu0 0
    %3579 = vmatpush1.bf16.msra.mxu0 0
    %3580 = vmatprep.subr.bf16.mxu0 0
    %3581 = vmatpush1.bf16.msra.mxu0 0
    %3582 = vmatprep.subr.bf16.mxu0 0
    %3583 = vmatpush1.bf16.msra.mxu0 0
    %3584 = vmatprep.subr.bf16.mxu0 0
    %3585 = vmatpush1.bf16.msra.mxu0 0
    %3586 = vmatprep.subr.bf16.mxu0 0
    %3587 = vmatpush1.bf16.msra.mxu0 0
    %3588 = vmatprep.subr.bf16.mxu0 0
    %3589 = vmatpush1.bf16.msra.mxu0 0
    %3590 = vmatprep.subr.bf16.mxu0 0
    %3591 = vmatpush1.bf16.msra.mxu0 0
    %3592 = vmatprep.subr.bf16.mxu0 0
    %3593 = vmatpush1.bf16.msra.mxu0 0
    %3594 = vmatprep.mubr.bf16.mxu0 0
    %3595 = vmatmul.mubr.bf16.gmra.mrb[0].mxu0 %v3491
    %v3596 = vpop.f32.mrb[0].mxu0
    %v3597 = vadd.f32 0.0, %v3596
    %v3598 = vpop.f32.mrb[0].mxu0
    %v3599 = vpop.f32.mrb[0].mxu0
    %v3600 = vadd.f32 0.0, %v3599
    %v3601 = vpop.f32.mrb[0].mxu0
    %3602 = vmatprep.mubr.bf16.mxu0 0
    %3603 = vmatmul.mubr.bf16.gmra.mrb[0].mxu0 %v3494
    %v3604 = vpop.f32.mrb[0].mxu0
    %v3605 = vadd.f32 0.0, %v3604
    %v3606 = vpop.f32.mrb[0].mxu0
    %v3607 = vpop.f32.mrb[0].mxu0
    %v3608 = vadd.f32 0.0, %v3607
    %v3609 = vpop.f32.mrb[0].mxu0
    %3610 = vdwg.mxu0
    %3611 = vmatprep.subr.mxu0 0.0
    %3612 = vmatpush1.msra.mxu0 %v3597
    %3613 = vmatprep.subr.mxu0 0.0
    %3614 = vmatpush1.msra.mxu0 %v3600
    %3615 = vmatprep.subr.mxu0 0.0
    %3616 = vmatpush1.msra.mxu0 %v3605
    %3617 = vmatprep.subr.mxu0 0.0
    %3618 = vmatpush1.msra.mxu0 %v3608
    %3619 = vmatprep.subr.mxu0 0.0
    %3620 = vmatpush1.msra.mxu0 0.0
    %3621 = vmatprep.subr.mxu0 0.0
    %3622 = vmatpush1.msra.mxu0 0.0
    %3623 = vmatprep.subr.mxu0 0.0
    %3624 = vmatpush1.msra.mxu0 0.0
    %3625 = vmatprep.subr.mxu0 0.0
    %3626 = vmatpush1.msra.mxu0 0.0
    %3627 = vmatprep.subr.mxu0 0.0
    %3628 = vmatpush1.msra.mxu0 0.0
    %3629 = vmatprep.subr.mxu0 0.0
    %3630 = vmatpush1.msra.mxu0 0.0
    %3631 = vmatprep.subr.mxu0 0.0
    %3632 = vmatpush1.msra.mxu0 0.0
    %3633 = vmatprep.subr.mxu0 0.0
    %3634 = vmatpush1.msra.mxu0 0.0
    %3635 = vmatprep.subr.mxu0 0.0
    %3636 = vmatpush1.msra.mxu0 0.0
    %3637 = vmatprep.subr.mxu0 0.0
    %3638 = vmatpush1.msra.mxu0 0.0
    %3639 = vmatprep.subr.mxu0 0.0
    %3640 = vmatpush1.msra.mxu0 0.0
    %3641 = vmatprep.subr.mxu0 0.0
    %3642 = vmatpush1.msra.mxu0 0.0
    %3643 = vmatprep.subr.mxu0 0.0
    %3644 = vmatpush1.msra.mxu0 0.0
    %3645 = vmatprep.subr.mxu0 0.0
    %3646 = vmatpush1.msra.mxu0 0.0
    %3647 = vmatprep.subr.mxu0 0.0
    %3648 = vmatpush1.msra.mxu0 0.0
    %3649 = vmatprep.subr.mxu0 0.0
    %3650 = vmatpush1.msra.mxu0 0.0
    %3651 = vmatprep.subr.mxu0 0.0
    %3652 = vmatpush1.msra.mxu0 0.0
    %3653 = vmatprep.subr.mxu0 0.0
    %3654 = vmatpush1.msra.mxu0 0.0
    %3655 = vmatprep.subr.mxu0 0.0
    %3656 = vmatpush1.msra.mxu0 0.0
    %3657 = vmatprep.subr.mxu0 0.0
    %3658 = vmatpush1.msra.mxu0 0.0
    %3659 = vmatprep.subr.mxu0 0.0
    %3660 = vmatpush1.msra.mxu0 0.0
    %3661 = vmatprep.subr.mxu0 0.0
    %3662 = vmatpush1.msra.mxu0 0.0
    %3663 = vmatprep.subr.mxu0 0.0
    %3664 = vmatpush1.msra.mxu0 0.0
    %3665 = vmatprep.subr.mxu0 0.0
    %3666 = vmatpush1.msra.mxu0 0.0
    %3667 = vmatprep.subr.mxu0 0.0
    %3668 = vmatpush1.msra.mxu0 0.0
    %3669 = vmatprep.subr.mxu0 0.0
    %3670 = vmatpush1.msra.mxu0 0.0
    %3671 = vmatprep.subr.mxu0 0.0
    %3672 = vmatpush1.msra.mxu0 0.0
    %3673 = vmatprep.subr.mxu0 0.0
    %3674 = vmatpush1.msra.mxu0 0.0
    %3675 = vmatprep.mubr.f32.mxu0 0.0
    %3676 = vmatmul.mubr.f32.gmra.mrb[0].mxu0 %v1003
    %v3677 = vpop.f32.mrb[0].mxu0
    %v3678 = vadd.f32 0.0, %v3677
    %v3679 = vpop.f32.mrb[0].mxu0
    %3680 = vmatprep.mubr.f32.mxu0 0.0
    %3681 = vmatmul.mubr.f32.gmra.mrb[0].mxu0 %v1006
    %v3682 = vpop.f32.mrb[0].mxu0
    %v3683 = vadd.f32 0.0, %v3682
    %v3684 = vpop.f32.mrb[0].mxu0
    %3685 = vmatprep.mubr.f32.mxu0 0.0
    %3686 = vmatmul.mubr.f32.gmra.mrb[0].mxu0 %v1009
    %v3687 = vpop.f32.mrb[0].mxu0
    %v3688 = vadd.f32 0.0, %v3687
    %v3689 = vpop.f32.mrb[0].mxu0
    %3690 = vmatprep.mubr.f32.mxu0 0.0
    %3691 = vmatmul.mubr.f32.gmra.mrb[0].mxu0 %v1012
    %v3692 = vpop.f32.mrb[0].mxu0
    %v3693 = vadd.f32 0.0, %v3692
    %v3694 = vpop.f32.mrb[0].mxu0
    %3695 = vdwg.mxu0
    %3696 = vmatprep.subr.mxu0 0.0
    %3697 = vmatpush1.msra.mxu0 %v3531
    %3698 = vmatprep.subr.mxu0 0.0
    %3699 = vmatpush1.msra.mxu0 %v3534
    %3700 = vmatprep.subr.mxu0 0.0
    %3701 = vmatpush1.msra.mxu0 %v3539
    %3702 = vmatprep.subr.mxu0 0.0
    %3703 = vmatpush1.msra.mxu0 %v3542
    %3704 = vmatprep.subr.mxu0 0.0
    %3705 = vmatpush1.msra.mxu0 0.0
    %3706 = vmatprep.subr.mxu0 0.0
    %3707 = vmatpush1.msra.mxu0 0.0
    %3708 = vmatprep.subr.mxu0 0.0
    %3709 = vmatpush1.msra.mxu0 0.0
    %3710 = vmatprep.subr.mxu0 0.0
    %3711 = vmatpush1.msra.mxu0 0.0
    %3712 = vmatprep.subr.mxu0 0.0
    %3713 = vmatpush1.msra.mxu0 0.0
    %3714 = vmatprep.subr.mxu0 0.0
    %3715 = vmatpush1.msra.mxu0 0.0
    %3716 = vmatprep.subr.mxu0 0.0
    %3717 = vmatpush1.msra.mxu0 0.0
    %3718 = vmatprep.subr.mxu0 0.0
    %3719 = vmatpush1.msra.mxu0 0.0
    %3720 = vmatprep.subr.mxu0 0.0
    %3721 = vmatpush1.msra.mxu0 0.0
    %3722 = vmatprep.subr.mxu0 0.0
    %3723 = vmatpush1.msra.mxu0 0.0
    %3724 = vmatprep.subr.mxu0 0.0
    %3725 = vmatpush1.msra.mxu0 0.0
    %3726 = vmatprep.subr.mxu0 0.0
    %3727 = vmatpush1.msra.mxu0 0.0
    %3728 = vmatprep.subr.mxu0 0.0
    %3729 = vmatpush1.msra.mxu0 0.0
    %3730 = vmatprep.subr.mxu0 0.0
    %3731 = vmatpush1.msra.mxu0 0.0
    %3732 = vmatprep.subr.mxu0 0.0
    %3733 = vmatpush1.msra.mxu0 0.0
    %3734 = vmatprep.subr.mxu0 0.0
    %3735 = vmatpush1.msra.mxu0 0.0
    %3736 = vmatprep.subr.mxu0 0.0
    %3737 = vmatpush1.msra.mxu0 0.0
    %3738 = vmatprep.subr.mxu0 0.0
    %3739 = vmatpush1.msra.mxu0 0.0
    %3740 = vmatprep.subr.mxu0 0.0
    %3741 = vmatpush1.msra.mxu0 0.0
    %3742 = vmatprep.subr.mxu0 0.0
    %3743 = vmatpush1.msra.mxu0 0.0
    %3744 = vmatprep.subr.mxu0 0.0
    %3745 = vmatpush1.msra.mxu0 0.0
    %3746 = vmatprep.subr.mxu0 0.0
    %3747 = vmatpush1.msra.mxu0 0.0
    %3748 = vmatprep.subr.mxu0 0.0
    %3749 = vmatpush1.msra.mxu0 0.0
    %3750 = vmatprep.subr.mxu0 0.0
    %3751 = vmatpush1.msra.mxu0 0.0
    %3752 = vmatprep.subr.mxu0 0.0
    %3753 = vmatpush1.msra.mxu0 0.0
    %3754 = vmatprep.subr.mxu0 0.0
    %3755 = vmatpush1.msra.mxu0 0.0
    %3756 = vmatprep.subr.mxu0 0.0
    %3757 = vmatpush1.msra.mxu0 0.0
    %3758 = vmatprep.subr.mxu0 0.0
    %3759 = vmatpush1.msra.mxu0 0.0
    %3760 = vmatprep.mubr.f32.mxu0 0.0
    %3761 = vmatmul.mubr.f32.gmra.mrb[0].mxu0 %v1100
    %v3762 = vpop.f32.mrb[0].mxu0
    %v3763 = vadd.f32 %v3678, %v3762
    %v3764 = vpop.f32.mrb[0].mxu0
    %3765 = vmatprep.mubr.f32.mxu0 0.0
    %3766 = vmatmul.mubr.f32.gmra.mrb[0].mxu0 %v1103
    %v3767 = vpop.f32.mrb[0].mxu0
    %v3768 = vadd.f32 %v3683, %v3767
    %v3769 = vpop.f32.mrb[0].mxu0
    %3770 = vmatprep.mubr.f32.mxu0 0.0
    %3771 = vmatmul.mubr.f32.gmra.mrb[0].mxu0 %v1106
    %v3772 = vpop.f32.mrb[0].mxu0
    %v3773 = vadd.f32 %v3688, %v3772
    %v3774 = vpop.f32.mrb[0].mxu0
    %3775 = vmatprep.mubr.f32.mxu0 0.0
    %3776 = vmatmul.mubr.f32.gmra.mrb[0].mxu0 %v1109
    %v3777 = vpop.f32.mrb[0].mxu0
    %v3778 = vadd.f32 %v3693, %v3777
    %v3779 = vpop.f32.mrb[0].mxu0
    %3780 = vdwg.mxu0
    %s3781 = scalar_lea.vmem %s25, 96
    %v3782 = vld [vmem:[%s3781] sm:$0xf]
    %v3783 = vld [vmem:[%s3781 + $0x4] sm:$0xf]
    %v3784 = vld [vmem:[%s3781 + $0x8] sm:$0xf]
    %v3785 = vld [vmem:[%s3781 + $0xc] sm:$0xf]
    %v3790 = vunpack.c.l.b16 %v3782
    %v3791 = vunpack.c.l.b16 %v3783
    %v3792 = vunpack.c.l.b16 %v3784
    %v3793 = vunpack.c.l.b16 %v3785
    %v3794 = vpack.c.b16 %v3791, %v3790
    %v3795 = vpack.c.b16 %v3793, %v3792
    %3798 = vmatprep.subr.bf16.mxu0 0
    %3799 = vmatpush1.bf16.msra.mxu0 %v3794
    %3800 = vmatprep.subr.bf16.mxu0 0
    %3801 = vmatpush1.bf16.msra.mxu0 %v3795
    %3802 = vmatprep.subr.bf16.mxu0 0
    %3803 = vmatpush1.bf16.msra.mxu0 0
    %3804 = vmatprep.subr.bf16.mxu0 0
    %3805 = vmatpush1.bf16.msra.mxu0 0
    %3806 = vmatprep.subr.bf16.mxu0 0
    %3807 = vmatpush1.bf16.msra.mxu0 0
    %3808 = vmatprep.subr.bf16.mxu0 0
    %3809 = vmatpush1.bf16.msra.mxu0 0
    %3810 = vmatprep.subr.bf16.mxu0 0
    %3811 = vmatpush1.bf16.msra.mxu0 0
    %3812 = vmatprep.subr.bf16.mxu0 0
    %3813 = vmatpush1.bf16.msra.mxu0 0
    %3814 = vmatprep.subr.bf16.mxu0 0
    %3815 = vmatpush1.bf16.msra.mxu0 0
    %3816 = vmatprep.subr.bf16.mxu0 0
    %3817 = vmatpush1.bf16.msra.mxu0 0
    %3818 = vmatprep.subr.bf16.mxu0 0
    %3819 = vmatpush1.bf16.msra.mxu0 0
    %3820 = vmatprep.subr.bf16.mxu0 0
    %3821 = vmatpush1.bf16.msra.mxu0 0
    %3822 = vmatprep.subr.bf16.mxu0 0
    %3823 = vmatpush1.bf16.msra.mxu0 0
    %3824 = vmatprep.subr.bf16.mxu0 0
    %3825 = vmatpush1.bf16.msra.mxu0 0
    %3826 = vmatprep.subr.bf16.mxu0 0
    %3827 = vmatpush1.bf16.msra.mxu0 0
    %3828 = vmatprep.subr.bf16.mxu0 0
    %3829 = vmatpush1.bf16.msra.mxu0 0
    %3830 = vmatprep.mubr.bf16.mxu0 0
    %3831 = vmatmul.mubr.bf16.gmra.mrb[0].mxu0 %v3491
    %v3832 = vpop.f32.mrb[0].mxu0
    %v3833 = vadd.f32 0.0, %v3832
    %v3834 = vpop.f32.mrb[0].mxu0
    %v3835 = vpop.f32.mrb[0].mxu0
    %v3836 = vadd.f32 0.0, %v3835
    %v3837 = vpop.f32.mrb[0].mxu0
    %3838 = vmatprep.mubr.bf16.mxu0 0
    %3839 = vmatmul.mubr.bf16.gmra.mrb[0].mxu0 %v3494
    %v3840 = vpop.f32.mrb[0].mxu0
    %v3841 = vadd.f32 0.0, %v3840
    %v3842 = vpop.f32.mrb[0].mxu0
    %v3843 = vpop.f32.mrb[0].mxu0
    %v3844 = vadd.f32 0.0, %v3843
    %v3845 = vpop.f32.mrb[0].mxu0
    %3846 = vdwg.mxu0
    %3847 = vmatprep.subr.mxu0 0.0
    %3848 = vmatpush1.msra.mxu0 %v3833
    %3849 = vmatprep.subr.mxu0 0.0
    %3850 = vmatpush1.msra.mxu0 %v3836
    %3851 = vmatprep.subr.mxu0 0.0
    %3852 = vmatpush1.msra.mxu0 %v3841
    %3853 = vmatprep.subr.mxu0 0.0
    %3854 = vmatpush1.msra.mxu0 %v3844
    %3855 = vmatprep.subr.mxu0 0.0
    %3856 = vmatpush1.msra.mxu0 0.0
    %3857 = vmatprep.subr.mxu0 0.0
    %3858 = vmatpush1.msra.mxu0 0.0
    %3859 = vmatprep.subr.mxu0 0.0
    %3860 = vmatpush1.msra.mxu0 0.0
    %3861 = vmatprep.subr.mxu0 0.0
    %3862 = vmatpush1.msra.mxu0 0.0
    %3863 = vmatprep.subr.mxu0 0.0
    %3864 = vmatpush1.msra.mxu0 0.0
    %3865 = vmatprep.subr.mxu0 0.0
    %3866 = vmatpush1.msra.mxu0 0.0
    %3867 = vmatprep.subr.mxu0 0.0
    %3868 = vmatpush1.msra.mxu0 0.0
    %3869 = vmatprep.subr.mxu0 0.0
    %3870 = vmatpush1.msra.mxu0 0.0
    %3871 = vmatprep.subr.mxu0 0.0
    %3872 = vmatpush1.msra.mxu0 0.0
    %3873 = vmatprep.subr.mxu0 0.0
    %3874 = vmatpush1.msra.mxu0 0.0
    %3875 = vmatprep.subr.mxu0 0.0
    %3876 = vmatpush1.msra.mxu0 0.0
    %3877 = vmatprep.subr.mxu0 0.0
    %3878 = vmatpush1.msra.mxu0 0.0
    %3879 = vmatprep.subr.mxu0 0.0
    %3880 = vmatpush1.msra.mxu0 0.0
    %3881 = vmatprep.subr.mxu0 0.0
    %3882 = vmatpush1.msra.mxu0 0.0
    %3883 = vmatprep.subr.mxu0 0.0
    %3884 = vmatpush1.msra.mxu0 0.0
    %3885 = vmatprep.subr.mxu0 0.0
    %3886 = vmatpush1.msra.mxu0 0.0
    %3887 = vmatprep.subr.mxu0 0.0
    %3888 = vmatpush1.msra.mxu0 0.0
    %3889 = vmatprep.subr.mxu0 0.0
    %3890 = vmatpush1.msra.mxu0 0.0
    %3891 = vmatprep.subr.mxu0 0.0
    %3892 = vmatpush1.msra.mxu0 0.0
    %3893 = vmatprep.subr.mxu0 0.0
    %3894 = vmatpush1.msra.mxu0 0.0
    %3895 = vmatprep.subr.mxu0 0.0
    %3896 = vmatpush1.msra.mxu0 0.0
    %3897 = vmatprep.subr.mxu0 0.0
    %3898 = vmatpush1.msra.mxu0 0.0
    %3899 = vmatprep.subr.mxu0 0.0
    %3900 = vmatpush1.msra.mxu0 0.0
    %3901 = vmatprep.subr.mxu0 0.0
    %3902 = vmatpush1.msra.mxu0 0.0
    %3903 = vmatprep.subr.mxu0 0.0
    %3904 = vmatpush1.msra.mxu0 0.0
    %3905 = vmatprep.subr.mxu0 0.0
    %3906 = vmatpush1.msra.mxu0 0.0
    %3907 = vmatprep.subr.mxu0 0.0
    %3908 = vmatpush1.msra.mxu0 0.0
    %3909 = vmatprep.subr.mxu0 0.0
    %3910 = vmatpush1.msra.mxu0 0.0
    %3911 = vmatprep.mubr.f32.mxu0 0.0
    %3912 = vmatmul.mubr.f32.gmra.mrb[0].mxu0 %v1268
    %v3913 = vpop.f32.mrb[0].mxu0
    %v3914 = vadd.f32 0.0, %v3913
    %v3915 = vpop.f32.mrb[0].mxu0
    %3916 = vmatprep.mubr.f32.mxu0 0.0
    %3917 = vmatmul.mubr.f32.gmra.mrb[0].mxu0 %v1271
    %v3918 = vpop.f32.mrb[0].mxu0
    %v3919 = vadd.f32 0.0, %v3918
    %v3920 = vpop.f32.mrb[0].mxu0
    %3921 = vmatprep.mubr.f32.mxu0 0.0
    %3922 = vmatmul.mubr.f32.gmra.mrb[0].mxu0 %v1274
    %v3923 = vpop.f32.mrb[0].mxu0
    %v3924 = vadd.f32 0.0, %v3923
    %v3925 = vpop.f32.mrb[0].mxu0
    %3926 = vmatprep.mubr.f32.mxu0 0.0
    %3927 = vmatmul.mubr.f32.gmra.mrb[0].mxu0 %v1277
    %v3928 = vpop.f32.mrb[0].mxu0
    %v3929 = vadd.f32 0.0, %v3928
    %v3930 = vpop.f32.mrb[0].mxu0
    %3931 = vdwg.mxu0
    %v3932 = vadd.f32 %v3763, %v3914
    %v3933 = vadd.f32 %v3768, %v3919
    %v3934 = vadd.f32 %v3773, %v3924
    %v3935 = vadd.f32 %v3778, %v3929
    %s3936 = scalar_lea.vmem %s25, 112
    %v3937 = vld [vmem:[%s3936] sm:$0xf]
    %v3938 = vld [vmem:[%s3936 + $0x4] sm:$0xf]
    %v3939 = vld [vmem:[%s3936 + $0x8] sm:$0xf]
    %v3940 = vld [vmem:[%s3936 + $0xc] sm:$0xf]
    %v3945 = vunpack.c.l.b16 %v3937
    %v3946 = vunpack.c.l.b16 %v3938
    %v3947 = vunpack.c.l.b16 %v3939
    %v3948 = vunpack.c.l.b16 %v3940
    %v3949 = vpack.c.b16 %v3946, %v3945
    %v3950 = vpack.c.b16 %v3948, %v3947
    %3953 = vmatprep.subr.bf16.mxu0 0
    %3954 = vmatpush1.bf16.msra.mxu0 %v3949
    %3955 = vmatprep.subr.bf16.mxu0 0
    %3956 = vmatpush1.bf16.msra.mxu0 %v3950
    %3957 = vmatprep.subr.bf16.mxu0 0
    %3958 = vmatpush1.bf16.msra.mxu0 0
    %3959 = vmatprep.subr.bf16.mxu0 0
    %3960 = vmatpush1.bf16.msra.mxu0 0
    %3961 = vmatprep.subr.bf16.mxu0 0
    %3962 = vmatpush1.bf16.msra.mxu0 0
    %3963 = vmatprep.subr.bf16.mxu0 0
    %3964 = vmatpush1.bf16.msra.mxu0 0
    %3965 = vmatprep.subr.bf16.mxu0 0
    %3966 = vmatpush1.bf16.msra.mxu0 0
    %3967 = vmatprep.subr.bf16.mxu0 0
    %3968 = vmatpush1.bf16.msra.mxu0 0
    %3969 = vmatprep.subr.bf16.mxu0 0
    %3970 = vmatpush1.bf16.msra.mxu0 0
    %3971 = vmatprep.subr.bf16.mxu0 0
    %3972 = vmatpush1.bf16.msra.mxu0 0
    %3973 = vmatprep.subr.bf16.mxu0 0
    %3974 = vmatpush1.bf16.msra.mxu0 0
    %3975 = vmatprep.subr.bf16.mxu0 0
    %3976 = vmatpush1.bf16.msra.mxu0 0
    %3977 = vmatprep.subr.bf16.mxu0 0
    %3978 = vmatpush1.bf16.msra.mxu0 0
    %3979 = vmatprep.subr.bf16.mxu0 0
    %3980 = vmatpush1.bf16.msra.mxu0 0
    %3981 = vmatprep.subr.bf16.mxu0 0
    %3982 = vmatpush1.bf16.msra.mxu0 0
    %3983 = vmatprep.subr.bf16.mxu0 0
    %3984 = vmatpush1.bf16.msra.mxu0 0
    %3985 = vmatprep.mubr.bf16.mxu0 0
    %3986 = vmatmul.mubr.bf16.gmra.mrb[0].mxu0 %v3491
    %v3987 = vpop.f32.mrb[0].mxu0
    %v3988 = vadd.f32 0.0, %v3987
    %v3989 = vpop.f32.mrb[0].mxu0
    %v3990 = vpop.f32.mrb[0].mxu0
    %v3991 = vadd.f32 0.0, %v3990
    %v3992 = vpop.f32.mrb[0].mxu0
    %3993 = vmatprep.mubr.bf16.mxu0 0
    %3994 = vmatmul.mubr.bf16.gmra.mrb[0].mxu0 %v3494
    %v3995 = vpop.f32.mrb[0].mxu0
    %v3996 = vadd.f32 0.0, %v3995
    %v3997 = vpop.f32.mrb[0].mxu0
    %v3998 = vpop.f32.mrb[0].mxu0
    %v3999 = vadd.f32 0.0, %v3998
    %v4000 = vpop.f32.mrb[0].mxu0
    %4001 = vdwg.mxu0
    %4002 = vmatprep.subr.mxu0 0.0
    %4003 = vmatpush1.msra.mxu0 %v3988
    %4004 = vmatprep.subr.mxu0 0.0
    %4005 = vmatpush1.msra.mxu0 %v3991
    %4006 = vmatprep.subr.mxu0 0.0
    %4007 = vmatpush1.msra.mxu0 %v3996
    %4008 = vmatprep.subr.mxu0 0.0
    %4009 = vmatpush1.msra.mxu0 %v3999
    %4010 = vmatprep.subr.mxu0 0.0
    %4011 = vmatpush1.msra.mxu0 0.0
    %4012 = vmatprep.subr.mxu0 0.0
    %4013 = vmatpush1.msra.mxu0 0.0
    %4014 = vmatprep.subr.mxu0 0.0
    %4015 = vmatpush1.msra.mxu0 0.0
    %4016 = vmatprep.subr.mxu0 0.0
    %4017 = vmatpush1.msra.mxu0 0.0
    %4018 = vmatprep.subr.mxu0 0.0
    %4019 = vmatpush1.msra.mxu0 0.0
    %4020 = vmatprep.subr.mxu0 0.0
    %4021 = vmatpush1.msra.mxu0 0.0
    %4022 = vmatprep.subr.mxu0 0.0
    %4023 = vmatpush1.msra.mxu0 0.0
    %4024 = vmatprep.subr.mxu0 0.0
    %4025 = vmatpush1.msra.mxu0 0.0
    %4026 = vmatprep.subr.mxu0 0.0
    %4027 = vmatpush1.msra.mxu0 0.0
    %4028 = vmatprep.subr.mxu0 0.0
    %4029 = vmatpush1.msra.mxu0 0.0
    %4030 = vmatprep.subr.mxu0 0.0
    %4031 = vmatpush1.msra.mxu0 0.0
    %4032 = vmatprep.subr.mxu0 0.0
    %4033 = vmatpush1.msra.mxu0 0.0
    %4034 = vmatprep.subr.mxu0 0.0
    %4035 = vmatpush1.msra.mxu0 0.0
    %4036 = vmatprep.subr.mxu0 0.0
    %4037 = vmatpush1.msra.mxu0 0.0
    %4038 = vmatprep.subr.mxu0 0.0
    %4039 = vmatpush1.msra.mxu0 0.0
    %4040 = vmatprep.subr.mxu0 0.0
    %4041 = vmatpush1.msra.mxu0 0.0
    %4042 = vmatprep.subr.mxu0 0.0
    %4043 = vmatpush1.msra.mxu0 0.0
    %4044 = vmatprep.subr.mxu0 0.0
    %4045 = vmatpush1.msra.mxu0 0.0
    %4046 = vmatprep.subr.mxu0 0.0
    %4047 = vmatpush1.msra.mxu0 0.0
    %4048 = vmatprep.subr.mxu0 0.0
    %4049 = vmatpush1.msra.mxu0 0.0
    %4050 = vmatprep.subr.mxu0 0.0
    %4051 = vmatpush1.msra.mxu0 0.0
    %4052 = vmatprep.subr.mxu0 0.0
    %4053 = vmatpush1.msra.mxu0 0.0
    %4054 = vmatprep.subr.mxu0 0.0
    %4055 = vmatpush1.msra.mxu0 0.0
    %4056 = vmatprep.subr.mxu0 0.0
    %4057 = vmatpush1.msra.mxu0 0.0
    %4058 = vmatprep.subr.mxu0 0.0
    %4059 = vmatpush1.msra.mxu0 0.0
    %4060 = vmatprep.subr.mxu0 0.0
    %4061 = vmatpush1.msra.mxu0 0.0
    %4062 = vmatprep.subr.mxu0 0.0
    %4063 = vmatpush1.msra.mxu0 0.0
    %4064 = vmatprep.subr.mxu0 0.0
    %4065 = vmatpush1.msra.mxu0 0.0
    %4066 = vmatprep.mubr.f32.mxu0 0.0
    %4067 = vmatmul.mubr.f32.gmra.mrb[0].mxu0 %v1440
    %v4068 = vpop.f32.mrb[0].mxu0
    %v4069 = vadd.f32 0.0, %v4068
    %v4070 = vpop.f32.mrb[0].mxu0
    %4071 = vmatprep.mubr.f32.mxu0 0.0
    %4072 = vmatmul.mubr.f32.gmra.mrb[0].mxu0 %v1443
    %v4073 = vpop.f32.mrb[0].mxu0
    %v4074 = vadd.f32 0.0, %v4073
    %v4075 = vpop.f32.mrb[0].mxu0
    %4076 = vmatprep.mubr.f32.mxu0 0.0
    %4077 = vmatmul.mubr.f32.gmra.mrb[0].mxu0 %v1446
    %v4078 = vpop.f32.mrb[0].mxu0
    %v4079 = vadd.f32 0.0, %v4078
    %v4080 = vpop.f32.mrb[0].mxu0
    %4081 = vmatprep.mubr.f32.mxu0 0.0
    %4082 = vmatmul.mubr.f32.gmra.mrb[0].mxu0 %v1449
    %v4083 = vpop.f32.mrb[0].mxu0
    %v4084 = vadd.f32 0.0, %v4083
    %v4085 = vpop.f32.mrb[0].mxu0
    %4086 = vdwg.mxu0
    %v4087 = vadd.f32 %v3932, %v4069
    %v4088 = vadd.f32 %v3933, %v4074
    %v4089 = vadd.f32 %v3934, %v4079
    %v4090 = vadd.f32 %v3935, %v4084
    %s4091 = scalar_lea.vmem [#allocation6], 1
    %v4092 = vld [vmem:[%s4091] sm:$0x1]
    %v4094 = vlaneseq
    %v4095 = vshrl.u32 %v4094, 7
    %v4096 = vsub.s32 0, %v4095
    %v4097 = vrot.slane %v4092, %v4096
    %v4099 = vadd.f32 %v4087, %v4097
    %v4100 = vadd.f32 %v4088, %v4097
    %v4101 = vadd.f32 %v4089, %v4097
    %v4102 = vadd.f32 %v4090, %v4097
    %s4103 = scalar_lea.vmem %s29, 64
    %v4104 = vld [vmem:[%s4103] sm:$0xf]
    %v4105 = vld [vmem:[%s4103 + $0x4] sm:$0xf]
    %v4106 = vld [vmem:[%s4103 + $0x8] sm:$0xf]
    %v4107 = vld [vmem:[%s4103 + $0xc] sm:$0xf]
    %v4112 = vunpack.c.l.b16 %v4104
    %v4113 = vunpack.c.l.b16 %v4105
    %v4114 = vunpack.c.l.b16 %v4106
    %v4115 = vunpack.c.l.b16 %v4107
    %v4116 = vpack.c.b16 %v4113, %v4112
    %v4117 = vpack.c.b16 %v4115, %v4114
    %4120 = vmatprep.subr.bf16.mxu0 0
    %4121 = vmatpush1.bf16.msra.mxu0 %v4116
    %4122 = vmatprep.subr.bf16.mxu0 0
    %4123 = vmatpush1.bf16.msra.mxu0 %v4117
    %4124 = vmatprep.subr.bf16.mxu0 0
    %4125 = vmatpush1.bf16.msra.mxu0 0
    %4126 = vmatprep.subr.bf16.mxu0 0
    %4127 = vmatpush1.bf16.msra.mxu0 0
    %4128 = vmatprep.subr.bf16.mxu0 0
    %4129 = vmatpush1.bf16.msra.mxu0 0
    %4130 = vmatprep.subr.bf16.mxu0 0
    %4131 = vmatpush1.bf16.msra.mxu0 0
    %4132 = vmatprep.subr.bf16.mxu0 0
    %4133 = vmatpush1.bf16.msra.mxu0 0
    %4134 = vmatprep.subr.bf16.mxu0 0
    %4135 = vmatpush1.bf16.msra.mxu0 0
    %4136 = vmatprep.subr.bf16.mxu0 0
    %4137 = vmatpush1.bf16.msra.mxu0 0
    %4138 = vmatprep.subr.bf16.mxu0 0
    %4139 = vmatpush1.bf16.msra.mxu0 0
    %4140 = vmatprep.subr.bf16.mxu0 0
    %4141 = vmatpush1.bf16.msra.mxu0 0
    %4142 = vmatprep.subr.bf16.mxu0 0
    %4143 = vmatpush1.bf16.msra.mxu0 0
    %4144 = vmatprep.subr.bf16.mxu0 0
    %4145 = vmatpush1.bf16.msra.mxu0 0
    %4146 = vmatprep.subr.bf16.mxu0 0
    %4147 = vmatpush1.bf16.msra.mxu0 0
    %4148 = vmatprep.subr.bf16.mxu0 0
    %4149 = vmatpush1.bf16.msra.mxu0 0
    %4150 = vmatprep.subr.bf16.mxu0 0
    %4151 = vmatpush1.bf16.msra.mxu0 0
    %4152 = vmatprep.mubr.bf16.mxu0 0
    %4153 = vmatmul.mubr.bf16.gmra.mrb[0].mxu0 %v3491
    %v4154 = vpop.f32.mrb[0].mxu0
    %v4155 = vadd.f32 0.0, %v4154
    %v4156 = vpop.f32.mrb[0].mxu0
    %v4157 = vpop.f32.mrb[0].mxu0
    %v4158 = vadd.f32 0.0, %v4157
    %v4159 = vpop.f32.mrb[0].mxu0
    %4160 = vmatprep.mubr.bf16.mxu0 0
    %4161 = vmatmul.mubr.bf16.gmra.mrb[0].mxu0 %v3494
    %v4162 = vpop.f32.mrb[0].mxu0
    %v4163 = vadd.f32 0.0, %v4162
    %v4164 = vpop.f32.mrb[0].mxu0
    %v4165 = vpop.f32.mrb[0].mxu0
    %v4166 = vadd.f32 0.0, %v4165
    %v4167 = vpop.f32.mrb[0].mxu0
    %4168 = vdwg.mxu0
    %s4169 = scalar_lea.vmem %s29, 80
    %v4170 = vld [vmem:[%s4169] sm:$0xf]
    %v4171 = vld [vmem:[%s4169 + $0x4] sm:$0xf]
    %v4172 = vld [vmem:[%s4169 + $0x8] sm:$0xf]
    %v4173 = vld [vmem:[%s4169 + $0xc] sm:$0xf]
    %v4178 = vunpack.c.l.b16 %v4170
    %v4179 = vunpack.c.l.b16 %v4171
    %v4180 = vunpack.c.l.b16 %v4172
    %v4181 = vunpack.c.l.b16 %v4173
    %v4182 = vpack.c.b16 %v4179, %v4178
    %v4183 = vpack.c.b16 %v4181, %v4180
    %4186 = vmatprep.subr.bf16.mxu0 0
    %4187 = vmatpush1.bf16.msra.mxu0 %v4182
    %4188 = vmatprep.subr.bf16.mxu0 0
    %4189 = vmatpush1.bf16.msra.mxu0 %v4183
    %4190 = vmatprep.subr.bf16.mxu0 0
    %4191 = vmatpush1.bf16.msra.mxu0 0
    %4192 = vmatprep.subr.bf16.mxu0 0
    %4193 = vmatpush1.bf16.msra.mxu0 0
    %4194 = vmatprep.subr.bf16.mxu0 0
    %4195 = vmatpush1.bf16.msra.mxu0 0
    %4196 = vmatprep.subr.bf16.mxu0 0
    %4197 = vmatpush1.bf16.msra.mxu0 0
    %4198 = vmatprep.subr.bf16.mxu0 0
    %4199 = vmatpush1.bf16.msra.mxu0 0
    %4200 = vmatprep.subr.bf16.mxu0 0
    %4201 = vmatpush1.bf16.msra.mxu0 0
    %4202 = vmatprep.subr.bf16.mxu0 0
    %4203 = vmatpush1.bf16.msra.mxu0 0
    %4204 = vmatprep.subr.bf16.mxu0 0
    %4205 = vmatpush1.bf16.msra.mxu0 0
    %4206 = vmatprep.subr.bf16.mxu0 0
    %4207 = vmatpush1.bf16.msra.mxu0 0
    %4208 = vmatprep.subr.bf16.mxu0 0
    %4209 = vmatpush1.bf16.msra.mxu0 0
    %4210 = vmatprep.subr.bf16.mxu0 0
    %4211 = vmatpush1.bf16.msra.mxu0 0
    %4212 = vmatprep.subr.bf16.mxu0 0
    %4213 = vmatpush1.bf16.msra.mxu0 0
    %4214 = vmatprep.subr.bf16.mxu0 0
    %4215 = vmatpush1.bf16.msra.mxu0 0
    %4216 = vmatprep.subr.bf16.mxu0 0
    %4217 = vmatpush1.bf16.msra.mxu0 0
    %4218 = vmatprep.mubr.bf16.mxu0 0
    %4219 = vmatmul.mubr.bf16.gmra.mrb[0].mxu0 %v3491
    %v4220 = vpop.f32.mrb[0].mxu0
    %v4221 = vadd.f32 0.0, %v4220
    %v4222 = vpop.f32.mrb[0].mxu0
    %v4223 = vpop.f32.mrb[0].mxu0
    %v4224 = vadd.f32 0.0, %v4223
    %v4225 = vpop.f32.mrb[0].mxu0
    %4226 = vmatprep.mubr.bf16.mxu0 0
    %4227 = vmatmul.mubr.bf16.gmra.mrb[0].mxu0 %v3494
    %v4228 = vpop.f32.mrb[0].mxu0
    %v4229 = vadd.f32 0.0, %v4228
    %v4230 = vpop.f32.mrb[0].mxu0
    %v4231 = vpop.f32.mrb[0].mxu0
    %v4232 = vadd.f32 0.0, %v4231
    %v4233 = vpop.f32.mrb[0].mxu0
    %4234 = vdwg.mxu0
    %4235 = vmatprep.subr.mxu0 0.0
    %4236 = vmatpush1.msra.mxu0 %v4221
    %4237 = vmatprep.subr.mxu0 0.0
    %4238 = vmatpush1.msra.mxu0 %v4224
    %4239 = vmatprep.subr.mxu0 0.0
    %4240 = vmatpush1.msra.mxu0 %v4229
    %4241 = vmatprep.subr.mxu0 0.0
    %4242 = vmatpush1.msra.mxu0 %v4232
    %4243 = vmatprep.subr.mxu0 0.0
    %4244 = vmatpush1.msra.mxu0 0.0
    %4245 = vmatprep.subr.mxu0 0.0
    %4246 = vmatpush1.msra.mxu0 0.0
    %4247 = vmatprep.subr.mxu0 0.0
    %4248 = vmatpush1.msra.mxu0 0.0
    %4249 = vmatprep.subr.mxu0 0.0
    %4250 = vmatpush1.msra.mxu0 0.0
    %4251 = vmatprep.subr.mxu0 0.0
    %4252 = vmatpush1.msra.mxu0 0.0
    %4253 = vmatprep.subr.mxu0 0.0
    %4254 = vmatpush1.msra.mxu0 0.0
    %4255 = vmatprep.subr.mxu0 0.0
    %4256 = vmatpush1.msra.mxu0 0.0
    %4257 = vmatprep.subr.mxu0 0.0
    %4258 = vmatpush1.msra.mxu0 0.0
    %4259 = vmatprep.subr.mxu0 0.0
    %4260 = vmatpush1.msra.mxu0 0.0
    %4261 = vmatprep.subr.mxu0 0.0
    %4262 = vmatpush1.msra.mxu0 0.0
    %4263 = vmatprep.subr.mxu0 0.0
    %4264 = vmatpush1.msra.mxu0 0.0
    %4265 = vmatprep.subr.mxu0 0.0
    %4266 = vmatpush1.msra.mxu0 0.0
    %4267 = vmatprep.subr.mxu0 0.0
    %4268 = vmatpush1.msra.mxu0 0.0
    %4269 = vmatprep.subr.mxu0 0.0
    %4270 = vmatpush1.msra.mxu0 0.0
    %4271 = vmatprep.subr.mxu0 0.0
    %4272 = vmatpush1.msra.mxu0 0.0
    %4273 = vmatprep.subr.mxu0 0.0
    %4274 = vmatpush1.msra.mxu0 0.0
    %4275 = vmatprep.subr.mxu0 0.0
    %4276 = vmatpush1.msra.mxu0 0.0
    %4277 = vmatprep.subr.mxu0 0.0
    %4278 = vmatpush1.msra.mxu0 0.0
    %4279 = vmatprep.subr.mxu0 0.0
    %4280 = vmatpush1.msra.mxu0 0.0
    %4281 = vmatprep.subr.mxu0 0.0
    %4282 = vmatpush1.msra.mxu0 0.0
    %4283 = vmatprep.subr.mxu0 0.0
    %4284 = vmatpush1.msra.mxu0 0.0
    %4285 = vmatprep.subr.mxu0 0.0
    %4286 = vmatpush1.msra.mxu0 0.0
    %4287 = vmatprep.subr.mxu0 0.0
    %4288 = vmatpush1.msra.mxu0 0.0
    %4289 = vmatprep.subr.mxu0 0.0
    %4290 = vmatpush1.msra.mxu0 0.0
    %4291 = vmatprep.subr.mxu0 0.0
    %4292 = vmatpush1.msra.mxu0 0.0
    %4293 = vmatprep.subr.mxu0 0.0
    %4294 = vmatpush1.msra.mxu0 0.0
    %4295 = vmatprep.subr.mxu0 0.0
    %4296 = vmatpush1.msra.mxu0 0.0
    %4297 = vmatprep.subr.mxu0 0.0
    %4298 = vmatpush1.msra.mxu0 0.0
    %4299 = vmatprep.mubr.f32.mxu0 0.0
    %4300 = vmatmul.mubr.f32.gmra.mrb[0].mxu0 %v1003
    %v4301 = vpop.f32.mrb[0].mxu0
    %v4302 = vadd.f32 0.0, %v4301
    %v4303 = vpop.f32.mrb[0].mxu0
    %4304 = vmatprep.mubr.f32.mxu0 0.0
    %4305 = vmatmul.mubr.f32.gmra.mrb[0].mxu0 %v1006
    %v4306 = vpop.f32.mrb[0].mxu0
    %v4307 = vadd.f32 0.0, %v4306
    %v4308 = vpop.f32.mrb[0].mxu0
    %4309 = vmatprep.mubr.f32.mxu0 0.0
    %4310 = vmatmul.mubr.f32.gmra.mrb[0].mxu0 %v1009
    %v4311 = vpop.f32.mrb[0].mxu0
    %v4312 = vadd.f32 0.0, %v4311
    %v4313 = vpop.f32.mrb[0].mxu0
    %4314 = vmatprep.mubr.f32.mxu0 0.0
    %4315 = vmatmul.mubr.f32.gmra.mrb[0].mxu0 %v1012
    %v4316 = vpop.f32.mrb[0].mxu0
    %v4317 = vadd.f32 0.0, %v4316
    %v4318 = vpop.f32.mrb[0].mxu0
    %4319 = vdwg.mxu0
    %4320 = vmatprep.subr.mxu0 0.0
    %4321 = vmatpush1.msra.mxu0 %v4155
    %4322 = vmatprep.subr.mxu0 0.0
    %4323 = vmatpush1.msra.mxu0 %v4158
    %4324 = vmatprep.subr.mxu0 0.0
    %4325 = vmatpush1.msra.mxu0 %v4163
    %4326 = vmatprep.subr.mxu0 0.0
    %4327 = vmatpush1.msra.mxu0 %v4166
    %4328 = vmatprep.subr.mxu0 0.0
    %4329 = vmatpush1.msra.mxu0 0.0
    %4330 = vmatprep.subr.mxu0 0.0
    %4331 = vmatpush1.msra.mxu0 0.0
    %4332 = vmatprep.subr.mxu0 0.0
    %4333 = vmatpush1.msra.mxu0 0.0
    %4334 = vmatprep.subr.mxu0 0.0
    %4335 = vmatpush1.msra.mxu0 0.0
    %4336 = vmatprep.subr.mxu0 0.0
    %4337 = vmatpush1.msra.mxu0 0.0
    %4338 = vmatprep.subr.mxu0 0.0
    %4339 = vmatpush1.msra.mxu0 0.0
    %4340 = vmatprep.subr.mxu0 0.0
    %4341 = vmatpush1.msra.mxu0 0.0
    %4342 = vmatprep.subr.mxu0 0.0
    %4343 = vmatpush1.msra.mxu0 0.0
    %4344 = vmatprep.subr.mxu0 0.0
    %4345 = vmatpush1.msra.mxu0 0.0
    %4346 = vmatprep.subr.mxu0 0.0
    %4347 = vmatpush1.msra.mxu0 0.0
    %4348 = vmatprep.subr.mxu0 0.0
    %4349 = vmatpush1.msra.mxu0 0.0
    %4350 = vmatprep.subr.mxu0 0.0
    %4351 = vmatpush1.msra.mxu0 0.0
    %4352 = vmatprep.subr.mxu0 0.0
    %4353 = vmatpush1.msra.mxu0 0.0
    %4354 = vmatprep.subr.mxu0 0.0
    %4355 = vmatpush1.msra.mxu0 0.0
    %4356 = vmatprep.subr.mxu0 0.0
    %4357 = vmatpush1.msra.mxu0 0.0
    %4358 = vmatprep.subr.mxu0 0.0
    %4359 = vmatpush1.msra.mxu0 0.0
    %4360 = vmatprep.subr.mxu0 0.0
    %4361 = vmatpush1.msra.mxu0 0.0
    %4362 = vmatprep.subr.mxu0 0.0
    %4363 = vmatpush1.msra.mxu0 0.0
    %4364 = vmatprep.subr.mxu0 0.0
    %4365 = vmatpush1.msra.mxu0 0.0
    %4366 = vmatprep.subr.mxu0 0.0
    %4367 = vmatpush1.msra.mxu0 0.0
    %4368 = vmatprep.subr.mxu0 0.0
    %4369 = vmatpush1.msra.mxu0 0.0
    %4370 = vmatprep.subr.mxu0 0.0
    %4371 = vmatpush1.msra.mxu0 0.0
    %4372 = vmatprep.subr.mxu0 0.0
    %4373 = vmatpush1.msra.mxu0 0.0
    %4374 = vmatprep.subr.mxu0 0.0
    %4375 = vmatpush1.msra.mxu0 0.0
    %4376 = vmatprep.subr.mxu0 0.0
    %4377 = vmatpush1.msra.mxu0 0.0
    %4378 = vmatprep.subr.mxu0 0.0
    %4379 = vmatpush1.msra.mxu0 0.0
    %4380 = vmatprep.subr.mxu0 0.0
    %4381 = vmatpush1.msra.mxu0 0.0
    %4382 = vmatprep.subr.mxu0 0.0
    %4383 = vmatpush1.msra.mxu0 0.0
    %4384 = vmatprep.mubr.f32.mxu0 0.0
    %4385 = vmatmul.mubr.f32.gmra.mrb[0].mxu0 %v1100
    %v4386 = vpop.f32.mrb[0].mxu0
    %v4387 = vadd.f32 %v4302, %v4386
    %v4388 = vpop.f32.mrb[0].mxu0
    %4389 = vmatprep.mubr.f32.mxu0 0.0
    %4390 = vmatmul.mubr.f32.gmra.mrb[0].mxu0 %v1103
    %v4391 = vpop.f32.mrb[0].mxu0
    %v4392 = vadd.f32 %v4307, %v4391
    %v4393 = vpop.f32.mrb[0].mxu0
    %4394 = vmatprep.mubr.f32.mxu0 0.0
    %4395 = vmatmul.mubr.f32.gmra.mrb[0].mxu0 %v1106
    %v4396 = vpop.f32.mrb[0].mxu0
    %v4397 = vadd.f32 %v4312, %v4396
    %v4398 = vpop.f32.mrb[0].mxu0
    %4399 = vmatprep.mubr.f32.mxu0 0.0
    %4400 = vmatmul.mubr.f32.gmra.mrb[0].mxu0 %v1109
    %v4401 = vpop.f32.mrb[0].mxu0
    %v4402 = vadd.f32 %v4317, %v4401
    %v4403 = vpop.f32.mrb[0].mxu0
    %4404 = vdwg.mxu0
    %s4405 = scalar_lea.vmem %s29, 96
    %v4406 = vld [vmem:[%s4405] sm:$0xf]
    %v4407 = vld [vmem:[%s4405 + $0x4] sm:$0xf]
    %v4408 = vld [vmem:[%s4405 + $0x8] sm:$0xf]
    %v4409 = vld [vmem:[%s4405 + $0xc] sm:$0xf]
    %v4414 = vunpack.c.l.b16 %v4406
    %v4415 = vunpack.c.l.b16 %v4407
    %v4416 = vunpack.c.l.b16 %v4408
    %v4417 = vunpack.c.l.b16 %v4409
    %v4418 = vpack.c.b16 %v4415, %v4414
    %v4419 = vpack.c.b16 %v4417, %v4416
    %4422 = vmatprep.subr.bf16.mxu0 0
    %4423 = vmatpush1.bf16.msra.mxu0 %v4418
    %4424 = vmatprep.subr.bf16.mxu0 0
    %4425 = vmatpush1.bf16.msra.mxu0 %v4419
    %4426 = vmatprep.subr.bf16.mxu0 0
    %4427 = vmatpush1.bf16.msra.mxu0 0
    %4428 = vmatprep.subr.bf16.mxu0 0
    %4429 = vmatpush1.bf16.msra.mxu0 0
    %4430 = vmatprep.subr.bf16.mxu0 0
    %4431 = vmatpush1.bf16.msra.mxu0 0
    %4432 = vmatprep.subr.bf16.mxu0 0
    %4433 = vmatpush1.bf16.msra.mxu0 0
    %4434 = vmatprep.subr.bf16.mxu0 0
    %4435 = vmatpush1.bf16.msra.mxu0 0
    %4436 = vmatprep.subr.bf16.mxu0 0
    %4437 = vmatpush1.bf16.msra.mxu0 0
    %4438 = vmatprep.subr.bf16.mxu0 0
    %4439 = vmatpush1.bf16.msra.mxu0 0
    %4440 = vmatprep.subr.bf16.mxu0 0
    %4441 = vmatpush1.bf16.msra.mxu0 0
    %4442 = vmatprep.subr.bf16.mxu0 0
    %4443 = vmatpush1.bf16.msra.mxu0 0
    %4444 = vmatprep.subr.bf16.mxu0 0
    %4445 = vmatpush1.bf16.msra.mxu0 0
    %4446 = vmatprep.subr.bf16.mxu0 0
    %4447 = vmatpush1.bf16.msra.mxu0 0
    %4448 = vmatprep.subr.bf16.mxu0 0
    %4449 = vmatpush1.bf16.msra.mxu0 0
    %4450 = vmatprep.subr.bf16.mxu0 0
    %4451 = vmatpush1.bf16.msra.mxu0 0
    %4452 = vmatprep.subr.bf16.mxu0 0
    %4453 = vmatpush1.bf16.msra.mxu0 0
    %4454 = vmatprep.mubr.bf16.mxu0 0
    %4455 = vmatmul.mubr.bf16.gmra.mrb[0].mxu0 %v3491
    %v4456 = vpop.f32.mrb[0].mxu0
    %v4457 = vadd.f32 0.0, %v4456
    %v4458 = vpop.f32.mrb[0].mxu0
    %v4459 = vpop.f32.mrb[0].mxu0
    %v4460 = vadd.f32 0.0, %v4459
    %v4461 = vpop.f32.mrb[0].mxu0
    %4462 = vmatprep.mubr.bf16.mxu0 0
    %4463 = vmatmul.mubr.bf16.gmra.mrb[0].mxu0 %v3494
    %v4464 = vpop.f32.mrb[0].mxu0
    %v4465 = vadd.f32 0.0, %v4464
    %v4466 = vpop.f32.mrb[0].mxu0
    %v4467 = vpop.f32.mrb[0].mxu0
    %v4468 = vadd.f32 0.0, %v4467
    %v4469 = vpop.f32.mrb[0].mxu0
    %4470 = vdwg.mxu0
    %4471 = vmatprep.subr.mxu0 0.0
    %4472 = vmatpush1.msra.mxu0 %v4457
    %4473 = vmatprep.subr.mxu0 0.0
    %4474 = vmatpush1.msra.mxu0 %v4460
    %4475 = vmatprep.subr.mxu0 0.0
    %4476 = vmatpush1.msra.mxu0 %v4465
    %4477 = vmatprep.subr.mxu0 0.0
    %4478 = vmatpush1.msra.mxu0 %v4468
    %4479 = vmatprep.subr.mxu0 0.0
    %4480 = vmatpush1.msra.mxu0 0.0
    %4481 = vmatprep.subr.mxu0 0.0
    %4482 = vmatpush1.msra.mxu0 0.0
    %4483 = vmatprep.subr.mxu0 0.0
    %4484 = vmatpush1.msra.mxu0 0.0
    %4485 = vmatprep.subr.mxu0 0.0
    %4486 = vmatpush1.msra.mxu0 0.0
    %4487 = vmatprep.subr.mxu0 0.0
    %4488 = vmatpush1.msra.mxu0 0.0
    %4489 = vmatprep.subr.mxu0 0.0
    %4490 = vmatpush1.msra.mxu0 0.0
    %4491 = vmatprep.subr.mxu0 0.0
    %4492 = vmatpush1.msra.mxu0 0.0
    %4493 = vmatprep.subr.mxu0 0.0
    %4494 = vmatpush1.msra.mxu0 0.0
    %4495 = vmatprep.subr.mxu0 0.0
    %4496 = vmatpush1.msra.mxu0 0.0
    %4497 = vmatprep.subr.mxu0 0.0
    %4498 = vmatpush1.msra.mxu0 0.0
    %4499 = vmatprep.subr.mxu0 0.0
    %4500 = vmatpush1.msra.mxu0 0.0
    %4501 = vmatprep.subr.mxu0 0.0
    %4502 = vmatpush1.msra.mxu0 0.0
    %4503 = vmatprep.subr.mxu0 0.0
    %4504 = vmatpush1.msra.mxu0 0.0
    %4505 = vmatprep.subr.mxu0 0.0
    %4506 = vmatpush1.msra.mxu0 0.0
    %4507 = vmatprep.subr.mxu0 0.0
    %4508 = vmatpush1.msra.mxu0 0.0
    %4509 = vmatprep.subr.mxu0 0.0
    %4510 = vmatpush1.msra.mxu0 0.0
    %4511 = vmatprep.subr.mxu0 0.0
    %4512 = vmatpush1.msra.mxu0 0.0
    %4513 = vmatprep.subr.mxu0 0.0
    %4514 = vmatpush1.msra.mxu0 0.0
    %4515 = vmatprep.subr.mxu0 0.0
    %4516 = vmatpush1.msra.mxu0 0.0
    %4517 = vmatprep.subr.mxu0 0.0
    %4518 = vmatpush1.msra.mxu0 0.0
    %4519 = vmatprep.subr.mxu0 0.0
    %4520 = vmatpush1.msra.mxu0 0.0
    %4521 = vmatprep.subr.mxu0 0.0
    %4522 = vmatpush1.msra.mxu0 0.0
    %4523 = vmatprep.subr.mxu0 0.0
    %4524 = vmatpush1.msra.mxu0 0.0
    %4525 = vmatprep.subr.mxu0 0.0
    %4526 = vmatpush1.msra.mxu0 0.0
    %4527 = vmatprep.subr.mxu0 0.0
    %4528 = vmatpush1.msra.mxu0 0.0
    %4529 = vmatprep.subr.mxu0 0.0
    %4530 = vmatpush1.msra.mxu0 0.0
    %4531 = vmatprep.subr.mxu0 0.0
    %4532 = vmatpush1.msra.mxu0 0.0
    %4533 = vmatprep.subr.mxu0 0.0
    %4534 = vmatpush1.msra.mxu0 0.0
    %4535 = vmatprep.mubr.f32.mxu0 0.0
    %4536 = vmatmul.mubr.f32.gmra.mrb[0].mxu0 %v1268
    %v4537 = vpop.f32.mrb[0].mxu0
    %v4538 = vadd.f32 0.0, %v4537
    %v4539 = vpop.f32.mrb[0].mxu0
    %4540 = vmatprep.mubr.f32.mxu0 0.0
    %4541 = vmatmul.mubr.f32.gmra.mrb[0].mxu0 %v1271
    %v4542 = vpop.f32.mrb[0].mxu0
    %v4543 = vadd.f32 0.0, %v4542
    %v4544 = vpop.f32.mrb[0].mxu0
    %4545 = vmatprep.mubr.f32.mxu0 0.0
    %4546 = vmatmul.mubr.f32.gmra.mrb[0].mxu0 %v1274
    %v4547 = vpop.f32.mrb[0].mxu0
    %v4548 = vadd.f32 0.0, %v4547
    %v4549 = vpop.f32.mrb[0].mxu0
    %4550 = vmatprep.mubr.f32.mxu0 0.0
    %4551 = vmatmul.mubr.f32.gmra.mrb[0].mxu0 %v1277
    %v4552 = vpop.f32.mrb[0].mxu0
    %v4553 = vadd.f32 0.0, %v4552
    %v4554 = vpop.f32.mrb[0].mxu0
    %4555 = vdwg.mxu0
    %v4556 = vadd.f32 %v4387, %v4538
    %v4557 = vadd.f32 %v4392, %v4543
    %v4558 = vadd.f32 %v4397, %v4548
    %v4559 = vadd.f32 %v4402, %v4553
    %s4560 = scalar_lea.vmem %s29, 112
    %v4561 = vld [vmem:[%s4560] sm:$0xf]
    %v4562 = vld [vmem:[%s4560 + $0x4] sm:$0xf]
    %v4563 = vld [vmem:[%s4560 + $0x8] sm:$0xf]
    %v4564 = vld [vmem:[%s4560 + $0xc] sm:$0xf]
    %v4569 = vunpack.c.l.b16 %v4561
    %v4570 = vunpack.c.l.b16 %v4562
    %v4571 = vunpack.c.l.b16 %v4563
    %v4572 = vunpack.c.l.b16 %v4564
    %v4573 = vpack.c.b16 %v4570, %v4569
    %v4574 = vpack.c.b16 %v4572, %v4571
    %4577 = vmatprep.subr.bf16.mxu0 0
    %4578 = vmatpush1.bf16.msra.mxu0 %v4573
    %4579 = vmatprep.subr.bf16.mxu0 0
    %4580 = vmatpush1.bf16.msra.mxu0 %v4574
    %4581 = vmatprep.subr.bf16.mxu0 0
    %4582 = vmatpush1.bf16.msra.mxu0 0
    %4583 = vmatprep.subr.bf16.mxu0 0
    %4584 = vmatpush1.bf16.msra.mxu0 0
    %4585 = vmatprep.subr.bf16.mxu0 0
    %4586 = vmatpush1.bf16.msra.mxu0 0
    %4587 = vmatprep.subr.bf16.mxu0 0
    %4588 = vmatpush1.bf16.msra.mxu0 0
    %4589 = vmatprep.subr.bf16.mxu0 0
    %4590 = vmatpush1.bf16.msra.mxu0 0
    %4591 = vmatprep.subr.bf16.mxu0 0
    %4592 = vmatpush1.bf16.msra.mxu0 0
    %4593 = vmatprep.subr.bf16.mxu0 0
    %4594 = vmatpush1.bf16.msra.mxu0 0
    %4595 = vmatprep.subr.bf16.mxu0 0
    %4596 = vmatpush1.bf16.msra.mxu0 0
    %4597 = vmatprep.subr.bf16.mxu0 0
    %4598 = vmatpush1.bf16.msra.mxu0 0
    %4599 = vmatprep.subr.bf16.mxu0 0
    %4600 = vmatpush1.bf16.msra.mxu0 0
    %4601 = vmatprep.subr.bf16.mxu0 0
    %4602 = vmatpush1.bf16.msra.mxu0 0
    %4603 = vmatprep.subr.bf16.mxu0 0
    %4604 = vmatpush1.bf16.msra.mxu0 0
    %4605 = vmatprep.subr.bf16.mxu0 0
    %4606 = vmatpush1.bf16.msra.mxu0 0
    %4607 = vmatprep.subr.bf16.mxu0 0
    %4608 = vmatpush1.bf16.msra.mxu0 0
    %4609 = vmatprep.mubr.bf16.mxu0 0
    %4610 = vmatmul.mubr.bf16.gmra.mrb[0].mxu0 %v3491
    %v4611 = vpop.f32.mrb[0].mxu0
    %v4612 = vadd.f32 0.0, %v4611
    %v4613 = vpop.f32.mrb[0].mxu0
    %v4614 = vpop.f32.mrb[0].mxu0
    %v4615 = vadd.f32 0.0, %v4614
    %v4616 = vpop.f32.mrb[0].mxu0
    %4617 = vmatprep.mubr.bf16.mxu0 0
    %4618 = vmatmul.mubr.bf16.gmra.mrb[0].mxu0 %v3494
    %v4619 = vpop.f32.mrb[0].mxu0
    %v4620 = vadd.f32 0.0, %v4619
    %v4621 = vpop.f32.mrb[0].mxu0
    %v4622 = vpop.f32.mrb[0].mxu0
    %v4623 = vadd.f32 0.0, %v4622
    %v4624 = vpop.f32.mrb[0].mxu0
    %4625 = vdwg.mxu0
    %4626 = vmatprep.subr.mxu0 0.0
    %4627 = vmatpush1.msra.mxu0 %v4612
    %4628 = vmatprep.subr.mxu0 0.0
    %4629 = vmatpush1.msra.mxu0 %v4615
    %4630 = vmatprep.subr.mxu0 0.0
    %4631 = vmatpush1.msra.mxu0 %v4620
    %4632 = vmatprep.subr.mxu0 0.0
    %4633 = vmatpush1.msra.mxu0 %v4623
    %4634 = vmatprep.subr.mxu0 0.0
    %4635 = vmatpush1.msra.mxu0 0.0
    %4636 = vmatprep.subr.mxu0 0.0
    %4637 = vmatpush1.msra.mxu0 0.0
    %4638 = vmatprep.subr.mxu0 0.0
    %4639 = vmatpush1.msra.mxu0 0.0
    %4640 = vmatprep.subr.mxu0 0.0
    %4641 = vmatpush1.msra.mxu0 0.0
    %4642 = vmatprep.subr.mxu0 0.0
    %4643 = vmatpush1.msra.mxu0 0.0
    %4644 = vmatprep.subr.mxu0 0.0
    %4645 = vmatpush1.msra.mxu0 0.0
    %4646 = vmatprep.subr.mxu0 0.0
    %4647 = vmatpush1.msra.mxu0 0.0
    %4648 = vmatprep.subr.mxu0 0.0
    %4649 = vmatpush1.msra.mxu0 0.0
    %4650 = vmatprep.subr.mxu0 0.0
    %4651 = vmatpush1.msra.mxu0 0.0
    %4652 = vmatprep.subr.mxu0 0.0
    %4653 = vmatpush1.msra.mxu0 0.0
    %4654 = vmatprep.subr.mxu0 0.0
    %4655 = vmatpush1.msra.mxu0 0.0
    %4656 = vmatprep.subr.mxu0 0.0
    %4657 = vmatpush1.msra.mxu0 0.0
    %4658 = vmatprep.subr.mxu0 0.0
    %4659 = vmatpush1.msra.mxu0 0.0
    %4660 = vmatprep.subr.mxu0 0.0
    %4661 = vmatpush1.msra.mxu0 0.0
    %4662 = vmatprep.subr.mxu0 0.0
    %4663 = vmatpush1.msra.mxu0 0.0
    %4664 = vmatprep.subr.mxu0 0.0
    %4665 = vmatpush1.msra.mxu0 0.0
    %4666 = vmatprep.subr.mxu0 0.0
    %4667 = vmatpush1.msra.mxu0 0.0
    %4668 = vmatprep.subr.mxu0 0.0
    %4669 = vmatpush1.msra.mxu0 0.0
    %4670 = vmatprep.subr.mxu0 0.0
    %4671 = vmatpush1.msra.mxu0 0.0
    %4672 = vmatprep.subr.mxu0 0.0
    %4673 = vmatpush1.msra.mxu0 0.0
    %4674 = vmatprep.subr.mxu0 0.0
    %4675 = vmatpush1.msra.mxu0 0.0
    %4676 = vmatprep.subr.mxu0 0.0
    %4677 = vmatpush1.msra.mxu0 0.0
    %4678 = vmatprep.subr.mxu0 0.0
    %4679 = vmatpush1.msra.mxu0 0.0
    %4680 = vmatprep.subr.mxu0 0.0
    %4681 = vmatpush1.msra.mxu0 0.0
    %4682 = vmatprep.subr.mxu0 0.0
    %4683 = vmatpush1.msra.mxu0 0.0
    %4684 = vmatprep.subr.mxu0 0.0
    %4685 = vmatpush1.msra.mxu0 0.0
    %4686 = vmatprep.subr.mxu0 0.0
    %4687 = vmatpush1.msra.mxu0 0.0
    %4688 = vmatprep.subr.mxu0 0.0
    %4689 = vmatpush1.msra.mxu0 0.0
    %4690 = vmatprep.mubr.f32.mxu0 0.0
    %4691 = vmatmul.mubr.f32.gmra.mrb[0].mxu0 %v1440
    %v4692 = vpop.f32.mrb[0].mxu0
    %v4693 = vadd.f32 0.0, %v4692
    %v4694 = vpop.f32.mrb[0].mxu0
    %4695 = vmatprep.mubr.f32.mxu0 0.0
    %4696 = vmatmul.mubr.f32.gmra.mrb[0].mxu0 %v1443
    %v4697 = vpop.f32.mrb[0].mxu0
    %v4698 = vadd.f32 0.0, %v4697
    %v4699 = vpop.f32.mrb[0].mxu0
    %4700 = vmatprep.mubr.f32.mxu0 0.0
    %4701 = vmatmul.mubr.f32.gmra.mrb[0].mxu0 %v1446
    %v4702 = vpop.f32.mrb[0].mxu0
    %v4703 = vadd.f32 0.0, %v4702
    %v4704 = vpop.f32.mrb[0].mxu0
    %4705 = vmatprep.mubr.f32.mxu0 0.0
    %4706 = vmatmul.mubr.f32.gmra.mrb[0].mxu0 %v1449
    %v4707 = vpop.f32.mrb[0].mxu0
    %v4708 = vadd.f32 0.0, %v4707
    %v4709 = vpop.f32.mrb[0].mxu0
    %4710 = vdwg.mxu0
    %v4711 = vadd.f32 %v4556, %v4693
    %v4712 = vadd.f32 %v4557, %v4698
    %v4713 = vadd.f32 %v4558, %v4703
    %v4714 = vadd.f32 %v4559, %v4708
    %s4715 = scalar_lea.vmem [#allocation7], 1
    %v4716 = vld [vmem:[%s4715] sm:$0x1]
    %v4718 = vlaneseq
    %v4719 = vshrl.u32 %v4718, 7
    %v4720 = vsub.s32 0, %v4719
    %v4721 = vrot.slane %v4716, %v4720
    %v4723 = vadd.f32 %v4711, %v4721
    %v4724 = vadd.f32 %v4712, %v4721
    %v4725 = vadd.f32 %v4713, %v4721
    %v4726 = vadd.f32 %v4714, %v4721
    %v4727 = vxor.u32 %v4723, 2147483648
    %v4728 = vxor.u32 %v4724, 2147483648
    %v4729 = vxor.u32 %v4725, 2147483648
    %v4730 = vxor.u32 %v4726, 2147483648
    %v4731 = vmul.f32 %v4727, 1.442695
    %v4732 = vpow.pop %v4731
    %v4733 = vmul.f32 %v4728, 1.442695
    %v4734 = vpow.pop %v4733
    %v4735 = vmul.f32 %v4729, 1.442695
    %v4736 = vpow.pop %v4735
    %v4737 = vmul.f32 %v4730, 1.442695
    %v4738 = vpow.pop %v4737
    %v4739 = vadd.f32 %v4732, 1.0
    %v4740 = vadd.f32 %v4734, 1.0
    %v4741 = vadd.f32 %v4736, 1.0
    %v4742 = vadd.f32 %v4738, 1.0
    %v4743 = vrcp.pop %v4739
    %v4744 = vmul.f32 1.0, %v4743
    %v4745 = vrcp.pop %v4740
    %v4746 = vmul.f32 1.0, %v4745
    %v4747 = vrcp.pop %v4741
    %v4748 = vmul.f32 1.0, %v4747
    %v4749 = vrcp.pop %v4742
    %v4750 = vmul.f32 1.0, %v4749
    %v4751 = vmul.f32 %v4099, %v4744
    %v4752 = vmul.f32 %v4100, %v4746
    %v4753 = vmul.f32 %v4101, %v4748
    %v4754 = vmul.f32 %v4102, %v4750
    %v4755 = vpack.c.bf16 %v4752, %v4751
    %v4756 = vpack.c.bf16 %v4754, %v4753
    %v4757 = vld [vmem:[%s33] sm:$0xf]
    %v4758 = vld [vmem:[%s33 + $0x4] sm:$0xf]
    %v4759 = vld [vmem:[%s33 + $0x8] sm:$0xf]
    %v4760 = vld [vmem:[%s33 + $0xc] sm:$0xf]
    %v4761 = vld [vmem:[#allocation9] sm:$0x1]
    %v4763 = vlaneseq
    %v4764 = vshrl.u32 %v4763, 7
    %v4765 = vsub.s32 0, %v4764
    %v4766 = vrot.slane %v4761, %v4765
    %v4772 = vunpack.c.l.b16 %v4757
    %v4773 = vunpack.c.l.b16 %v4758
    %v4774 = vunpack.c.l.b16 %v4759
    %v4775 = vunpack.c.l.b16 %v4760
    %v4776 = vpack.c.b16 %v4773, %v4772
    %v4777 = vpack.c.b16 %v4775, %v4774
    %v4781 = vsel %vm871, %v4755, 0
    %v4784 = vsel %vm871, %v4756, 0
    %4786 = vmatprep.subr.bf16.mxu0 0
    %4787 = vmatpush1.bf16.msra.mxu0 %v4776
    %4788 = vmatprep.subr.bf16.mxu0 0
    %4789 = vmatpush1.bf16.msra.mxu0 %v4777
    %4790 = vmatprep.subr.bf16.mxu0 0
    %4791 = vmatpush1.bf16.msra.mxu0 0
    %4792 = vmatprep.subr.bf16.mxu0 0
    %4793 = vmatpush1.bf16.msra.mxu0 0
    %4794 = vmatprep.subr.bf16.mxu0 0
    %4795 = vmatpush1.bf16.msra.mxu0 0
    %4796 = vmatprep.subr.bf16.mxu0 0
    %4797 = vmatpush1.bf16.msra.mxu0 0
    %4798 = vmatprep.subr.bf16.mxu0 0
    %4799 = vmatpush1.bf16.msra.mxu0 0
    %4800 = vmatprep.subr.bf16.mxu0 0
    %4801 = vmatpush1.bf16.msra.mxu0 0
    %4802 = vmatprep.subr.bf16.mxu0 0
    %4803 = vmatpush1.bf16.msra.mxu0 0
    %4804 = vmatprep.subr.bf16.mxu0 0
    %4805 = vmatpush1.bf16.msra.mxu0 0
    %4806 = vmatprep.subr.bf16.mxu0 0
    %4807 = vmatpush1.bf16.msra.mxu0 0
    %4808 = vmatprep.subr.bf16.mxu0 0
    %4809 = vmatpush1.bf16.msra.mxu0 0
    %4810 = vmatprep.subr.bf16.mxu0 0
    %4811 = vmatpush1.bf16.msra.mxu0 0
    %4812 = vmatprep.subr.bf16.mxu0 0
    %4813 = vmatpush1.bf16.msra.mxu0 0
    %4814 = vmatprep.subr.bf16.mxu0 0
    %4815 = vmatpush1.bf16.msra.mxu0 0
    %4816 = vmatprep.subr.bf16.mxu0 0
    %4817 = vmatpush1.bf16.msra.mxu0 0
    %4818 = vmatprep.mubr.bf16.mxu0 0
    %4819 = vmatmul.mubr.bf16.gmra.mrb[0].mxu0 %v4781
    %v4820 = vpop.f32.mrb[0].mxu0
    %v4821 = vadd.f32 %v4766, %v4820
    %v4822 = vpop.f32.mrb[0].mxu0
    %v4823 = vpop.f32.mrb[0].mxu0
    %v4824 = vadd.f32 %v4766, %v4823
    %v4825 = vpop.f32.mrb[0].mxu0
    %4826 = vmatprep.mubr.bf16.mxu0 0
    %4827 = vmatmul.mubr.bf16.gmra.mrb[0].mxu0 %v4784
    %v4828 = vpop.f32.mrb[0].mxu0
    %v4829 = vadd.f32 %v4766, %v4828
    %v4830 = vpop.f32.mrb[0].mxu0
    %v4831 = vpop.f32.mrb[0].mxu0
    %v4832 = vadd.f32 %v4766, %v4831
    %v4833 = vpop.f32.mrb[0].mxu0
    %4834 = vdwg.mxu0
    %v4835 = vld [vmem:[%s15] sm:$0xff]
    %v4836 = vld [vmem:[%s15 + $0x8] sm:$0xff]
    %v4837 = vld [vmem:[%s15 + $0x10] sm:$0xff]
    %v4838 = vld [vmem:[%s15 + $0x18] sm:$0xff]
    %v4839 = vld [vmem:[#allocation10] sm:$0x1]
    %v4840 = vld [vmem:[#allocation12] sm:$0x1]
    %v4841 = vsel %vm334, %v4821, 0.0
    %4842 = vadd.xlane.f32.xlu0 %v4841
    %v4843 = vpop.xlane.xlu0 %4842
    %v4844 = vsel %vm334, %v4824, 0.0
    %4845 = vadd.xlane.f32.xlu0 %v4844
    %v4846 = vpop.xlane.xlu0 %4845
    %v4847 = vsel %vm334, %v4829, 0.0
    %4848 = vadd.xlane.f32.xlu0 %v4847
    %v4849 = vpop.xlane.xlu0 %4848
    %v4850 = vsel %vm334, %v4832, 0.0
    %4851 = vadd.xlane.f32.xlu0 %v4850
    %v4852 = vpop.xlane.xlu0 %4851
    %v4853 = vrcp.pop 64.0
    %v4854 = vmul.f32 %v4843, %v4853
    %v4855 = vmul.f32 %v4846, %v4853
    %v4856 = vmul.f32 %v4849, %v4853
    %v4857 = vmul.f32 %v4852, %v4853
    %v4858 = vsub.f32 %v4821, %v4854
    %v4859 = vsub.f32 %v4824, %v4855
    %v4860 = vsub.f32 %v4829, %v4856
    %v4861 = vsub.f32 %v4832, %v4857
    %v4862 = vmul.f32 %v4858, %v4858
    %v4863 = vmul.f32 %v4859, %v4859
    %v4864 = vmul.f32 %v4860, %v4860
    %v4865 = vmul.f32 %v4861, %v4861
    %v4866 = vsel %vm334, %v4862, 0.0
    %4867 = vadd.xlane.f32.xlu0 %v4866
    %v4868 = vpop.xlane.xlu0 %4867
    %v4869 = vsel %vm334, %v4863, 0.0
    %4870 = vadd.xlane.f32.xlu0 %v4869
    %v4871 = vpop.xlane.xlu0 %4870
    %v4872 = vsel %vm334, %v4864, 0.0
    %4873 = vadd.xlane.f32.xlu0 %v4872
    %v4874 = vpop.xlane.xlu0 %4873
    %v4875 = vsel %vm334, %v4865, 0.0
    %4876 = vadd.xlane.f32.xlu0 %v4875
    %v4877 = vpop.xlane.xlu0 %4876
    %v4878 = vmul.f32 %v4868, %v4853
    %v4879 = vmul.f32 %v4871, %v4853
    %v4880 = vmul.f32 %v4874, %v4853
    %v4881 = vmul.f32 %v4877, %v4853
    %v4882 = vadd.f32 %v4878, 1e-06
    %v4883 = vadd.f32 %v4879, 1e-06
    %v4884 = vadd.f32 %v4880, 1e-06
    %v4885 = vadd.f32 %v4881, 1e-06
    %v4886 = vrsqrt.pop %v4882
    %v4887 = vrsqrt.pop %v4883
    %v4888 = vrsqrt.pop %v4884
    %v4889 = vrsqrt.pop %v4885
    %v4890 = vmul.f32 %v4858, %v4886
    %v4891 = vmul.f32 %v4859, %v4887
    %v4892 = vmul.f32 %v4860, %v4888
    %v4893 = vmul.f32 %v4861, %v4889
    %v4895 = vlaneseq
    %v4896 = vshrl.u32 %v4895, 7
    %v4897 = vsub.s32 0, %v4896
    %v4898 = vrot.slane %v4839, %v4897
    %v4900 = vmul.f32 %v4890, %v4898
    %v4901 = vmul.f32 %v4891, %v4898
    %v4902 = vmul.f32 %v4892, %v4898
    %v4903 = vmul.f32 %v4893, %v4898
    %v4905 = vlaneseq
    %v4906 = vshrl.u32 %v4905, 7
    %v4907 = vsub.s32 0, %v4906
    %v4908 = vrot.slane %v4840, %v4907
    %v4910 = vadd.f32 %v4900, %v4908
    %v4911 = vadd.f32 %v4901, %v4908
    %v4912 = vadd.f32 %v4902, %v4908
    %v4913 = vadd.f32 %v4903, %v4908
    %v4914 = vpack.c.bf16 %v4911, %v4910
    %v4915 = vpack.c.bf16 %v4913, %v4912
    %v4916 = vld [vmem:[%s41] sm:$0xf]
    %v4917 = vld [vmem:[%s41 + $0x4] sm:$0xf]
    %v4918 = vld [vmem:[%s41 + $0x8] sm:$0xf]
    %v4919 = vld [vmem:[%s41 + $0xc] sm:$0xf]
    %v4920 = vld [vmem:[%s41 + $0x10] sm:$0xf]
    %v4921 = vld [vmem:[%s41 + $0x14] sm:$0xf]
    %v4922 = vld [vmem:[%s41 + $0x18] sm:$0xf]
    %v4923 = vld [vmem:[%s41 + $0x1c] sm:$0xf]
    %v4932 = vunpack.c.l.b16 %v4916
    %v4933 = vunpack.c.l.b16 %v4917
    %v4934 = vunpack.c.l.b16 %v4918
    %v4935 = vunpack.c.l.b16 %v4919
    %v4936 = vunpack.c.l.b16 %v4920
    %v4937 = vunpack.c.l.b16 %v4921
    %v4938 = vunpack.c.l.b16 %v4922
    %v4939 = vunpack.c.l.b16 %v4923
    %v4940 = vpack.c.b16 %v4933, %v4932
    %v4941 = vpack.c.b16 %v4935, %v4934
    %v4942 = vpack.c.b16 %v4937, %v4936
    %v4943 = vpack.c.b16 %v4939, %v4938
    %v4949 = vsel %vm334, %v4914, 0
    %v4952 = vsel %vm334, %v4915, 0
    %4954 = vmatprep.subr.bf16.mxu0 0
    %4955 = vmatpush1.bf16.msra.mxu0 %v4940
    %4956 = vmatprep.subr.bf16.mxu0 0
    %4957 = vmatpush1.bf16.msra.mxu0 %v4941
    %4958 = vmatprep.subr.bf16.mxu0 0
    %4959 = vmatpush1.bf16.msra.mxu0 %v4942
    %4960 = vmatprep.subr.bf16.mxu0 0
    %4961 = vmatpush1.bf16.msra.mxu0 %v4943
    %4962 = vmatprep.subr.bf16.mxu0 0
    %4963 = vmatpush1.bf16.msra.mxu0 0
    %4964 = vmatprep.subr.bf16.mxu0 0
    %4965 = vmatpush1.bf16.msra.mxu0 0
    %4966 = vmatprep.subr.bf16.mxu0 0
    %4967 = vmatpush1.bf16.msra.mxu0 0
    %4968 = vmatprep.subr.bf16.mxu0 0
    %4969 = vmatpush1.bf16.msra.mxu0 0
    %4970 = vmatprep.subr.bf16.mxu0 0
    %4971 = vmatpush1.bf16.msra.mxu0 0
    %4972 = vmatprep.subr.bf16.mxu0 0
    %4973 = vmatpush1.bf16.msra.mxu0 0
    %4974 = vmatprep.subr.bf16.mxu0 0
    %4975 = vmatpush1.bf16.msra.mxu0 0
    %4976 = vmatprep.subr.bf16.mxu0 0
    %4977 = vmatpush1.bf16.msra.mxu0 0
    %4978 = vmatprep.subr.bf16.mxu0 0
    %4979 = vmatpush1.bf16.msra.mxu0 0
    %4980 = vmatprep.subr.bf16.mxu0 0
    %4981 = vmatpush1.bf16.msra.mxu0 0
    %4982 = vmatprep.subr.bf16.mxu0 0
    %4983 = vmatpush1.bf16.msra.mxu0 0
    %4984 = vmatprep.subr.bf16.mxu0 0
    %4985 = vmatpush1.bf16.msra.mxu0 0
    %4986 = vmatprep.mubr.bf16.mxu0 0
    %4987 = vmatmul.mubr.bf16.gmra.mrb[0].mxu0 %v4949
    %v4988 = vpop.f32.mrb[0].mxu0
    %v4989 = vadd.f32 0.0, %v4988
    %v4990 = vpop.f32.mrb[0].mxu0
    %v4991 = vpop.f32.mrb[0].mxu0
    %v4992 = vadd.f32 0.0, %v4991
    %v4993 = vpop.f32.mrb[0].mxu0
    %4994 = vmatprep.mubr.bf16.mxu0 0
    %4995 = vmatmul.mubr.bf16.gmra.mrb[0].mxu0 %v4952
    %v4996 = vpop.f32.mrb[0].mxu0
    %v4997 = vadd.f32 0.0, %v4996
    %v4998 = vpop.f32.mrb[0].mxu0
    %v4999 = vpop.f32.mrb[0].mxu0
    %v5000 = vadd.f32 0.0, %v4999
    %v5001 = vpop.f32.mrb[0].mxu0
    %5002 = vdwg.mxu0
    %v5003 = vmul.f32 %v4989, 0.25
    %v5004 = vmul.f32 %v4992, 0.25
    %v5005 = vmul.f32 %v4997, 0.25
    %v5006 = vmul.f32 %v5000, 0.25
    %v5007 = vld [vmem:[%s43] sm:$0xf]
    %v5008 = vld [vmem:[%s43 + $0x4] sm:$0xf]
    %v5009 = vld [vmem:[%s43 + $0x8] sm:$0xf]
    %v5010 = vld [vmem:[%s43 + $0xc] sm:$0xf]
    %v5011 = vld [vmem:[%s43 + $0x10] sm:$0xf]
    %v5012 = vld [vmem:[%s43 + $0x14] sm:$0xf]
    %v5013 = vld [vmem:[%s43 + $0x18] sm:$0xf]
    %v5014 = vld [vmem:[%s43 + $0x1c] sm:$0xf]
    %v5023 = vunpack.c.l.b16 %v5007
    %v5024 = vunpack.c.l.b16 %v5008
    %v5025 = vunpack.c.l.b16 %v5009
    %v5026 = vunpack.c.l.b16 %v5010
    %v5027 = vunpack.c.l.b16 %v5011
    %v5028 = vunpack.c.l.b16 %v5012
    %v5029 = vunpack.c.l.b16 %v5013
    %v5030 = vunpack.c.l.b16 %v5014
    %v5031 = vpack.c.b16 %v5024, %v5023
    %v5032 = vpack.c.b16 %v5026, %v5025
    %v5033 = vpack.c.b16 %v5028, %v5027
    %v5034 = vpack.c.b16 %v5030, %v5029
    %5039 = vmatprep.subr.bf16.mxu0 0
    %5040 = vmatpush1.bf16.msra.mxu0 %v5031
    %5041 = vmatprep.subr.bf16.mxu0 0
    %5042 = vmatpush1.bf16.msra.mxu0 %v5032
    %5043 = vmatprep.subr.bf16.mxu0 0
    %5044 = vmatpush1.bf16.msra.mxu0 %v5033
    %5045 = vmatprep.subr.bf16.mxu0 0
    %5046 = vmatpush1.bf16.msra.mxu0 %v5034
    %5047 = vmatprep.subr.bf16.mxu0 0
    %5048 = vmatpush1.bf16.msra.mxu0 0
    %5049 = vmatprep.subr.bf16.mxu0 0
    %5050 = vmatpush1.bf16.msra.mxu0 0
    %5051 = vmatprep.subr.bf16.mxu0 0
    %5052 = vmatpush1.bf16.msra.mxu0 0
    %5053 = vmatprep.subr.bf16.mxu0 0
    %5054 = vmatpush1.bf16.msra.mxu0 0
    %5055 = vmatprep.subr.bf16.mxu0 0
    %5056 = vmatpush1.bf16.msra.mxu0 0
    %5057 = vmatprep.subr.bf16.mxu0 0
    %5058 = vmatpush1.bf16.msra.mxu0 0
    %5059 = vmatprep.subr.bf16.mxu0 0
    %5060 = vmatpush1.bf16.msra.mxu0 0
    %5061 = vmatprep.subr.bf16.mxu0 0
    %5062 = vmatpush1.bf16.msra.mxu0 0
    %5063 = vmatprep.subr.bf16.mxu0 0
    %5064 = vmatpush1.bf16.msra.mxu0 0
    %5065 = vmatprep.subr.bf16.mxu0 0
    %5066 = vmatpush1.bf16.msra.mxu0 0
    %5067 = vmatprep.subr.bf16.mxu0 0
    %5068 = vmatpush1.bf16.msra.mxu0 0
    %5069 = vmatprep.subr.bf16.mxu0 0
    %5070 = vmatpush1.bf16.msra.mxu0 0
    %5071 = vmatprep.mubr.bf16.mxu0 0
    %5072 = vmatmul.mubr.bf16.gmra.mrb[0].mxu0 %v4949
    %v5073 = vpop.f32.mrb[0].mxu0
    %v5074 = vadd.f32 0.0, %v5073
    %v5075 = vpop.f32.mrb[0].mxu0
    %v5076 = vpop.f32.mrb[0].mxu0
    %v5077 = vadd.f32 0.0, %v5076
    %v5078 = vpop.f32.mrb[0].mxu0
    %5079 = vmatprep.mubr.bf16.mxu0 0
    %5080 = vmatmul.mubr.bf16.gmra.mrb[0].mxu0 %v4952
    %v5081 = vpop.f32.mrb[0].mxu0
    %v5082 = vadd.f32 0.0, %v5081
    %v5083 = vpop.f32.mrb[0].mxu0
    %v5084 = vpop.f32.mrb[0].mxu0
    %v5085 = vadd.f32 0.0, %v5084
    %v5086 = vpop.f32.mrb[0].mxu0
    %5087 = vdwg.mxu0
    %v5088 = vld [vmem:[%s45] sm:$0xf]
    %v5089 = vld [vmem:[%s45 + $0x4] sm:$0xf]
    %v5090 = vld [vmem:[%s45 + $0x8] sm:$0xf]
    %v5091 = vld [vmem:[%s45 + $0xc] sm:$0xf]
    %v5092 = vld [vmem:[%s45 + $0x10] sm:$0xf]
    %v5093 = vld [vmem:[%s45 + $0x14] sm:$0xf]
    %v5094 = vld [vmem:[%s45 + $0x18] sm:$0xf]
    %v5095 = vld [vmem:[%s45 + $0x1c] sm:$0xf]
    %v5104 = vunpack.c.l.b16 %v5088
    %v5105 = vunpack.c.l.b16 %v5089
    %v5106 = vunpack.c.l.b16 %v5090
    %v5107 = vunpack.c.l.b16 %v5091
    %v5108 = vunpack.c.l.b16 %v5092
    %v5109 = vunpack.c.l.b16 %v5093
    %v5110 = vunpack.c.l.b16 %v5094
    %v5111 = vunpack.c.l.b16 %v5095
    %v5112 = vpack.c.b16 %v5105, %v5104
    %v5113 = vpack.c.b16 %v5107, %v5106
    %v5114 = vpack.c.b16 %v5109, %v5108
    %v5115 = vpack.c.b16 %v5111, %v5110
    %5120 = vmatprep.subr.bf16.mxu0 0
    %5121 = vmatpush1.bf16.msra.mxu0 %v5112
    %5122 = vmatprep.subr.bf16.mxu0 0
    %5123 = vmatpush1.bf16.msra.mxu0 %v5113
    %5124 = vmatprep.subr.bf16.mxu0 0
    %5125 = vmatpush1.bf16.msra.mxu0 %v5114
    %5126 = vmatprep.subr.bf16.mxu0 0
    %5127 = vmatpush1.bf16.msra.mxu0 %v5115
    %5128 = vmatprep.subr.bf16.mxu0 0
    %5129 = vmatpush1.bf16.msra.mxu0 0
    %5130 = vmatprep.subr.bf16.mxu0 0
    %5131 = vmatpush1.bf16.msra.mxu0 0
    %5132 = vmatprep.subr.bf16.mxu0 0
    %5133 = vmatpush1.bf16.msra.mxu0 0
    %5134 = vmatprep.subr.bf16.mxu0 0
    %5135 = vmatpush1.bf16.msra.mxu0 0
    %5136 = vmatprep.subr.bf16.mxu0 0
    %5137 = vmatpush1.bf16.msra.mxu0 0
    %5138 = vmatprep.subr.bf16.mxu0 0
    %5139 = vmatpush1.bf16.msra.mxu0 0
    %5140 = vmatprep.subr.bf16.mxu0 0
    %5141 = vmatpush1.bf16.msra.mxu0 0
    %5142 = vmatprep.subr.bf16.mxu0 0
    %5143 = vmatpush1.bf16.msra.mxu0 0
    %5144 = vmatprep.subr.bf16.mxu0 0
    %5145 = vmatpush1.bf16.msra.mxu0 0
    %5146 = vmatprep.subr.bf16.mxu0 0
    %5147 = vmatpush1.bf16.msra.mxu0 0
    %5148 = vmatprep.subr.bf16.mxu0 0
    %5149 = vmatpush1.bf16.msra.mxu0 0
    %5150 = vmatprep.subr.bf16.mxu0 0
    %5151 = vmatpush1.bf16.msra.mxu0 0
    %5152 = vmatprep.mubr.bf16.mxu0 0
    %5153 = vmatmul.mubr.bf16.gmra.mrb[0].mxu0 %v4949
    %v5154 = vpop.f32.mrb[0].mxu0
    %v5155 = vadd.f32 0.0, %v5154
    %v5156 = vpop.f32.mrb[0].mxu0
    %v5157 = vpop.f32.mrb[0].mxu0
    %v5158 = vadd.f32 0.0, %v5157
    %v5159 = vpop.f32.mrb[0].mxu0
    %5160 = vmatprep.mubr.bf16.mxu0 0
    %5161 = vmatmul.mubr.bf16.gmra.mrb[0].mxu0 %v4952
    %v5162 = vpop.f32.mrb[0].mxu0
    %v5163 = vadd.f32 0.0, %v5162
    %v5164 = vpop.f32.mrb[0].mxu0
    %v5165 = vpop.f32.mrb[0].mxu0
    %v5166 = vadd.f32 0.0, %v5165
    %v5167 = vpop.f32.mrb[0].mxu0
    %5168 = vdwg.mxu0
    %v5169 = vpack.c.bf16 %v5004, %v5003
    %v5170 = vpack.c.bf16 %v5006, %v5005
    %v5171 = vpack.c.bf16 %v5077, %v5074
    %v5172 = vpack.c.bf16 %v5085, %v5082
    %v5174 = vsel %vm797, %v5169, 0
    %v5177 = vsel %vm797, %v5170, 0
    %v5180 = vsel %vm797, %v5171, 0
    %v5183 = vsel %vm797, %v5172, 0
    %5185 = vmatprep.subr.bf16.mxu0 0
    %5186 = vmatpush1.bf16.xpose.msra.mxu0 %v5180
    %5187 = vmatprep.subr.bf16.mxu0 0
    %5188 = vmatpush1.bf16.xpose.msra.mxu0 %v5183
    %5189 = vmatprep.subr.bf16.mxu0 0
    %5190 = vmatpush1.bf16.xpose.msra.mxu0 0
    %5191 = vmatprep.subr.bf16.mxu0 0
    %5192 = vmatpush1.bf16.xpose.msra.mxu0 0
    %5193 = vmatprep.subr.bf16.mxu0 0
    %5194 = vmatpush1.bf16.xpose.msra.mxu0 0
    %5195 = vmatprep.subr.bf16.mxu0 0
    %5196 = vmatpush1.bf16.xpose.msra.mxu0 0
    %5197 = vmatprep.subr.bf16.mxu0 0
    %5198 = vmatpush1.bf16.xpose.msra.mxu0 0
    %5199 = vmatprep.subr.bf16.mxu0 0
    %5200 = vmatpush1.bf16.xpose.msra.mxu0 0
    %5201 = vmatprep.subr.bf16.mxu0 0
    %5202 = vmatpush1.bf16.xpose.msra.mxu0 0
    %5203 = vmatprep.subr.bf16.mxu0 0
    %5204 = vmatpush1.bf16.xpose.msra.mxu0 0
    %5205 = vmatprep.subr.bf16.mxu0 0
    %5206 = vmatpush1.bf16.xpose.msra.mxu0 0
    %5207 = vmatprep.subr.bf16.mxu0 0
    %5208 = vmatpush1.bf16.xpose.msra.mxu0 0
    %5209 = vmatprep.subr.bf16.mxu0 0
    %5210 = vmatpush1.bf16.xpose.msra.mxu0 0
    %5211 = vmatprep.subr.bf16.mxu0 0
    %5212 = vmatpush1.bf16.xpose.msra.mxu0 0
    %5213 = vmatprep.subr.bf16.mxu0 0
    %5214 = vmatpush1.bf16.xpose.msra.mxu0 0
    %5215 = vmatprep.subr.bf16.mxu0 0
    %5216 = vmatpush1.bf16.xpose.msra.mxu0 0
    %5217 = vmatprep.mubr.bf16.mxu0 0
    %5218 = vmatmul.mubr.bf16.gmra.mrb[0].mxu0 %v5174
    %v5219 = vpop.f32.mrb[0].mxu0
    %v5220 = vadd.f32 %v4835, %v5219
    %v5221 = vpop.f32.mrb[0].mxu0
    %v5222 = vpop.f32.mrb[0].mxu0
    %v5223 = vadd.f32 %v4836, %v5222
    %v5224 = vpop.f32.mrb[0].mxu0
    %5225 = vmatprep.mubr.bf16.mxu0 0
    %5226 = vmatmul.mubr.bf16.gmra.mrb[0].mxu0 %v5177
    %v5227 = vpop.f32.mrb[0].mxu0
    %v5228 = vadd.f32 %v4837, %v5227
    %v5229 = vpop.f32.mrb[0].mxu0
    %v5230 = vpop.f32.mrb[0].mxu0
    %v5231 = vadd.f32 %v4838, %v5230
    %v5232 = vpop.f32.mrb[0].mxu0
    %5233 = vdwg.mxu0
    %v5234 = vsel %vm871, %v5220, -inf
    %5235 = vmax.xlane.f32.xlu0 %v5234
    %v5236 = vpop.xlane.xlu0 %5235
    %v5237 = vsel %vm871, %v5223, -inf
    %5238 = vmax.xlane.f32.xlu0 %v5237
    %v5239 = vpop.xlane.xlu0 %5238
    %v5240 = vsel %vm871, %v5228, -inf
    %5241 = vmax.xlane.f32.xlu0 %v5240
    %v5242 = vpop.xlane.xlu0 %5241
    %v5243 = vsel %vm871, %v5231, -inf
    %5244 = vmax.xlane.f32.xlu0 %v5243
    %v5245 = vpop.xlane.xlu0 %5244
    %v5246 = vsub.f32 %v5220, %v5236
    %v5247 = vsub.f32 %v5223, %v5239
    %v5248 = vsub.f32 %v5228, %v5242
    %v5249 = vsub.f32 %v5231, %v5245
    %v5250 = vmul.f32 %v5246, 1.442695
    %v5251 = vpow.pop %v5250
    %v5252 = vmul.f32 %v5247, 1.442695
    %v5253 = vpow.pop %v5252
    %v5254 = vmul.f32 %v5248, 1.442695
    %v5255 = vpow.pop %v5254
    %v5256 = vmul.f32 %v5249, 1.442695
    %v5257 = vpow.pop %v5256
    %v5258 = vsel %vm871, %v5251, 0.0
    %5259 = vadd.xlane.f32.xlu0 %v5258
    %v5260 = vpop.xlane.xlu0 %5259
    %v5261 = vsel %vm871, %v5253, 0.0
    %5262 = vadd.xlane.f32.xlu0 %v5261
    %v5263 = vpop.xlane.xlu0 %5262
    %v5264 = vsel %vm871, %v5255, 0.0
    %5265 = vadd.xlane.f32.xlu0 %v5264
    %v5266 = vpop.xlane.xlu0 %5265
    %v5267 = vsel %vm871, %v5257, 0.0
    %5268 = vadd.xlane.f32.xlu0 %v5267
    %v5269 = vpop.xlane.xlu0 %5268
    %v5270 = vrcp.pop %v5260
    %v5271 = vrcp.pop %v5263
    %v5272 = vrcp.pop %v5266
    %v5273 = vrcp.pop %v5269
    %v5274 = vmul.f32 %v5251, %v5270
    %v5275 = vmul.f32 %v5253, %v5271
    %v5276 = vmul.f32 %v5255, %v5272
    %v5277 = vmul.f32 %v5257, %v5273
    %v5278 = vpack.c.bf16 %v5275, %v5274
    %v5279 = vpack.c.bf16 %v5277, %v5276
    %v5280 = vpack.c.bf16 %v5158, %v5155
    %v5281 = vpack.c.bf16 %v5166, %v5163
    %v5283 = vsel %vm871, %v5278, 0
    %v5286 = vsel %vm871, %v5279, 0
    %5288 = vmatprep.subr.bf16.mxu0 0
    %5289 = vmatpush1.bf16.msra.mxu0 %v5280
    %5290 = vmatprep.subr.bf16.mxu0 0
    %5291 = vmatpush1.bf16.msra.mxu0 %v5281
    %5292 = vmatprep.subr.bf16.mxu0 0
    %5293 = vmatpush1.bf16.msra.mxu0 0
    %5294 = vmatprep.subr.bf16.mxu0 0
    %5295 = vmatpush1.bf16.msra.mxu0 0
    %5296 = vmatprep.subr.bf16.mxu0 0
    %5297 = vmatpush1.bf16.msra.mxu0 0
    %5298 = vmatprep.subr.bf16.mxu0 0
    %5299 = vmatpush1.bf16.msra.mxu0 0
    %5300 = vmatprep.subr.bf16.mxu0 0
    %5301 = vmatpush1.bf16.msra.mxu0 0
    %5302 = vmatprep.subr.bf16.mxu0 0
    %5303 = vmatpush1.bf16.msra.mxu0 0
    %5304 = vmatprep.subr.bf16.mxu0 0
    %5305 = vmatpush1.bf16.msra.mxu0 0
    %5306 = vmatprep.subr.bf16.mxu0 0
    %5307 = vmatpush1.bf16.msra.mxu0 0
    %5308 = vmatprep.subr.bf16.mxu0 0
    %5309 = vmatpush1.bf16.msra.mxu0 0
    %5310 = vmatprep.subr.bf16.mxu0 0
    %5311 = vmatpush1.bf16.msra.mxu0 0
    %5312 = vmatprep.subr.bf16.mxu0 0
    %5313 = vmatpush1.bf16.msra.mxu0 0
    %5314 = vmatprep.subr.bf16.mxu0 0
    %5315 = vmatpush1.bf16.msra.mxu0 0
    %5316 = vmatprep.subr.bf16.mxu0 0
    %5317 = vmatpush1.bf16.msra.mxu0 0
    %5318 = vmatprep.subr.bf16.mxu0 0
    %5319 = vmatpush1.bf16.msra.mxu0 0
    %5320 = vmatprep.mubr.bf16.mxu0 0
    %5321 = vmatmul.mubr.bf16.gmra.mrb[0].mxu0 %v5283
    %v5322 = vpop.f32.mrb[0].mxu0
    %v5323 = vadd.f32 0.0, %v5322
    %v5324 = vpop.f32.mrb[0].mxu0
    %v5325 = vpop.f32.mrb[0].mxu0
    %v5326 = vadd.f32 0.0, %v5325
    %v5327 = vpop.f32.mrb[0].mxu0
    %5328 = vmatprep.mubr.bf16.mxu0 0
    %5329 = vmatmul.mubr.bf16.gmra.mrb[0].mxu0 %v5286
    %v5330 = vpop.f32.mrb[0].mxu0
    %v5331 = vadd.f32 0.0, %v5330
    %v5332 = vpop.f32.mrb[0].mxu0
    %v5333 = vpop.f32.mrb[0].mxu0
    %v5334 = vadd.f32 0.0, %v5333
    %v5335 = vpop.f32.mrb[0].mxu0
    %5336 = vdwg.mxu0
    %v5337 = vpack.c.bf16 %v5326, %v5323
    %v5338 = vpack.c.bf16 %v5334, %v5331
    %v5339 = vld [vmem:[%s47] sm:$0xf]
    %v5340 = vld [vmem:[%s47 + $0x4] sm:$0xf]
    %s5341 = scalar_lea.vmem %s41, 32
    %v5342 = vld [vmem:[%s5341] sm:$0xf]
    %v5343 = vld [vmem:[%s5341 + $0x4] sm:$0xf]
    %v5344 = vld [vmem:[%s5341 + $0x8] sm:$0xf]
    %v5345 = vld [vmem:[%s5341 + $0xc] sm:$0xf]
    %v5346 = vld [vmem:[%s5341 + $0x10] sm:$0xf]
    %v5347 = vld [vmem:[%s5341 + $0x14] sm:$0xf]
    %v5348 = vld [vmem:[%s5341 + $0x18] sm:$0xf]
    %v5349 = vld [vmem:[%s5341 + $0x1c] sm:$0xf]
    %v5358 = vunpack.c.l.b16 %v5342
    %v5359 = vunpack.c.l.b16 %v5343
    %v5360 = vunpack.c.l.b16 %v5344
    %v5361 = vunpack.c.l.b16 %v5345
    %v5362 = vunpack.c.l.b16 %v5346
    %v5363 = vunpack.c.l.b16 %v5347
    %v5364 = vunpack.c.l.b16 %v5348
    %v5365 = vunpack.c.l.b16 %v5349
    %v5366 = vpack.c.b16 %v5359, %v5358
    %v5367 = vpack.c.b16 %v5361, %v5360
    %v5368 = vpack.c.b16 %v5363, %v5362
    %v5369 = vpack.c.b16 %v5365, %v5364
    %5374 = vmatprep.subr.bf16.mxu0 0
    %5375 = vmatpush1.bf16.msra.mxu0 %v5366
    %5376 = vmatprep.subr.bf16.mxu0 0
    %5377 = vmatpush1.bf16.msra.mxu0 %v5367
    %5378 = vmatprep.subr.bf16.mxu0 0
    %5379 = vmatpush1.bf16.msra.mxu0 %v5368
    %5380 = vmatprep.subr.bf16.mxu0 0
    %5381 = vmatpush1.bf16.msra.mxu0 %v5369
    %5382 = vmatprep.subr.bf16.mxu0 0
    %5383 = vmatpush1.bf16.msra.mxu0 0
    %5384 = vmatprep.subr.bf16.mxu0 0
    %5385 = vmatpush1.bf16.msra.mxu0 0
    %5386 = vmatprep.subr.bf16.mxu0 0
    %5387 = vmatpush1.bf16.msra.mxu0 0
    %5388 = vmatprep.subr.bf16.mxu0 0
    %5389 = vmatpush1.bf16.msra.mxu0 0
    %5390 = vmatprep.subr.bf16.mxu0 0
    %5391 = vmatpush1.bf16.msra.mxu0 0
    %5392 = vmatprep.subr.bf16.mxu0 0
    %5393 = vmatpush1.bf16.msra.mxu0 0
    %5394 = vmatprep.subr.bf16.mxu0 0
    %5395 = vmatpush1.bf16.msra.mxu0 0
    %5396 = vmatprep.subr.bf16.mxu0 0
    %5397 = vmatpush1.bf16.msra.mxu0 0
    %5398 = vmatprep.subr.bf16.mxu0 0
    %5399 = vmatpush1.bf16.msra.mxu0 0
    %5400 = vmatprep.subr.bf16.mxu0 0
    %5401 = vmatpush1.bf16.msra.mxu0 0
    %5402 = vmatprep.subr.bf16.mxu0 0
    %5403 = vmatpush1.bf16.msra.mxu0 0
    %5404 = vmatprep.subr.bf16.mxu0 0
    %5405 = vmatpush1.bf16.msra.mxu0 0
    %5406 = vmatprep.mubr.bf16.mxu0 0
    %5407 = vmatmul.mubr.bf16.gmra.mrb[0].mxu0 %v4949
    %v5408 = vpop.f32.mrb[0].mxu0
    %v5409 = vadd.f32 0.0, %v5408
    %v5410 = vpop.f32.mrb[0].mxu0
    %v5411 = vpop.f32.mrb[0].mxu0
    %v5412 = vadd.f32 0.0, %v5411
    %v5413 = vpop.f32.mrb[0].mxu0
    %5414 = vmatprep.mubr.bf16.mxu0 0
    %5415 = vmatmul.mubr.bf16.gmra.mrb[0].mxu0 %v4952
    %v5416 = vpop.f32.mrb[0].mxu0
    %v5417 = vadd.f32 0.0, %v5416
    %v5418 = vpop.f32.mrb[0].mxu0
    %v5419 = vpop.f32.mrb[0].mxu0
    %v5420 = vadd.f32 0.0, %v5419
    %v5421 = vpop.f32.mrb[0].mxu0
    %5422 = vdwg.mxu0
    %v5423 = vmul.f32 %v5409, 0.25
    %v5424 = vmul.f32 %v5412, 0.25
    %v5425 = vmul.f32 %v5417, 0.25
    %v5426 = vmul.f32 %v5420, 0.25
    %s5427 = scalar_lea.vmem %s43, 32
    %v5428 = vld [vmem:[%s5427] sm:$0xf]
    %v5429 = vld [vmem:[%s5427 + $0x4] sm:$0xf]
    %v5430 = vld [vmem:[%s5427 + $0x8] sm:$0xf]
    %v5431 = vld [vmem:[%s5427 + $0xc] sm:$0xf]
    %v5432 = vld [vmem:[%s5427 + $0x10] sm:$0xf]
    %v5433 = vld [vmem:[%s5427 + $0x14] sm:$0xf]
    %v5434 = vld [vmem:[%s5427 + $0x18] sm:$0xf]
    %v5435 = vld [vmem:[%s5427 + $0x1c] sm:$0xf]
    %v5444 = vunpack.c.l.b16 %v5428
    %v5445 = vunpack.c.l.b16 %v5429
    %v5446 = vunpack.c.l.b16 %v5430
    %v5447 = vunpack.c.l.b16 %v5431
    %v5448 = vunpack.c.l.b16 %v5432
    %v5449 = vunpack.c.l.b16 %v5433
    %v5450 = vunpack.c.l.b16 %v5434
    %v5451 = vunpack.c.l.b16 %v5435
    %v5452 = vpack.c.b16 %v5445, %v5444
    %v5453 = vpack.c.b16 %v5447, %v5446
    %v5454 = vpack.c.b16 %v5449, %v5448
    %v5455 = vpack.c.b16 %v5451, %v5450
    %5460 = vmatprep.subr.bf16.mxu0 0
    %5461 = vmatpush1.bf16.msra.mxu0 %v5452
    %5462 = vmatprep.subr.bf16.mxu0 0
    %5463 = vmatpush1.bf16.msra.mxu0 %v5453
    %5464 = vmatprep.subr.bf16.mxu0 0
    %5465 = vmatpush1.bf16.msra.mxu0 %v5454
    %5466 = vmatprep.subr.bf16.mxu0 0
    %5467 = vmatpush1.bf16.msra.mxu0 %v5455
    %5468 = vmatprep.subr.bf16.mxu0 0
    %5469 = vmatpush1.bf16.msra.mxu0 0
    %5470 = vmatprep.subr.bf16.mxu0 0
    %5471 = vmatpush1.bf16.msra.mxu0 0
    %5472 = vmatprep.subr.bf16.mxu0 0
    %5473 = vmatpush1.bf16.msra.mxu0 0
    %5474 = vmatprep.subr.bf16.mxu0 0
    %5475 = vmatpush1.bf16.msra.mxu0 0
    %5476 = vmatprep.subr.bf16.mxu0 0
    %5477 = vmatpush1.bf16.msra.mxu0 0
    %5478 = vmatprep.subr.bf16.mxu0 0
    %5479 = vmatpush1.bf16.msra.mxu0 0
    %5480 = vmatprep.subr.bf16.mxu0 0
    %5481 = vmatpush1.bf16.msra.mxu0 0
    %5482 = vmatprep.subr.bf16.mxu0 0
    %5483 = vmatpush1.bf16.msra.mxu0 0
    %5484 = vmatprep.subr.bf16.mxu0 0
    %5485 = vmatpush1.bf16.msra.mxu0 0
    %5486 = vmatprep.subr.bf16.mxu0 0
    %5487 = vmatpush1.bf16.msra.mxu0 0
    %5488 = vmatprep.subr.bf16.mxu0 0
    %5489 = vmatpush1.bf16.msra.mxu0 0
    %5490 = vmatprep.subr.bf16.mxu0 0
    %5491 = vmatpush1.bf16.msra.mxu0 0
    %5492 = vmatprep.mubr.bf16.mxu0 0
    %5493 = vmatmul.mubr.bf16.gmra.mrb[0].mxu0 %v4949
    %v5494 = vpop.f32.mrb[0].mxu0
    %v5495 = vadd.f32 0.0, %v5494
    %v5496 = vpop.f32.mrb[0].mxu0
    %v5497 = vpop.f32.mrb[0].mxu0
    %v5498 = vadd.f32 0.0, %v5497
    %v5499 = vpop.f32.mrb[0].mxu0
    %5500 = vmatprep.mubr.bf16.mxu0 0
    %5501 = vmatmul.mubr.bf16.gmra.mrb[0].mxu0 %v4952
    %v5502 = vpop.f32.mrb[0].mxu0
    %v5503 = vadd.f32 0.0, %v5502
    %v5504 = vpop.f32.mrb[0].mxu0
    %v5505 = vpop.f32.mrb[0].mxu0
    %v5506 = vadd.f32 0.0, %v5505
    %v5507 = vpop.f32.mrb[0].mxu0
    %5508 = vdwg.mxu0
    %s5509 = scalar_lea.vmem %s45, 32
    %v5510 = vld [vmem:[%s5509] sm:$0xf]
    %v5511 = vld [vmem:[%s5509 + $0x4] sm:$0xf]
    %v5512 = vld [vmem:[%s5509 + $0x8] sm:$0xf]
    %v5513 = vld [vmem:[%s5509 + $0xc] sm:$0xf]
    %v5514 = vld [vmem:[%s5509 + $0x10] sm:$0xf]
    %v5515 = vld [vmem:[%s5509 + $0x14] sm:$0xf]
    %v5516 = vld [vmem:[%s5509 + $0x18] sm:$0xf]
    %v5517 = vld [vmem:[%s5509 + $0x1c] sm:$0xf]
    %v5526 = vunpack.c.l.b16 %v5510
    %v5527 = vunpack.c.l.b16 %v5511
    %v5528 = vunpack.c.l.b16 %v5512
    %v5529 = vunpack.c.l.b16 %v5513
    %v5530 = vunpack.c.l.b16 %v5514
    %v5531 = vunpack.c.l.b16 %v5515
    %v5532 = vunpack.c.l.b16 %v5516
    %v5533 = vunpack.c.l.b16 %v5517
    %v5534 = vpack.c.b16 %v5527, %v5526
    %v5535 = vpack.c.b16 %v5529, %v5528
    %v5536 = vpack.c.b16 %v5531, %v5530
    %v5537 = vpack.c.b16 %v5533, %v5532
    %5542 = vmatprep.subr.bf16.mxu0 0
    %5543 = vmatpush1.bf16.msra.mxu0 %v5534
    %5544 = vmatprep.subr.bf16.mxu0 0
    %5545 = vmatpush1.bf16.msra.mxu0 %v5535
    %5546 = vmatprep.subr.bf16.mxu0 0
    %5547 = vmatpush1.bf16.msra.mxu0 %v5536
    %5548 = vmatprep.subr.bf16.mxu0 0
    %5549 = vmatpush1.bf16.msra.mxu0 %v5537
    %5550 = vmatprep.subr.bf16.mxu0 0
    %5551 = vmatpush1.bf16.msra.mxu0 0
    %5552 = vmatprep.subr.bf16.mxu0 0
    %5553 = vmatpush1.bf16.msra.mxu0 0
    %5554 = vmatprep.subr.bf16.mxu0 0
    %5555 = vmatpush1.bf16.msra.mxu0 0
    %5556 = vmatprep.subr.bf16.mxu0 0
    %5557 = vmatpush1.bf16.msra.mxu0 0
    %5558 = vmatprep.subr.bf16.mxu0 0
    %5559 = vmatpush1.bf16.msra.mxu0 0
    %5560 = vmatprep.subr.bf16.mxu0 0
    %5561 = vmatpush1.bf16.msra.mxu0 0
    %5562 = vmatprep.subr.bf16.mxu0 0
    %5563 = vmatpush1.bf16.msra.mxu0 0
    %5564 = vmatprep.subr.bf16.mxu0 0
    %5565 = vmatpush1.bf16.msra.mxu0 0
    %5566 = vmatprep.subr.bf16.mxu0 0
    %5567 = vmatpush1.bf16.msra.mxu0 0
    %5568 = vmatprep.subr.bf16.mxu0 0
    %5569 = vmatpush1.bf16.msra.mxu0 0
    %5570 = vmatprep.subr.bf16.mxu0 0
    %5571 = vmatpush1.bf16.msra.mxu0 0
    %5572 = vmatprep.subr.bf16.mxu0 0
    %5573 = vmatpush1.bf16.msra.mxu0 0
    %5574 = vmatprep.mubr.bf16.mxu0 0
    %5575 = vmatmul.mubr.bf16.gmra.mrb[0].mxu0 %v4949
    %v5576 = vpop.f32.mrb[0].mxu0
    %v5577 = vadd.f32 0.0, %v5576
    %v5578 = vpop.f32.mrb[0].mxu0
    %v5579 = vpop.f32.mrb[0].mxu0
    %v5580 = vadd.f32 0.0, %v5579
    %v5581 = vpop.f32.mrb[0].mxu0
    %5582 = vmatprep.mubr.bf16.mxu0 0
    %5583 = vmatmul.mubr.bf16.gmra.mrb[0].mxu0 %v4952
    %v5584 = vpop.f32.mrb[0].mxu0
    %v5585 = vadd.f32 0.0, %v5584
    %v5586 = vpop.f32.mrb[0].mxu0
    %v5587 = vpop.f32.mrb[0].mxu0
    %v5588 = vadd.f32 0.0, %v5587
    %v5589 = vpop.f32.mrb[0].mxu0
    %5590 = vdwg.mxu0
    %v5591 = vpack.c.bf16 %v5424, %v5423
    %v5592 = vpack.c.bf16 %v5426, %v5425
    %v5593 = vpack.c.bf16 %v5498, %v5495
    %v5594 = vpack.c.bf16 %v5506, %v5503
    %v5596 = vsel %vm797, %v5591, 0
    %v5599 = vsel %vm797, %v5592, 0
    %v5602 = vsel %vm797, %v5593, 0
    %v5605 = vsel %vm797, %v5594, 0
    %5607 = vmatprep.subr.bf16.mxu0 0
    %5608 = vmatpush1.bf16.xpose.msra.mxu0 %v5602
    %5609 = vmatprep.subr.bf16.mxu0 0
    %5610 = vmatpush1.bf16.xpose.msra.mxu0 %v5605
    %5611 = vmatprep.subr.bf16.mxu0 0
    %5612 = vmatpush1.bf16.xpose.msra.mxu0 0
    %5613 = vmatprep.subr.bf16.mxu0 0
    %5614 = vmatpush1.bf16.xpose.msra.mxu0 0
    %5615 = vmatprep.subr.bf16.mxu0 0
    %5616 = vmatpush1.bf16.xpose.msra.mxu0 0
    %5617 = vmatprep.subr.bf16.mxu0 0
    %5618 = vmatpush1.bf16.xpose.msra.mxu0 0
    %5619 = vmatprep.subr.bf16.mxu0 0
    %5620 = vmatpush1.bf16.xpose.msra.mxu0 0
    %5621 = vmatprep.subr.bf16.mxu0 0
    %5622 = vmatpush1.bf16.xpose.msra.mxu0 0
    %5623 = vmatprep.subr.bf16.mxu0 0
    %5624 = vmatpush1.bf16.xpose.msra.mxu0 0
    %5625 = vmatprep.subr.bf16.mxu0 0
    %5626 = vmatpush1.bf16.xpose.msra.mxu0 0
    %5627 = vmatprep.subr.bf16.mxu0 0
    %5628 = vmatpush1.bf16.xpose.msra.mxu0 0
    %5629 = vmatprep.subr.bf16.mxu0 0
    %5630 = vmatpush1.bf16.xpose.msra.mxu0 0
    %5631 = vmatprep.subr.bf16.mxu0 0
    %5632 = vmatpush1.bf16.xpose.msra.mxu0 0
    %5633 = vmatprep.subr.bf16.mxu0 0
    %5634 = vmatpush1.bf16.xpose.msra.mxu0 0
    %5635 = vmatprep.subr.bf16.mxu0 0
    %5636 = vmatpush1.bf16.xpose.msra.mxu0 0
    %5637 = vmatprep.subr.bf16.mxu0 0
    %5638 = vmatpush1.bf16.xpose.msra.mxu0 0
    %5639 = vmatprep.mubr.bf16.mxu0 0
    %5640 = vmatmul.mubr.bf16.gmra.mrb[0].mxu0 %v5596
    %v5641 = vpop.f32.mrb[0].mxu0
    %v5642 = vadd.f32 %v4835, %v5641
    %v5643 = vpop.f32.mrb[0].mxu0
    %v5644 = vpop.f32.mrb[0].mxu0
    %v5645 = vadd.f32 %v4836, %v5644
    %v5646 = vpop.f32.mrb[0].mxu0
    %5647 = vmatprep.mubr.bf16.mxu0 0
    %5648 = vmatmul.mubr.bf16.gmra.mrb[0].mxu0 %v5599
    %v5649 = vpop.f32.mrb[0].mxu0
    %v5650 = vadd.f32 %v4837, %v5649
    %v5651 = vpop.f32.mrb[0].mxu0
    %v5652 = vpop.f32.mrb[0].mxu0
    %v5653 = vadd.f32 %v4838, %v5652
    %v5654 = vpop.f32.mrb[0].mxu0
    %5655 = vdwg.mxu0
    %v5656 = vsel %vm871, %v5642, -inf
    %5657 = vmax.xlane.f32.xlu0 %v5656
    %v5658 = vpop.xlane.xlu0 %5657
    %v5659 = vsel %vm871, %v5645, -inf
    %5660 = vmax.xlane.f32.xlu0 %v5659
    %v5661 = vpop.xlane.xlu0 %5660
    %v5662 = vsel %vm871, %v5650, -inf
    %5663 = vmax.xlane.f32.xlu0 %v5662
    %v5664 = vpop.xlane.xlu0 %5663
    %v5665 = vsel %vm871, %v5653, -inf
    %5666 = vmax.xlane.f32.xlu0 %v5665
    %v5667 = vpop.xlane.xlu0 %5666
    %v5668 = vsub.f32 %v5642, %v5658
    %v5669 = vsub.f32 %v5645, %v5661
    %v5670 = vsub.f32 %v5650, %v5664
    %v5671 = vsub.f32 %v5653, %v5667
    %v5672 = vmul.f32 %v5668, 1.442695
    %v5673 = vpow.pop %v5672
    %v5674 = vmul.f32 %v5669, 1.442695
    %v5675 = vpow.pop %v5674
    %v5676 = vmul.f32 %v5670, 1.442695
    %v5677 = vpow.pop %v5676
    %v5678 = vmul.f32 %v5671, 1.442695
    %v5679 = vpow.pop %v5678
    %v5680 = vsel %vm871, %v5673, 0.0
    %5681 = vadd.xlane.f32.xlu0 %v5680
    %v5682 = vpop.xlane.xlu0 %5681
    %v5683 = vsel %vm871, %v5675, 0.0
    %5684 = vadd.xlane.f32.xlu0 %v5683
    %v5685 = vpop.xlane.xlu0 %5684
    %v5686 = vsel %vm871, %v5677, 0.0
    %5687 = vadd.xlane.f32.xlu0 %v5686
    %v5688 = vpop.xlane.xlu0 %5687
    %v5689 = vsel %vm871, %v5679, 0.0
    %5690 = vadd.xlane.f32.xlu0 %v5689
    %v5691 = vpop.xlane.xlu0 %5690
    %v5692 = vrcp.pop %v5682
    %v5693 = vrcp.pop %v5685
    %v5694 = vrcp.pop %v5688
    %v5695 = vrcp.pop %v5691
    %v5696 = vmul.f32 %v5673, %v5692
    %v5697 = vmul.f32 %v5675, %v5693
    %v5698 = vmul.f32 %v5677, %v5694
    %v5699 = vmul.f32 %v5679, %v5695
    %v5700 = vpack.c.bf16 %v5697, %v5696
    %v5701 = vpack.c.bf16 %v5699, %v5698
    %v5702 = vpack.c.bf16 %v5580, %v5577
    %v5703 = vpack.c.bf16 %v5588, %v5585
    %v5705 = vsel %vm871, %v5700, 0
    %v5708 = vsel %vm871, %v5701, 0
    %5710 = vmatprep.subr.bf16.mxu0 0
    %5711 = vmatpush1.bf16.msra.mxu0 %v5702
    %5712 = vmatprep.subr.bf16.mxu0 0
    %5713 = vmatpush1.bf16.msra.mxu0 %v5703
    %5714 = vmatprep.subr.bf16.mxu0 0
    %5715 = vmatpush1.bf16.msra.mxu0 0
    %5716 = vmatprep.subr.bf16.mxu0 0
    %5717 = vmatpush1.bf16.msra.mxu0 0
    %5718 = vmatprep.subr.bf16.mxu0 0
    %5719 = vmatpush1.bf16.msra.mxu0 0
    %5720 = vmatprep.subr.bf16.mxu0 0
    %5721 = vmatpush1.bf16.msra.mxu0 0
    %5722 = vmatprep.subr.bf16.mxu0 0
    %5723 = vmatpush1.bf16.msra.mxu0 0
    %5724 = vmatprep.subr.bf16.mxu0 0
    %5725 = vmatpush1.bf16.msra.mxu0 0
    %5726 = vmatprep.subr.bf16.mxu0 0
    %5727 = vmatpush1.bf16.msra.mxu0 0
    %5728 = vmatprep.subr.bf16.mxu0 0
    %5729 = vmatpush1.bf16.msra.mxu0 0
    %5730 = vmatprep.subr.bf16.mxu0 0
    %5731 = vmatpush1.bf16.msra.mxu0 0
    %5732 = vmatprep.subr.bf16.mxu0 0
    %5733 = vmatpush1.bf16.msra.mxu0 0
    %5734 = vmatprep.subr.bf16.mxu0 0
    %5735 = vmatpush1.bf16.msra.mxu0 0
    %5736 = vmatprep.subr.bf16.mxu0 0
    %5737 = vmatpush1.bf16.msra.mxu0 0
    %5738 = vmatprep.subr.bf16.mxu0 0
    %5739 = vmatpush1.bf16.msra.mxu0 0
    %5740 = vmatprep.subr.bf16.mxu0 0
    %5741 = vmatpush1.bf16.msra.mxu0 0
    %5742 = vmatprep.mubr.bf16.mxu0 0
    %5743 = vmatmul.mubr.bf16.gmra.mrb[0].mxu0 %v5705
    %v5744 = vpop.f32.mrb[0].mxu0
    %v5745 = vadd.f32 0.0, %v5744
    %v5746 = vpop.f32.mrb[0].mxu0
    %v5747 = vpop.f32.mrb[0].mxu0
    %v5748 = vadd.f32 0.0, %v5747
    %v5749 = vpop.f32.mrb[0].mxu0
    %5750 = vmatprep.mubr.bf16.mxu0 0
    %5751 = vmatmul.mubr.bf16.gmra.mrb[0].mxu0 %v5708
    %v5752 = vpop.f32.mrb[0].mxu0
    %v5753 = vadd.f32 0.0, %v5752
    %v5754 = vpop.f32.mrb[0].mxu0
    %v5755 = vpop.f32.mrb[0].mxu0
    %v5756 = vadd.f32 0.0, %v5755
    %v5757 = vpop.f32.mrb[0].mxu0
    %5758 = vdwg.mxu0
    %v5759 = vpack.c.bf16 %v5748, %v5745
    %v5760 = vpack.c.bf16 %v5756, %v5753
    %s5761 = scalar_lea.vmem %s47, 8
    %v5762 = vld [vmem:[%s5761] sm:$0xf]
    %v5763 = vld [vmem:[%s5761 + $0x4] sm:$0xf]
    %v5766 = vunpack.c.l.b16 %v5762
    %v5767 = vunpack.c.l.b16 %v5763
    %v5768 = vpack.c.b16 %v5767, %v5766
    %v5771 = vsel %vm797, %v5759, 0
    %v5774 = vsel %vm797, %v5760, 0
    %5776 = vmatprep.subr.bf16.mxu0 0
    %5777 = vmatpush1.bf16.msra.mxu0 %v5768
    %5778 = vmatprep.subr.bf16.mxu0 0
    %5779 = vmatpush1.bf16.msra.mxu0 0
    %5780 = vmatprep.subr.bf16.mxu0 0
    %5781 = vmatpush1.bf16.msra.mxu0 0
    %5782 = vmatprep.subr.bf16.mxu0 0
    %5783 = vmatpush1.bf16.msra.mxu0 0
    %5784 = vmatprep.subr.bf16.mxu0 0
    %5785 = vmatpush1.bf16.msra.mxu0 0
    %5786 = vmatprep.subr.bf16.mxu0 0
    %5787 = vmatpush1.bf16.msra.mxu0 0
    %5788 = vmatprep.subr.bf16.mxu0 0
    %5789 = vmatpush1.bf16.msra.mxu0 0
    %5790 = vmatprep.subr.bf16.mxu0 0
    %5791 = vmatpush1.bf16.msra.mxu0 0
    %5792 = vmatprep.subr.bf16.mxu0 0
    %5793 = vmatpush1.bf16.msra.mxu0 0
    %5794 = vmatprep.subr.bf16.mxu0 0
    %5795 = vmatpush1.bf16.msra.mxu0 0
    %5796 = vmatprep.subr.bf16.mxu0 0
    %5797 = vmatpush1.bf16.msra.mxu0 0
    %5798 = vmatprep.subr.bf16.mxu0 0
    %5799 = vmatpush1.bf16.msra.mxu0 0
    %5800 = vmatprep.subr.bf16.mxu0 0
    %5801 = vmatpush1.bf16.msra.mxu0 0
    %5802 = vmatprep.subr.bf16.mxu0 0
    %5803 = vmatpush1.bf16.msra.mxu0 0
    %5804 = vmatprep.subr.bf16.mxu0 0
    %5805 = vmatpush1.bf16.msra.mxu0 0
    %5806 = vmatprep.subr.bf16.mxu0 0
    %5807 = vmatpush1.bf16.msra.mxu0 0
    %5808 = vmatprep.mubr.bf16.mxu0 0
    %5809 = vmatmul.mubr.bf16.gmra.mrb[0].mxu0 %v5771
    %v5810 = vpop.f32.mrb[0].mxu0
    %v5811 = vadd.f32 0.0, %v5810
    %v5812 = vpop.f32.mrb[0].mxu0
    %v5813 = vpop.f32.mrb[0].mxu0
    %v5814 = vadd.f32 0.0, %v5813
    %v5815 = vpop.f32.mrb[0].mxu0
    %5816 = vmatprep.mubr.bf16.mxu0 0
    %5817 = vmatmul.mubr.bf16.gmra.mrb[0].mxu0 %v5774
    %v5818 = vpop.f32.mrb[0].mxu0
    %v5819 = vadd.f32 0.0, %v5818
    %v5820 = vpop.f32.mrb[0].mxu0
    %v5821 = vpop.f32.mrb[0].mxu0
    %v5822 = vadd.f32 0.0, %v5821
    %v5823 = vpop.f32.mrb[0].mxu0
    %5824 = vdwg.mxu0
    %v5827 = vunpack.c.l.b16 %v5339
    %v5828 = vunpack.c.l.b16 %v5340
    %v5829 = vpack.c.b16 %v5828, %v5827
    %v5832 = vsel %vm797, %v5337, 0
    %v5835 = vsel %vm797, %v5338, 0
    %5837 = vmatprep.subr.bf16.mxu0 0
    %5838 = vmatpush1.bf16.msra.mxu0 %v5829
    %5839 = vmatprep.subr.bf16.mxu0 0
    %5840 = vmatpush1.bf16.msra.mxu0 0
    %5841 = vmatprep.subr.bf16.mxu0 0
    %5842 = vmatpush1.bf16.msra.mxu0 0
    %5843 = vmatprep.subr.bf16.mxu0 0
    %5844 = vmatpush1.bf16.msra.mxu0 0
    %5845 = vmatprep.subr.bf16.mxu0 0
    %5846 = vmatpush1.bf16.msra.mxu0 0
    %5847 = vmatprep.subr.bf16.mxu0 0
    %5848 = vmatpush1.bf16.msra.mxu0 0
    %5849 = vmatprep.subr.bf16.mxu0 0
    %5850 = vmatpush1.bf16.msra.mxu0 0
    %5851 = vmatprep.subr.bf16.mxu0 0
    %5852 = vmatpush1.bf16.msra.mxu0 0
    %5853 = vmatprep.subr.bf16.mxu0 0
    %5854 = vmatpush1.bf16.msra.mxu0 0
    %5855 = vmatprep.subr.bf16.mxu0 0
    %5856 = vmatpush1.bf16.msra.mxu0 0
    %5857 = vmatprep.subr.bf16.mxu0 0
    %5858 = vmatpush1.bf16.msra.mxu0 0
    %5859 = vmatprep.subr.bf16.mxu0 0
    %5860 = vmatpush1.bf16.msra.mxu0 0
    %5861 = vmatprep.subr.bf16.mxu0 0
    %5862 = vmatpush1.bf16.msra.mxu0 0
    %5863 = vmatprep.subr.bf16.mxu0 0
    %5864 = vmatpush1.bf16.msra.mxu0 0
    %5865 = vmatprep.subr.bf16.mxu0 0
    %5866 = vmatpush1.bf16.msra.mxu0 0
    %5867 = vmatprep.subr.bf16.mxu0 0
    %5868 = vmatpush1.bf16.msra.mxu0 0
    %5869 = vmatprep.mubr.bf16.mxu0 0
    %5870 = vmatmul.mubr.bf16.gmra.mrb[0].mxu0 %v5832
    %v5871 = vpop.f32.mrb[0].mxu0
    %v5872 = vadd.f32 %v5811, %v5871
    %v5873 = vpop.f32.mrb[0].mxu0
    %v5874 = vpop.f32.mrb[0].mxu0
    %v5875 = vadd.f32 %v5814, %v5874
    %v5876 = vpop.f32.mrb[0].mxu0
    %5877 = vmatprep.mubr.bf16.mxu0 0
    %5878 = vmatmul.mubr.bf16.gmra.mrb[0].mxu0 %v5835
    %v5879 = vpop.f32.mrb[0].mxu0
    %v5880 = vadd.f32 %v5819, %v5879
    %v5881 = vpop.f32.mrb[0].mxu0
    %v5882 = vpop.f32.mrb[0].mxu0
    %v5883 = vadd.f32 %v5822, %v5882
    %v5884 = vpop.f32.mrb[0].mxu0
    %5885 = vdwg.mxu0
    %s5886 = scalar_lea.vmem %s41, 64
    %v5887 = vld [vmem:[%s5886] sm:$0xf]
    %v5888 = vld [vmem:[%s5886 + $0x4] sm:$0xf]
    %v5889 = vld [vmem:[%s5886 + $0x8] sm:$0xf]
    %v5890 = vld [vmem:[%s5886 + $0xc] sm:$0xf]
    %v5891 = vld [vmem:[%s5886 + $0x10] sm:$0xf]
    %v5892 = vld [vmem:[%s5886 + $0x14] sm:$0xf]
    %v5893 = vld [vmem:[%s5886 + $0x18] sm:$0xf]
    %v5894 = vld [vmem:[%s5886 + $0x1c] sm:$0xf]
    %v5903 = vunpack.c.l.b16 %v5887
    %v5904 = vunpack.c.l.b16 %v5888
    %v5905 = vunpack.c.l.b16 %v5889
    %v5906 = vunpack.c.l.b16 %v5890
    %v5907 = vunpack.c.l.b16 %v5891
    %v5908 = vunpack.c.l.b16 %v5892
    %v5909 = vunpack.c.l.b16 %v5893
    %v5910 = vunpack.c.l.b16 %v5894
    %v5911 = vpack.c.b16 %v5904, %v5903
    %v5912 = vpack.c.b16 %v5906, %v5905
    %v5913 = vpack.c.b16 %v5908, %v5907
    %v5914 = vpack.c.b16 %v5910, %v5909
    %5919 = vmatprep.subr.bf16.mxu0 0
    %5920 = vmatpush1.bf16.msra.mxu0 %v5911
    %5921 = vmatprep.subr.bf16.mxu0 0
    %5922 = vmatpush1.bf16.msra.mxu0 %v5912
    %5923 = vmatprep.subr.bf16.mxu0 0
    %5924 = vmatpush1.bf16.msra.mxu0 %v5913
    %5925 = vmatprep.subr.bf16.mxu0 0
    %5926 = vmatpush1.bf16.msra.mxu0 %v5914
    %5927 = vmatprep.subr.bf16.mxu0 0
    %5928 = vmatpush1.bf16.msra.mxu0 0
    %5929 = vmatprep.subr.bf16.mxu0 0
    %5930 = vmatpush1.bf16.msra.mxu0 0
    %5931 = vmatprep.subr.bf16.mxu0 0
    %5932 = vmatpush1.bf16.msra.mxu0 0
    %5933 = vmatprep.subr.bf16.mxu0 0
    %5934 = vmatpush1.bf16.msra.mxu0 0
    %5935 = vmatprep.subr.bf16.mxu0 0
    %5936 = vmatpush1.bf16.msra.mxu0 0
    %5937 = vmatprep.subr.bf16.mxu0 0
    %5938 = vmatpush1.bf16.msra.mxu0 0
    %5939 = vmatprep.subr.bf16.mxu0 0
    %5940 = vmatpush1.bf16.msra.mxu0 0
    %5941 = vmatprep.subr.bf16.mxu0 0
    %5942 = vmatpush1.bf16.msra.mxu0 0
    %5943 = vmatprep.subr.bf16.mxu0 0
    %5944 = vmatpush1.bf16.msra.mxu0 0
    %5945 = vmatprep.subr.bf16.mxu0 0
    %5946 = vmatpush1.bf16.msra.mxu0 0
    %5947 = vmatprep.subr.bf16.mxu0 0
    %5948 = vmatpush1.bf16.msra.mxu0 0
    %5949 = vmatprep.subr.bf16.mxu0 0
    %5950 = vmatpush1.bf16.msra.mxu0 0
    %5951 = vmatprep.mubr.bf16.mxu0 0
    %5952 = vmatmul.mubr.bf16.gmra.mrb[0].mxu0 %v4949
    %v5953 = vpop.f32.mrb[0].mxu0
    %v5954 = vadd.f32 0.0, %v5953
    %v5955 = vpop.f32.mrb[0].mxu0
    %v5956 = vpop.f32.mrb[0].mxu0
    %v5957 = vadd.f32 0.0, %v5956
    %v5958 = vpop.f32.mrb[0].mxu0
    %5959 = vmatprep.mubr.bf16.mxu0 0
    %5960 = vmatmul.mubr.bf16.gmra.mrb[0].mxu0 %v4952
    %v5961 = vpop.f32.mrb[0].mxu0
    %v5962 = vadd.f32 0.0, %v5961
    %v5963 = vpop.f32.mrb[0].mxu0
    %v5964 = vpop.f32.mrb[0].mxu0
    %v5965 = vadd.f32 0.0, %v5964
    %v5966 = vpop.f32.mrb[0].mxu0
    %5967 = vdwg.mxu0
    %v5968 = vmul.f32 %v5954, 0.25
    %v5969 = vmul.f32 %v5957, 0.25
    %v5970 = vmul.f32 %v5962, 0.25
    %v5971 = vmul.f32 %v5965, 0.25
    %s5972 = scalar_lea.vmem %s43, 64
    %v5973 = vld [vmem:[%s5972] sm:$0xf]
    %v5974 = vld [vmem:[%s5972 + $0x4] sm:$0xf]
    %v5975 = vld [vmem:[%s5972 + $0x8] sm:$0xf]
    %v5976 = vld [vmem:[%s5972 + $0xc] sm:$0xf]
    %v5977 = vld [vmem:[%s5972 + $0x10] sm:$0xf]
    %v5978 = vld [vmem:[%s5972 + $0x14] sm:$0xf]
    %v5979 = vld [vmem:[%s5972 + $0x18] sm:$0xf]
    %v5980 = vld [vmem:[%s5972 + $0x1c] sm:$0xf]
    %v5989 = vunpack.c.l.b16 %v5973
    %v5990 = vunpack.c.l.b16 %v5974
    %v5991 = vunpack.c.l.b16 %v5975
    %v5992 = vunpack.c.l.b16 %v5976
    %v5993 = vunpack.c.l.b16 %v5977
    %v5994 = vunpack.c.l.b16 %v5978
    %v5995 = vunpack.c.l.b16 %v5979
    %v5996 = vunpack.c.l.b16 %v5980
    %v5997 = vpack.c.b16 %v5990, %v5989
    %v5998 = vpack.c.b16 %v5992, %v5991
    %v5999 = vpack.c.b16 %v5994, %v5993
    %v6000 = vpack.c.b16 %v5996, %v5995
    %6005 = vmatprep.subr.bf16.mxu0 0
    %6006 = vmatpush1.bf16.msra.mxu0 %v5997
    %6007 = vmatprep.subr.bf16.mxu0 0
    %6008 = vmatpush1.bf16.msra.mxu0 %v5998
    %6009 = vmatprep.subr.bf16.mxu0 0
    %6010 = vmatpush1.bf16.msra.mxu0 %v5999
    %6011 = vmatprep.subr.bf16.mxu0 0
    %6012 = vmatpush1.bf16.msra.mxu0 %v6000
    %6013 = vmatprep.subr.bf16.mxu0 0
    %6014 = vmatpush1.bf16.msra.mxu0 0
    %6015 = vmatprep.subr.bf16.mxu0 0
    %6016 = vmatpush1.bf16.msra.mxu0 0
    %6017 = vmatprep.subr.bf16.mxu0 0
    %6018 = vmatpush1.bf16.msra.mxu0 0
    %6019 = vmatprep.subr.bf16.mxu0 0
    %6020 = vmatpush1.bf16.msra.mxu0 0
    %6021 = vmatprep.subr.bf16.mxu0 0
    %6022 = vmatpush1.bf16.msra.mxu0 0
    %6023 = vmatprep.subr.bf16.mxu0 0
    %6024 = vmatpush1.bf16.msra.mxu0 0
    %6025 = vmatprep.subr.bf16.mxu0 0
    %6026 = vmatpush1.bf16.msra.mxu0 0
    %6027 = vmatprep.subr.bf16.mxu0 0
    %6028 = vmatpush1.bf16.msra.mxu0 0
    %6029 = vmatprep.subr.bf16.mxu0 0
    %6030 = vmatpush1.bf16.msra.mxu0 0
    %6031 = vmatprep.subr.bf16.mxu0 0
    %6032 = vmatpush1.bf16.msra.mxu0 0
    %6033 = vmatprep.subr.bf16.mxu0 0
    %6034 = vmatpush1.bf16.msra.mxu0 0
    %6035 = vmatprep.subr.bf16.mxu0 0
    %6036 = vmatpush1.bf16.msra.mxu0 0
    %6037 = vmatprep.mubr.bf16.mxu0 0
    %6038 = vmatmul.mubr.bf16.gmra.mrb[0].mxu0 %v4949
    %v6039 = vpop.f32.mrb[0].mxu0
    %v6040 = vadd.f32 0.0, %v6039
    %v6041 = vpop.f32.mrb[0].mxu0
    %v6042 = vpop.f32.mrb[0].mxu0
    %v6043 = vadd.f32 0.0, %v6042
    %v6044 = vpop.f32.mrb[0].mxu0
    %6045 = vmatprep.mubr.bf16.mxu0 0
    %6046 = vmatmul.mubr.bf16.gmra.mrb[0].mxu0 %v4952
    %v6047 = vpop.f32.mrb[0].mxu0
    %v6048 = vadd.f32 0.0, %v6047
    %v6049 = vpop.f32.mrb[0].mxu0
    %v6050 = vpop.f32.mrb[0].mxu0
    %v6051 = vadd.f32 0.0, %v6050
    %v6052 = vpop.f32.mrb[0].mxu0
    %6053 = vdwg.mxu0
    %s6054 = scalar_lea.vmem %s45, 64
    %v6055 = vld [vmem:[%s6054] sm:$0xf]
    %v6056 = vld [vmem:[%s6054 + $0x4] sm:$0xf]
    %v6057 = vld [vmem:[%s6054 + $0x8] sm:$0xf]
    %v6058 = vld [vmem:[%s6054 + $0xc] sm:$0xf]
    %v6059 = vld [vmem:[%s6054 + $0x10] sm:$0xf]
    %v6060 = vld [vmem:[%s6054 + $0x14] sm:$0xf]
    %v6061 = vld [vmem:[%s6054 + $0x18] sm:$0xf]
    %v6062 = vld [vmem:[%s6054 + $0x1c] sm:$0xf]
    %v6071 = vunpack.c.l.b16 %v6055
    %v6072 = vunpack.c.l.b16 %v6056
    %v6073 = vunpack.c.l.b16 %v6057
    %v6074 = vunpack.c.l.b16 %v6058
    %v6075 = vunpack.c.l.b16 %v6059
    %v6076 = vunpack.c.l.b16 %v6060
    %v6077 = vunpack.c.l.b16 %v6061
    %v6078 = vunpack.c.l.b16 %v6062
    %v6079 = vpack.c.b16 %v6072, %v6071
    %v6080 = vpack.c.b16 %v6074, %v6073
    %v6081 = vpack.c.b16 %v6076, %v6075
    %v6082 = vpack.c.b16 %v6078, %v6077
    %6087 = vmatprep.subr.bf16.mxu0 0
    %6088 = vmatpush1.bf16.msra.mxu0 %v6079
    %6089 = vmatprep.subr.bf16.mxu0 0
    %6090 = vmatpush1.bf16.msra.mxu0 %v6080
    %6091 = vmatprep.subr.bf16.mxu0 0
    %6092 = vmatpush1.bf16.msra.mxu0 %v6081
    %6093 = vmatprep.subr.bf16.mxu0 0
    %6094 = vmatpush1.bf16.msra.mxu0 %v6082
    %6095 = vmatprep.subr.bf16.mxu0 0
    %6096 = vmatpush1.bf16.msra.mxu0 0
    %6097 = vmatprep.subr.bf16.mxu0 0
    %6098 = vmatpush1.bf16.msra.mxu0 0
    %6099 = vmatprep.subr.bf16.mxu0 0
    %6100 = vmatpush1.bf16.msra.mxu0 0
    %6101 = vmatprep.subr.bf16.mxu0 0
    %6102 = vmatpush1.bf16.msra.mxu0 0
    %6103 = vmatprep.subr.bf16.mxu0 0
    %6104 = vmatpush1.bf16.msra.mxu0 0
    %6105 = vmatprep.subr.bf16.mxu0 0
    %6106 = vmatpush1.bf16.msra.mxu0 0
    %6107 = vmatprep.subr.bf16.mxu0 0
    %6108 = vmatpush1.bf16.msra.mxu0 0
    %6109 = vmatprep.subr.bf16.mxu0 0
    %6110 = vmatpush1.bf16.msra.mxu0 0
    %6111 = vmatprep.subr.bf16.mxu0 0
    %6112 = vmatpush1.bf16.msra.mxu0 0
    %6113 = vmatprep.subr.bf16.mxu0 0
    %6114 = vmatpush1.bf16.msra.mxu0 0
    %6115 = vmatprep.subr.bf16.mxu0 0
    %6116 = vmatpush1.bf16.msra.mxu0 0
    %6117 = vmatprep.subr.bf16.mxu0 0
    %6118 = vmatpush1.bf16.msra.mxu0 0
    %6119 = vmatprep.mubr.bf16.mxu0 0
    %6120 = vmatmul.mubr.bf16.gmra.mrb[0].mxu0 %v4949
    %v6121 = vpop.f32.mrb[0].mxu0
    %v6122 = vadd.f32 0.0, %v6121
    %v6123 = vpop.f32.mrb[0].mxu0
    %v6124 = vpop.f32.mrb[0].mxu0
    %v6125 = vadd.f32 0.0, %v6124
    %v6126 = vpop.f32.mrb[0].mxu0
    %6127 = vmatprep.mubr.bf16.mxu0 0
    %6128 = vmatmul.mubr.bf16.gmra.mrb[0].mxu0 %v4952
    %v6129 = vpop.f32.mrb[0].mxu0
    %v6130 = vadd.f32 0.0, %v6129
    %v6131 = vpop.f32.mrb[0].mxu0
    %v6132 = vpop.f32.mrb[0].mxu0
    %v6133 = vadd.f32 0.0, %v6132
    %v6134 = vpop.f32.mrb[0].mxu0
    %6135 = vdwg.mxu0
    %v6136 = vpack.c.bf16 %v5969, %v5968
    %v6137 = vpack.c.bf16 %v5971, %v5970
    %v6138 = vpack.c.bf16 %v6043, %v6040
    %v6139 = vpack.c.bf16 %v6051, %v6048
    %v6141 = vsel %vm797, %v6136, 0
    %v6144 = vsel %vm797, %v6137, 0
    %v6147 = vsel %vm797, %v6138, 0
    %v6150 = vsel %vm797, %v6139, 0
    %6152 = vmatprep.subr.bf16.mxu0 0
    %6153 = vmatpush1.bf16.xpose.msra.mxu0 %v6147
    %6154 = vmatprep.subr.bf16.mxu0 0
    %6155 = vmatpush1.bf16.xpose.msra.mxu0 %v6150
    %6156 = vmatprep.subr.bf16.mxu0 0
    %6157 = vmatpush1.bf16.xpose.msra.mxu0 0
    %6158 = vmatprep.subr.bf16.mxu0 0
    %6159 = vmatpush1.bf16.xpose.msra.mxu0 0
    %6160 = vmatprep.subr.bf16.mxu0 0
    %6161 = vmatpush1.bf16.xpose.msra.mxu0 0
    %6162 = vmatprep.subr.bf16.mxu0 0
    %6163 = vmatpush1.bf16.xpose.msra.mxu0 0
    %6164 = vmatprep.subr.bf16.mxu0 0
    %6165 = vmatpush1.bf16.xpose.msra.mxu0 0
    %6166 = vmatprep.subr.bf16.mxu0 0
    %6167 = vmatpush1.bf16.xpose.msra.mxu0 0
    %6168 = vmatprep.subr.bf16.mxu0 0
    %6169 = vmatpush1.bf16.xpose.msra.mxu0 0
    %6170 = vmatprep.subr.bf16.mxu0 0
    %6171 = vmatpush1.bf16.xpose.msra.mxu0 0
    %6172 = vmatprep.subr.bf16.mxu0 0
    %6173 = vmatpush1.bf16.xpose.msra.mxu0 0
    %6174 = vmatprep.subr.bf16.mxu0 0
    %6175 = vmatpush1.bf16.xpose.msra.mxu0 0
    %6176 = vmatprep.subr.bf16.mxu0 0
    %6177 = vmatpush1.bf16.xpose.msra.mxu0 0
    %6178 = vmatprep.subr.bf16.mxu0 0
    %6179 = vmatpush1.bf16.xpose.msra.mxu0 0
    %6180 = vmatprep.subr.bf16.mxu0 0
    %6181 = vmatpush1.bf16.xpose.msra.mxu0 0
    %6182 = vmatprep.subr.bf16.mxu0 0
    %6183 = vmatpush1.bf16.xpose.msra.mxu0 0
    %6184 = vmatprep.mubr.bf16.mxu0 0
    %6185 = vmatmul.mubr.bf16.gmra.mrb[0].mxu0 %v6141
    %v6186 = vpop.f32.mrb[0].mxu0
    %v6187 = vadd.f32 %v4835, %v6186
    %v6188 = vpop.f32.mrb[0].mxu0
    %v6189 = vpop.f32.mrb[0].mxu0
    %v6190 = vadd.f32 %v4836, %v6189
    %v6191 = vpop.f32.mrb[0].mxu0
    %6192 = vmatprep.mubr.bf16.mxu0 0
    %6193 = vmatmul.mubr.bf16.gmra.mrb[0].mxu0 %v6144
    %v6194 = vpop.f32.mrb[0].mxu0
    %v6195 = vadd.f32 %v4837, %v6194
    %v6196 = vpop.f32.mrb[0].mxu0
    %v6197 = vpop.f32.mrb[0].mxu0
    %v6198 = vadd.f32 %v4838, %v6197
    %v6199 = vpop.f32.mrb[0].mxu0
    %6200 = vdwg.mxu0
    %v6201 = vsel %vm871, %v6187, -inf
    %6202 = vmax.xlane.f32.xlu0 %v6201
    %v6203 = vpop.xlane.xlu0 %6202
    %v6204 = vsel %vm871, %v6190, -inf
    %6205 = vmax.xlane.f32.xlu0 %v6204
    %v6206 = vpop.xlane.xlu0 %6205
    %v6207 = vsel %vm871, %v6195, -inf
    %6208 = vmax.xlane.f32.xlu0 %v6207
    %v6209 = vpop.xlane.xlu0 %6208
    %v6210 = vsel %vm871, %v6198, -inf
    %6211 = vmax.xlane.f32.xlu0 %v6210
    %v6212 = vpop.xlane.xlu0 %6211
    %v6213 = vsub.f32 %v6187, %v6203
    %v6214 = vsub.f32 %v6190, %v6206
    %v6215 = vsub.f32 %v6195, %v6209
    %v6216 = vsub.f32 %v6198, %v6212
    %v6217 = vmul.f32 %v6213, 1.442695
    %v6218 = vpow.pop %v6217
    %v6219 = vmul.f32 %v6214, 1.442695
    %v6220 = vpow.pop %v6219
    %v6221 = vmul.f32 %v6215, 1.442695
    %v6222 = vpow.pop %v6221
    %v6223 = vmul.f32 %v6216, 1.442695
    %v6224 = vpow.pop %v6223
    %v6225 = vsel %vm871, %v6218, 0.0
    %6226 = vadd.xlane.f32.xlu0 %v6225
    %v6227 = vpop.xlane.xlu0 %6226
    %v6228 = vsel %vm871, %v6220, 0.0
    %6229 = vadd.xlane.f32.xlu0 %v6228
    %v6230 = vpop.xlane.xlu0 %6229
    %v6231 = vsel %vm871, %v6222, 0.0
    %6232 = vadd.xlane.f32.xlu0 %v6231
    %v6233 = vpop.xlane.xlu0 %6232
    %v6234 = vsel %vm871, %v6224, 0.0
    %6235 = vadd.xlane.f32.xlu0 %v6234
    %v6236 = vpop.xlane.xlu0 %6235
    %v6237 = vrcp.pop %v6227
    %v6238 = vrcp.pop %v6230
    %v6239 = vrcp.pop %v6233
    %v6240 = vrcp.pop %v6236
    %v6241 = vmul.f32 %v6218, %v6237
    %v6242 = vmul.f32 %v6220, %v6238
    %v6243 = vmul.f32 %v6222, %v6239
    %v6244 = vmul.f32 %v6224, %v6240
    %v6245 = vpack.c.bf16 %v6242, %v6241
    %v6246 = vpack.c.bf16 %v6244, %v6243
    %v6247 = vpack.c.bf16 %v6125, %v6122
    %v6248 = vpack.c.bf16 %v6133, %v6130
    %v6250 = vsel %vm871, %v6245, 0
    %v6253 = vsel %vm871, %v6246, 0
    %6255 = vmatprep.subr.bf16.mxu0 0
    %6256 = vmatpush1.bf16.msra.mxu0 %v6247
    %6257 = vmatprep.subr.bf16.mxu0 0
    %6258 = vmatpush1.bf16.msra.mxu0 %v6248
    %6259 = vmatprep.subr.bf16.mxu0 0
    %6260 = vmatpush1.bf16.msra.mxu0 0
    %6261 = vmatprep.subr.bf16.mxu0 0
    %6262 = vmatpush1.bf16.msra.mxu0 0
    %6263 = vmatprep.subr.bf16.mxu0 0
    %6264 = vmatpush1.bf16.msra.mxu0 0
    %6265 = vmatprep.subr.bf16.mxu0 0
    %6266 = vmatpush1.bf16.msra.mxu0 0
    %6267 = vmatprep.subr.bf16.mxu0 0
    %6268 = vmatpush1.bf16.msra.mxu0 0
    %6269 = vmatprep.subr.bf16.mxu0 0
    %6270 = vmatpush1.bf16.msra.mxu0 0
    %6271 = vmatprep.subr.bf16.mxu0 0
    %6272 = vmatpush1.bf16.msra.mxu0 0
    %6273 = vmatprep.subr.bf16.mxu0 0
    %6274 = vmatpush1.bf16.msra.mxu0 0
    %6275 = vmatprep.subr.bf16.mxu0 0
    %6276 = vmatpush1.bf16.msra.mxu0 0
    %6277 = vmatprep.subr.bf16.mxu0 0
    %6278 = vmatpush1.bf16.msra.mxu0 0
    %6279 = vmatprep.subr.bf16.mxu0 0
    %6280 = vmatpush1.bf16.msra.mxu0 0
    %6281 = vmatprep.subr.bf16.mxu0 0
    %6282 = vmatpush1.bf16.msra.mxu0 0
    %6283 = vmatprep.subr.bf16.mxu0 0
    %6284 = vmatpush1.bf16.msra.mxu0 0
    %6285 = vmatprep.subr.bf16.mxu0 0
    %6286 = vmatpush1.bf16.msra.mxu0 0
    %6287 = vmatprep.mubr.bf16.mxu0 0
    %6288 = vmatmul.mubr.bf16.gmra.mrb[0].mxu0 %v6250
    %v6289 = vpop.f32.mrb[0].mxu0
    %v6290 = vadd.f32 0.0, %v6289
    %v6291 = vpop.f32.mrb[0].mxu0
    %v6292 = vpop.f32.mrb[0].mxu0
    %v6293 = vadd.f32 0.0, %v6292
    %v6294 = vpop.f32.mrb[0].mxu0
    %6295 = vmatprep.mubr.bf16.mxu0 0
    %6296 = vmatmul.mubr.bf16.gmra.mrb[0].mxu0 %v6253
    %v6297 = vpop.f32.mrb[0].mxu0
    %v6298 = vadd.f32 0.0, %v6297
    %v6299 = vpop.f32.mrb[0].mxu0
    %v6300 = vpop.f32.mrb[0].mxu0
    %v6301 = vadd.f32 0.0, %v6300
    %v6302 = vpop.f32.mrb[0].mxu0
    %6303 = vdwg.mxu0
    %v6304 = vpack.c.bf16 %v6293, %v6290
    %v6305 = vpack.c.bf16 %v6301, %v6298
    %s6306 = scalar_lea.vmem %s47, 16
    %v6307 = vld [vmem:[%s6306] sm:$0xf]
    %v6308 = vld [vmem:[%s6306 + $0x4] sm:$0xf]
    %v6311 = vunpack.c.l.b16 %v6307
    %v6312 = vunpack.c.l.b16 %v6308
    %v6313 = vpack.c.b16 %v6312, %v6311
    %v6316 = vsel %vm797, %v6304, 0
    %v6319 = vsel %vm797, %v6305, 0
    %6321 = vmatprep.subr.bf16.mxu0 0
    %6322 = vmatpush1.bf16.msra.mxu0 %v6313
    %6323 = vmatprep.subr.bf16.mxu0 0
    %6324 = vmatpush1.bf16.msra.mxu0 0
    %6325 = vmatprep.subr.bf16.mxu0 0
    %6326 = vmatpush1.bf16.msra.mxu0 0
    %6327 = vmatprep.subr.bf16.mxu0 0
    %6328 = vmatpush1.bf16.msra.mxu0 0
    %6329 = vmatprep.subr.bf16.mxu0 0
    %6330 = vmatpush1.bf16.msra.mxu0 0
    %6331 = vmatprep.subr.bf16.mxu0 0
    %6332 = vmatpush1.bf16.msra.mxu0 0
    %6333 = vmatprep.subr.bf16.mxu0 0
    %6334 = vmatpush1.bf16.msra.mxu0 0
    %6335 = vmatprep.subr.bf16.mxu0 0
    %6336 = vmatpush1.bf16.msra.mxu0 0
    %6337 = vmatprep.subr.bf16.mxu0 0
    %6338 = vmatpush1.bf16.msra.mxu0 0
    %6339 = vmatprep.subr.bf16.mxu0 0
    %6340 = vmatpush1.bf16.msra.mxu0 0
    %6341 = vmatprep.subr.bf16.mxu0 0
    %6342 = vmatpush1.bf16.msra.mxu0 0
    %6343 = vmatprep.subr.bf16.mxu0 0
    %6344 = vmatpush1.bf16.msra.mxu0 0
    %6345 = vmatprep.subr.bf16.mxu0 0
    %6346 = vmatpush1.bf16.msra.mxu0 0
    %6347 = vmatprep.subr.bf16.mxu0 0
    %6348 = vmatpush1.bf16.msra.mxu0 0
    %6349 = vmatprep.subr.bf16.mxu0 0
    %6350 = vmatpush1.bf16.msra.mxu0 0
    %6351 = vmatprep.subr.bf16.mxu0 0
    %6352 = vmatpush1.bf16.msra.mxu0 0
    %6353 = vmatprep.mubr.bf16.mxu0 0
    %6354 = vmatmul.mubr.bf16.gmra.mrb[0].mxu0 %v6316
    %v6355 = vpop.f32.mrb[0].mxu0
    %v6356 = vadd.f32 0.0, %v6355
    %v6357 = vpop.f32.mrb[0].mxu0
    %v6358 = vpop.f32.mrb[0].mxu0
    %v6359 = vadd.f32 0.0, %v6358
    %v6360 = vpop.f32.mrb[0].mxu0
    %6361 = vmatprep.mubr.bf16.mxu0 0
    %6362 = vmatmul.mubr.bf16.gmra.mrb[0].mxu0 %v6319
    %v6363 = vpop.f32.mrb[0].mxu0
    %v6364 = vadd.f32 0.0, %v6363
    %v6365 = vpop.f32.mrb[0].mxu0
    %v6366 = vpop.f32.mrb[0].mxu0
    %v6367 = vadd.f32 0.0, %v6366
    %v6368 = vpop.f32.mrb[0].mxu0
    %6369 = vdwg.mxu0
    %v6370 = vadd.f32 %v5872, %v6356
    %v6371 = vadd.f32 %v5875, %v6359
    %v6372 = vadd.f32 %v5880, %v6364
    %v6373 = vadd.f32 %v5883, %v6367
    %s6374 = scalar_lea.vmem %s41, 96
    %v6375 = vld [vmem:[%s6374] sm:$0xf]
    %v6376 = vld [vmem:[%s6374 + $0x4] sm:$0xf]
    %v6377 = vld [vmem:[%s6374 + $0x8] sm:$0xf]
    %v6378 = vld [vmem:[%s6374 + $0xc] sm:$0xf]
    %v6379 = vld [vmem:[%s6374 + $0x10] sm:$0xf]
    %v6380 = vld [vmem:[%s6374 + $0x14] sm:$0xf]
    %v6381 = vld [vmem:[%s6374 + $0x18] sm:$0xf]
    %v6382 = vld [vmem:[%s6374 + $0x1c] sm:$0xf]
    %v6391 = vunpack.c.l.b16 %v6375
    %v6392 = vunpack.c.l.b16 %v6376
    %v6393 = vunpack.c.l.b16 %v6377
    %v6394 = vunpack.c.l.b16 %v6378
    %v6395 = vunpack.c.l.b16 %v6379
    %v6396 = vunpack.c.l.b16 %v6380
    %v6397 = vunpack.c.l.b16 %v6381
    %v6398 = vunpack.c.l.b16 %v6382
    %v6399 = vpack.c.b16 %v6392, %v6391
    %v6400 = vpack.c.b16 %v6394, %v6393
    %v6401 = vpack.c.b16 %v6396, %v6395
    %v6402 = vpack.c.b16 %v6398, %v6397
    %6407 = vmatprep.subr.bf16.mxu0 0
    %6408 = vmatpush1.bf16.msra.mxu0 %v6399
    %6409 = vmatprep.subr.bf16.mxu0 0
    %6410 = vmatpush1.bf16.msra.mxu0 %v6400
    %6411 = vmatprep.subr.bf16.mxu0 0
    %6412 = vmatpush1.bf16.msra.mxu0 %v6401
    %6413 = vmatprep.subr.bf16.mxu0 0
    %6414 = vmatpush1.bf16.msra.mxu0 %v6402
    %6415 = vmatprep.subr.bf16.mxu0 0
    %6416 = vmatpush1.bf16.msra.mxu0 0
    %6417 = vmatprep.subr.bf16.mxu0 0
    %6418 = vmatpush1.bf16.msra.mxu0 0
    %6419 = vmatprep.subr.bf16.mxu0 0
    %6420 = vmatpush1.bf16.msra.mxu0 0
    %6421 = vmatprep.subr.bf16.mxu0 0
    %6422 = vmatpush1.bf16.msra.mxu0 0
    %6423 = vmatprep.subr.bf16.mxu0 0
    %6424 = vmatpush1.bf16.msra.mxu0 0
    %6425 = vmatprep.subr.bf16.mxu0 0
    %6426 = vmatpush1.bf16.msra.mxu0 0
    %6427 = vmatprep.subr.bf16.mxu0 0
    %6428 = vmatpush1.bf16.msra.mxu0 0
    %6429 = vmatprep.subr.bf16.mxu0 0
    %6430 = vmatpush1.bf16.msra.mxu0 0
    %6431 = vmatprep.subr.bf16.mxu0 0
    %6432 = vmatpush1.bf16.msra.mxu0 0
    %6433 = vmatprep.subr.bf16.mxu0 0
    %6434 = vmatpush1.bf16.msra.mxu0 0
    %6435 = vmatprep.subr.bf16.mxu0 0
    %6436 = vmatpush1.bf16.msra.mxu0 0
    %6437 = vmatprep.subr.bf16.mxu0 0
    %6438 = vmatpush1.bf16.msra.mxu0 0
    %6439 = vmatprep.mubr.bf16.mxu0 0
    %6440 = vmatmul.mubr.bf16.gmra.mrb[0].mxu0 %v4949
    %v6441 = vpop.f32.mrb[0].mxu0
    %v6442 = vadd.f32 0.0, %v6441
    %v6443 = vpop.f32.mrb[0].mxu0
    %v6444 = vpop.f32.mrb[0].mxu0
    %v6445 = vadd.f32 0.0, %v6444
    %v6446 = vpop.f32.mrb[0].mxu0
    %6447 = vmatprep.mubr.bf16.mxu0 0
    %6448 = vmatmul.mubr.bf16.gmra.mrb[0].mxu0 %v4952
    %v6449 = vpop.f32.mrb[0].mxu0
    %v6450 = vadd.f32 0.0, %v6449
    %v6451 = vpop.f32.mrb[0].mxu0
    %v6452 = vpop.f32.mrb[0].mxu0
    %v6453 = vadd.f32 0.0, %v6452
    %v6454 = vpop.f32.mrb[0].mxu0
    %6455 = vdwg.mxu0
    %v6456 = vmul.f32 %v6442, 0.25
    %v6457 = vmul.f32 %v6445, 0.25
    %v6458 = vmul.f32 %v6450, 0.25
    %v6459 = vmul.f32 %v6453, 0.25
    %s6460 = scalar_lea.vmem %s43, 96
    %v6461 = vld [vmem:[%s6460] sm:$0xf]
    %v6462 = vld [vmem:[%s6460 + $0x4] sm:$0xf]
    %v6463 = vld [vmem:[%s6460 + $0x8] sm:$0xf]
    %v6464 = vld [vmem:[%s6460 + $0xc] sm:$0xf]
    %v6465 = vld [vmem:[%s6460 + $0x10] sm:$0xf]
    %v6466 = vld [vmem:[%s6460 + $0x14] sm:$0xf]
    %v6467 = vld [vmem:[%s6460 + $0x18] sm:$0xf]
    %v6468 = vld [vmem:[%s6460 + $0x1c] sm:$0xf]
    %v6477 = vunpack.c.l.b16 %v6461
    %v6478 = vunpack.c.l.b16 %v6462
    %v6479 = vunpack.c.l.b16 %v6463
    %v6480 = vunpack.c.l.b16 %v6464
    %v6481 = vunpack.c.l.b16 %v6465
    %v6482 = vunpack.c.l.b16 %v6466
    %v6483 = vunpack.c.l.b16 %v6467
    %v6484 = vunpack.c.l.b16 %v6468
    %v6485 = vpack.c.b16 %v6478, %v6477
    %v6486 = vpack.c.b16 %v6480, %v6479
    %v6487 = vpack.c.b16 %v6482, %v6481
    %v6488 = vpack.c.b16 %v6484, %v6483
    %6493 = vmatprep.subr.bf16.mxu0 0
    %6494 = vmatpush1.bf16.msra.mxu0 %v6485
    %6495 = vmatprep.subr.bf16.mxu0 0
    %6496 = vmatpush1.bf16.msra.mxu0 %v6486
    %6497 = vmatprep.subr.bf16.mxu0 0
    %6498 = vmatpush1.bf16.msra.mxu0 %v6487
    %6499 = vmatprep.subr.bf16.mxu0 0
    %6500 = vmatpush1.bf16.msra.mxu0 %v6488
    %6501 = vmatprep.subr.bf16.mxu0 0
    %6502 = vmatpush1.bf16.msra.mxu0 0
    %6503 = vmatprep.subr.bf16.mxu0 0
    %6504 = vmatpush1.bf16.msra.mxu0 0
    %6505 = vmatprep.subr.bf16.mxu0 0
    %6506 = vmatpush1.bf16.msra.mxu0 0
    %6507 = vmatprep.subr.bf16.mxu0 0
    %6508 = vmatpush1.bf16.msra.mxu0 0
    %6509 = vmatprep.subr.bf16.mxu0 0
    %6510 = vmatpush1.bf16.msra.mxu0 0
    %6511 = vmatprep.subr.bf16.mxu0 0
    %6512 = vmatpush1.bf16.msra.mxu0 0
    %6513 = vmatprep.subr.bf16.mxu0 0
    %6514 = vmatpush1.bf16.msra.mxu0 0
    %6515 = vmatprep.subr.bf16.mxu0 0
    %6516 = vmatpush1.bf16.msra.mxu0 0
    %6517 = vmatprep.subr.bf16.mxu0 0
    %6518 = vmatpush1.bf16.msra.mxu0 0
    %6519 = vmatprep.subr.bf16.mxu0 0
    %6520 = vmatpush1.bf16.msra.mxu0 0
    %6521 = vmatprep.subr.bf16.mxu0 0
    %6522 = vmatpush1.bf16.msra.mxu0 0
    %6523 = vmatprep.subr.bf16.mxu0 0
    %6524 = vmatpush1.bf16.msra.mxu0 0
    %6525 = vmatprep.mubr.bf16.mxu0 0
    %6526 = vmatmul.mubr.bf16.gmra.mrb[0].mxu0 %v4949
    %v6527 = vpop.f32.mrb[0].mxu0
    %v6528 = vadd.f32 0.0, %v6527
    %v6529 = vpop.f32.mrb[0].mxu0
    %v6530 = vpop.f32.mrb[0].mxu0
    %v6531 = vadd.f32 0.0, %v6530
    %v6532 = vpop.f32.mrb[0].mxu0
    %6533 = vmatprep.mubr.bf16.mxu0 0
    %6534 = vmatmul.mubr.bf16.gmra.mrb[0].mxu0 %v4952
    %v6535 = vpop.f32.mrb[0].mxu0
    %v6536 = vadd.f32 0.0, %v6535
    %v6537 = vpop.f32.mrb[0].mxu0
    %v6538 = vpop.f32.mrb[0].mxu0
    %v6539 = vadd.f32 0.0, %v6538
    %v6540 = vpop.f32.mrb[0].mxu0
    %6541 = vdwg.mxu0
    %s6542 = scalar_lea.vmem %s45, 96
    %v6543 = vld [vmem:[%s6542] sm:$0xf]
    %v6544 = vld [vmem:[%s6542 + $0x4] sm:$0xf]
    %v6545 = vld [vmem:[%s6542 + $0x8] sm:$0xf]
    %v6546 = vld [vmem:[%s6542 + $0xc] sm:$0xf]
    %v6547 = vld [vmem:[%s6542 + $0x10] sm:$0xf]
    %v6548 = vld [vmem:[%s6542 + $0x14] sm:$0xf]
    %v6549 = vld [vmem:[%s6542 + $0x18] sm:$0xf]
    %v6550 = vld [vmem:[%s6542 + $0x1c] sm:$0xf]
    %v6559 = vunpack.c.l.b16 %v6543
    %v6560 = vunpack.c.l.b16 %v6544
    %v6561 = vunpack.c.l.b16 %v6545
    %v6562 = vunpack.c.l.b16 %v6546
    %v6563 = vunpack.c.l.b16 %v6547
    %v6564 = vunpack.c.l.b16 %v6548
    %v6565 = vunpack.c.l.b16 %v6549
    %v6566 = vunpack.c.l.b16 %v6550
    %v6567 = vpack.c.b16 %v6560, %v6559
    %v6568 = vpack.c.b16 %v6562, %v6561
    %v6569 = vpack.c.b16 %v6564, %v6563
    %v6570 = vpack.c.b16 %v6566, %v6565
    %6575 = vmatprep.subr.bf16.mxu0 0
    %6576 = vmatpush1.bf16.msra.mxu0 %v6567
    %6577 = vmatprep.subr.bf16.mxu0 0
    %6578 = vmatpush1.bf16.msra.mxu0 %v6568
    %6579 = vmatprep.subr.bf16.mxu0 0
    %6580 = vmatpush1.bf16.msra.mxu0 %v6569
    %6581 = vmatprep.subr.bf16.mxu0 0
    %6582 = vmatpush1.bf16.msra.mxu0 %v6570
    %6583 = vmatprep.subr.bf16.mxu0 0
    %6584 = vmatpush1.bf16.msra.mxu0 0
    %6585 = vmatprep.subr.bf16.mxu0 0
    %6586 = vmatpush1.bf16.msra.mxu0 0
    %6587 = vmatprep.subr.bf16.mxu0 0
    %6588 = vmatpush1.bf16.msra.mxu0 0
    %6589 = vmatprep.subr.bf16.mxu0 0
    %6590 = vmatpush1.bf16.msra.mxu0 0
    %6591 = vmatprep.subr.bf16.mxu0 0
    %6592 = vmatpush1.bf16.msra.mxu0 0
    %6593 = vmatprep.subr.bf16.mxu0 0
    %6594 = vmatpush1.bf16.msra.mxu0 0
    %6595 = vmatprep.subr.bf16.mxu0 0
    %6596 = vmatpush1.bf16.msra.mxu0 0
    %6597 = vmatprep.subr.bf16.mxu0 0
    %6598 = vmatpush1.bf16.msra.mxu0 0
    %6599 = vmatprep.subr.bf16.mxu0 0
    %6600 = vmatpush1.bf16.msra.mxu0 0
    %6601 = vmatprep.subr.bf16.mxu0 0
    %6602 = vmatpush1.bf16.msra.mxu0 0
    %6603 = vmatprep.subr.bf16.mxu0 0
    %6604 = vmatpush1.bf16.msra.mxu0 0
    %6605 = vmatprep.subr.bf16.mxu0 0
    %6606 = vmatpush1.bf16.msra.mxu0 0
    %6607 = vmatprep.mubr.bf16.mxu0 0
    %6608 = vmatmul.mubr.bf16.gmra.mrb[0].mxu0 %v4949
    %v6609 = vpop.f32.mrb[0].mxu0
    %v6610 = vadd.f32 0.0, %v6609
    %v6611 = vpop.f32.mrb[0].mxu0
    %v6612 = vpop.f32.mrb[0].mxu0
    %v6613 = vadd.f32 0.0, %v6612
    %v6614 = vpop.f32.mrb[0].mxu0
    %6615 = vmatprep.mubr.bf16.mxu0 0
    %6616 = vmatmul.mubr.bf16.gmra.mrb[0].mxu0 %v4952
    %v6617 = vpop.f32.mrb[0].mxu0
    %v6618 = vadd.f32 0.0, %v6617
    %v6619 = vpop.f32.mrb[0].mxu0
    %v6620 = vpop.f32.mrb[0].mxu0
    %v6621 = vadd.f32 0.0, %v6620
    %v6622 = vpop.f32.mrb[0].mxu0
    %6623 = vdwg.mxu0
    %v6624 = vpack.c.bf16 %v6457, %v6456
    %v6625 = vpack.c.bf16 %v6459, %v6458
    %v6626 = vpack.c.bf16 %v6531, %v6528
    %v6627 = vpack.c.bf16 %v6539, %v6536
    %v6629 = vsel %vm797, %v6624, 0
    %v6632 = vsel %vm797, %v6625, 0
    %v6635 = vsel %vm797, %v6626, 0
    %v6638 = vsel %vm797, %v6627, 0
    %6640 = vmatprep.subr.bf16.mxu0 0
    %6641 = vmatpush1.bf16.xpose.msra.mxu0 %v6635
    %6642 = vmatprep.subr.bf16.mxu0 0
    %6643 = vmatpush1.bf16.xpose.msra.mxu0 %v6638
    %6644 = vmatprep.subr.bf16.mxu0 0
    %6645 = vmatpush1.bf16.xpose.msra.mxu0 0
    %6646 = vmatprep.subr.bf16.mxu0 0
    %6647 = vmatpush1.bf16.xpose.msra.mxu0 0
    %6648 = vmatprep.subr.bf16.mxu0 0
    %6649 = vmatpush1.bf16.xpose.msra.mxu0 0
    %6650 = vmatprep.subr.bf16.mxu0 0
    %6651 = vmatpush1.bf16.xpose.msra.mxu0 0
    %6652 = vmatprep.subr.bf16.mxu0 0
    %6653 = vmatpush1.bf16.xpose.msra.mxu0 0
    %6654 = vmatprep.subr.bf16.mxu0 0
    %6655 = vmatpush1.bf16.xpose.msra.mxu0 0
    %6656 = vmatprep.subr.bf16.mxu0 0
    %6657 = vmatpush1.bf16.xpose.msra.mxu0 0
    %6658 = vmatprep.subr.bf16.mxu0 0
    %6659 = vmatpush1.bf16.xpose.msra.mxu0 0
    %6660 = vmatprep.subr.bf16.mxu0 0
    %6661 = vmatpush1.bf16.xpose.msra.mxu0 0
    %6662 = vmatprep.subr.bf16.mxu0 0
    %6663 = vmatpush1.bf16.xpose.msra.mxu0 0
    %6664 = vmatprep.subr.bf16.mxu0 0
    %6665 = vmatpush1.bf16.xpose.msra.mxu0 0
    %6666 = vmatprep.subr.bf16.mxu0 0
    %6667 = vmatpush1.bf16.xpose.msra.mxu0 0
    %6668 = vmatprep.subr.bf16.mxu0 0
    %6669 = vmatpush1.bf16.xpose.msra.mxu0 0
    %6670 = vmatprep.subr.bf16.mxu0 0
    %6671 = vmatpush1.bf16.xpose.msra.mxu0 0
    %6672 = vmatprep.mubr.bf16.mxu0 0
    %6673 = vmatmul.mubr.bf16.gmra.mrb[0].mxu0 %v6629
    %v6674 = vpop.f32.mrb[0].mxu0
    %v6675 = vadd.f32 %v4835, %v6674
    %v6676 = vpop.f32.mrb[0].mxu0
    %v6677 = vpop.f32.mrb[0].mxu0
    %v6678 = vadd.f32 %v4836, %v6677
    %v6679 = vpop.f32.mrb[0].mxu0
    %6680 = vmatprep.mubr.bf16.mxu0 0
    %6681 = vmatmul.mubr.bf16.gmra.mrb[0].mxu0 %v6632
    %v6682 = vpop.f32.mrb[0].mxu0
    %v6683 = vadd.f32 %v4837, %v6682
    %v6684 = vpop.f32.mrb[0].mxu0
    %v6685 = vpop.f32.mrb[0].mxu0
    %v6686 = vadd.f32 %v4838, %v6685
    %v6687 = vpop.f32.mrb[0].mxu0
    %6688 = vdwg.mxu0
    %v6689 = vsel %vm871, %v6675, -inf
    %6690 = vmax.xlane.f32.xlu0 %v6689
    %v6691 = vpop.xlane.xlu0 %6690
    %v6692 = vsel %vm871, %v6678, -inf
    %6693 = vmax.xlane.f32.xlu0 %v6692
    %v6694 = vpop.xlane.xlu0 %6693
    %v6695 = vsel %vm871, %v6683, -inf
    %6696 = vmax.xlane.f32.xlu0 %v6695
    %v6697 = vpop.xlane.xlu0 %6696
    %v6698 = vsel %vm871, %v6686, -inf
    %6699 = vmax.xlane.f32.xlu0 %v6698
    %v6700 = vpop.xlane.xlu0 %6699
    %v6701 = vsub.f32 %v6675, %v6691
    %v6702 = vsub.f32 %v6678, %v6694
    %v6703 = vsub.f32 %v6683, %v6697
    %v6704 = vsub.f32 %v6686, %v6700
    %v6705 = vmul.f32 %v6701, 1.442695
    %v6706 = vpow.pop %v6705
    %v6707 = vmul.f32 %v6702, 1.442695
    %v6708 = vpow.pop %v6707
    %v6709 = vmul.f32 %v6703, 1.442695
    %v6710 = vpow.pop %v6709
    %v6711 = vmul.f32 %v6704, 1.442695
    %v6712 = vpow.pop %v6711
    %v6713 = vsel %vm871, %v6706, 0.0
    %6714 = vadd.xlane.f32.xlu0 %v6713
    %v6715 = vpop.xlane.xlu0 %6714
    %v6716 = vsel %vm871, %v6708, 0.0
    %6717 = vadd.xlane.f32.xlu0 %v6716
    %v6718 = vpop.xlane.xlu0 %6717
    %v6719 = vsel %vm871, %v6710, 0.0
    %6720 = vadd.xlane.f32.xlu0 %v6719
    %v6721 = vpop.xlane.xlu0 %6720
    %v6722 = vsel %vm871, %v6712, 0.0
    %6723 = vadd.xlane.f32.xlu0 %v6722
    %v6724 = vpop.xlane.xlu0 %6723
    %v6725 = vrcp.pop %v6715
    %v6726 = vrcp.pop %v6718
    %v6727 = vrcp.pop %v6721
    %v6728 = vrcp.pop %v6724
    %v6729 = vmul.f32 %v6706, %v6725
    %v6730 = vmul.f32 %v6708, %v6726
    %v6731 = vmul.f32 %v6710, %v6727
    %v6732 = vmul.f32 %v6712, %v6728
    %v6733 = vpack.c.bf16 %v6730, %v6729
    %v6734 = vpack.c.bf16 %v6732, %v6731
    %v6735 = vpack.c.bf16 %v6613, %v6610
    %v6736 = vpack.c.bf16 %v6621, %v6618
    %v6738 = vsel %vm871, %v6733, 0
    %v6741 = vsel %vm871, %v6734, 0
    %6743 = vmatprep.subr.bf16.mxu0 0
    %6744 = vmatpush1.bf16.msra.mxu0 %v6735
    %6745 = vmatprep.subr.bf16.mxu0 0
    %6746 = vmatpush1.bf16.msra.mxu0 %v6736
    %6747 = vmatprep.subr.bf16.mxu0 0
    %6748 = vmatpush1.bf16.msra.mxu0 0
    %6749 = vmatprep.subr.bf16.mxu0 0
    %6750 = vmatpush1.bf16.msra.mxu0 0
    %6751 = vmatprep.subr.bf16.mxu0 0
    %6752 = vmatpush1.bf16.msra.mxu0 0
    %6753 = vmatprep.subr.bf16.mxu0 0
    %6754 = vmatpush1.bf16.msra.mxu0 0
    %6755 = vmatprep.subr.bf16.mxu0 0
    %6756 = vmatpush1.bf16.msra.mxu0 0
    %6757 = vmatprep.subr.bf16.mxu0 0
    %6758 = vmatpush1.bf16.msra.mxu0 0
    %6759 = vmatprep.subr.bf16.mxu0 0
    %6760 = vmatpush1.bf16.msra.mxu0 0
    %6761 = vmatprep.subr.bf16.mxu0 0
    %6762 = vmatpush1.bf16.msra.mxu0 0
    %6763 = vmatprep.subr.bf16.mxu0 0
    %6764 = vmatpush1.bf16.msra.mxu0 0
    %6765 = vmatprep.subr.bf16.mxu0 0
    %6766 = vmatpush1.bf16.msra.mxu0 0
    %6767 = vmatprep.subr.bf16.mxu0 0
    %6768 = vmatpush1.bf16.msra.mxu0 0
    %6769 = vmatprep.subr.bf16.mxu0 0
    %6770 = vmatpush1.bf16.msra.mxu0 0
    %6771 = vmatprep.subr.bf16.mxu0 0
    %6772 = vmatpush1.bf16.msra.mxu0 0
    %6773 = vmatprep.subr.bf16.mxu0 0
    %6774 = vmatpush1.bf16.msra.mxu0 0
    %6775 = vmatprep.mubr.bf16.mxu0 0
    %6776 = vmatmul.mubr.bf16.gmra.mrb[0].mxu0 %v6738
    %v6777 = vpop.f32.mrb[0].mxu0
    %v6778 = vadd.f32 0.0, %v6777
    %v6779 = vpop.f32.mrb[0].mxu0
    %v6780 = vpop.f32.mrb[0].mxu0
    %v6781 = vadd.f32 0.0, %v6780
    %v6782 = vpop.f32.mrb[0].mxu0
    %6783 = vmatprep.mubr.bf16.mxu0 0
    %6784 = vmatmul.mubr.bf16.gmra.mrb[0].mxu0 %v6741
    %v6785 = vpop.f32.mrb[0].mxu0
    %v6786 = vadd.f32 0.0, %v6785
    %v6787 = vpop.f32.mrb[0].mxu0
    %v6788 = vpop.f32.mrb[0].mxu0
    %v6789 = vadd.f32 0.0, %v6788
    %v6790 = vpop.f32.mrb[0].mxu0
    %6791 = vdwg.mxu0
    %v6792 = vpack.c.bf16 %v6781, %v6778
    %v6793 = vpack.c.bf16 %v6789, %v6786
    %s6794 = scalar_lea.vmem %s47, 24
    %v6795 = vld [vmem:[%s6794] sm:$0xf]
    %v6796 = vld [vmem:[%s6794 + $0x4] sm:$0xf]
    %v6799 = vunpack.c.l.b16 %v6795
    %v6800 = vunpack.c.l.b16 %v6796
    %v6801 = vpack.c.b16 %v6800, %v6799
    %v6804 = vsel %vm797, %v6792, 0
    %v6807 = vsel %vm797, %v6793, 0
    %6809 = vmatprep.subr.bf16.mxu0 0
    %6810 = vmatpush1.bf16.msra.mxu0 %v6801
    %6811 = vmatprep.subr.bf16.mxu0 0
    %6812 = vmatpush1.bf16.msra.mxu0 0
    %6813 = vmatprep.subr.bf16.mxu0 0
    %6814 = vmatpush1.bf16.msra.mxu0 0
    %6815 = vmatprep.subr.bf16.mxu0 0
    %6816 = vmatpush1.bf16.msra.mxu0 0
    %6817 = vmatprep.subr.bf16.mxu0 0
    %6818 = vmatpush1.bf16.msra.mxu0 0
    %6819 = vmatprep.subr.bf16.mxu0 0
    %6820 = vmatpush1.bf16.msra.mxu0 0
    %6821 = vmatprep.subr.bf16.mxu0 0
    %6822 = vmatpush1.bf16.msra.mxu0 0
    %6823 = vmatprep.subr.bf16.mxu0 0
    %6824 = vmatpush1.bf16.msra.mxu0 0
    %6825 = vmatprep.subr.bf16.mxu0 0
    %6826 = vmatpush1.bf16.msra.mxu0 0
    %6827 = vmatprep.subr.bf16.mxu0 0
    %6828 = vmatpush1.bf16.msra.mxu0 0
    %6829 = vmatprep.subr.bf16.mxu0 0
    %6830 = vmatpush1.bf16.msra.mxu0 0
    %6831 = vmatprep.subr.bf16.mxu0 0
    %6832 = vmatpush1.bf16.msra.mxu0 0
    %6833 = vmatprep.subr.bf16.mxu0 0
    %6834 = vmatpush1.bf16.msra.mxu0 0
    %6835 = vmatprep.subr.bf16.mxu0 0
    %6836 = vmatpush1.bf16.msra.mxu0 0
    %6837 = vmatprep.subr.bf16.mxu0 0
    %6838 = vmatpush1.bf16.msra.mxu0 0
    %6839 = vmatprep.subr.bf16.mxu0 0
    %6840 = vmatpush1.bf16.msra.mxu0 0
    %6841 = vmatprep.mubr.bf16.mxu0 0
    %6842 = vmatmul.mubr.bf16.gmra.mrb[0].mxu0 %v6804
    %v6843 = vpop.f32.mrb[0].mxu0
    %v6844 = vadd.f32 0.0, %v6843
    %v6845 = vpop.f32.mrb[0].mxu0
    %v6846 = vpop.f32.mrb[0].mxu0
    %v6847 = vadd.f32 0.0, %v6846
    %v6848 = vpop.f32.mrb[0].mxu0
    %6849 = vmatprep.mubr.bf16.mxu0 0
    %6850 = vmatmul.mubr.bf16.gmra.mrb[0].mxu0 %v6807
    %v6851 = vpop.f32.mrb[0].mxu0
    %v6852 = vadd.f32 0.0, %v6851
    %v6853 = vpop.f32.mrb[0].mxu0
    %v6854 = vpop.f32.mrb[0].mxu0
    %v6855 = vadd.f32 0.0, %v6854
    %v6856 = vpop.f32.mrb[0].mxu0
    %6857 = vdwg.mxu0
    %v6858 = vadd.f32 %v6370, %v6844
    %v6859 = vadd.f32 %v6371, %v6847
    %v6860 = vadd.f32 %v6372, %v6852
    %v6861 = vadd.f32 %v6373, %v6855
    %v6862 = vadd.f32 %v6858, %v4910
    %v6863 = vadd.f32 %v6859, %v4911
    %v6864 = vadd.f32 %v6860, %v4912
    %v6865 = vadd.f32 %v6861, %v4913
    %v6866 = vld [vmem:[#allocation13] sm:$0x1]
    %v6867 = vld [vmem:[#allocation15] sm:$0x1]
    %v6868 = vsel %vm334, %v6862, 0.0
    %6869 = vadd.xlane.f32.xlu0 %v6868
    %v6870 = vpop.xlane.xlu0 %6869
    %v6871 = vsel %vm334, %v6863, 0.0
    %6872 = vadd.xlane.f32.xlu0 %v6871
    %v6873 = vpop.xlane.xlu0 %6872
    %v6874 = vsel %vm334, %v6864, 0.0
    %6875 = vadd.xlane.f32.xlu0 %v6874
    %v6876 = vpop.xlane.xlu0 %6875
    %v6877 = vsel %vm334, %v6865, 0.0
    %6878 = vadd.xlane.f32.xlu0 %v6877
    %v6879 = vpop.xlane.xlu0 %6878
    %v6880 = vmul.f32 %v6870, %v4853
    %v6881 = vmul.f32 %v6873, %v4853
    %v6882 = vmul.f32 %v6876, %v4853
    %v6883 = vmul.f32 %v6879, %v4853
    %v6884 = vsub.f32 %v6862, %v6880
    %v6885 = vsub.f32 %v6863, %v6881
    %v6886 = vsub.f32 %v6864, %v6882
    %v6887 = vsub.f32 %v6865, %v6883
    %v6888 = vmul.f32 %v6884, %v6884
    %v6889 = vmul.f32 %v6885, %v6885
    %v6890 = vmul.f32 %v6886, %v6886
    %v6891 = vmul.f32 %v6887, %v6887
    %v6892 = vsel %vm334, %v6888, 0.0
    %6893 = vadd.xlane.f32.xlu0 %v6892
    %v6894 = vpop.xlane.xlu0 %6893
    %v6895 = vsel %vm334, %v6889, 0.0
    %6896 = vadd.xlane.f32.xlu0 %v6895
    %v6897 = vpop.xlane.xlu0 %6896
    %v6898 = vsel %vm334, %v6890, 0.0
    %6899 = vadd.xlane.f32.xlu0 %v6898
    %v6900 = vpop.xlane.xlu0 %6899
    %v6901 = vsel %vm334, %v6891, 0.0
    %6902 = vadd.xlane.f32.xlu0 %v6901
    %v6903 = vpop.xlane.xlu0 %6902
    %v6904 = vmul.f32 %v6894, %v4853
    %v6905 = vmul.f32 %v6897, %v4853
    %v6906 = vmul.f32 %v6900, %v4853
    %v6907 = vmul.f32 %v6903, %v4853
    %v6908 = vadd.f32 %v6904, 1e-06
    %v6909 = vadd.f32 %v6905, 1e-06
    %v6910 = vadd.f32 %v6906, 1e-06
    %v6911 = vadd.f32 %v6907, 1e-06
    %v6912 = vrsqrt.pop %v6908
    %v6913 = vrsqrt.pop %v6909
    %v6914 = vrsqrt.pop %v6910
    %v6915 = vrsqrt.pop %v6911
    %v6916 = vmul.f32 %v6884, %v6912
    %v6917 = vmul.f32 %v6885, %v6913
    %v6918 = vmul.f32 %v6886, %v6914
    %v6919 = vmul.f32 %v6887, %v6915
    %v6921 = vlaneseq
    %v6922 = vshrl.u32 %v6921, 7
    %v6923 = vsub.s32 0, %v6922
    %v6924 = vrot.slane %v6866, %v6923
    %v6926 = vmul.f32 %v6916, %v6924
    %v6927 = vmul.f32 %v6917, %v6924
    %v6928 = vmul.f32 %v6918, %v6924
    %v6929 = vmul.f32 %v6919, %v6924
    %v6931 = vlaneseq
    %v6932 = vshrl.u32 %v6931, 7
    %v6933 = vsub.s32 0, %v6932
    %v6934 = vrot.slane %v6867, %v6933
    %v6936 = vadd.f32 %v6926, %v6934
    %v6937 = vadd.f32 %v6927, %v6934
    %v6938 = vadd.f32 %v6928, %v6934
    %v6939 = vadd.f32 %v6929, %v6934
    %v6940 = vpack.c.bf16 %v6937, %v6936
    %v6941 = vpack.c.bf16 %v6939, %v6938
    %v6942 = vld [vmem:[%s53] sm:$0xf]
    %v6943 = vld [vmem:[%s53 + $0x4] sm:$0xf]
    %v6944 = vld [vmem:[%s53 + $0x8] sm:$0xf]
    %v6945 = vld [vmem:[%s53 + $0xc] sm:$0xf]
    %v6946 = vld [vmem:[%s53 + $0x10] sm:$0xf]
    %v6947 = vld [vmem:[%s53 + $0x14] sm:$0xf]
    %v6948 = vld [vmem:[%s53 + $0x18] sm:$0xf]
    %v6949 = vld [vmem:[%s53 + $0x1c] sm:$0xf]
    %v6950 = vld [vmem:[#allocation16] sm:$0x1]
    %v6952 = vlaneseq
    %v6953 = vshrl.u32 %v6952, 7
    %v6954 = vsub.s32 0, %v6953
    %v6955 = vrot.slane %v6950, %v6954
    %v6965 = vunpack.c.l.b16 %v6942
    %v6966 = vunpack.c.l.b16 %v6943
    %v6967 = vunpack.c.l.b16 %v6944
    %v6968 = vunpack.c.l.b16 %v6945
    %v6969 = vunpack.c.l.b16 %v6946
    %v6970 = vunpack.c.l.b16 %v6947
    %v6971 = vunpack.c.l.b16 %v6948
    %v6972 = vunpack.c.l.b16 %v6949
    %v6973 = vpack.c.b16 %v6966, %v6965
    %v6974 = vpack.c.b16 %v6968, %v6967
    %v6975 = vpack.c.b16 %v6970, %v6969
    %v6976 = vpack.c.b16 %v6972, %v6971
    %v6982 = vsel %vm334, %v6940, 0
    %v6985 = vsel %vm334, %v6941, 0
    %6987 = vmatprep.subr.bf16.mxu0 0
    %6988 = vmatpush1.bf16.msra.mxu0 %v6973
    %6989 = vmatprep.subr.bf16.mxu0 0
    %6990 = vmatpush1.bf16.msra.mxu0 %v6974
    %6991 = vmatprep.subr.bf16.mxu0 0
    %6992 = vmatpush1.bf16.msra.mxu0 %v6975
    %6993 = vmatprep.subr.bf16.mxu0 0
    %6994 = vmatpush1.bf16.msra.mxu0 %v6976
    %6995 = vmatprep.subr.bf16.mxu0 0
    %6996 = vmatpush1.bf16.msra.mxu0 0
    %6997 = vmatprep.subr.bf16.mxu0 0
    %6998 = vmatpush1.bf16.msra.mxu0 0
    %6999 = vmatprep.subr.bf16.mxu0 0
    %7000 = vmatpush1.bf16.msra.mxu0 0
    %7001 = vmatprep.subr.bf16.mxu0 0
    %7002 = vmatpush1.bf16.msra.mxu0 0
    %7003 = vmatprep.subr.bf16.mxu0 0
    %7004 = vmatpush1.bf16.msra.mxu0 0
    %7005 = vmatprep.subr.bf16.mxu0 0
    %7006 = vmatpush1.bf16.msra.mxu0 0
    %7007 = vmatprep.subr.bf16.mxu0 0
    %7008 = vmatpush1.bf16.msra.mxu0 0
    %7009 = vmatprep.subr.bf16.mxu0 0
    %7010 = vmatpush1.bf16.msra.mxu0 0
    %7011 = vmatprep.subr.bf16.mxu0 0
    %7012 = vmatpush1.bf16.msra.mxu0 0
    %7013 = vmatprep.subr.bf16.mxu0 0
    %7014 = vmatpush1.bf16.msra.mxu0 0
    %7015 = vmatprep.subr.bf16.mxu0 0
    %7016 = vmatpush1.bf16.msra.mxu0 0
    %7017 = vmatprep.subr.bf16.mxu0 0
    %7018 = vmatpush1.bf16.msra.mxu0 0
    %7019 = vmatprep.mubr.bf16.mxu0 0
    %7020 = vmatmul.mubr.bf16.gmra.mrb[0].mxu0 %v6982
    %v7021 = vpop.f32.mrb[0].mxu0
    %v7022 = vadd.f32 %v6955, %v7021
    %v7023 = vpop.f32.mrb[0].mxu0
    %v7024 = vpop.f32.mrb[0].mxu0
    %v7025 = vadd.f32 %v6955, %v7024
    %v7026 = vpop.f32.mrb[0].mxu0
    %7027 = vmatprep.mubr.bf16.mxu0 0
    %7028 = vmatmul.mubr.bf16.gmra.mrb[0].mxu0 %v6985
    %v7029 = vpop.f32.mrb[0].mxu0
    %v7030 = vadd.f32 %v6955, %v7029
    %v7031 = vpop.f32.mrb[0].mxu0
    %v7032 = vpop.f32.mrb[0].mxu0
    %v7033 = vadd.f32 %v6955, %v7032
    %v7034 = vpop.f32.mrb[0].mxu0
    %7035 = vdwg.mxu0
    %v7036 = vmax.f32 %v7022, 0.0
    %v7037 = vmax.f32 %v7025, 0.0
    %v7038 = vmax.f32 %v7030, 0.0
    %v7039 = vmax.f32 %v7033, 0.0
    %v7040 = vpack.c.bf16 %v7037, %v7036
    %v7041 = vpack.c.bf16 %v7039, %v7038
    %v7042 = vld [vmem:[%s57] sm:$0xf]
    %v7043 = vld [vmem:[%s57 + $0x4] sm:$0xf]
    %v7044 = vld [vmem:[%s57 + $0x8] sm:$0xf]
    %v7045 = vld [vmem:[%s57 + $0xc] sm:$0xf]
    %v7046 = vld [vmem:[%s57 + $0x10] sm:$0xf]
    %v7047 = vld [vmem:[%s57 + $0x14] sm:$0xf]
    %v7048 = vld [vmem:[%s57 + $0x18] sm:$0xf]
    %v7049 = vld [vmem:[%s57 + $0x1c] sm:$0xf]
    %v7050 = vld [vmem:[%s57 + $0x20] sm:$0xf]
    %v7051 = vld [vmem:[%s57 + $0x24] sm:$0xf]
    %v7052 = vld [vmem:[%s57 + $0x28] sm:$0xf]
    %v7053 = vld [vmem:[%s57 + $0x2c] sm:$0xf]
    %v7054 = vld [vmem:[%s57 + $0x30] sm:$0xf]
    %v7055 = vld [vmem:[%s57 + $0x34] sm:$0xf]
    %v7056 = vld [vmem:[%s57 + $0x38] sm:$0xf]
    %v7057 = vld [vmem:[%s57 + $0x3c] sm:$0xf]
    %v7058 = vld [vmem:[#allocation18] sm:$0x1]
    %v7060 = vlaneseq
    %v7061 = vshrl.u32 %v7060, 7
    %v7062 = vsub.s32 0, %v7061
    %v7063 = vrot.slane %v7058, %v7062
    %v7081 = vunpack.c.l.b16 %v7042
    %v7082 = vunpack.c.l.b16 %v7043
    %v7083 = vunpack.c.l.b16 %v7044
    %v7084 = vunpack.c.l.b16 %v7045
    %v7085 = vunpack.c.l.b16 %v7046
    %v7086 = vunpack.c.l.b16 %v7047
    %v7087 = vunpack.c.l.b16 %v7048
    %v7088 = vunpack.c.l.b16 %v7049
    %v7089 = vunpack.c.l.b16 %v7050
    %v7090 = vunpack.c.l.b16 %v7051
    %v7091 = vunpack.c.l.b16 %v7052
    %v7092 = vunpack.c.l.b16 %v7053
    %v7093 = vunpack.c.l.b16 %v7054
    %v7094 = vunpack.c.l.b16 %v7055
    %v7095 = vunpack.c.l.b16 %v7056
    %v7096 = vunpack.c.l.b16 %v7057
    %v7097 = vpack.c.b16 %v7082, %v7081
    %v7098 = vpack.c.b16 %v7084, %v7083
    %v7099 = vpack.c.b16 %v7086, %v7085
    %v7100 = vpack.c.b16 %v7088, %v7087
    %v7101 = vpack.c.b16 %v7090, %v7089
    %v7102 = vpack.c.b16 %v7092, %v7091
    %v7103 = vpack.c.b16 %v7094, %v7093
    %v7104 = vpack.c.b16 %v7096, %v7095
    %7113 = vmatprep.subr.bf16.mxu0 0
    %7114 = vmatpush1.bf16.msra.mxu0 %v7097
    %7115 = vmatprep.subr.bf16.mxu0 0
    %7116 = vmatpush1.bf16.msra.mxu0 %v7098
    %7117 = vmatprep.subr.bf16.mxu0 0
    %7118 = vmatpush1.bf16.msra.mxu0 %v7099
    %7119 = vmatprep.subr.bf16.mxu0 0
    %7120 = vmatpush1.bf16.msra.mxu0 %v7100
    %7121 = vmatprep.subr.bf16.mxu0 0
    %7122 = vmatpush1.bf16.msra.mxu0 %v7101
    %7123 = vmatprep.subr.bf16.mxu0 0
    %7124 = vmatpush1.bf16.msra.mxu0 %v7102
    %7125 = vmatprep.subr.bf16.mxu0 0
    %7126 = vmatpush1.bf16.msra.mxu0 %v7103
    %7127 = vmatprep.subr.bf16.mxu0 0
    %7128 = vmatpush1.bf16.msra.mxu0 %v7104
    %7129 = vmatprep.subr.bf16.mxu0 0
    %7130 = vmatpush1.bf16.msra.mxu0 0
    %7131 = vmatprep.subr.bf16.mxu0 0
    %7132 = vmatpush1.bf16.msra.mxu0 0
    %7133 = vmatprep.subr.bf16.mxu0 0
    %7134 = vmatpush1.bf16.msra.mxu0 0
    %7135 = vmatprep.subr.bf16.mxu0 0
    %7136 = vmatpush1.bf16.msra.mxu0 0
    %7137 = vmatprep.subr.bf16.mxu0 0
    %7138 = vmatpush1.bf16.msra.mxu0 0
    %7139 = vmatprep.subr.bf16.mxu0 0
    %7140 = vmatpush1.bf16.msra.mxu0 0
    %7141 = vmatprep.subr.bf16.mxu0 0
    %7142 = vmatpush1.bf16.msra.mxu0 0
    %7143 = vmatprep.subr.bf16.mxu0 0
    %7144 = vmatpush1.bf16.msra.mxu0 0
    %7145 = vmatprep.mubr.bf16.mxu0 0
    %7146 = vmatmul.mubr.bf16.gmra.mrb[0].mxu0 %v7040
    %v7147 = vpop.f32.mrb[0].mxu0
    %v7148 = vadd.f32 %v7063, %v7147
    %v7149 = vpop.f32.mrb[0].mxu0
    %v7150 = vpop.f32.mrb[0].mxu0
    %v7151 = vadd.f32 %v7063, %v7150
    %v7152 = vpop.f32.mrb[0].mxu0
    %7153 = vmatprep.mubr.bf16.mxu0 0
    %7154 = vmatmul.mubr.bf16.gmra.mrb[0].mxu0 %v7041
    %v7155 = vpop.f32.mrb[0].mxu0
    %v7156 = vadd.f32 %v7063, %v7155
    %v7157 = vpop.f32.mrb[0].mxu0
    %v7158 = vpop.f32.mrb[0].mxu0
    %v7159 = vadd.f32 %v7063, %v7158
    %v7160 = vpop.f32.mrb[0].mxu0
    %7161 = vdwg.mxu0
    %v7162 = vadd.f32 %v7148, %v6936
    %v7163 = vadd.f32 %v7151, %v6937
    %v7164 = vadd.f32 %v7156, %v6938
    %v7165 = vadd.f32 %v7159, %v6939
    %v7166 = vld [vmem:[#allocation19] sm:$0x1]
    %v7167 = vld [vmem:[#allocation21] sm:$0x1]
    %v7168 = vsel %vm334, %v7162, 0.0
    %7169 = vadd.xlane.f32.xlu0 %v7168
    %v7170 = vpop.xlane.xlu0 %7169
    %v7171 = vsel %vm334, %v7163, 0.0
    %7172 = vadd.xlane.f32.xlu0 %v7171
    %v7173 = vpop.xlane.xlu0 %7172
    %v7174 = vsel %vm334, %v7164, 0.0
    %7175 = vadd.xlane.f32.xlu0 %v7174
    %v7176 = vpop.xlane.xlu0 %7175
    %v7177 = vsel %vm334, %v7165, 0.0
    %7178 = vadd.xlane.f32.xlu0 %v7177
    %v7179 = vpop.xlane.xlu0 %7178
    %v7180 = vmul.f32 %v7170, %v4853
    %v7181 = vmul.f32 %v7173, %v4853
    %v7182 = vmul.f32 %v7176, %v4853
    %v7183 = vmul.f32 %v7179, %v4853
    %v7184 = vsub.f32 %v7162, %v7180
    %v7185 = vsub.f32 %v7163, %v7181
    %v7186 = vsub.f32 %v7164, %v7182
    %v7187 = vsub.f32 %v7165, %v7183
    %v7188 = vmul.f32 %v7184, %v7184
    %v7189 = vmul.f32 %v7185, %v7185
    %v7190 = vmul.f32 %v7186, %v7186
    %v7191 = vmul.f32 %v7187, %v7187
    %v7192 = vsel %vm334, %v7188, 0.0
    %7193 = vadd.xlane.f32.xlu0 %v7192
    %v7194 = vpop.xlane.xlu0 %7193
    %v7195 = vsel %vm334, %v7189, 0.0
    %7196 = vadd.xlane.f32.xlu0 %v7195
    %v7197 = vpop.xlane.xlu0 %7196
    %v7198 = vsel %vm334, %v7190, 0.0
    %7199 = vadd.xlane.f32.xlu0 %v7198
    %v7200 = vpop.xlane.xlu0 %7199
    %v7201 = vsel %vm334, %v7191, 0.0
    %7202 = vadd.xlane.f32.xlu0 %v7201
    %v7203 = vpop.xlane.xlu0 %7202
    %v7204 = vmul.f32 %v7194, %v4853
    %v7205 = vmul.f32 %v7197, %v4853
    %v7206 = vmul.f32 %v7200, %v4853
    %v7207 = vmul.f32 %v7203, %v4853
    %v7208 = vadd.f32 %v7204, 1e-06
    %v7209 = vadd.f32 %v7205, 1e-06
    %v7210 = vadd.f32 %v7206, 1e-06
    %v7211 = vadd.f32 %v7207, 1e-06
    %v7212 = vrsqrt.pop %v7208
    %v7213 = vrsqrt.pop %v7209
    %v7214 = vrsqrt.pop %v7210
    %v7215 = vrsqrt.pop %v7211
    %v7216 = vmul.f32 %v7184, %v7212
    %v7217 = vmul.f32 %v7185, %v7213
    %v7218 = vmul.f32 %v7186, %v7214
    %v7219 = vmul.f32 %v7187, %v7215
    %v7221 = vlaneseq
    %v7222 = vshrl.u32 %v7221, 7
    %v7223 = vsub.s32 0, %v7222
    %v7224 = vrot.slane %v7166, %v7223
    %v7226 = vmul.f32 %v7216, %v7224
    %v7227 = vmul.f32 %v7217, %v7224
    %v7228 = vmul.f32 %v7218, %v7224
    %v7229 = vmul.f32 %v7219, %v7224
    %v7231 = vlaneseq
    %v7232 = vshrl.u32 %v7231, 7
    %v7233 = vsub.s32 0, %v7232
    %v7234 = vrot.slane %v7167, %v7233
    %v7236 = vadd.f32 %v7226, %v7234
    %v7237 = vadd.f32 %v7227, %v7234
    %v7238 = vadd.f32 %v7228, %v7234
    %v7239 = vadd.f32 %v7229, %v7234
    %v7240 = vpack.c.bf16 %v7237, %v7236
    %v7241 = vpack.c.bf16 %v7239, %v7238
    %s7242 = scalar_lea.vmem %s41, 128
    %v7243 = vld [vmem:[%s7242] sm:$0xf]
    %v7244 = vld [vmem:[%s7242 + $0x4] sm:$0xf]
    %v7245 = vld [vmem:[%s7242 + $0x8] sm:$0xf]
    %v7246 = vld [vmem:[%s7242 + $0xc] sm:$0xf]
    %v7247 = vld [vmem:[%s7242 + $0x10] sm:$0xf]
    %v7248 = vld [vmem:[%s7242 + $0x14] sm:$0xf]
    %v7249 = vld [vmem:[%s7242 + $0x18] sm:$0xf]
    %v7250 = vld [vmem:[%s7242 + $0x1c] sm:$0xf]
    %v7259 = vunpack.c.l.b16 %v7243
    %v7260 = vunpack.c.l.b16 %v7244
    %v7261 = vunpack.c.l.b16 %v7245
    %v7262 = vunpack.c.l.b16 %v7246
    %v7263 = vunpack.c.l.b16 %v7247
    %v7264 = vunpack.c.l.b16 %v7248
    %v7265 = vunpack.c.l.b16 %v7249
    %v7266 = vunpack.c.l.b16 %v7250
    %v7267 = vpack.c.b16 %v7260, %v7259
    %v7268 = vpack.c.b16 %v7262, %v7261
    %v7269 = vpack.c.b16 %v7264, %v7263
    %v7270 = vpack.c.b16 %v7266, %v7265
    %v7276 = vsel %vm334, %v7240, 0
    %v7279 = vsel %vm334, %v7241, 0
    %7281 = vmatprep.subr.bf16.mxu0 0
    %7282 = vmatpush1.bf16.msra.mxu0 %v7267
    %7283 = vmatprep.subr.bf16.mxu0 0
    %7284 = vmatpush1.bf16.msra.mxu0 %v7268
    %7285 = vmatprep.subr.bf16.mxu0 0
    %7286 = vmatpush1.bf16.msra.mxu0 %v7269
    %7287 = vmatprep.subr.bf16.mxu0 0
    %7288 = vmatpush1.bf16.msra.mxu0 %v7270
    %7289 = vmatprep.subr.bf16.mxu0 0
    %7290 = vmatpush1.bf16.msra.mxu0 0
    %7291 = vmatprep.subr.bf16.mxu0 0
    %7292 = vmatpush1.bf16.msra.mxu0 0
    %7293 = vmatprep.subr.bf16.mxu0 0
    %7294 = vmatpush1.bf16.msra.mxu0 0
    %7295 = vmatprep.subr.bf16.mxu0 0
    %7296 = vmatpush1.bf16.msra.mxu0 0
    %7297 = vmatprep.subr.bf16.mxu0 0
    %7298 = vmatpush1.bf16.msra.mxu0 0
    %7299 = vmatprep.subr.bf16.mxu0 0
    %7300 = vmatpush1.bf16.msra.mxu0 0
    %7301 = vmatprep.subr.bf16.mxu0 0
    %7302 = vmatpush1.bf16.msra.mxu0 0
    %7303 = vmatprep.subr.bf16.mxu0 0
    %7304 = vmatpush1.bf16.msra.mxu0 0
    %7305 = vmatprep.subr.bf16.mxu0 0
    %7306 = vmatpush1.bf16.msra.mxu0 0
    %7307 = vmatprep.subr.bf16.mxu0 0
    %7308 = vmatpush1.bf16.msra.mxu0 0
    %7309 = vmatprep.subr.bf16.mxu0 0
    %7310 = vmatpush1.bf16.msra.mxu0 0
    %7311 = vmatprep.subr.bf16.mxu0 0
    %7312 = vmatpush1.bf16.msra.mxu0 0
    %7313 = vmatprep.mubr.bf16.mxu0 0
    %7314 = vmatmul.mubr.bf16.gmra.mrb[0].mxu0 %v7276
    %v7315 = vpop.f32.mrb[0].mxu0
    %v7316 = vadd.f32 0.0, %v7315
    %v7317 = vpop.f32.mrb[0].mxu0
    %v7318 = vpop.f32.mrb[0].mxu0
    %v7319 = vadd.f32 0.0, %v7318
    %v7320 = vpop.f32.mrb[0].mxu0
    %7321 = vmatprep.mubr.bf16.mxu0 0
    %7322 = vmatmul.mubr.bf16.gmra.mrb[0].mxu0 %v7279
    %v7323 = vpop.f32.mrb[0].mxu0
    %v7324 = vadd.f32 0.0, %v7323
    %v7325 = vpop.f32.mrb[0].mxu0
    %v7326 = vpop.f32.mrb[0].mxu0
    %v7327 = vadd.f32 0.0, %v7326
    %v7328 = vpop.f32.mrb[0].mxu0
    %7329 = vdwg.mxu0
    %v7330 = vmul.f32 %v7316, 0.25
    %v7331 = vmul.f32 %v7319, 0.25
    %v7332 = vmul.f32 %v7324, 0.25
    %v7333 = vmul.f32 %v7327, 0.25
    %s7334 = scalar_lea.vmem %s43, 128
    %v7335 = vld [vmem:[%s7334] sm:$0xf]
    %v7336 = vld [vmem:[%s7334 + $0x4] sm:$0xf]
    %v7337 = vld [vmem:[%s7334 + $0x8] sm:$0xf]
    %v7338 = vld [vmem:[%s7334 + $0xc] sm:$0xf]
    %v7339 = vld [vmem:[%s7334 + $0x10] sm:$0xf]
    %v7340 = vld [vmem:[%s7334 + $0x14] sm:$0xf]
    %v7341 = vld [vmem:[%s7334 + $0x18] sm:$0xf]
    %v7342 = vld [vmem:[%s7334 + $0x1c] sm:$0xf]
    %v7351 = vunpack.c.l.b16 %v7335
    %v7352 = vunpack.c.l.b16 %v7336
    %v7353 = vunpack.c.l.b16 %v7337
    %v7354 = vunpack.c.l.b16 %v7338
    %v7355 = vunpack.c.l.b16 %v7339
    %v7356 = vunpack.c.l.b16 %v7340
    %v7357 = vunpack.c.l.b16 %v7341
    %v7358 = vunpack.c.l.b16 %v7342
    %v7359 = vpack.c.b16 %v7352, %v7351
    %v7360 = vpack.c.b16 %v7354, %v7353
    %v7361 = vpack.c.b16 %v7356, %v7355
    %v7362 = vpack.c.b16 %v7358, %v7357
    %7367 = vmatprep.subr.bf16.mxu0 0
    %7368 = vmatpush1.bf16.msra.mxu0 %v7359
    %7369 = vmatprep.subr.bf16.mxu0 0
    %7370 = vmatpush1.bf16.msra.mxu0 %v7360
    %7371 = vmatprep.subr.bf16.mxu0 0
    %7372 = vmatpush1.bf16.msra.mxu0 %v7361
    %7373 = vmatprep.subr.bf16.mxu0 0
    %7374 = vmatpush1.bf16.msra.mxu0 %v7362
    %7375 = vmatprep.subr.bf16.mxu0 0
    %7376 = vmatpush1.bf16.msra.mxu0 0
    %7377 = vmatprep.subr.bf16.mxu0 0
    %7378 = vmatpush1.bf16.msra.mxu0 0
    %7379 = vmatprep.subr.bf16.mxu0 0
    %7380 = vmatpush1.bf16.msra.mxu0 0
    %7381 = vmatprep.subr.bf16.mxu0 0
    %7382 = vmatpush1.bf16.msra.mxu0 0
    %7383 = vmatprep.subr.bf16.mxu0 0
    %7384 = vmatpush1.bf16.msra.mxu0 0
    %7385 = vmatprep.subr.bf16.mxu0 0
    %7386 = vmatpush1.bf16.msra.mxu0 0
    %7387 = vmatprep.subr.bf16.mxu0 0
    %7388 = vmatpush1.bf16.msra.mxu0 0
    %7389 = vmatprep.subr.bf16.mxu0 0
    %7390 = vmatpush1.bf16.msra.mxu0 0
    %7391 = vmatprep.subr.bf16.mxu0 0
    %7392 = vmatpush1.bf16.msra.mxu0 0
    %7393 = vmatprep.subr.bf16.mxu0 0
    %7394 = vmatpush1.bf16.msra.mxu0 0
    %7395 = vmatprep.subr.bf16.mxu0 0
    %7396 = vmatpush1.bf16.msra.mxu0 0
    %7397 = vmatprep.subr.bf16.mxu0 0
    %7398 = vmatpush1.bf16.msra.mxu0 0
    %7399 = vmatprep.mubr.bf16.mxu0 0
    %7400 = vmatmul.mubr.bf16.gmra.mrb[0].mxu0 %v7276
    %v7401 = vpop.f32.mrb[0].mxu0
    %v7402 = vadd.f32 0.0, %v7401
    %v7403 = vpop.f32.mrb[0].mxu0
    %v7404 = vpop.f32.mrb[0].mxu0
    %v7405 = vadd.f32 0.0, %v7404
    %v7406 = vpop.f32.mrb[0].mxu0
    %7407 = vmatprep.mubr.bf16.mxu0 0
    %7408 = vmatmul.mubr.bf16.gmra.mrb[0].mxu0 %v7279
    %v7409 = vpop.f32.mrb[0].mxu0
    %v7410 = vadd.f32 0.0, %v7409
    %v7411 = vpop.f32.mrb[0].mxu0
    %v7412 = vpop.f32.mrb[0].mxu0
    %v7413 = vadd.f32 0.0, %v7412
    %v7414 = vpop.f32.mrb[0].mxu0
    %7415 = vdwg.mxu0
    %s7416 = scalar_lea.vmem %s45, 128
    %v7417 = vld [vmem:[%s7416] sm:$0xf]
    %v7418 = vld [vmem:[%s7416 + $0x4] sm:$0xf]
    %v7419 = vld [vmem:[%s7416 + $0x8] sm:$0xf]
    %v7420 = vld [vmem:[%s7416 + $0xc] sm:$0xf]
    %v7421 = vld [vmem:[%s7416 + $0x10] sm:$0xf]
    %v7422 = vld [vmem:[%s7416 + $0x14] sm:$0xf]
    %v7423 = vld [vmem:[%s7416 + $0x18] sm:$0xf]
    %v7424 = vld [vmem:[%s7416 + $0x1c] sm:$0xf]
    %v7433 = vunpack.c.l.b16 %v7417
    %v7434 = vunpack.c.l.b16 %v7418
    %v7435 = vunpack.c.l.b16 %v7419
    %v7436 = vunpack.c.l.b16 %v7420
    %v7437 = vunpack.c.l.b16 %v7421
    %v7438 = vunpack.c.l.b16 %v7422
    %v7439 = vunpack.c.l.b16 %v7423
    %v7440 = vunpack.c.l.b16 %v7424
    %v7441 = vpack.c.b16 %v7434, %v7433
    %v7442 = vpack.c.b16 %v7436, %v7435
    %v7443 = vpack.c.b16 %v7438, %v7437
    %v7444 = vpack.c.b16 %v7440, %v7439
    %7449 = vmatprep.subr.bf16.mxu0 0
    %7450 = vmatpush1.bf16.msra.mxu0 %v7441
    %7451 = vmatprep.subr.bf16.mxu0 0
    %7452 = vmatpush1.bf16.msra.mxu0 %v7442
    %7453 = vmatprep.subr.bf16.mxu0 0
    %7454 = vmatpush1.bf16.msra.mxu0 %v7443
    %7455 = vmatprep.subr.bf16.mxu0 0
    %7456 = vmatpush1.bf16.msra.mxu0 %v7444
    %7457 = vmatprep.subr.bf16.mxu0 0
    %7458 = vmatpush1.bf16.msra.mxu0 0
    %7459 = vmatprep.subr.bf16.mxu0 0
    %7460 = vmatpush1.bf16.msra.mxu0 0
    %7461 = vmatprep.subr.bf16.mxu0 0
    %7462 = vmatpush1.bf16.msra.mxu0 0
    %7463 = vmatprep.subr.bf16.mxu0 0
    %7464 = vmatpush1.bf16.msra.mxu0 0
    %7465 = vmatprep.subr.bf16.mxu0 0
    %7466 = vmatpush1.bf16.msra.mxu0 0
    %7467 = vmatprep.subr.bf16.mxu0 0
    %7468 = vmatpush1.bf16.msra.mxu0 0
    %7469 = vmatprep.subr.bf16.mxu0 0
    %7470 = vmatpush1.bf16.msra.mxu0 0
    %7471 = vmatprep.subr.bf16.mxu0 0
    %7472 = vmatpush1.bf16.msra.mxu0 0
    %7473 = vmatprep.subr.bf16.mxu0 0
    %7474 = vmatpush1.bf16.msra.mxu0 0
    %7475 = vmatprep.subr.bf16.mxu0 0
    %7476 = vmatpush1.bf16.msra.mxu0 0
    %7477 = vmatprep.subr.bf16.mxu0 0
    %7478 = vmatpush1.bf16.msra.mxu0 0
    %7479 = vmatprep.subr.bf16.mxu0 0
    %7480 = vmatpush1.bf16.msra.mxu0 0
    %7481 = vmatprep.mubr.bf16.mxu0 0
    %7482 = vmatmul.mubr.bf16.gmra.mrb[0].mxu0 %v7276
    %v7483 = vpop.f32.mrb[0].mxu0
    %v7484 = vadd.f32 0.0, %v7483
    %v7485 = vpop.f32.mrb[0].mxu0
    %v7486 = vpop.f32.mrb[0].mxu0
    %v7487 = vadd.f32 0.0, %v7486
    %v7488 = vpop.f32.mrb[0].mxu0
    %7489 = vmatprep.mubr.bf16.mxu0 0
    %7490 = vmatmul.mubr.bf16.gmra.mrb[0].mxu0 %v7279
    %v7491 = vpop.f32.mrb[0].mxu0
    %v7492 = vadd.f32 0.0, %v7491
    %v7493 = vpop.f32.mrb[0].mxu0
    %v7494 = vpop.f32.mrb[0].mxu0
    %v7495 = vadd.f32 0.0, %v7494
    %v7496 = vpop.f32.mrb[0].mxu0
    %7497 = vdwg.mxu0
    %v7498 = vpack.c.bf16 %v7331, %v7330
    %v7499 = vpack.c.bf16 %v7333, %v7332
    %v7500 = vpack.c.bf16 %v7405, %v7402
    %v7501 = vpack.c.bf16 %v7413, %v7410
    %v7503 = vsel %vm797, %v7498, 0
    %v7506 = vsel %vm797, %v7499, 0
    %v7509 = vsel %vm797, %v7500, 0
    %v7512 = vsel %vm797, %v7501, 0
    %7514 = vmatprep.subr.bf16.mxu0 0
    %7515 = vmatpush1.bf16.xpose.msra.mxu0 %v7509
    %7516 = vmatprep.subr.bf16.mxu0 0
    %7517 = vmatpush1.bf16.xpose.msra.mxu0 %v7512
    %7518 = vmatprep.subr.bf16.mxu0 0
    %7519 = vmatpush1.bf16.xpose.msra.mxu0 0
    %7520 = vmatprep.subr.bf16.mxu0 0
    %7521 = vmatpush1.bf16.xpose.msra.mxu0 0
    %7522 = vmatprep.subr.bf16.mxu0 0
    %7523 = vmatpush1.bf16.xpose.msra.mxu0 0
    %7524 = vmatprep.subr.bf16.mxu0 0
    %7525 = vmatpush1.bf16.xpose.msra.mxu0 0
    %7526 = vmatprep.subr.bf16.mxu0 0
    %7527 = vmatpush1.bf16.xpose.msra.mxu0 0
    %7528 = vmatprep.subr.bf16.mxu0 0
    %7529 = vmatpush1.bf16.xpose.msra.mxu0 0
    %7530 = vmatprep.subr.bf16.mxu0 0
    %7531 = vmatpush1.bf16.xpose.msra.mxu0 0
    %7532 = vmatprep.subr.bf16.mxu0 0
    %7533 = vmatpush1.bf16.xpose.msra.mxu0 0
    %7534 = vmatprep.subr.bf16.mxu0 0
    %7535 = vmatpush1.bf16.xpose.msra.mxu0 0
    %7536 = vmatprep.subr.bf16.mxu0 0
    %7537 = vmatpush1.bf16.xpose.msra.mxu0 0
    %7538 = vmatprep.subr.bf16.mxu0 0
    %7539 = vmatpush1.bf16.xpose.msra.mxu0 0
    %7540 = vmatprep.subr.bf16.mxu0 0
    %7541 = vmatpush1.bf16.xpose.msra.mxu0 0
    %7542 = vmatprep.subr.bf16.mxu0 0
    %7543 = vmatpush1.bf16.xpose.msra.mxu0 0
    %7544 = vmatprep.subr.bf16.mxu0 0
    %7545 = vmatpush1.bf16.xpose.msra.mxu0 0
    %7546 = vmatprep.mubr.bf16.mxu0 0
    %7547 = vmatmul.mubr.bf16.gmra.mrb[0].mxu0 %v7503
    %v7548 = vpop.f32.mrb[0].mxu0
    %v7549 = vadd.f32 %v4835, %v7548
    %v7550 = vpop.f32.mrb[0].mxu0
    %v7551 = vpop.f32.mrb[0].mxu0
    %v7552 = vadd.f32 %v4836, %v7551
    %v7553 = vpop.f32.mrb[0].mxu0
    %7554 = vmatprep.mubr.bf16.mxu0 0
    %7555 = vmatmul.mubr.bf16.gmra.mrb[0].mxu0 %v7506
    %v7556 = vpop.f32.mrb[0].mxu0
    %v7557 = vadd.f32 %v4837, %v7556
    %v7558 = vpop.f32.mrb[0].mxu0
    %v7559 = vpop.f32.mrb[0].mxu0
    %v7560 = vadd.f32 %v4838, %v7559
    %v7561 = vpop.f32.mrb[0].mxu0
    %7562 = vdwg.mxu0
    %v7563 = vsel %vm871, %v7549, -inf
    %7564 = vmax.xlane.f32.xlu0 %v7563
    %v7565 = vpop.xlane.xlu0 %7564
    %v7566 = vsel %vm871, %v7552, -inf
    %7567 = vmax.xlane.f32.xlu0 %v7566
    %v7568 = vpop.xlane.xlu0 %7567
    %v7569 = vsel %vm871, %v7557, -inf
    %7570 = vmax.xlane.f32.xlu0 %v7569
    %v7571 = vpop.xlane.xlu0 %7570
    %v7572 = vsel %vm871, %v7560, -inf
    %7573 = vmax.xlane.f32.xlu0 %v7572
    %v7574 = vpop.xlane.xlu0 %7573
    %v7575 = vsub.f32 %v7549, %v7565
    %v7576 = vsub.f32 %v7552, %v7568
    %v7577 = vsub.f32 %v7557, %v7571
    %v7578 = vsub.f32 %v7560, %v7574
    %v7579 = vmul.f32 %v7575, 1.442695
    %v7580 = vpow.pop %v7579
    %v7581 = vmul.f32 %v7576, 1.442695
    %v7582 = vpow.pop %v7581
    %v7583 = vmul.f32 %v7577, 1.442695
    %v7584 = vpow.pop %v7583
    %v7585 = vmul.f32 %v7578, 1.442695
    %v7586 = vpow.pop %v7585
    %v7587 = vsel %vm871, %v7580, 0.0
    %7588 = vadd.xlane.f32.xlu0 %v7587
    %v7589 = vpop.xlane.xlu0 %7588
    %v7590 = vsel %vm871, %v7582, 0.0
    %7591 = vadd.xlane.f32.xlu0 %v7590
    %v7592 = vpop.xlane.xlu0 %7591
    %v7593 = vsel %vm871, %v7584, 0.0
    %7594 = vadd.xlane.f32.xlu0 %v7593
    %v7595 = vpop.xlane.xlu0 %7594
    %v7596 = vsel %vm871, %v7586, 0.0
    %7597 = vadd.xlane.f32.xlu0 %v7596
    %v7598 = vpop.xlane.xlu0 %7597
    %v7599 = vrcp.pop %v7589
    %v7600 = vrcp.pop %v7592
    %v7601 = vrcp.pop %v7595
    %v7602 = vrcp.pop %v7598
    %v7603 = vmul.f32 %v7580, %v7599
    %v7604 = vmul.f32 %v7582, %v7600
    %v7605 = vmul.f32 %v7584, %v7601
    %v7606 = vmul.f32 %v7586, %v7602
    %v7607 = vpack.c.bf16 %v7604, %v7603
    %v7608 = vpack.c.bf16 %v7606, %v7605
    %v7609 = vpack.c.bf16 %v7487, %v7484
    %v7610 = vpack.c.bf16 %v7495, %v7492
    %v7612 = vsel %vm871, %v7607, 0
    %v7615 = vsel %vm871, %v7608, 0
    %7617 = vmatprep.subr.bf16.mxu0 0
    %7618 = vmatpush1.bf16.msra.mxu0 %v7609
    %7619 = vmatprep.subr.bf16.mxu0 0
    %7620 = vmatpush1.bf16.msra.mxu0 %v7610
    %7621 = vmatprep.subr.bf16.mxu0 0
    %7622 = vmatpush1.bf16.msra.mxu0 0
    %7623 = vmatprep.subr.bf16.mxu0 0
    %7624 = vmatpush1.bf16.msra.mxu0 0
    %7625 = vmatprep.subr.bf16.mxu0 0
    %7626 = vmatpush1.bf16.msra.mxu0 0
    %7627 = vmatprep.subr.bf16.mxu0 0
    %7628 = vmatpush1.bf16.msra.mxu0 0
    %7629 = vmatprep.subr.bf16.mxu0 0
    %7630 = vmatpush1.bf16.msra.mxu0 0
    %7631 = vmatprep.subr.bf16.mxu0 0
    %7632 = vmatpush1.bf16.msra.mxu0 0
    %7633 = vmatprep.subr.bf16.mxu0 0
    %7634 = vmatpush1.bf16.msra.mxu0 0
    %7635 = vmatprep.subr.bf16.mxu0 0
    %7636 = vmatpush1.bf16.msra.mxu0 0
    %7637 = vmatprep.subr.bf16.mxu0 0
    %7638 = vmatpush1.bf16.msra.mxu0 0
    %7639 = vmatprep.subr.bf16.mxu0 0
    %7640 = vmatpush1.bf16.msra.mxu0 0
    %7641 = vmatprep.subr.bf16.mxu0 0
    %7642 = vmatpush1.bf16.msra.mxu0 0
    %7643 = vmatprep.subr.bf16.mxu0 0
    %7644 = vmatpush1.bf16.msra.mxu0 0
    %7645 = vmatprep.subr.bf16.mxu0 0
    %7646 = vmatpush1.bf16.msra.mxu0 0
    %7647 = vmatprep.subr.bf16.mxu0 0
    %7648 = vmatpush1.bf16.msra.mxu0 0
    %7649 = vmatprep.mubr.bf16.mxu0 0
    %7650 = vmatmul.mubr.bf16.gmra.mrb[0].mxu0 %v7612
    %v7651 = vpop.f32.mrb[0].mxu0
    %v7652 = vadd.f32 0.0, %v7651
    %v7653 = vpop.f32.mrb[0].mxu0
    %v7654 = vpop.f32.mrb[0].mxu0
    %v7655 = vadd.f32 0.0, %v7654
    %v7656 = vpop.f32.mrb[0].mxu0
    %7657 = vmatprep.mubr.bf16.mxu0 0
    %7658 = vmatmul.mubr.bf16.gmra.mrb[0].mxu0 %v7615
    %v7659 = vpop.f32.mrb[0].mxu0
    %v7660 = vadd.f32 0.0, %v7659
    %v7661 = vpop.f32.mrb[0].mxu0
    %v7662 = vpop.f32.mrb[0].mxu0
    %v7663 = vadd.f32 0.0, %v7662
    %v7664 = vpop.f32.mrb[0].mxu0
    %7665 = vdwg.mxu0
    %v7666 = vpack.c.bf16 %v7655, %v7652
    %v7667 = vpack.c.bf16 %v7663, %v7660
    %s7668 = scalar_lea.vmem %s47, 32
    %v7669 = vld [vmem:[%s7668] sm:$0xf]
    %v7670 = vld [vmem:[%s7668 + $0x4] sm:$0xf]
    %s7671 = scalar_lea.vmem %s41, 160
    %v7672 = vld [vmem:[%s7671] sm:$0xf]
    %v7673 = vld [vmem:[%s7671 + $0x4] sm:$0xf]
    %v7674 = vld [vmem:[%s7671 + $0x8] sm:$0xf]
    %v7675 = vld [vmem:[%s7671 + $0xc] sm:$0xf]
    %v7676 = vld [vmem:[%s7671 + $0x10] sm:$0xf]
    %v7677 = vld [vmem:[%s7671 + $0x14] sm:$0xf]
    %v7678 = vld [vmem:[%s7671 + $0x18] sm:$0xf]
    %v7679 = vld [vmem:[%s7671 + $0x1c] sm:$0xf]
    %v7688 = vunpack.c.l.b16 %v7672
    %v7689 = vunpack.c.l.b16 %v7673
    %v7690 = vunpack.c.l.b16 %v7674
    %v7691 = vunpack.c.l.b16 %v7675
    %v7692 = vunpack.c.l.b16 %v7676
    %v7693 = vunpack.c.l.b16 %v7677
    %v7694 = vunpack.c.l.b16 %v7678
    %v7695 = vunpack.c.l.b16 %v7679
    %v7696 = vpack.c.b16 %v7689, %v7688
    %v7697 = vpack.c.b16 %v7691, %v7690
    %v7698 = vpack.c.b16 %v7693, %v7692
    %v7699 = vpack.c.b16 %v7695, %v7694
    %7704 = vmatprep.subr.bf16.mxu0 0
    %7705 = vmatpush1.bf16.msra.mxu0 %v7696
    %7706 = vmatprep.subr.bf16.mxu0 0
    %7707 = vmatpush1.bf16.msra.mxu0 %v7697
    %7708 = vmatprep.subr.bf16.mxu0 0
    %7709 = vmatpush1.bf16.msra.mxu0 %v7698
    %7710 = vmatprep.subr.bf16.mxu0 0
    %7711 = vmatpush1.bf16.msra.mxu0 %v7699
    %7712 = vmatprep.subr.bf16.mxu0 0
    %7713 = vmatpush1.bf16.msra.mxu0 0
    %7714 = vmatprep.subr.bf16.mxu0 0
    %7715 = vmatpush1.bf16.msra.mxu0 0
    %7716 = vmatprep.subr.bf16.mxu0 0
    %7717 = vmatpush1.bf16.msra.mxu0 0
    %7718 = vmatprep.subr.bf16.mxu0 0
    %7719 = vmatpush1.bf16.msra.mxu0 0
    %7720 = vmatprep.subr.bf16.mxu0 0
    %7721 = vmatpush1.bf16.msra.mxu0 0
    %7722 = vmatprep.subr.bf16.mxu0 0
    %7723 = vmatpush1.bf16.msra.mxu0 0
    %7724 = vmatprep.subr.bf16.mxu0 0
    %7725 = vmatpush1.bf16.msra.mxu0 0
    %7726 = vmatprep.subr.bf16.mxu0 0
    %7727 = vmatpush1.bf16.msra.mxu0 0
    %7728 = vmatprep.subr.bf16.mxu0 0
    %7729 = vmatpush1.bf16.msra.mxu0 0
    %7730 = vmatprep.subr.bf16.mxu0 0
    %7731 = vmatpush1.bf16.msra.mxu0 0
    %7732 = vmatprep.subr.bf16.mxu0 0
    %7733 = vmatpush1.bf16.msra.mxu0 0
    %7734 = vmatprep.subr.bf16.mxu0 0
    %7735 = vmatpush1.bf16.msra.mxu0 0
    %7736 = vmatprep.mubr.bf16.mxu0 0
    %7737 = vmatmul.mubr.bf16.gmra.mrb[0].mxu0 %v7276
    %v7738 = vpop.f32.mrb[0].mxu0
    %v7739 = vadd.f32 0.0, %v7738
    %v7740 = vpop.f32.mrb[0].mxu0
    %v7741 = vpop.f32.mrb[0].mxu0
    %v7742 = vadd.f32 0.0, %v7741
    %v7743 = vpop.f32.mrb[0].mxu0
    %7744 = vmatprep.mubr.bf16.mxu0 0
    %7745 = vmatmul.mubr.bf16.gmra.mrb[0].mxu0 %v7279
    %v7746 = vpop.f32.mrb[0].mxu0
    %v7747 = vadd.f32 0.0, %v7746
    %v7748 = vpop.f32.mrb[0].mxu0
    %v7749 = vpop.f32.mrb[0].mxu0
    %v7750 = vadd.f32 0.0, %v7749
    %v7751 = vpop.f32.mrb[0].mxu0
    %7752 = vdwg.mxu0
    %v7753 = vmul.f32 %v7739, 0.25
    %v7754 = vmul.f32 %v7742, 0.25
    %v7755 = vmul.f32 %v7747, 0.25
    %v7756 = vmul.f32 %v7750, 0.25
    %s7757 = scalar_lea.vmem %s43, 160
    %v7758 = vld [vmem:[%s7757] sm:$0xf]
    %v7759 = vld [vmem:[%s7757 + $0x4] sm:$0xf]
    %v7760 = vld [vmem:[%s7757 + $0x8] sm:$0xf]
    %v7761 = vld [vmem:[%s7757 + $0xc] sm:$0xf]
    %v7762 = vld [vmem:[%s7757 + $0x10] sm:$0xf]
    %v7763 = vld [vmem:[%s7757 + $0x14] sm:$0xf]
    %v7764 = vld [vmem:[%s7757 + $0x18] sm:$0xf]
    %v7765 = vld [vmem:[%s7757 + $0x1c] sm:$0xf]
    %v7774 = vunpack.c.l.b16 %v7758
    %v7775 = vunpack.c.l.b16 %v7759
    %v7776 = vunpack.c.l.b16 %v7760
    %v7777 = vunpack.c.l.b16 %v7761
    %v7778 = vunpack.c.l.b16 %v7762
    %v7779 = vunpack.c.l.b16 %v7763
    %v7780 = vunpack.c.l.b16 %v7764
    %v7781 = vunpack.c.l.b16 %v7765
    %v7782 = vpack.c.b16 %v7775, %v7774
    %v7783 = vpack.c.b16 %v7777, %v7776
    %v7784 = vpack.c.b16 %v7779, %v7778
    %v7785 = vpack.c.b16 %v7781, %v7780
    %7790 = vmatprep.subr.bf16.mxu0 0
    %7791 = vmatpush1.bf16.msra.mxu0 %v7782
    %7792 = vmatprep.subr.bf16.mxu0 0
    %7793 = vmatpush1.bf16.msra.mxu0 %v7783
    %7794 = vmatprep.subr.bf16.mxu0 0
    %7795 = vmatpush1.bf16.msra.mxu0 %v7784
    %7796 = vmatprep.subr.bf16.mxu0 0
    %7797 = vmatpush1.bf16.msra.mxu0 %v7785
    %7798 = vmatprep.subr.bf16.mxu0 0
    %7799 = vmatpush1.bf16.msra.mxu0 0
    %7800 = vmatprep.subr.bf16.mxu0 0
    %7801 = vmatpush1.bf16.msra.mxu0 0
    %7802 = vmatprep.subr.bf16.mxu0 0
    %7803 = vmatpush1.bf16.msra.mxu0 0
    %7804 = vmatprep.subr.bf16.mxu0 0
    %7805 = vmatpush1.bf16.msra.mxu0 0
    %7806 = vmatprep.subr.bf16.mxu0 0
    %7807 = vmatpush1.bf16.msra.mxu0 0
    %7808 = vmatprep.subr.bf16.mxu0 0
    %7809 = vmatpush1.bf16.msra.mxu0 0
    %7810 = vmatprep.subr.bf16.mxu0 0
    %7811 = vmatpush1.bf16.msra.mxu0 0
    %7812 = vmatprep.subr.bf16.mxu0 0
    %7813 = vmatpush1.bf16.msra.mxu0 0
    %7814 = vmatprep.subr.bf16.mxu0 0
    %7815 = vmatpush1.bf16.msra.mxu0 0
    %7816 = vmatprep.subr.bf16.mxu0 0
    %7817 = vmatpush1.bf16.msra.mxu0 0
    %7818 = vmatprep.subr.bf16.mxu0 0
    %7819 = vmatpush1.bf16.msra.mxu0 0
    %7820 = vmatprep.subr.bf16.mxu0 0
    %7821 = vmatpush1.bf16.msra.mxu0 0
    %7822 = vmatprep.mubr.bf16.mxu0 0
    %7823 = vmatmul.mubr.bf16.gmra.mrb[0].mxu0 %v7276
    %v7824 = vpop.f32.mrb[0].mxu0
    %v7825 = vadd.f32 0.0, %v7824
    %v7826 = vpop.f32.mrb[0].mxu0
    %v7827 = vpop.f32.mrb[0].mxu0
    %v7828 = vadd.f32 0.0, %v7827
    %v7829 = vpop.f32.mrb[0].mxu0
    %7830 = vmatprep.mubr.bf16.mxu0 0
    %7831 = vmatmul.mubr.bf16.gmra.mrb[0].mxu0 %v7279
    %v7832 = vpop.f32.mrb[0].mxu0
    %v7833 = vadd.f32 0.0, %v7832
    %v7834 = vpop.f32.mrb[0].mxu0
    %v7835 = vpop.f32.mrb[0].mxu0
    %v7836 = vadd.f32 0.0, %v7835
    %v7837 = vpop.f32.mrb[0].mxu0
    %7838 = vdwg.mxu0
    %s7839 = scalar_lea.vmem %s45, 160
    %v7840 = vld [vmem:[%s7839] sm:$0xf]
    %v7841 = vld [vmem:[%s7839 + $0x4] sm:$0xf]
    %v7842 = vld [vmem:[%s7839 + $0x8] sm:$0xf]
    %v7843 = vld [vmem:[%s7839 + $0xc] sm:$0xf]
    %v7844 = vld [vmem:[%s7839 + $0x10] sm:$0xf]
    %v7845 = vld [vmem:[%s7839 + $0x14] sm:$0xf]
    %v7846 = vld [vmem:[%s7839 + $0x18] sm:$0xf]
    %v7847 = vld [vmem:[%s7839 + $0x1c] sm:$0xf]
    %v7856 = vunpack.c.l.b16 %v7840
    %v7857 = vunpack.c.l.b16 %v7841
    %v7858 = vunpack.c.l.b16 %v7842
    %v7859 = vunpack.c.l.b16 %v7843
    %v7860 = vunpack.c.l.b16 %v7844
    %v7861 = vunpack.c.l.b16 %v7845
    %v7862 = vunpack.c.l.b16 %v7846
    %v7863 = vunpack.c.l.b16 %v7847
    %v7864 = vpack.c.b16 %v7857, %v7856
    %v7865 = vpack.c.b16 %v7859, %v7858
    %v7866 = vpack.c.b16 %v7861, %v7860
    %v7867 = vpack.c.b16 %v7863, %v7862
    %7872 = vmatprep.subr.bf16.mxu0 0
    %7873 = vmatpush1.bf16.msra.mxu0 %v7864
    %7874 = vmatprep.subr.bf16.mxu0 0
    %7875 = vmatpush1.bf16.msra.mxu0 %v7865
    %7876 = vmatprep.subr.bf16.mxu0 0
    %7877 = vmatpush1.bf16.msra.mxu0 %v7866
    %7878 = vmatprep.subr.bf16.mxu0 0
    %7879 = vmatpush1.bf16.msra.mxu0 %v7867
    %7880 = vmatprep.subr.bf16.mxu0 0
    %7881 = vmatpush1.bf16.msra.mxu0 0
    %7882 = vmatprep.subr.bf16.mxu0 0
    %7883 = vmatpush1.bf16.msra.mxu0 0
    %7884 = vmatprep.subr.bf16.mxu0 0
    %7885 = vmatpush1.bf16.msra.mxu0 0
    %7886 = vmatprep.subr.bf16.mxu0 0
    %7887 = vmatpush1.bf16.msra.mxu0 0
    %7888 = vmatprep.subr.bf16.mxu0 0
    %7889 = vmatpush1.bf16.msra.mxu0 0
    %7890 = vmatprep.subr.bf16.mxu0 0
    %7891 = vmatpush1.bf16.msra.mxu0 0
    %7892 = vmatprep.subr.bf16.mxu0 0
    %7893 = vmatpush1.bf16.msra.mxu0 0
    %7894 = vmatprep.subr.bf16.mxu0 0
    %7895 = vmatpush1.bf16.msra.mxu0 0
    %7896 = vmatprep.subr.bf16.mxu0 0
    %7897 = vmatpush1.bf16.msra.mxu0 0
    %7898 = vmatprep.subr.bf16.mxu0 0
    %7899 = vmatpush1.bf16.msra.mxu0 0
    %7900 = vmatprep.subr.bf16.mxu0 0
    %7901 = vmatpush1.bf16.msra.mxu0 0
    %7902 = vmatprep.subr.bf16.mxu0 0
    %7903 = vmatpush1.bf16.msra.mxu0 0
    %7904 = vmatprep.mubr.bf16.mxu0 0
    %7905 = vmatmul.mubr.bf16.gmra.mrb[0].mxu0 %v7276
    %v7906 = vpop.f32.mrb[0].mxu0
    %v7907 = vadd.f32 0.0, %v7906
    %v7908 = vpop.f32.mrb[0].mxu0
    %v7909 = vpop.f32.mrb[0].mxu0
    %v7910 = vadd.f32 0.0, %v7909
    %v7911 = vpop.f32.mrb[0].mxu0
    %7912 = vmatprep.mubr.bf16.mxu0 0
    %7913 = vmatmul.mubr.bf16.gmra.mrb[0].mxu0 %v7279
    %v7914 = vpop.f32.mrb[0].mxu0
    %v7915 = vadd.f32 0.0, %v7914
    %v7916 = vpop.f32.mrb[0].mxu0
    %v7917 = vpop.f32.mrb[0].mxu0
    %v7918 = vadd.f32 0.0, %v7917
    %v7919 = vpop.f32.mrb[0].mxu0
    %7920 = vdwg.mxu0
    %v7921 = vpack.c.bf16 %v7754, %v7753
    %v7922 = vpack.c.bf16 %v7756, %v7755
    %v7923 = vpack.c.bf16 %v7828, %v7825
    %v7924 = vpack.c.bf16 %v7836, %v7833
    %v7926 = vsel %vm797, %v7921, 0
    %v7929 = vsel %vm797, %v7922, 0
    %v7932 = vsel %vm797, %v7923, 0
    %v7935 = vsel %vm797, %v7924, 0
    %7937 = vmatprep.subr.bf16.mxu0 0
    %7938 = vmatpush1.bf16.xpose.msra.mxu0 %v7932
    %7939 = vmatprep.subr.bf16.mxu0 0
    %7940 = vmatpush1.bf16.xpose.msra.mxu0 %v7935
    %7941 = vmatprep.subr.bf16.mxu0 0
    %7942 = vmatpush1.bf16.xpose.msra.mxu0 0
    %7943 = vmatprep.subr.bf16.mxu0 0
    %7944 = vmatpush1.bf16.xpose.msra.mxu0 0
    %7945 = vmatprep.subr.bf16.mxu0 0
    %7946 = vmatpush1.bf16.xpose.msra.mxu0 0
    %7947 = vmatprep.subr.bf16.mxu0 0
    %7948 = vmatpush1.bf16.xpose.msra.mxu0 0
    %7949 = vmatprep.subr.bf16.mxu0 0
    %7950 = vmatpush1.bf16.xpose.msra.mxu0 0
    %7951 = vmatprep.subr.bf16.mxu0 0
    %7952 = vmatpush1.bf16.xpose.msra.mxu0 0
    %7953 = vmatprep.subr.bf16.mxu0 0
    %7954 = vmatpush1.bf16.xpose.msra.mxu0 0
    %7955 = vmatprep.subr.bf16.mxu0 0
    %7956 = vmatpush1.bf16.xpose.msra.mxu0 0
    %7957 = vmatprep.subr.bf16.mxu0 0
    %7958 = vmatpush1.bf16.xpose.msra.mxu0 0
    %7959 = vmatprep.subr.bf16.mxu0 0
    %7960 = vmatpush1.bf16.xpose.msra.mxu0 0
    %7961 = vmatprep.subr.bf16.mxu0 0
    %7962 = vmatpush1.bf16.xpose.msra.mxu0 0
    %7963 = vmatprep.subr.bf16.mxu0 0
    %7964 = vmatpush1.bf16.xpose.msra.mxu0 0
    %7965 = vmatprep.subr.bf16.mxu0 0
    %7966 = vmatpush1.bf16.xpose.msra.mxu0 0
    %7967 = vmatprep.subr.bf16.mxu0 0
    %7968 = vmatpush1.bf16.xpose.msra.mxu0 0
    %7969 = vmatprep.mubr.bf16.mxu0 0
    %7970 = vmatmul.mubr.bf16.gmra.mrb[0].mxu0 %v7926
    %v7971 = vpop.f32.mrb[0].mxu0
    %v7972 = vadd.f32 %v4835, %v7971
    %v7973 = vpop.f32.mrb[0].mxu0
    %v7974 = vpop.f32.mrb[0].mxu0
    %v7975 = vadd.f32 %v4836, %v7974
    %v7976 = vpop.f32.mrb[0].mxu0
    %7977 = vmatprep.mubr.bf16.mxu0 0
    %7978 = vmatmul.mubr.bf16.gmra.mrb[0].mxu0 %v7929
    %v7979 = vpop.f32.mrb[0].mxu0
    %v7980 = vadd.f32 %v4837, %v7979
    %v7981 = vpop.f32.mrb[0].mxu0
    %v7982 = vpop.f32.mrb[0].mxu0
    %v7983 = vadd.f32 %v4838, %v7982
    %v7984 = vpop.f32.mrb[0].mxu0
    %7985 = vdwg.mxu0
    %v7986 = vsel %vm871, %v7972, -inf
    %7987 = vmax.xlane.f32.xlu0 %v7986
    %v7988 = vpop.xlane.xlu0 %7987
    %v7989 = vsel %vm871, %v7975, -inf
    %7990 = vmax.xlane.f32.xlu0 %v7989
    %v7991 = vpop.xlane.xlu0 %7990
    %v7992 = vsel %vm871, %v7980, -inf
    %7993 = vmax.xlane.f32.xlu0 %v7992
    %v7994 = vpop.xlane.xlu0 %7993
    %v7995 = vsel %vm871, %v7983, -inf
    %7996 = vmax.xlane.f32.xlu0 %v7995
    %v7997 = vpop.xlane.xlu0 %7996
    %v7998 = vsub.f32 %v7972, %v7988
    %v7999 = vsub.f32 %v7975, %v7991
    %v8000 = vsub.f32 %v7980, %v7994
    %v8001 = vsub.f32 %v7983, %v7997
    %v8002 = vmul.f32 %v7998, 1.442695
    %v8003 = vpow.pop %v8002
    %v8004 = vmul.f32 %v7999, 1.442695
    %v8005 = vpow.pop %v8004
    %v8006 = vmul.f32 %v8000, 1.442695
    %v8007 = vpow.pop %v8006
    %v8008 = vmul.f32 %v8001, 1.442695
    %v8009 = vpow.pop %v8008
    %v8010 = vsel %vm871, %v8003, 0.0
    %8011 = vadd.xlane.f32.xlu0 %v8010
    %v8012 = vpop.xlane.xlu0 %8011
    %v8013 = vsel %vm871, %v8005, 0.0
    %8014 = vadd.xlane.f32.xlu0 %v8013
    %v8015 = vpop.xlane.xlu0 %8014
    %v8016 = vsel %vm871, %v8007, 0.0
    %8017 = vadd.xlane.f32.xlu0 %v8016
    %v8018 = vpop.xlane.xlu0 %8017
    %v8019 = vsel %vm871, %v8009, 0.0
    %8020 = vadd.xlane.f32.xlu0 %v8019
    %v8021 = vpop.xlane.xlu0 %8020
    %v8022 = vrcp.pop %v8012
    %v8023 = vrcp.pop %v8015
    %v8024 = vrcp.pop %v8018
    %v8025 = vrcp.pop %v8021
    %v8026 = vmul.f32 %v8003, %v8022
    %v8027 = vmul.f32 %v8005, %v8023
    %v8028 = vmul.f32 %v8007, %v8024
    %v8029 = vmul.f32 %v8009, %v8025
    %v8030 = vpack.c.bf16 %v8027, %v8026
    %v8031 = vpack.c.bf16 %v8029, %v8028
    %v8032 = vpack.c.bf16 %v7910, %v7907
    %v8033 = vpack.c.bf16 %v7918, %v7915
    %v8035 = vsel %vm871, %v8030, 0
    %v8038 = vsel %vm871, %v8031, 0
    %8040 = vmatprep.subr.bf16.mxu0 0
    %8041 = vmatpush1.bf16.msra.mxu0 %v8032
    %8042 = vmatprep.subr.bf16.mxu0 0
    %8043 = vmatpush1.bf16.msra.mxu0 %v8033
    %8044 = vmatprep.subr.bf16.mxu0 0
    %8045 = vmatpush1.bf16.msra.mxu0 0
    %8046 = vmatprep.subr.bf16.mxu0 0
    %8047 = vmatpush1.bf16.msra.mxu0 0
    %8048 = vmatprep.subr.bf16.mxu0 0
    %8049 = vmatpush1.bf16.msra.mxu0 0
    %8050 = vmatprep.subr.bf16.mxu0 0
    %8051 = vmatpush1.bf16.msra.mxu0 0
    %8052 = vmatprep.subr.bf16.mxu0 0
    %8053 = vmatpush1.bf16.msra.mxu0 0
    %8054 = vmatprep.subr.bf16.mxu0 0
    %8055 = vmatpush1.bf16.msra.mxu0 0
    %8056 = vmatprep.subr.bf16.mxu0 0
    %8057 = vmatpush1.bf16.msra.mxu0 0
    %8058 = vmatprep.subr.bf16.mxu0 0
    %8059 = vmatpush1.bf16.msra.mxu0 0
    %8060 = vmatprep.subr.bf16.mxu0 0
    %8061 = vmatpush1.bf16.msra.mxu0 0
    %8062 = vmatprep.subr.bf16.mxu0 0
    %8063 = vmatpush1.bf16.msra.mxu0 0
    %8064 = vmatprep.subr.bf16.mxu0 0
    %8065 = vmatpush1.bf16.msra.mxu0 0
    %8066 = vmatprep.subr.bf16.mxu0 0
    %8067 = vmatpush1.bf16.msra.mxu0 0
    %8068 = vmatprep.subr.bf16.mxu0 0
    %8069 = vmatpush1.bf16.msra.mxu0 0
    %8070 = vmatprep.subr.bf16.mxu0 0
    %8071 = vmatpush1.bf16.msra.mxu0 0
    %8072 = vmatprep.mubr.bf16.mxu0 0
    %8073 = vmatmul.mubr.bf16.gmra.mrb[0].mxu0 %v8035
    %v8074 = vpop.f32.mrb[0].mxu0
    %v8075 = vadd.f32 0.0, %v8074
    %v8076 = vpop.f32.mrb[0].mxu0
    %v8077 = vpop.f32.mrb[0].mxu0
    %v8078 = vadd.f32 0.0, %v8077
    %v8079 = vpop.f32.mrb[0].mxu0
    %8080 = vmatprep.mubr.bf16.mxu0 0
    %8081 = vmatmul.mubr.bf16.gmra.mrb[0].mxu0 %v8038
    %v8082 = vpop.f32.mrb[0].mxu0
    %v8083 = vadd.f32 0.0, %v8082
    %v8084 = vpop.f32.mrb[0].mxu0
    %v8085 = vpop.f32.mrb[0].mxu0
    %v8086 = vadd.f32 0.0, %v8085
    %v8087 = vpop.f32.mrb[0].mxu0
    %8088 = vdwg.mxu0
    %v8089 = vpack.c.bf16 %v8078, %v8075
    %v8090 = vpack.c.bf16 %v8086, %v8083
    %s8091 = scalar_lea.vmem %s47, 40
    %v8092 = vld [vmem:[%s8091] sm:$0xf]
    %v8093 = vld [vmem:[%s8091 + $0x4] sm:$0xf]
    %v8096 = vunpack.c.l.b16 %v8092
    %v8097 = vunpack.c.l.b16 %v8093
    %v8098 = vpack.c.b16 %v8097, %v8096
    %v8101 = vsel %vm797, %v8089, 0
    %v8104 = vsel %vm797, %v8090, 0
    %8106 = vmatprep.subr.bf16.mxu0 0
    %8107 = vmatpush1.bf16.msra.mxu0 %v8098
    %8108 = vmatprep.subr.bf16.mxu0 0
    %8109 = vmatpush1.bf16.msra.mxu0 0
    %8110 = vmatprep.subr.bf16.mxu0 0
    %8111 = vmatpush1.bf16.msra.mxu0 0
    %8112 = vmatprep.subr.bf16.mxu0 0
    %8113 = vmatpush1.bf16.msra.mxu0 0
    %8114 = vmatprep.subr.bf16.mxu0 0
    %8115 = vmatpush1.bf16.msra.mxu0 0
    %8116 = vmatprep.subr.bf16.mxu0 0
    %8117 = vmatpush1.bf16.msra.mxu0 0
    %8118 = vmatprep.subr.bf16.mxu0 0
    %8119 = vmatpush1.bf16.msra.mxu0 0
    %8120 = vmatprep.subr.bf16.mxu0 0
    %8121 = vmatpush1.bf16.msra.mxu0 0
    %8122 = vmatprep.subr.bf16.mxu0 0
    %8123 = vmatpush1.bf16.msra.mxu0 0
    %8124 = vmatprep.subr.bf16.mxu0 0
    %8125 = vmatpush1.bf16.msra.mxu0 0
    %8126 = vmatprep.subr.bf16.mxu0 0
    %8127 = vmatpush1.bf16.msra.mxu0 0
    %8128 = vmatprep.subr.bf16.mxu0 0
    %8129 = vmatpush1.bf16.msra.mxu0 0
    %8130 = vmatprep.subr.bf16.mxu0 0
    %8131 = vmatpush1.bf16.msra.mxu0 0
    %8132 = vmatprep.subr.bf16.mxu0 0
    %8133 = vmatpush1.bf16.msra.mxu0 0
    %8134 = vmatprep.subr.bf16.mxu0 0
    %8135 = vmatpush1.bf16.msra.mxu0 0
    %8136 = vmatprep.subr.bf16.mxu0 0
    %8137 = vmatpush1.bf16.msra.mxu0 0
    %8138 = vmatprep.mubr.bf16.mxu0 0
    %8139 = vmatmul.mubr.bf16.gmra.mrb[0].mxu0 %v8101
    %v8140 = vpop.f32.mrb[0].mxu0
    %v8141 = vadd.f32 0.0, %v8140
    %v8142 = vpop.f32.mrb[0].mxu0
    %v8143 = vpop.f32.mrb[0].mxu0
    %v8144 = vadd.f32 0.0, %v8143
    %v8145 = vpop.f32.mrb[0].mxu0
    %8146 = vmatprep.mubr.bf16.mxu0 0
    %8147 = vmatmul.mubr.bf16.gmra.mrb[0].mxu0 %v8104
    %v8148 = vpop.f32.mrb[0].mxu0
    %v8149 = vadd.f32 0.0, %v8148
    %v8150 = vpop.f32.mrb[0].mxu0
    %v8151 = vpop.f32.mrb[0].mxu0
    %v8152 = vadd.f32 0.0, %v8151
    %v8153 = vpop.f32.mrb[0].mxu0
    %8154 = vdwg.mxu0
    %v8157 = vunpack.c.l.b16 %v7669
    %v8158 = vunpack.c.l.b16 %v7670
    %v8159 = vpack.c.b16 %v8158, %v8157
    %v8162 = vsel %vm797, %v7666, 0
    %v8165 = vsel %vm797, %v7667, 0
    %8167 = vmatprep.subr.bf16.mxu0 0
    %8168 = vmatpush1.bf16.msra.mxu0 %v8159
    %8169 = vmatprep.subr.bf16.mxu0 0
    %8170 = vmatpush1.bf16.msra.mxu0 0
    %8171 = vmatprep.subr.bf16.mxu0 0
    %8172 = vmatpush1.bf16.msra.mxu0 0
    %8173 = vmatprep.subr.bf16.mxu0 0
    %8174 = vmatpush1.bf16.msra.mxu0 0
    %8175 = vmatprep.subr.bf16.mxu0 0
    %8176 = vmatpush1.bf16.msra.mxu0 0
    %8177 = vmatprep.subr.bf16.mxu0 0
    %8178 = vmatpush1.bf16.msra.mxu0 0
    %8179 = vmatprep.subr.bf16.mxu0 0
    %8180 = vmatpush1.bf16.msra.mxu0 0
    %8181 = vmatprep.subr.bf16.mxu0 0
    %8182 = vmatpush1.bf16.msra.mxu0 0
    %8183 = vmatprep.subr.bf16.mxu0 0
    %8184 = vmatpush1.bf16.msra.mxu0 0
    %8185 = vmatprep.subr.bf16.mxu0 0
    %8186 = vmatpush1.bf16.msra.mxu0 0
    %8187 = vmatprep.subr.bf16.mxu0 0
    %8188 = vmatpush1.bf16.msra.mxu0 0
    %8189 = vmatprep.subr.bf16.mxu0 0
    %8190 = vmatpush1.bf16.msra.mxu0 0
    %8191 = vmatprep.subr.bf16.mxu0 0
    %8192 = vmatpush1.bf16.msra.mxu0 0
    %8193 = vmatprep.subr.bf16.mxu0 0
    %8194 = vmatpush1.bf16.msra.mxu0 0
    %8195 = vmatprep.subr.bf16.mxu0 0
    %8196 = vmatpush1.bf16.msra.mxu0 0
    %8197 = vmatprep.subr.bf16.mxu0 0
    %8198 = vmatpush1.bf16.msra.mxu0 0
    %8199 = vmatprep.mubr.bf16.mxu0 0
    %8200 = vmatmul.mubr.bf16.gmra.mrb[0].mxu0 %v8162
    %v8201 = vpop.f32.mrb[0].mxu0
    %v8202 = vadd.f32 %v8141, %v8201
    %v8203 = vpop.f32.mrb[0].mxu0
    %v8204 = vpop.f32.mrb[0].mxu0
    %v8205 = vadd.f32 %v8144, %v8204
    %v8206 = vpop.f32.mrb[0].mxu0
    %8207 = vmatprep.mubr.bf16.mxu0 0
    %8208 = vmatmul.mubr.bf16.gmra.mrb[0].mxu0 %v8165
    %v8209 = vpop.f32.mrb[0].mxu0
    %v8210 = vadd.f32 %v8149, %v8209
    %v8211 = vpop.f32.mrb[0].mxu0
    %v8212 = vpop.f32.mrb[0].mxu0
    %v8213 = vadd.f32 %v8152, %v8212
    %v8214 = vpop.f32.mrb[0].mxu0
    %8215 = vdwg.mxu0
    %s8216 = scalar_lea.vmem %s41, 192
    %v8217 = vld [vmem:[%s8216] sm:$0xf]
    %v8218 = vld [vmem:[%s8216 + $0x4] sm:$0xf]
    %v8219 = vld [vmem:[%s8216 + $0x8] sm:$0xf]
    %v8220 = vld [vmem:[%s8216 + $0xc] sm:$0xf]
    %v8221 = vld [vmem:[%s8216 + $0x10] sm:$0xf]
    %v8222 = vld [vmem:[%s8216 + $0x14] sm:$0xf]
    %v8223 = vld [vmem:[%s8216 + $0x18] sm:$0xf]
    %v8224 = vld [vmem:[%s8216 + $0x1c] sm:$0xf]
    %v8233 = vunpack.c.l.b16 %v8217
    %v8234 = vunpack.c.l.b16 %v8218
    %v8235 = vunpack.c.l.b16 %v8219
    %v8236 = vunpack.c.l.b16 %v8220
    %v8237 = vunpack.c.l.b16 %v8221
    %v8238 = vunpack.c.l.b16 %v8222
    %v8239 = vunpack.c.l.b16 %v8223
    %v8240 = vunpack.c.l.b16 %v8224
    %v8241 = vpack.c.b16 %v8234, %v8233
    %v8242 = vpack.c.b16 %v8236, %v8235
    %v8243 = vpack.c.b16 %v8238, %v8237
    %v8244 = vpack.c.b16 %v8240, %v8239
    %8249 = vmatprep.subr.bf16.mxu0 0
    %8250 = vmatpush1.bf16.msra.mxu0 %v8241
    %8251 = vmatprep.subr.bf16.mxu0 0
    %8252 = vmatpush1.bf16.msra.mxu0 %v8242
    %8253 = vmatprep.subr.bf16.mxu0 0
    %8254 = vmatpush1.bf16.msra.mxu0 %v8243
    %8255 = vmatprep.subr.bf16.mxu0 0
    %8256 = vmatpush1.bf16.msra.mxu0 %v8244
    %8257 = vmatprep.subr.bf16.mxu0 0
    %8258 = vmatpush1.bf16.msra.mxu0 0
    %8259 = vmatprep.subr.bf16.mxu0 0
    %8260 = vmatpush1.bf16.msra.mxu0 0
    %8261 = vmatprep.subr.bf16.mxu0 0
    %8262 = vmatpush1.bf16.msra.mxu0 0
    %8263 = vmatprep.subr.bf16.mxu0 0
    %8264 = vmatpush1.bf16.msra.mxu0 0
    %8265 = vmatprep.subr.bf16.mxu0 0
    %8266 = vmatpush1.bf16.msra.mxu0 0
    %8267 = vmatprep.subr.bf16.mxu0 0
    %8268 = vmatpush1.bf16.msra.mxu0 0
    %8269 = vmatprep.subr.bf16.mxu0 0
    %8270 = vmatpush1.bf16.msra.mxu0 0
    %8271 = vmatprep.subr.bf16.mxu0 0
    %8272 = vmatpush1.bf16.msra.mxu0 0
    %8273 = vmatprep.subr.bf16.mxu0 0
    %8274 = vmatpush1.bf16.msra.mxu0 0
    %8275 = vmatprep.subr.bf16.mxu0 0
    %8276 = vmatpush1.bf16.msra.mxu0 0
    %8277 = vmatprep.subr.bf16.mxu0 0
    %8278 = vmatpush1.bf16.msra.mxu0 0
    %8279 = vmatprep.subr.bf16.mxu0 0
    %8280 = vmatpush1.bf16.msra.mxu0 0
    %8281 = vmatprep.mubr.bf16.mxu0 0
    %8282 = vmatmul.mubr.bf16.gmra.mrb[0].mxu0 %v7276
    %v8283 = vpop.f32.mrb[0].mxu0
    %v8284 = vadd.f32 0.0, %v8283
    %v8285 = vpop.f32.mrb[0].mxu0
    %v8286 = vpop.f32.mrb[0].mxu0
    %v8287 = vadd.f32 0.0, %v8286
    %v8288 = vpop.f32.mrb[0].mxu0
    %8289 = vmatprep.mubr.bf16.mxu0 0
    %8290 = vmatmul.mubr.bf16.gmra.mrb[0].mxu0 %v7279
    %v8291 = vpop.f32.mrb[0].mxu0
    %v8292 = vadd.f32 0.0, %v8291
    %v8293 = vpop.f32.mrb[0].mxu0
    %v8294 = vpop.f32.mrb[0].mxu0
    %v8295 = vadd.f32 0.0, %v8294
    %v8296 = vpop.f32.mrb[0].mxu0
    %8297 = vdwg.mxu0
    %v8298 = vmul.f32 %v8284, 0.25
    %v8299 = vmul.f32 %v8287, 0.25
    %v8300 = vmul.f32 %v8292, 0.25
    %v8301 = vmul.f32 %v8295, 0.25
    %s8302 = scalar_lea.vmem %s43, 192
    %v8303 = vld [vmem:[%s8302] sm:$0xf]
    %v8304 = vld [vmem:[%s8302 + $0x4] sm:$0xf]
    %v8305 = vld [vmem:[%s8302 + $0x8] sm:$0xf]
    %v8306 = vld [vmem:[%s8302 + $0xc] sm:$0xf]
    %v8307 = vld [vmem:[%s8302 + $0x10] sm:$0xf]
    %v8308 = vld [vmem:[%s8302 + $0x14] sm:$0xf]
    %v8309 = vld [vmem:[%s8302 + $0x18] sm:$0xf]
    %v8310 = vld [vmem:[%s8302 + $0x1c] sm:$0xf]
    %v8319 = vunpack.c.l.b16 %v8303
    %v8320 = vunpack.c.l.b16 %v8304
    %v8321 = vunpack.c.l.b16 %v8305
    %v8322 = vunpack.c.l.b16 %v8306
    %v8323 = vunpack.c.l.b16 %v8307
    %v8324 = vunpack.c.l.b16 %v8308
    %v8325 = vunpack.c.l.b16 %v8309
    %v8326 = vunpack.c.l.b16 %v8310
    %v8327 = vpack.c.b16 %v8320, %v8319
    %v8328 = vpack.c.b16 %v8322, %v8321
    %v8329 = vpack.c.b16 %v8324, %v8323
    %v8330 = vpack.c.b16 %v8326, %v8325
    %8335 = vmatprep.subr.bf16.mxu0 0
    %8336 = vmatpush1.bf16.msra.mxu0 %v8327
    %8337 = vmatprep.subr.bf16.mxu0 0
    %8338 = vmatpush1.bf16.msra.mxu0 %v8328
    %8339 = vmatprep.subr.bf16.mxu0 0
    %8340 = vmatpush1.bf16.msra.mxu0 %v8329
    %8341 = vmatprep.subr.bf16.mxu0 0
    %8342 = vmatpush1.bf16.msra.mxu0 %v8330
    %8343 = vmatprep.subr.bf16.mxu0 0
    %8344 = vmatpush1.bf16.msra.mxu0 0
    %8345 = vmatprep.subr.bf16.mxu0 0
    %8346 = vmatpush1.bf16.msra.mxu0 0
    %8347 = vmatprep.subr.bf16.mxu0 0
    %8348 = vmatpush1.bf16.msra.mxu0 0
    %8349 = vmatprep.subr.bf16.mxu0 0
    %8350 = vmatpush1.bf16.msra.mxu0 0
    %8351 = vmatprep.subr.bf16.mxu0 0
    %8352 = vmatpush1.bf16.msra.mxu0 0
    %8353 = vmatprep.subr.bf16.mxu0 0
    %8354 = vmatpush1.bf16.msra.mxu0 0
    %8355 = vmatprep.subr.bf16.mxu0 0
    %8356 = vmatpush1.bf16.msra.mxu0 0
    %8357 = vmatprep.subr.bf16.mxu0 0
    %8358 = vmatpush1.bf16.msra.mxu0 0
    %8359 = vmatprep.subr.bf16.mxu0 0
    %8360 = vmatpush1.bf16.msra.mxu0 0
    %8361 = vmatprep.subr.bf16.mxu0 0
    %8362 = vmatpush1.bf16.msra.mxu0 0
    %8363 = vmatprep.subr.bf16.mxu0 0
    %8364 = vmatpush1.bf16.msra.mxu0 0
    %8365 = vmatprep.subr.bf16.mxu0 0
    %8366 = vmatpush1.bf16.msra.mxu0 0
    %8367 = vmatprep.mubr.bf16.mxu0 0
    %8368 = vmatmul.mubr.bf16.gmra.mrb[0].mxu0 %v7276
    %v8369 = vpop.f32.mrb[0].mxu0
    %v8370 = vadd.f32 0.0, %v8369
    %v8371 = vpop.f32.mrb[0].mxu0
    %v8372 = vpop.f32.mrb[0].mxu0
    %v8373 = vadd.f32 0.0, %v8372
    %v8374 = vpop.f32.mrb[0].mxu0
    %8375 = vmatprep.mubr.bf16.mxu0 0
    %8376 = vmatmul.mubr.bf16.gmra.mrb[0].mxu0 %v7279
    %v8377 = vpop.f32.mrb[0].mxu0
    %v8378 = vadd.f32 0.0, %v8377
    %v8379 = vpop.f32.mrb[0].mxu0
    %v8380 = vpop.f32.mrb[0].mxu0
    %v8381 = vadd.f32 0.0, %v8380
    %v8382 = vpop.f32.mrb[0].mxu0
    %8383 = vdwg.mxu0
    %s8384 = scalar_lea.vmem %s45, 192
    %v8385 = vld [vmem:[%s8384] sm:$0xf]
    %v8386 = vld [vmem:[%s8384 + $0x4] sm:$0xf]
    %v8387 = vld [vmem:[%s8384 + $0x8] sm:$0xf]
    %v8388 = vld [vmem:[%s8384 + $0xc] sm:$0xf]
    %v8389 = vld [vmem:[%s8384 + $0x10] sm:$0xf]
    %v8390 = vld [vmem:[%s8384 + $0x14] sm:$0xf]
    %v8391 = vld [vmem:[%s8384 + $0x18] sm:$0xf]
    %v8392 = vld [vmem:[%s8384 + $0x1c] sm:$0xf]
    %v8401 = vunpack.c.l.b16 %v8385
    %v8402 = vunpack.c.l.b16 %v8386
    %v8403 = vunpack.c.l.b16 %v8387
    %v8404 = vunpack.c.l.b16 %v8388
    %v8405 = vunpack.c.l.b16 %v8389
    %v8406 = vunpack.c.l.b16 %v8390
    %v8407 = vunpack.c.l.b16 %v8391
    %v8408 = vunpack.c.l.b16 %v8392
    %v8409 = vpack.c.b16 %v8402, %v8401
    %v8410 = vpack.c.b16 %v8404, %v8403
    %v8411 = vpack.c.b16 %v8406, %v8405
    %v8412 = vpack.c.b16 %v8408, %v8407
    %8417 = vmatprep.subr.bf16.mxu0 0
    %8418 = vmatpush1.bf16.msra.mxu0 %v8409
    %8419 = vmatprep.subr.bf16.mxu0 0
    %8420 = vmatpush1.bf16.msra.mxu0 %v8410
    %8421 = vmatprep.subr.bf16.mxu0 0
    %8422 = vmatpush1.bf16.msra.mxu0 %v8411
    %8423 = vmatprep.subr.bf16.mxu0 0
    %8424 = vmatpush1.bf16.msra.mxu0 %v8412
    %8425 = vmatprep.subr.bf16.mxu0 0
    %8426 = vmatpush1.bf16.msra.mxu0 0
    %8427 = vmatprep.subr.bf16.mxu0 0
    %8428 = vmatpush1.bf16.msra.mxu0 0
    %8429 = vmatprep.subr.bf16.mxu0 0
    %8430 = vmatpush1.bf16.msra.mxu0 0
    %8431 = vmatprep.subr.bf16.mxu0 0
    %8432 = vmatpush1.bf16.msra.mxu0 0
    %8433 = vmatprep.subr.bf16.mxu0 0
    %8434 = vmatpush1.bf16.msra.mxu0 0
    %8435 = vmatprep.subr.bf16.mxu0 0
    %8436 = vmatpush1.bf16.msra.mxu0 0
    %8437 = vmatprep.subr.bf16.mxu0 0
    %8438 = vmatpush1.bf16.msra.mxu0 0
    %8439 = vmatprep.subr.bf16.mxu0 0
    %8440 = vmatpush1.bf16.msra.mxu0 0
    %8441 = vmatprep.subr.bf16.mxu0 0
    %8442 = vmatpush1.bf16.msra.mxu0 0
    %8443 = vmatprep.subr.bf16.mxu0 0
    %8444 = vmatpush1.bf16.msra.mxu0 0
    %8445 = vmatprep.subr.bf16.mxu0 0
    %8446 = vmatpush1.bf16.msra.mxu0 0
    %8447 = vmatprep.subr.bf16.mxu0 0
    %8448 = vmatpush1.bf16.msra.mxu0 0
    %8449 = vmatprep.mubr.bf16.mxu0 0
    %8450 = vmatmul.mubr.bf16.gmra.mrb[0].mxu0 %v7276
    %v8451 = vpop.f32.mrb[0].mxu0
    %v8452 = vadd.f32 0.0, %v8451
    %v8453 = vpop.f32.mrb[0].mxu0
    %v8454 = vpop.f32.mrb[0].mxu0
    %v8455 = vadd.f32 0.0, %v8454
    %v8456 = vpop.f32.mrb[0].mxu0
    %8457 = vmatprep.mubr.bf16.mxu0 0
    %8458 = vmatmul.mubr.bf16.gmra.mrb[0].mxu0 %v7279
    %v8459 = vpop.f32.mrb[0].mxu0
    %v8460 = vadd.f32 0.0, %v8459
    %v8461 = vpop.f32.mrb[0].mxu0
    %v8462 = vpop.f32.mrb[0].mxu0
    %v8463 = vadd.f32 0.0, %v8462
    %v8464 = vpop.f32.mrb[0].mxu0
    %8465 = vdwg.mxu0
    %v8466 = vpack.c.bf16 %v8299, %v8298
    %v8467 = vpack.c.bf16 %v8301, %v8300
    %v8468 = vpack.c.bf16 %v8373, %v8370
    %v8469 = vpack.c.bf16 %v8381, %v8378
    %v8471 = vsel %vm797, %v8466, 0
    %v8474 = vsel %vm797, %v8467, 0
    %v8477 = vsel %vm797, %v8468, 0
    %v8480 = vsel %vm797, %v8469, 0
    %8482 = vmatprep.subr.bf16.mxu0 0
    %8483 = vmatpush1.bf16.xpose.msra.mxu0 %v8477
    %8484 = vmatprep.subr.bf16.mxu0 0
    %8485 = vmatpush1.bf16.xpose.msra.mxu0 %v8480
    %8486 = vmatprep.subr.bf16.mxu0 0
    %8487 = vmatpush1.bf16.xpose.msra.mxu0 0
    %8488 = vmatprep.subr.bf16.mxu0 0
    %8489 = vmatpush1.bf16.xpose.msra.mxu0 0
    %8490 = vmatprep.subr.bf16.mxu0 0
    %8491 = vmatpush1.bf16.xpose.msra.mxu0 0
    %8492 = vmatprep.subr.bf16.mxu0 0
    %8493 = vmatpush1.bf16.xpose.msra.mxu0 0
    %8494 = vmatprep.subr.bf16.mxu0 0
    %8495 = vmatpush1.bf16.xpose.msra.mxu0 0
    %8496 = vmatprep.subr.bf16.mxu0 0
    %8497 = vmatpush1.bf16.xpose.msra.mxu0 0
    %8498 = vmatprep.subr.bf16.mxu0 0
    %8499 = vmatpush1.bf16.xpose.msra.mxu0 0
    %8500 = vmatprep.subr.bf16.mxu0 0
    %8501 = vmatpush1.bf16.xpose.msra.mxu0 0
    %8502 = vmatprep.subr.bf16.mxu0 0
    %8503 = vmatpush1.bf16.xpose.msra.mxu0 0
    %8504 = vmatprep.subr.bf16.mxu0 0
    %8505 = vmatpush1.bf16.xpose.msra.mxu0 0
    %8506 = vmatprep.subr.bf16.mxu0 0
    %8507 = vmatpush1.bf16.xpose.msra.mxu0 0
    %8508 = vmatprep.subr.bf16.mxu0 0
    %8509 = vmatpush1.bf16.xpose.msra.mxu0 0
    %8510 = vmatprep.subr.bf16.mxu0 0
    %8511 = vmatpush1.bf16.xpose.msra.mxu0 0
    %8512 = vmatprep.subr.bf16.mxu0 0
    %8513 = vmatpush1.bf16.xpose.msra.mxu0 0
    %8514 = vmatprep.mubr.bf16.mxu0 0
    %8515 = vmatmul.mubr.bf16.gmra.mrb[0].mxu0 %v8471
    %v8516 = vpop.f32.mrb[0].mxu0
    %v8517 = vadd.f32 %v4835, %v8516
    %v8518 = vpop.f32.mrb[0].mxu0
    %v8519 = vpop.f32.mrb[0].mxu0
    %v8520 = vadd.f32 %v4836, %v8519
    %v8521 = vpop.f32.mrb[0].mxu0
    %8522 = vmatprep.mubr.bf16.mxu0 0
    %8523 = vmatmul.mubr.bf16.gmra.mrb[0].mxu0 %v8474
    %v8524 = vpop.f32.mrb[0].mxu0
    %v8525 = vadd.f32 %v4837, %v8524
    %v8526 = vpop.f32.mrb[0].mxu0
    %v8527 = vpop.f32.mrb[0].mxu0
    %v8528 = vadd.f32 %v4838, %v8527
    %v8529 = vpop.f32.mrb[0].mxu0
    %8530 = vdwg.mxu0
    %v8531 = vsel %vm871, %v8517, -inf
    %8532 = vmax.xlane.f32.xlu0 %v8531
    %v8533 = vpop.xlane.xlu0 %8532
    %v8534 = vsel %vm871, %v8520, -inf
    %8535 = vmax.xlane.f32.xlu0 %v8534
    %v8536 = vpop.xlane.xlu0 %8535
    %v8537 = vsel %vm871, %v8525, -inf
    %8538 = vmax.xlane.f32.xlu0 %v8537
    %v8539 = vpop.xlane.xlu0 %8538
    %v8540 = vsel %vm871, %v8528, -inf
    %8541 = vmax.xlane.f32.xlu0 %v8540
    %v8542 = vpop.xlane.xlu0 %8541
    %v8543 = vsub.f32 %v8517, %v8533
    %v8544 = vsub.f32 %v8520, %v8536
    %v8545 = vsub.f32 %v8525, %v8539
    %v8546 = vsub.f32 %v8528, %v8542
    %v8547 = vmul.f32 %v8543, 1.442695
    %v8548 = vpow.pop %v8547
    %v8549 = vmul.f32 %v8544, 1.442695
    %v8550 = vpow.pop %v8549
    %v8551 = vmul.f32 %v8545, 1.442695
    %v8552 = vpow.pop %v8551
    %v8553 = vmul.f32 %v8546, 1.442695
    %v8554 = vpow.pop %v8553
    %v8555 = vsel %vm871, %v8548, 0.0
    %8556 = vadd.xlane.f32.xlu0 %v8555
    %v8557 = vpop.xlane.xlu0 %8556
    %v8558 = vsel %vm871, %v8550, 0.0
    %8559 = vadd.xlane.f32.xlu0 %v8558
    %v8560 = vpop.xlane.xlu0 %8559
    %v8561 = vsel %vm871, %v8552, 0.0
    %8562 = vadd.xlane.f32.xlu0 %v8561
    %v8563 = vpop.xlane.xlu0 %8562
    %v8564 = vsel %vm871, %v8554, 0.0
    %8565 = vadd.xlane.f32.xlu0 %v8564
    %v8566 = vpop.xlane.xlu0 %8565
    %v8567 = vrcp.pop %v8557
    %v8568 = vrcp.pop %v8560
    %v8569 = vrcp.pop %v8563
    %v8570 = vrcp.pop %v8566
    %v8571 = vmul.f32 %v8548, %v8567
    %v8572 = vmul.f32 %v8550, %v8568
    %v8573 = vmul.f32 %v8552, %v8569
    %v8574 = vmul.f32 %v8554, %v8570
    %v8575 = vpack.c.bf16 %v8572, %v8571
    %v8576 = vpack.c.bf16 %v8574, %v8573
    %v8577 = vpack.c.bf16 %v8455, %v8452
    %v8578 = vpack.c.bf16 %v8463, %v8460
    %v8580 = vsel %vm871, %v8575, 0
    %v8583 = vsel %vm871, %v8576, 0
    %8585 = vmatprep.subr.bf16.mxu0 0
    %8586 = vmatpush1.bf16.msra.mxu0 %v8577
    %8587 = vmatprep.subr.bf16.mxu0 0
    %8588 = vmatpush1.bf16.msra.mxu0 %v8578
    %8589 = vmatprep.subr.bf16.mxu0 0
    %8590 = vmatpush1.bf16.msra.mxu0 0
    %8591 = vmatprep.subr.bf16.mxu0 0
    %8592 = vmatpush1.bf16.msra.mxu0 0
    %8593 = vmatprep.subr.bf16.mxu0 0
    %8594 = vmatpush1.bf16.msra.mxu0 0
    %8595 = vmatprep.subr.bf16.mxu0 0
    %8596 = vmatpush1.bf16.msra.mxu0 0
    %8597 = vmatprep.subr.bf16.mxu0 0
    %8598 = vmatpush1.bf16.msra.mxu0 0
    %8599 = vmatprep.subr.bf16.mxu0 0
    %8600 = vmatpush1.bf16.msra.mxu0 0
    %8601 = vmatprep.subr.bf16.mxu0 0
    %8602 = vmatpush1.bf16.msra.mxu0 0
    %8603 = vmatprep.subr.bf16.mxu0 0
    %8604 = vmatpush1.bf16.msra.mxu0 0
    %8605 = vmatprep.subr.bf16.mxu0 0
    %8606 = vmatpush1.bf16.msra.mxu0 0
    %8607 = vmatprep.subr.bf16.mxu0 0
    %8608 = vmatpush1.bf16.msra.mxu0 0
    %8609 = vmatprep.subr.bf16.mxu0 0
    %8610 = vmatpush1.bf16.msra.mxu0 0
    %8611 = vmatprep.subr.bf16.mxu0 0
    %8612 = vmatpush1.bf16.msra.mxu0 0
    %8613 = vmatprep.subr.bf16.mxu0 0
    %8614 = vmatpush1.bf16.msra.mxu0 0
    %8615 = vmatprep.subr.bf16.mxu0 0
    %8616 = vmatpush1.bf16.msra.mxu0 0
    %8617 = vmatprep.mubr.bf16.mxu0 0
    %8618 = vmatmul.mubr.bf16.gmra.mrb[0].mxu0 %v8580
    %v8619 = vpop.f32.mrb[0].mxu0
    %v8620 = vadd.f32 0.0, %v8619
    %v8621 = vpop.f32.mrb[0].mxu0
    %v8622 = vpop.f32.mrb[0].mxu0
    %v8623 = vadd.f32 0.0, %v8622
    %v8624 = vpop.f32.mrb[0].mxu0
    %8625 = vmatprep.mubr.bf16.mxu0 0
    %8626 = vmatmul.mubr.bf16.gmra.mrb[0].mxu0 %v8583
    %v8627 = vpop.f32.mrb[0].mxu0
    %v8628 = vadd.f32 0.0, %v8627
    %v8629 = vpop.f32.mrb[0].mxu0
    %v8630 = vpop.f32.mrb[0].mxu0
    %v8631 = vadd.f32 0.0, %v8630
    %v8632 = vpop.f32.mrb[0].mxu0
    %8633 = vdwg.mxu0
    %v8634 = vpack.c.bf16 %v8623, %v8620
    %v8635 = vpack.c.bf16 %v8631, %v8628
    %s8636 = scalar_lea.vmem %s47, 48
    %v8637 = vld [vmem:[%s8636] sm:$0xf]
    %v8638 = vld [vmem:[%s8636 + $0x4] sm:$0xf]
    %v8641 = vunpack.c.l.b16 %v8637
    %v8642 = vunpack.c.l.b16 %v8638
    %v8643 = vpack.c.b16 %v8642, %v8641
    %v8646 = vsel %vm797, %v8634, 0
    %v8649 = vsel %vm797, %v8635, 0
    %8651 = vmatprep.subr.bf16.mxu0 0
    %8652 = vmatpush1.bf16.msra.mxu0 %v8643
    %8653 = vmatprep.subr.bf16.mxu0 0
    %8654 = vmatpush1.bf16.msra.mxu0 0
    %8655 = vmatprep.subr.bf16.mxu0 0
    %8656 = vmatpush1.bf16.msra.mxu0 0
    %8657 = vmatprep.subr.bf16.mxu0 0
    %8658 = vmatpush1.bf16.msra.mxu0 0
    %8659 = vmatprep.subr.bf16.mxu0 0
    %8660 = vmatpush1.bf16.msra.mxu0 0
    %8661 = vmatprep.subr.bf16.mxu0 0
    %8662 = vmatpush1.bf16.msra.mxu0 0
    %8663 = vmatprep.subr.bf16.mxu0 0
    %8664 = vmatpush1.bf16.msra.mxu0 0
    %8665 = vmatprep.subr.bf16.mxu0 0
    %8666 = vmatpush1.bf16.msra.mxu0 0
    %8667 = vmatprep.subr.bf16.mxu0 0
    %8668 = vmatpush1.bf16.msra.mxu0 0
    %8669 = vmatprep.subr.bf16.mxu0 0
    %8670 = vmatpush1.bf16.msra.mxu0 0
    %8671 = vmatprep.subr.bf16.mxu0 0
    %8672 = vmatpush1.bf16.msra.mxu0 0
    %8673 = vmatprep.subr.bf16.mxu0 0
    %8674 = vmatpush1.bf16.msra.mxu0 0
    %8675 = vmatprep.subr.bf16.mxu0 0
    %8676 = vmatpush1.bf16.msra.mxu0 0
    %8677 = vmatprep.subr.bf16.mxu0 0
    %8678 = vmatpush1.bf16.msra.mxu0 0
    %8679 = vmatprep.subr.bf16.mxu0 0
    %8680 = vmatpush1.bf16.msra.mxu0 0
    %8681 = vmatprep.subr.bf16.mxu0 0
    %8682 = vmatpush1.bf16.msra.mxu0 0
    %8683 = vmatprep.mubr.bf16.mxu0 0
    %8684 = vmatmul.mubr.bf16.gmra.mrb[0].mxu0 %v8646
    %v8685 = vpop.f32.mrb[0].mxu0
    %v8686 = vadd.f32 0.0, %v8685
    %v8687 = vpop.f32.mrb[0].mxu0
    %v8688 = vpop.f32.mrb[0].mxu0
    %v8689 = vadd.f32 0.0, %v8688
    %v8690 = vpop.f32.mrb[0].mxu0
    %8691 = vmatprep.mubr.bf16.mxu0 0
    %8692 = vmatmul.mubr.bf16.gmra.mrb[0].mxu0 %v8649
    %v8693 = vpop.f32.mrb[0].mxu0
    %v8694 = vadd.f32 0.0, %v8693
    %v8695 = vpop.f32.mrb[0].mxu0
    %v8696 = vpop.f32.mrb[0].mxu0
    %v8697 = vadd.f32 0.0, %v8696
    %v8698 = vpop.f32.mrb[0].mxu0
    %8699 = vdwg.mxu0
    %v8700 = vadd.f32 %v8202, %v8686
    %v8701 = vadd.f32 %v8205, %v8689
    %v8702 = vadd.f32 %v8210, %v8694
    %v8703 = vadd.f32 %v8213, %v8697
    %s8704 = scalar_lea.vmem %s41, 224
    %v8705 = vld [vmem:[%s8704] sm:$0xf]
    %v8706 = vld [vmem:[%s8704 + $0x4] sm:$0xf]
    %v8707 = vld [vmem:[%s8704 + $0x8] sm:$0xf]
    %v8708 = vld [vmem:[%s8704 + $0xc] sm:$0xf]
    %v8709 = vld [vmem:[%s8704 + $0x10] sm:$0xf]
    %v8710 = vld [vmem:[%s8704 + $0x14] sm:$0xf]
    %v8711 = vld [vmem:[%s8704 + $0x18] sm:$0xf]
    %v8712 = vld [vmem:[%s8704 + $0x1c] sm:$0xf]
    %v8721 = vunpack.c.l.b16 %v8705
    %v8722 = vunpack.c.l.b16 %v8706
    %v8723 = vunpack.c.l.b16 %v8707
    %v8724 = vunpack.c.l.b16 %v8708
    %v8725 = vunpack.c.l.b16 %v8709
    %v8726 = vunpack.c.l.b16 %v8710
    %v8727 = vunpack.c.l.b16 %v8711
    %v8728 = vunpack.c.l.b16 %v8712
    %v8729 = vpack.c.b16 %v8722, %v8721
    %v8730 = vpack.c.b16 %v8724, %v8723
    %v8731 = vpack.c.b16 %v8726, %v8725
    %v8732 = vpack.c.b16 %v8728, %v8727
    %8737 = vmatprep.subr.bf16.mxu0 0
    %8738 = vmatpush1.bf16.msra.mxu0 %v8729
    %8739 = vmatprep.subr.bf16.mxu0 0
    %8740 = vmatpush1.bf16.msra.mxu0 %v8730
    %8741 = vmatprep.subr.bf16.mxu0 0
    %8742 = vmatpush1.bf16.msra.mxu0 %v8731
    %8743 = vmatprep.subr.bf16.mxu0 0
    %8744 = vmatpush1.bf16.msra.mxu0 %v8732
    %8745 = vmatprep.subr.bf16.mxu0 0
    %8746 = vmatpush1.bf16.msra.mxu0 0
    %8747 = vmatprep.subr.bf16.mxu0 0
    %8748 = vmatpush1.bf16.msra.mxu0 0
    %8749 = vmatprep.subr.bf16.mxu0 0
    %8750 = vmatpush1.bf16.msra.mxu0 0
    %8751 = vmatprep.subr.bf16.mxu0 0
    %8752 = vmatpush1.bf16.msra.mxu0 0
    %8753 = vmatprep.subr.bf16.mxu0 0
    %8754 = vmatpush1.bf16.msra.mxu0 0
    %8755 = vmatprep.subr.bf16.mxu0 0
    %8756 = vmatpush1.bf16.msra.mxu0 0
    %8757 = vmatprep.subr.bf16.mxu0 0
    %8758 = vmatpush1.bf16.msra.mxu0 0
    %8759 = vmatprep.subr.bf16.mxu0 0
    %8760 = vmatpush1.bf16.msra.mxu0 0
    %8761 = vmatprep.subr.bf16.mxu0 0
    %8762 = vmatpush1.bf16.msra.mxu0 0
    %8763 = vmatprep.subr.bf16.mxu0 0
    %8764 = vmatpush1.bf16.msra.mxu0 0
    %8765 = vmatprep.subr.bf16.mxu0 0
    %8766 = vmatpush1.bf16.msra.mxu0 0
    %8767 = vmatprep.subr.bf16.mxu0 0
    %8768 = vmatpush1.bf16.msra.mxu0 0
    %8769 = vmatprep.mubr.bf16.mxu0 0
    %8770 = vmatmul.mubr.bf16.gmra.mrb[0].mxu0 %v7276
    %v8771 = vpop.f32.mrb[0].mxu0
    %v8772 = vadd.f32 0.0, %v8771
    %v8773 = vpop.f32.mrb[0].mxu0
    %v8774 = vpop.f32.mrb[0].mxu0
    %v8775 = vadd.f32 0.0, %v8774
    %v8776 = vpop.f32.mrb[0].mxu0
    %8777 = vmatprep.mubr.bf16.mxu0 0
    %8778 = vmatmul.mubr.bf16.gmra.mrb[0].mxu0 %v7279
    %v8779 = vpop.f32.mrb[0].mxu0
    %v8780 = vadd.f32 0.0, %v8779
    %v8781 = vpop.f32.mrb[0].mxu0
    %v8782 = vpop.f32.mrb[0].mxu0
    %v8783 = vadd.f32 0.0, %v8782
    %v8784 = vpop.f32.mrb[0].mxu0
    %8785 = vdwg.mxu0
    %v8786 = vmul.f32 %v8772, 0.25
    %v8787 = vmul.f32 %v8775, 0.25
    %v8788 = vmul.f32 %v8780, 0.25
    %v8789 = vmul.f32 %v8783, 0.25
    %s8790 = scalar_lea.vmem %s43, 224
    %v8791 = vld [vmem:[%s8790] sm:$0xf]
    %v8792 = vld [vmem:[%s8790 + $0x4] sm:$0xf]
    %v8793 = vld [vmem:[%s8790 + $0x8] sm:$0xf]
    %v8794 = vld [vmem:[%s8790 + $0xc] sm:$0xf]
    %v8795 = vld [vmem:[%s8790 + $0x10] sm:$0xf]
    %v8796 = vld [vmem:[%s8790 + $0x14] sm:$0xf]
    %v8797 = vld [vmem:[%s8790 + $0x18] sm:$0xf]
    %v8798 = vld [vmem:[%s8790 + $0x1c] sm:$0xf]
    %v8807 = vunpack.c.l.b16 %v8791
    %v8808 = vunpack.c.l.b16 %v8792
    %v8809 = vunpack.c.l.b16 %v8793
    %v8810 = vunpack.c.l.b16 %v8794
    %v8811 = vunpack.c.l.b16 %v8795
    %v8812 = vunpack.c.l.b16 %v8796
    %v8813 = vunpack.c.l.b16 %v8797
    %v8814 = vunpack.c.l.b16 %v8798
    %v8815 = vpack.c.b16 %v8808, %v8807
    %v8816 = vpack.c.b16 %v8810, %v8809
    %v8817 = vpack.c.b16 %v8812, %v8811
    %v8818 = vpack.c.b16 %v8814, %v8813
    %8823 = vmatprep.subr.bf16.mxu0 0
    %8824 = vmatpush1.bf16.msra.mxu0 %v8815
    %8825 = vmatprep.subr.bf16.mxu0 0
    %8826 = vmatpush1.bf16.msra.mxu0 %v8816
    %8827 = vmatprep.subr.bf16.mxu0 0
    %8828 = vmatpush1.bf16.msra.mxu0 %v8817
    %8829 = vmatprep.subr.bf16.mxu0 0
    %8830 = vmatpush1.bf16.msra.mxu0 %v8818
    %8831 = vmatprep.subr.bf16.mxu0 0
    %8832 = vmatpush1.bf16.msra.mxu0 0
    %8833 = vmatprep.subr.bf16.mxu0 0
    %8834 = vmatpush1.bf16.msra.mxu0 0
    %8835 = vmatprep.subr.bf16.mxu0 0
    %8836 = vmatpush1.bf16.msra.mxu0 0
    %8837 = vmatprep.subr.bf16.mxu0 0
    %8838 = vmatpush1.bf16.msra.mxu0 0
    %8839 = vmatprep.subr.bf16.mxu0 0
    %8840 = vmatpush1.bf16.msra.mxu0 0
    %8841 = vmatprep.subr.bf16.mxu0 0
    %8842 = vmatpush1.bf16.msra.mxu0 0
    %8843 = vmatprep.subr.bf16.mxu0 0
    %8844 = vmatpush1.bf16.msra.mxu0 0
    %8845 = vmatprep.subr.bf16.mxu0 0
    %8846 = vmatpush1.bf16.msra.mxu0 0
    %8847 = vmatprep.subr.bf16.mxu0 0
    %8848 = vmatpush1.bf16.msra.mxu0 0
    %8849 = vmatprep.subr.bf16.mxu0 0
    %8850 = vmatpush1.bf16.msra.mxu0 0
    %8851 = vmatprep.subr.bf16.mxu0 0
    %8852 = vmatpush1.bf16.msra.mxu0 0
    %8853 = vmatprep.subr.bf16.mxu0 0
    %8854 = vmatpush1.bf16.msra.mxu0 0
    %8855 = vmatprep.mubr.bf16.mxu0 0
    %8856 = vmatmul.mubr.bf16.gmra.mrb[0].mxu0 %v7276
    %v8857 = vpop.f32.mrb[0].mxu0
    %v8858 = vadd.f32 0.0, %v8857
    %v8859 = vpop.f32.mrb[0].mxu0
    %v8860 = vpop.f32.mrb[0].mxu0
    %v8861 = vadd.f32 0.0, %v8860
    %v8862 = vpop.f32.mrb[0].mxu0
    %8863 = vmatprep.mubr.bf16.mxu0 0
    %8864 = vmatmul.mubr.bf16.gmra.mrb[0].mxu0 %v7279
    %v8865 = vpop.f32.mrb[0].mxu0
    %v8866 = vadd.f32 0.0, %v8865
    %v8867 = vpop.f32.mrb[0].mxu0
    %v8868 = vpop.f32.mrb[0].mxu0
    %v8869 = vadd.f32 0.0, %v8868
    %v8870 = vpop.f32.mrb[0].mxu0
    %8871 = vdwg.mxu0
    %s8872 = scalar_lea.vmem %s45, 224
    %v8873 = vld [vmem:[%s8872] sm:$0xf]
    %v8874 = vld [vmem:[%s8872 + $0x4] sm:$0xf]
    %v8875 = vld [vmem:[%s8872 + $0x8] sm:$0xf]
    %v8876 = vld [vmem:[%s8872 + $0xc] sm:$0xf]
    %v8877 = vld [vmem:[%s8872 + $0x10] sm:$0xf]
    %v8878 = vld [vmem:[%s8872 + $0x14] sm:$0xf]
    %v8879 = vld [vmem:[%s8872 + $0x18] sm:$0xf]
    %v8880 = vld [vmem:[%s8872 + $0x1c] sm:$0xf]
    %v8889 = vunpack.c.l.b16 %v8873
    %v8890 = vunpack.c.l.b16 %v8874
    %v8891 = vunpack.c.l.b16 %v8875
    %v8892 = vunpack.c.l.b16 %v8876
    %v8893 = vunpack.c.l.b16 %v8877
    %v8894 = vunpack.c.l.b16 %v8878
    %v8895 = vunpack.c.l.b16 %v8879
    %v8896 = vunpack.c.l.b16 %v8880
    %v8897 = vpack.c.b16 %v8890, %v8889
    %v8898 = vpack.c.b16 %v8892, %v8891
    %v8899 = vpack.c.b16 %v8894, %v8893
    %v8900 = vpack.c.b16 %v8896, %v8895
    %8905 = vmatprep.subr.bf16.mxu0 0
    %8906 = vmatpush1.bf16.msra.mxu0 %v8897
    %8907 = vmatprep.subr.bf16.mxu0 0
    %8908 = vmatpush1.bf16.msra.mxu0 %v8898
    %8909 = vmatprep.subr.bf16.mxu0 0
    %8910 = vmatpush1.bf16.msra.mxu0 %v8899
    %8911 = vmatprep.subr.bf16.mxu0 0
    %8912 = vmatpush1.bf16.msra.mxu0 %v8900
    %8913 = vmatprep.subr.bf16.mxu0 0
    %8914 = vmatpush1.bf16.msra.mxu0 0
    %8915 = vmatprep.subr.bf16.mxu0 0
    %8916 = vmatpush1.bf16.msra.mxu0 0
    %8917 = vmatprep.subr.bf16.mxu0 0
    %8918 = vmatpush1.bf16.msra.mxu0 0
    %8919 = vmatprep.subr.bf16.mxu0 0
    %8920 = vmatpush1.bf16.msra.mxu0 0
    %8921 = vmatprep.subr.bf16.mxu0 0
    %8922 = vmatpush1.bf16.msra.mxu0 0
    %8923 = vmatprep.subr.bf16.mxu0 0
    %8924 = vmatpush1.bf16.msra.mxu0 0
    %8925 = vmatprep.subr.bf16.mxu0 0
    %8926 = vmatpush1.bf16.msra.mxu0 0
    %8927 = vmatprep.subr.bf16.mxu0 0
    %8928 = vmatpush1.bf16.msra.mxu0 0
    %8929 = vmatprep.subr.bf16.mxu0 0
    %8930 = vmatpush1.bf16.msra.mxu0 0
    %8931 = vmatprep.subr.bf16.mxu0 0
    %8932 = vmatpush1.bf16.msra.mxu0 0
    %8933 = vmatprep.subr.bf16.mxu0 0
    %8934 = vmatpush1.bf16.msra.mxu0 0
    %8935 = vmatprep.subr.bf16.mxu0 0
    %8936 = vmatpush1.bf16.msra.mxu0 0
    %8937 = vmatprep.mubr.bf16.mxu0 0
    %8938 = vmatmul.mubr.bf16.gmra.mrb[0].mxu0 %v7276
    %v8939 = vpop.f32.mrb[0].mxu0
    %v8940 = vadd.f32 0.0, %v8939
    %v8941 = vpop.f32.mrb[0].mxu0
    %v8942 = vpop.f32.mrb[0].mxu0
    %v8943 = vadd.f32 0.0, %v8942
    %v8944 = vpop.f32.mrb[0].mxu0
    %8945 = vmatprep.mubr.bf16.mxu0 0
    %8946 = vmatmul.mubr.bf16.gmra.mrb[0].mxu0 %v7279
    %v8947 = vpop.f32.mrb[0].mxu0
    %v8948 = vadd.f32 0.0, %v8947
    %v8949 = vpop.f32.mrb[0].mxu0
    %v8950 = vpop.f32.mrb[0].mxu0
    %v8951 = vadd.f32 0.0, %v8950
    %v8952 = vpop.f32.mrb[0].mxu0
    %8953 = vdwg.mxu0
    %v8954 = vpack.c.bf16 %v8787, %v8786
    %v8955 = vpack.c.bf16 %v8789, %v8788
    %v8956 = vpack.c.bf16 %v8861, %v8858
    %v8957 = vpack.c.bf16 %v8869, %v8866
    %v8959 = vsel %vm797, %v8954, 0
    %v8962 = vsel %vm797, %v8955, 0
    %v8965 = vsel %vm797, %v8956, 0
    %v8968 = vsel %vm797, %v8957, 0
    %8970 = vmatprep.subr.bf16.mxu0 0
    %8971 = vmatpush1.bf16.xpose.msra.mxu0 %v8965
    %8972 = vmatprep.subr.bf16.mxu0 0
    %8973 = vmatpush1.bf16.xpose.msra.mxu0 %v8968
    %8974 = vmatprep.subr.bf16.mxu0 0
    %8975 = vmatpush1.bf16.xpose.msra.mxu0 0
    %8976 = vmatprep.subr.bf16.mxu0 0
    %8977 = vmatpush1.bf16.xpose.msra.mxu0 0
    %8978 = vmatprep.subr.bf16.mxu0 0
    %8979 = vmatpush1.bf16.xpose.msra.mxu0 0
    %8980 = vmatprep.subr.bf16.mxu0 0
    %8981 = vmatpush1.bf16.xpose.msra.mxu0 0
    %8982 = vmatprep.subr.bf16.mxu0 0
    %8983 = vmatpush1.bf16.xpose.msra.mxu0 0
    %8984 = vmatprep.subr.bf16.mxu0 0
    %8985 = vmatpush1.bf16.xpose.msra.mxu0 0
    %8986 = vmatprep.subr.bf16.mxu0 0
    %8987 = vmatpush1.bf16.xpose.msra.mxu0 0
    %8988 = vmatprep.subr.bf16.mxu0 0
    %8989 = vmatpush1.bf16.xpose.msra.mxu0 0
    %8990 = vmatprep.subr.bf16.mxu0 0
    %8991 = vmatpush1.bf16.xpose.msra.mxu0 0
    %8992 = vmatprep.subr.bf16.mxu0 0
    %8993 = vmatpush1.bf16.xpose.msra.mxu0 0
    %8994 = vmatprep.subr.bf16.mxu0 0
    %8995 = vmatpush1.bf16.xpose.msra.mxu0 0
    %8996 = vmatprep.subr.bf16.mxu0 0
    %8997 = vmatpush1.bf16.xpose.msra.mxu0 0
    %8998 = vmatprep.subr.bf16.mxu0 0
    %8999 = vmatpush1.bf16.xpose.msra.mxu0 0
    %9000 = vmatprep.subr.bf16.mxu0 0
    %9001 = vmatpush1.bf16.xpose.msra.mxu0 0
    %9002 = vmatprep.mubr.bf16.mxu0 0
    %9003 = vmatmul.mubr.bf16.gmra.mrb[0].mxu0 %v8959
    %v9004 = vpop.f32.mrb[0].mxu0
    %v9005 = vadd.f32 %v4835, %v9004
    %v9006 = vpop.f32.mrb[0].mxu0
    %v9007 = vpop.f32.mrb[0].mxu0
    %v9008 = vadd.f32 %v4836, %v9007
    %v9009 = vpop.f32.mrb[0].mxu0
    %9010 = vmatprep.mubr.bf16.mxu0 0
    %9011 = vmatmul.mubr.bf16.gmra.mrb[0].mxu0 %v8962
    %v9012 = vpop.f32.mrb[0].mxu0
    %v9013 = vadd.f32 %v4837, %v9012
    %v9014 = vpop.f32.mrb[0].mxu0
    %v9015 = vpop.f32.mrb[0].mxu0
    %v9016 = vadd.f32 %v4838, %v9015
    %v9017 = vpop.f32.mrb[0].mxu0
    %9018 = vdwg.mxu0
    %v9019 = vsel %vm871, %v9005, -inf
    %9020 = vmax.xlane.f32.xlu0 %v9019
    %v9021 = vpop.xlane.xlu0 %9020
    %v9022 = vsel %vm871, %v9008, -inf
    %9023 = vmax.xlane.f32.xlu0 %v9022
    %v9024 = vpop.xlane.xlu0 %9023
    %v9025 = vsel %vm871, %v9013, -inf
    %9026 = vmax.xlane.f32.xlu0 %v9025
    %v9027 = vpop.xlane.xlu0 %9026
    %v9028 = vsel %vm871, %v9016, -inf
    %9029 = vmax.xlane.f32.xlu0 %v9028
    %v9030 = vpop.xlane.xlu0 %9029
    %v9031 = vsub.f32 %v9005, %v9021
    %v9032 = vsub.f32 %v9008, %v9024
    %v9033 = vsub.f32 %v9013, %v9027
    %v9034 = vsub.f32 %v9016, %v9030
    %v9035 = vmul.f32 %v9031, 1.442695
    %v9036 = vpow.pop %v9035
    %v9037 = vmul.f32 %v9032, 1.442695
    %v9038 = vpow.pop %v9037
    %v9039 = vmul.f32 %v9033, 1.442695
    %v9040 = vpow.pop %v9039
    %v9041 = vmul.f32 %v9034, 1.442695
    %v9042 = vpow.pop %v9041
    %v9043 = vsel %vm871, %v9036, 0.0
    %9044 = vadd.xlane.f32.xlu0 %v9043
    %v9045 = vpop.xlane.xlu0 %9044
    %v9046 = vsel %vm871, %v9038, 0.0
    %9047 = vadd.xlane.f32.xlu0 %v9046
    %v9048 = vpop.xlane.xlu0 %9047
    %v9049 = vsel %vm871, %v9040, 0.0
    %9050 = vadd.xlane.f32.xlu0 %v9049
    %v9051 = vpop.xlane.xlu0 %9050
    %v9052 = vsel %vm871, %v9042, 0.0
    %9053 = vadd.xlane.f32.xlu0 %v9052
    %v9054 = vpop.xlane.xlu0 %9053
    %v9055 = vrcp.pop %v9045
    %v9056 = vrcp.pop %v9048
    %v9057 = vrcp.pop %v9051
    %v9058 = vrcp.pop %v9054
    %v9059 = vmul.f32 %v9036, %v9055
    %v9060 = vmul.f32 %v9038, %v9056
    %v9061 = vmul.f32 %v9040, %v9057
    %v9062 = vmul.f32 %v9042, %v9058
    %v9063 = vpack.c.bf16 %v9060, %v9059
    %v9064 = vpack.c.bf16 %v9062, %v9061
    %v9065 = vpack.c.bf16 %v8943, %v8940
    %v9066 = vpack.c.bf16 %v8951, %v8948
    %v9068 = vsel %vm871, %v9063, 0
    %v9071 = vsel %vm871, %v9064, 0
    %9073 = vmatprep.subr.bf16.mxu0 0
    %9074 = vmatpush1.bf16.msra.mxu0 %v9065
    %9075 = vmatprep.subr.bf16.mxu0 0
    %9076 = vmatpush1.bf16.msra.mxu0 %v9066
    %9077 = vmatprep.subr.bf16.mxu0 0
    %9078 = vmatpush1.bf16.msra.mxu0 0
    %9079 = vmatprep.subr.bf16.mxu0 0
    %9080 = vmatpush1.bf16.msra.mxu0 0
    %9081 = vmatprep.subr.bf16.mxu0 0
    %9082 = vmatpush1.bf16.msra.mxu0 0
    %9083 = vmatprep.subr.bf16.mxu0 0
    %9084 = vmatpush1.bf16.msra.mxu0 0
    %9085 = vmatprep.subr.bf16.mxu0 0
    %9086 = vmatpush1.bf16.msra.mxu0 0
    %9087 = vmatprep.subr.bf16.mxu0 0
    %9088 = vmatpush1.bf16.msra.mxu0 0
    %9089 = vmatprep.subr.bf16.mxu0 0
    %9090 = vmatpush1.bf16.msra.mxu0 0
    %9091 = vmatprep.subr.bf16.mxu0 0
    %9092 = vmatpush1.bf16.msra.mxu0 0
    %9093 = vmatprep.subr.bf16.mxu0 0
    %9094 = vmatpush1.bf16.msra.mxu0 0
    %9095 = vmatprep.subr.bf16.mxu0 0
    %9096 = vmatpush1.bf16.msra.mxu0 0
    %9097 = vmatprep.subr.bf16.mxu0 0
    %9098 = vmatpush1.bf16.msra.mxu0 0
    %9099 = vmatprep.subr.bf16.mxu0 0
    %9100 = vmatpush1.bf16.msra.mxu0 0
    %9101 = vmatprep.subr.bf16.mxu0 0
    %9102 = vmatpush1.bf16.msra.mxu0 0
    %9103 = vmatprep.subr.bf16.mxu0 0
    %9104 = vmatpush1.bf16.msra.mxu0 0
    %9105 = vmatprep.mubr.bf16.mxu0 0
    %9106 = vmatmul.mubr.bf16.gmra.mrb[0].mxu0 %v9068
    %v9107 = vpop.f32.mrb[0].mxu0
    %v9108 = vadd.f32 0.0, %v9107
    %v9109 = vpop.f32.mrb[0].mxu0
    %v9110 = vpop.f32.mrb[0].mxu0
    %v9111 = vadd.f32 0.0, %v9110
    %v9112 = vpop.f32.mrb[0].mxu0
    %9113 = vmatprep.mubr.bf16.mxu0 0
    %9114 = vmatmul.mubr.bf16.gmra.mrb[0].mxu0 %v9071
    %v9115 = vpop.f32.mrb[0].mxu0
    %v9116 = vadd.f32 0.0, %v9115
    %v9117 = vpop.f32.mrb[0].mxu0
    %v9118 = vpop.f32.mrb[0].mxu0
    %v9119 = vadd.f32 0.0, %v9118
    %v9120 = vpop.f32.mrb[0].mxu0
    %9121 = vdwg.mxu0
    %v9122 = vpack.c.bf16 %v9111, %v9108
    %v9123 = vpack.c.bf16 %v9119, %v9116
    %s9124 = scalar_lea.vmem %s47, 56
    %v9125 = vld [vmem:[%s9124] sm:$0xf]
    %v9126 = vld [vmem:[%s9124 + $0x4] sm:$0xf]
    %v9129 = vunpack.c.l.b16 %v9125
    %v9130 = vunpack.c.l.b16 %v9126
    %v9131 = vpack.c.b16 %v9130, %v9129
    %v9134 = vsel %vm797, %v9122, 0
    %v9137 = vsel %vm797, %v9123, 0
    %9139 = vmatprep.subr.bf16.mxu0 0
    %9140 = vmatpush1.bf16.msra.mxu0 %v9131
    %9141 = vmatprep.subr.bf16.mxu0 0
    %9142 = vmatpush1.bf16.msra.mxu0 0
    %9143 = vmatprep.subr.bf16.mxu0 0
    %9144 = vmatpush1.bf16.msra.mxu0 0
    %9145 = vmatprep.subr.bf16.mxu0 0
    %9146 = vmatpush1.bf16.msra.mxu0 0
    %9147 = vmatprep.subr.bf16.mxu0 0
    %9148 = vmatpush1.bf16.msra.mxu0 0
    %9149 = vmatprep.subr.bf16.mxu0 0
    %9150 = vmatpush1.bf16.msra.mxu0 0
    %9151 = vmatprep.subr.bf16.mxu0 0
    %9152 = vmatpush1.bf16.msra.mxu0 0
    %9153 = vmatprep.subr.bf16.mxu0 0
    %9154 = vmatpush1.bf16.msra.mxu0 0
    %9155 = vmatprep.subr.bf16.mxu0 0
    %9156 = vmatpush1.bf16.msra.mxu0 0
    %9157 = vmatprep.subr.bf16.mxu0 0
    %9158 = vmatpush1.bf16.msra.mxu0 0
    %9159 = vmatprep.subr.bf16.mxu0 0
    %9160 = vmatpush1.bf16.msra.mxu0 0
    %9161 = vmatprep.subr.bf16.mxu0 0
    %9162 = vmatpush1.bf16.msra.mxu0 0
    %9163 = vmatprep.subr.bf16.mxu0 0
    %9164 = vmatpush1.bf16.msra.mxu0 0
    %9165 = vmatprep.subr.bf16.mxu0 0
    %9166 = vmatpush1.bf16.msra.mxu0 0
    %9167 = vmatprep.subr.bf16.mxu0 0
    %9168 = vmatpush1.bf16.msra.mxu0 0
    %9169 = vmatprep.subr.bf16.mxu0 0
    %9170 = vmatpush1.bf16.msra.mxu0 0
    %9171 = vmatprep.mubr.bf16.mxu0 0
    %9172 = vmatmul.mubr.bf16.gmra.mrb[0].mxu0 %v9134
    %v9173 = vpop.f32.mrb[0].mxu0
    %v9174 = vadd.f32 0.0, %v9173
    %v9175 = vpop.f32.mrb[0].mxu0
    %v9176 = vpop.f32.mrb[0].mxu0
    %v9177 = vadd.f32 0.0, %v9176
    %v9178 = vpop.f32.mrb[0].mxu0
    %9179 = vmatprep.mubr.bf16.mxu0 0
    %9180 = vmatmul.mubr.bf16.gmra.mrb[0].mxu0 %v9137
    %v9181 = vpop.f32.mrb[0].mxu0
    %v9182 = vadd.f32 0.0, %v9181
    %v9183 = vpop.f32.mrb[0].mxu0
    %v9184 = vpop.f32.mrb[0].mxu0
    %v9185 = vadd.f32 0.0, %v9184
    %v9186 = vpop.f32.mrb[0].mxu0
    %9187 = vdwg.mxu0
    %v9188 = vadd.f32 %v8700, %v9174
    %v9189 = vadd.f32 %v8701, %v9177
    %v9190 = vadd.f32 %v8702, %v9182
    %v9191 = vadd.f32 %v8703, %v9185
    %v9192 = vadd.f32 %v9188, %v7236
    %v9193 = vadd.f32 %v9189, %v7237
    %v9194 = vadd.f32 %v9190, %v7238
    %v9195 = vadd.f32 %v9191, %v7239
    %s9196 = scalar_lea.vmem [#allocation13], 1
    %v9197 = vld [vmem:[%s9196] sm:$0x1]
    %s9198 = scalar_lea.vmem [#allocation15], 1
    %v9199 = vld [vmem:[%s9198] sm:$0x1]
    %v9200 = vsel %vm334, %v9192, 0.0
    %9201 = vadd.xlane.f32.xlu0 %v9200
    %v9202 = vpop.xlane.xlu0 %9201
    %v9203 = vsel %vm334, %v9193, 0.0
    %9204 = vadd.xlane.f32.xlu0 %v9203
    %v9205 = vpop.xlane.xlu0 %9204
    %v9206 = vsel %vm334, %v9194, 0.0
    %9207 = vadd.xlane.f32.xlu0 %v9206
    %v9208 = vpop.xlane.xlu0 %9207
    %v9209 = vsel %vm334, %v9195, 0.0
    %9210 = vadd.xlane.f32.xlu0 %v9209
    %v9211 = vpop.xlane.xlu0 %9210
    %v9212 = vmul.f32 %v9202, %v4853
    %v9213 = vmul.f32 %v9205, %v4853
    %v9214 = vmul.f32 %v9208, %v4853
    %v9215 = vmul.f32 %v9211, %v4853
    %v9216 = vsub.f32 %v9192, %v9212
    %v9217 = vsub.f32 %v9193, %v9213
    %v9218 = vsub.f32 %v9194, %v9214
    %v9219 = vsub.f32 %v9195, %v9215
    %v9220 = vmul.f32 %v9216, %v9216
    %v9221 = vmul.f32 %v9217, %v9217
    %v9222 = vmul.f32 %v9218, %v9218
    %v9223 = vmul.f32 %v9219, %v9219
    %v9224 = vsel %vm334, %v9220, 0.0
    %9225 = vadd.xlane.f32.xlu0 %v9224
    %v9226 = vpop.xlane.xlu0 %9225
    %v9227 = vsel %vm334, %v9221, 0.0
    %9228 = vadd.xlane.f32.xlu0 %v9227
    %v9229 = vpop.xlane.xlu0 %9228
    %v9230 = vsel %vm334, %v9222, 0.0
    %9231 = vadd.xlane.f32.xlu0 %v9230
    %v9232 = vpop.xlane.xlu0 %9231
    %v9233 = vsel %vm334, %v9223, 0.0
    %9234 = vadd.xlane.f32.xlu0 %v9233
    %v9235 = vpop.xlane.xlu0 %9234
    %v9236 = vmul.f32 %v9226, %v4853
    %v9237 = vmul.f32 %v9229, %v4853
    %v9238 = vmul.f32 %v9232, %v4853
    %v9239 = vmul.f32 %v9235, %v4853
    %v9240 = vadd.f32 %v9236, 1e-06
    %v9241 = vadd.f32 %v9237, 1e-06
    %v9242 = vadd.f32 %v9238, 1e-06
    %v9243 = vadd.f32 %v9239, 1e-06
    %v9244 = vrsqrt.pop %v9240
    %v9245 = vrsqrt.pop %v9241
    %v9246 = vrsqrt.pop %v9242
    %v9247 = vrsqrt.pop %v9243
    %v9248 = vmul.f32 %v9216, %v9244
    %v9249 = vmul.f32 %v9217, %v9245
    %v9250 = vmul.f32 %v9218, %v9246
    %v9251 = vmul.f32 %v9219, %v9247
    %v9253 = vlaneseq
    %v9254 = vshrl.u32 %v9253, 7
    %v9255 = vsub.s32 0, %v9254
    %v9256 = vrot.slane %v9197, %v9255
    %v9258 = vmul.f32 %v9248, %v9256
    %v9259 = vmul.f32 %v9249, %v9256
    %v9260 = vmul.f32 %v9250, %v9256
    %v9261 = vmul.f32 %v9251, %v9256
    %v9263 = vlaneseq
    %v9264 = vshrl.u32 %v9263, 7
    %v9265 = vsub.s32 0, %v9264
    %v9266 = vrot.slane %v9199, %v9265
    %v9268 = vadd.f32 %v9258, %v9266
    %v9269 = vadd.f32 %v9259, %v9266
    %v9270 = vadd.f32 %v9260, %v9266
    %v9271 = vadd.f32 %v9261, %v9266
    %v9272 = vpack.c.bf16 %v9269, %v9268
    %v9273 = vpack.c.bf16 %v9271, %v9270
    %s9274 = scalar_lea.vmem %s53, 32
    %v9275 = vld [vmem:[%s9274] sm:$0xf]
    %v9276 = vld [vmem:[%s9274 + $0x4] sm:$0xf]
    %v9277 = vld [vmem:[%s9274 + $0x8] sm:$0xf]
    %v9278 = vld [vmem:[%s9274 + $0xc] sm:$0xf]
    %v9279 = vld [vmem:[%s9274 + $0x10] sm:$0xf]
    %v9280 = vld [vmem:[%s9274 + $0x14] sm:$0xf]
    %v9281 = vld [vmem:[%s9274 + $0x18] sm:$0xf]
    %v9282 = vld [vmem:[%s9274 + $0x1c] sm:$0xf]
    %s9283 = scalar_lea.vmem [#allocation16], 1
    %v9284 = vld [vmem:[%s9283] sm:$0x1]
    %v9286 = vlaneseq
    %v9287 = vshrl.u32 %v9286, 7
    %v9288 = vsub.s32 0, %v9287
    %v9289 = vrot.slane %v9284, %v9288
    %v9299 = vunpack.c.l.b16 %v9275
    %v9300 = vunpack.c.l.b16 %v9276
    %v9301 = vunpack.c.l.b16 %v9277
    %v9302 = vunpack.c.l.b16 %v9278
    %v9303 = vunpack.c.l.b16 %v9279
    %v9304 = vunpack.c.l.b16 %v9280
    %v9305 = vunpack.c.l.b16 %v9281
    %v9306 = vunpack.c.l.b16 %v9282
    %v9307 = vpack.c.b16 %v9300, %v9299
    %v9308 = vpack.c.b16 %v9302, %v9301
    %v9309 = vpack.c.b16 %v9304, %v9303
    %v9310 = vpack.c.b16 %v9306, %v9305
    %v9316 = vsel %vm334, %v9272, 0
    %v9319 = vsel %vm334, %v9273, 0
    %9321 = vmatprep.subr.bf16.mxu0 0
    %9322 = vmatpush1.bf16.msra.mxu0 %v9307
    %9323 = vmatprep.subr.bf16.mxu0 0
    %9324 = vmatpush1.bf16.msra.mxu0 %v9308
    %9325 = vmatprep.subr.bf16.mxu0 0
    %9326 = vmatpush1.bf16.msra.mxu0 %v9309
    %9327 = vmatprep.subr.bf16.mxu0 0
    %9328 = vmatpush1.bf16.msra.mxu0 %v9310
    %9329 = vmatprep.subr.bf16.mxu0 0
    %9330 = vmatpush1.bf16.msra.mxu0 0
    %9331 = vmatprep.subr.bf16.mxu0 0
    %9332 = vmatpush1.bf16.msra.mxu0 0
    %9333 = vmatprep.subr.bf16.mxu0 0
    %9334 = vmatpush1.bf16.msra.mxu0 0
    %9335 = vmatprep.subr.bf16.mxu0 0
    %9336 = vmatpush1.bf16.msra.mxu0 0
    %9337 = vmatprep.subr.bf16.mxu0 0
    %9338 = vmatpush1.bf16.msra.mxu0 0
    %9339 = vmatprep.subr.bf16.mxu0 0
    %9340 = vmatpush1.bf16.msra.mxu0 0
    %9341 = vmatprep.subr.bf16.mxu0 0
    %9342 = vmatpush1.bf16.msra.mxu0 0
    %9343 = vmatprep.subr.bf16.mxu0 0
    %9344 = vmatpush1.bf16.msra.mxu0 0
    %9345 = vmatprep.subr.bf16.mxu0 0
    %9346 = vmatpush1.bf16.msra.mxu0 0
    %9347 = vmatprep.subr.bf16.mxu0 0
    %9348 = vmatpush1.bf16.msra.mxu0 0
    %9349 = vmatprep.subr.bf16.mxu0 0
    %9350 = vmatpush1.bf16.msra.mxu0 0
    %9351 = vmatprep.subr.bf16.mxu0 0
    %9352 = vmatpush1.bf16.msra.mxu0 0
    %9353 = vmatprep.mubr.bf16.mxu0 0
    %9354 = vmatmul.mubr.bf16.gmra.mrb[0].mxu0 %v9316
    %v9355 = vpop.f32.mrb[0].mxu0
    %v9356 = vadd.f32 %v9289, %v9355
    %v9357 = vpop.f32.mrb[0].mxu0
    %v9358 = vpop.f32.mrb[0].mxu0
    %v9359 = vadd.f32 %v9289, %v9358
    %v9360 = vpop.f32.mrb[0].mxu0
    %9361 = vmatprep.mubr.bf16.mxu0 0
    %9362 = vmatmul.mubr.bf16.gmra.mrb[0].mxu0 %v9319
    %v9363 = vpop.f32.mrb[0].mxu0
    %v9364 = vadd.f32 %v9289, %v9363
    %v9365 = vpop.f32.mrb[0].mxu0
    %v9366 = vpop.f32.mrb[0].mxu0
    %v9367 = vadd.f32 %v9289, %v9366
    %v9368 = vpop.f32.mrb[0].mxu0
    %9369 = vdwg.mxu0
    %v9370 = vmax.f32 %v9356, 0.0
    %v9371 = vmax.f32 %v9359, 0.0
    %v9372 = vmax.f32 %v9364, 0.0
    %v9373 = vmax.f32 %v9367, 0.0
    %v9374 = vpack.c.bf16 %v9371, %v9370
    %v9375 = vpack.c.bf16 %v9373, %v9372
    %s9376 = scalar_lea.vmem %s57, 64
    %v9377 = vld [vmem:[%s9376] sm:$0xf]
    %v9378 = vld [vmem:[%s9376 + $0x4] sm:$0xf]
    %v9379 = vld [vmem:[%s9376 + $0x8] sm:$0xf]
    %v9380 = vld [vmem:[%s9376 + $0xc] sm:$0xf]
    %v9381 = vld [vmem:[%s9376 + $0x10] sm:$0xf]
    %v9382 = vld [vmem:[%s9376 + $0x14] sm:$0xf]
    %v9383 = vld [vmem:[%s9376 + $0x18] sm:$0xf]
    %v9384 = vld [vmem:[%s9376 + $0x1c] sm:$0xf]
    %v9385 = vld [vmem:[%s9376 + $0x20] sm:$0xf]
    %v9386 = vld [vmem:[%s9376 + $0x24] sm:$0xf]
    %v9387 = vld [vmem:[%s9376 + $0x28] sm:$0xf]
    %v9388 = vld [vmem:[%s9376 + $0x2c] sm:$0xf]
    %v9389 = vld [vmem:[%s9376 + $0x30] sm:$0xf]
    %v9390 = vld [vmem:[%s9376 + $0x34] sm:$0xf]
    %v9391 = vld [vmem:[%s9376 + $0x38] sm:$0xf]
    %v9392 = vld [vmem:[%s9376 + $0x3c] sm:$0xf]
    %s9393 = scalar_lea.vmem [#allocation18], 1
    %v9394 = vld [vmem:[%s9393] sm:$0x1]
    %v9396 = vlaneseq
    %v9397 = vshrl.u32 %v9396, 7
    %v9398 = vsub.s32 0, %v9397
    %v9399 = vrot.slane %v9394, %v9398
    %v9417 = vunpack.c.l.b16 %v9377
    %v9418 = vunpack.c.l.b16 %v9378
    %v9419 = vunpack.c.l.b16 %v9379
    %v9420 = vunpack.c.l.b16 %v9380
    %v9421 = vunpack.c.l.b16 %v9381
    %v9422 = vunpack.c.l.b16 %v9382
    %v9423 = vunpack.c.l.b16 %v9383
    %v9424 = vunpack.c.l.b16 %v9384
    %v9425 = vunpack.c.l.b16 %v9385
    %v9426 = vunpack.c.l.b16 %v9386
    %v9427 = vunpack.c.l.b16 %v9387
    %v9428 = vunpack.c.l.b16 %v9388
    %v9429 = vunpack.c.l.b16 %v9389
    %v9430 = vunpack.c.l.b16 %v9390
    %v9431 = vunpack.c.l.b16 %v9391
    %v9432 = vunpack.c.l.b16 %v9392
    %v9433 = vpack.c.b16 %v9418, %v9417
    %v9434 = vpack.c.b16 %v9420, %v9419
    %v9435 = vpack.c.b16 %v9422, %v9421
    %v9436 = vpack.c.b16 %v9424, %v9423
    %v9437 = vpack.c.b16 %v9426, %v9425
    %v9438 = vpack.c.b16 %v9428, %v9427
    %v9439 = vpack.c.b16 %v9430, %v9429
    %v9440 = vpack.c.b16 %v9432, %v9431
    %9449 = vmatprep.subr.bf16.mxu0 0
    %9450 = vmatpush1.bf16.msra.mxu0 %v9433
    %9451 = vmatprep.subr.bf16.mxu0 0
    %9452 = vmatpush1.bf16.msra.mxu0 %v9434
    %9453 = vmatprep.subr.bf16.mxu0 0
    %9454 = vmatpush1.bf16.msra.mxu0 %v9435
    %9455 = vmatprep.subr.bf16.mxu0 0
    %9456 = vmatpush1.bf16.msra.mxu0 %v9436
    %9457 = vmatprep.subr.bf16.mxu0 0
    %9458 = vmatpush1.bf16.msra.mxu0 %v9437
    %9459 = vmatprep.subr.bf16.mxu0 0
    %9460 = vmatpush1.bf16.msra.mxu0 %v9438
    %9461 = vmatprep.subr.bf16.mxu0 0
    %9462 = vmatpush1.bf16.msra.mxu0 %v9439
    %9463 = vmatprep.subr.bf16.mxu0 0
    %9464 = vmatpush1.bf16.msra.mxu0 %v9440
    %9465 = vmatprep.subr.bf16.mxu0 0
    %9466 = vmatpush1.bf16.msra.mxu0 0
    %9467 = vmatprep.subr.bf16.mxu0 0
    %9468 = vmatpush1.bf16.msra.mxu0 0
    %9469 = vmatprep.subr.bf16.mxu0 0
    %9470 = vmatpush1.bf16.msra.mxu0 0
    %9471 = vmatprep.subr.bf16.mxu0 0
    %9472 = vmatpush1.bf16.msra.mxu0 0
    %9473 = vmatprep.subr.bf16.mxu0 0
    %9474 = vmatpush1.bf16.msra.mxu0 0
    %9475 = vmatprep.subr.bf16.mxu0 0
    %9476 = vmatpush1.bf16.msra.mxu0 0
    %9477 = vmatprep.subr.bf16.mxu0 0
    %9478 = vmatpush1.bf16.msra.mxu0 0
    %9479 = vmatprep.subr.bf16.mxu0 0
    %9480 = vmatpush1.bf16.msra.mxu0 0
    %9481 = vmatprep.mubr.bf16.mxu0 0
    %9482 = vmatmul.mubr.bf16.gmra.mrb[0].mxu0 %v9374
    %v9483 = vpop.f32.mrb[0].mxu0
    %v9484 = vadd.f32 %v9399, %v9483
    %v9485 = vpop.f32.mrb[0].mxu0
    %v9486 = vpop.f32.mrb[0].mxu0
    %v9487 = vadd.f32 %v9399, %v9486
    %v9488 = vpop.f32.mrb[0].mxu0
    %9489 = vmatprep.mubr.bf16.mxu0 0
    %9490 = vmatmul.mubr.bf16.gmra.mrb[0].mxu0 %v9375
    %v9491 = vpop.f32.mrb[0].mxu0
    %v9492 = vadd.f32 %v9399, %v9491
    %v9493 = vpop.f32.mrb[0].mxu0
    %v9494 = vpop.f32.mrb[0].mxu0
    %v9495 = vadd.f32 %v9399, %v9494
    %v9496 = vpop.f32.mrb[0].mxu0
    %9497 = vdwg.mxu0
    %v9498 = vadd.f32 %v9484, %v9268
    %v9499 = vadd.f32 %v9487, %v9269
    %v9500 = vadd.f32 %v9492, %v9270
    %v9501 = vadd.f32 %v9495, %v9271
    %s9502 = scalar_lea.vmem [#allocation19], 1
    %v9503 = vld [vmem:[%s9502] sm:$0x1]
    %s9504 = scalar_lea.vmem [#allocation21], 1
    %v9505 = vld [vmem:[%s9504] sm:$0x1]
    %v9506 = vsel %vm334, %v9498, 0.0
    %9507 = vadd.xlane.f32.xlu0 %v9506
    %v9508 = vpop.xlane.xlu0 %9507
    %v9509 = vsel %vm334, %v9499, 0.0
    %9510 = vadd.xlane.f32.xlu0 %v9509
    %v9511 = vpop.xlane.xlu0 %9510
    %v9512 = vsel %vm334, %v9500, 0.0
    %9513 = vadd.xlane.f32.xlu0 %v9512
    %v9514 = vpop.xlane.xlu0 %9513
    %v9515 = vsel %vm334, %v9501, 0.0
    %9516 = vadd.xlane.f32.xlu0 %v9515
    %v9517 = vpop.xlane.xlu0 %9516
    %v9518 = vmul.f32 %v9508, %v4853
    %v9519 = vmul.f32 %v9511, %v4853
    %v9520 = vmul.f32 %v9514, %v4853
    %v9521 = vmul.f32 %v9517, %v4853
    %v9522 = vsub.f32 %v9498, %v9518
    %v9523 = vsub.f32 %v9499, %v9519
    %v9524 = vsub.f32 %v9500, %v9520
    %v9525 = vsub.f32 %v9501, %v9521
    %v9526 = vmul.f32 %v9522, %v9522
    %v9527 = vmul.f32 %v9523, %v9523
    %v9528 = vmul.f32 %v9524, %v9524
    %v9529 = vmul.f32 %v9525, %v9525
    %v9530 = vsel %vm334, %v9526, 0.0
    %9531 = vadd.xlane.f32.xlu0 %v9530
    %v9532 = vpop.xlane.xlu0 %9531
    %v9533 = vsel %vm334, %v9527, 0.0
    %9534 = vadd.xlane.f32.xlu0 %v9533
    %v9535 = vpop.xlane.xlu0 %9534
    %v9536 = vsel %vm334, %v9528, 0.0
    %9537 = vadd.xlane.f32.xlu0 %v9536
    %v9538 = vpop.xlane.xlu0 %9537
    %v9539 = vsel %vm334, %v9529, 0.0
    %9540 = vadd.xlane.f32.xlu0 %v9539
    %v9541 = vpop.xlane.xlu0 %9540
    %v9542 = vmul.f32 %v9532, %v4853
    %v9543 = vmul.f32 %v9535, %v4853
    %v9544 = vmul.f32 %v9538, %v4853
    %v9545 = vmul.f32 %v9541, %v4853
    %v9546 = vadd.f32 %v9542, 1e-06
    %v9547 = vadd.f32 %v9543, 1e-06
    %v9548 = vadd.f32 %v9544, 1e-06
    %v9549 = vadd.f32 %v9545, 1e-06
    %v9550 = vrsqrt.pop %v9546
    %v9551 = vrsqrt.pop %v9547
    %v9552 = vrsqrt.pop %v9548
    %v9553 = vrsqrt.pop %v9549
    %v9554 = vmul.f32 %v9522, %v9550
    %v9555 = vmul.f32 %v9523, %v9551
    %v9556 = vmul.f32 %v9524, %v9552
    %v9557 = vmul.f32 %v9525, %v9553
    %v9559 = vlaneseq
    %v9560 = vshrl.u32 %v9559, 7
    %v9561 = vsub.s32 0, %v9560
    %v9562 = vrot.slane %v9503, %v9561
    %v9564 = vmul.f32 %v9554, %v9562
    %v9565 = vmul.f32 %v9555, %v9562
    %v9566 = vmul.f32 %v9556, %v9562
    %v9567 = vmul.f32 %v9557, %v9562
    %v9569 = vlaneseq
    %v9570 = vshrl.u32 %v9569, 7
    %v9571 = vsub.s32 0, %v9570
    %v9572 = vrot.slane %v9505, %v9571
    %v9574 = vadd.f32 %v9564, %v9572
    %v9575 = vadd.f32 %v9565, %v9572
    %v9576 = vadd.f32 %v9566, %v9572
    %v9577 = vadd.f32 %v9567, %v9572
    %v9578 = vpack.c.bf16 %v9575, %v9574
    %v9579 = vpack.c.bf16 %v9577, %v9576
    %v9580 = vld [vmem:[%s65] sm:$0xf]
    %v9581 = vld [vmem:[%s65 + $0x4] sm:$0xf]
    %v9582 = vld [vmem:[%s65 + $0x8] sm:$0xf]
    %v9583 = vld [vmem:[%s65 + $0xc] sm:$0xf]
    %v9584 = vld [vmem:[%s65 + $0x10] sm:$0xf]
    %v9585 = vld [vmem:[%s65 + $0x14] sm:$0xf]
    %v9586 = vld [vmem:[%s65 + $0x18] sm:$0xf]
    %v9587 = vld [vmem:[%s65 + $0x1c] sm:$0xf]
    %v9588 = vld [vmem:[#allocation22] sm:$0x1]
    %v9590 = vlaneseq
    %v9591 = vshrl.u32 %v9590, 7
    %v9592 = vsub.s32 0, %v9591
    %v9593 = vrot.slane %v9588, %v9592
    %v9603 = vunpack.c.l.b16 %v9580
    %v9604 = vunpack.c.l.b16 %v9581
    %v9605 = vunpack.c.l.b16 %v9582
    %v9606 = vunpack.c.l.b16 %v9583
    %v9607 = vunpack.c.l.b16 %v9584
    %v9608 = vunpack.c.l.b16 %v9585
    %v9609 = vunpack.c.l.b16 %v9586
    %v9610 = vunpack.c.l.b16 %v9587
    %v9611 = vpack.c.b16 %v9604, %v9603
    %v9612 = vpack.c.b16 %v9606, %v9605
    %v9613 = vpack.c.b16 %v9608, %v9607
    %v9614 = vpack.c.b16 %v9610, %v9609
    %v9620 = vsel %vm334, %v9578, 0
    %v9623 = vsel %vm334, %v9579, 0
    %9625 = vmatprep.subr.bf16.mxu0 0
    %9626 = vmatpush1.bf16.msra.mxu0 %v9611
    %9627 = vmatprep.subr.bf16.mxu0 0
    %9628 = vmatpush1.bf16.msra.mxu0 %v9612
    %9629 = vmatprep.subr.bf16.mxu0 0
    %9630 = vmatpush1.bf16.msra.mxu0 %v9613
    %9631 = vmatprep.subr.bf16.mxu0 0
    %9632 = vmatpush1.bf16.msra.mxu0 %v9614
    %9633 = vmatprep.subr.bf16.mxu0 0
    %9634 = vmatpush1.bf16.msra.mxu0 0
    %9635 = vmatprep.subr.bf16.mxu0 0
    %9636 = vmatpush1.bf16.msra.mxu0 0
    %9637 = vmatprep.subr.bf16.mxu0 0
    %9638 = vmatpush1.bf16.msra.mxu0 0
    %9639 = vmatprep.subr.bf16.mxu0 0
    %9640 = vmatpush1.bf16.msra.mxu0 0
    %9641 = vmatprep.subr.bf16.mxu0 0
    %9642 = vmatpush1.bf16.msra.mxu0 0
    %9643 = vmatprep.subr.bf16.mxu0 0
    %9644 = vmatpush1.bf16.msra.mxu0 0
    %9645 = vmatprep.subr.bf16.mxu0 0
    %9646 = vmatpush1.bf16.msra.mxu0 0
    %9647 = vmatprep.subr.bf16.mxu0 0
    %9648 = vmatpush1.bf16.msra.mxu0 0
    %9649 = vmatprep.subr.bf16.mxu0 0
    %9650 = vmatpush1.bf16.msra.mxu0 0
    %9651 = vmatprep.subr.bf16.mxu0 0
    %9652 = vmatpush1.bf16.msra.mxu0 0
    %9653 = vmatprep.subr.bf16.mxu0 0
    %9654 = vmatpush1.bf16.msra.mxu0 0
    %9655 = vmatprep.subr.bf16.mxu0 0
    %9656 = vmatpush1.bf16.msra.mxu0 0
    %9657 = vmatprep.mubr.bf16.mxu0 0
    %9658 = vmatmul.mubr.bf16.gmra.mrb[0].mxu0 %v9620
    %v9659 = vpop.f32.mrb[0].mxu0
    %v9660 = vadd.f32 %v9593, %v9659
    %v9661 = vpop.f32.mrb[0].mxu0
    %v9662 = vpop.f32.mrb[0].mxu0
    %v9663 = vadd.f32 %v9593, %v9662
    %v9664 = vpop.f32.mrb[0].mxu0
    %9665 = vmatprep.mubr.bf16.mxu0 0
    %9666 = vmatmul.mubr.bf16.gmra.mrb[0].mxu0 %v9623
    %v9667 = vpop.f32.mrb[0].mxu0
    %v9668 = vadd.f32 %v9593, %v9667
    %v9669 = vpop.f32.mrb[0].mxu0
    %v9670 = vpop.f32.mrb[0].mxu0
    %v9671 = vadd.f32 %v9593, %v9670
    %v9672 = vpop.f32.mrb[0].mxu0
    %9673 = vdwg.mxu0
    %v9674 = vand.u32 2147483647, %v9660
    %v9675 = vand.u32 2147483647, %v9663
    %v9676 = vand.u32 2147483647, %v9668
    %v9677 = vand.u32 2147483647, %v9671
    %9678 = vst.msk [vmem:[%s69] sm:$0xff] %vm797, %v9674
    %9679 = vst.msk [vmem:[%s69 + $0x8] sm:$0xff] %vm797, %v9675
    %9680 = vst.msk [vmem:[%s69 + $0x10] sm:$0xff] %vm797, %v9676
    %9681 = vst.msk [vmem:[%s69 + $0x18] sm:$0xff] %vm797, %v9677
    // Predicated region
    $region194: #{clean_specnet_forward.1} parent=1 // pred_check
      _
    $region195: #{clean_specnet_forward.1} parent=1 // pred_check_branch
      %9683 = sbr.rel (0) target = $region197
    $region196: #{clean_specnet_forward.1} parent=1 // pred_region
      _
    $region197: #{clean_specnet_forward.1} parent=1 // pred_fallthru
      _
    // Predicated region
    $region198: #{clean_specnet_forward.1} parent=1 // pred_check
      _
    $region199: #{clean_specnet_forward.1} parent=1 // pred_check_branch
      %9685 = sbr.rel (0) target = $region201
    $region200: #{clean_specnet_forward.1} parent=1 // pred_region
      _
    $region201: #{clean_specnet_forward.1} parent=1 // pred_fallthru
      _
    %9686 = vsyncpa [#allocation3], 1
    %9687 = vsyncpa [#allocation5], 1
    %9688 = vsyncpa [#allocation8], 1
    %9689 = vsyncpa [#allocation11], 1
    %9690 = vsyncpa [#allocation14], 1
    %9691 = vsyncpa [#allocation17], 1
    %9692 = vsyncpa [#allocation20], 1
    %9693 = vsyncpa [#allocation23], 1

</llo_original>
